<compile_context>
chip_gen: v7x
topology: tpu7x:2x2x1
jax: 0.10.0
libtpu: 0.0.40
codegen_flags: <defaults>
</compile_context>

<pallas_src>
from functools import partial

import numpy as np
import jax
import jax.numpy as jnp
from jax.experimental import pallas as pl
from jax.experimental.pallas import tpu as pltpu


# ----------------------------------------------------------------------------
# Helpers
# ----------------------------------------------------------------------------
def _choose_tm(M, tm_max=512):
    """Largest multiple-of-8 (preferably 16, bf16-tile friendly) divisor of M
    that is <= tm_max, preferring >= 4 grid steps so v7x's two TensorCores each
    get >= 2 pipelined iterations."""
    assert M % 8 == 0, "B*H*W must be a multiple of 8"
    top = min(M, tm_max)
    for min_steps in (4, 2, 1):
        cands = [c for c in range(8, top + 1, 8) if M % c == 0 and M // c >= min_steps]
        if cands:
            c16 = [c for c in cands if c % 16 == 0]
            return max(c16) if c16 else max(cands)
    return 8


def _compiler_params(num_grid_dims=1):
    # Generation-aware scoped-VMEM limit: ~3/4 of physical VMEM, capped at 100MiB
    # (v5e/v6e: 128 MiB physical; v7x: 64 MiB -> 48 MiB scoped).
    try:
        cap = int(pltpu.get_tpu_info().vmem_capacity_bytes)
    except Exception:
        cap = 64 * 1024 * 1024
    limit = min(cap * 3 // 4, 100 * 1024 * 1024)
    return pltpu.CompilerParams(dimension_semantics=("parallel",) * num_grid_dims,
                                vmem_limit_bytes=limit)


# ----------------------------------------------------------------------------
# Kernel 1: pointwise conv (folded eval-mode BN) + multi-step LIF over T,
# optionally with a fused residual add.
#   x:(T, tm, Cin) bf16   w:(Cin, Cout) bf16   b:(1, Cout) f32
#   One T-batched MXU dot per grid step, staged in VMEM; LIF scan over y[t].
# ----------------------------------------------------------------------------
def _conv_bn_lif_kernel(x_ref, w_ref, b_ref, o_ref, y_ref, v_ref, *, T, thr):
    tm = o_ref.shape[1]
    cin = x_ref.shape[2]
    x = x_ref[...].reshape(T * tm, cin)                  # batch T into the MXU M dim
    y_ref[...] = jnp.dot(x, w_ref[...],
                         preferred_element_type=jnp.float32) + b_ref[...]
    v_ref[...] = jnp.zeros_like(v_ref)
    for t in range(T):                                   # T static -> unrolled LIF scan
        vm = (v_ref[...] + y_ref[pl.ds(t * tm, tm), :]) * 0.5   # tau=2, v_reset=0
        spike = vm >= thr
        o_ref[t] = spike.astype(o_ref.dtype)             # spikes are exact 0/1
        v_ref[...] = jnp.where(spike, 0.0, vm)           # hard reset


def _conv_bn_lif_res_kernel(x_ref, r_ref, w_ref, b_ref, o_ref, y_ref, v_ref, *, T, thr):
    tm = o_ref.shape[1]
    cin = x_ref.shape[2]
    x = x_ref[...].reshape(T * tm, cin)
    y_ref[...] = jnp.dot(x, w_ref[...],
                         preferred_element_type=jnp.float32) + b_ref[...]
    v_ref[...] = jnp.zeros_like(v_ref)
    for t in range(T):
        vm = (v_ref[...] + y_ref[pl.ds(t * tm, tm), :]) * 0.5
        spike = vm >= thr
        o_ref[t] = (spike.astype(jnp.float32)
                    + r_ref[t].astype(jnp.float32)).astype(o_ref.dtype)  # fused residual
        v_ref[...] = jnp.where(spike, 0.0, vm)


def conv_bn_lif(x, w_eff, b_eff, thr=1.0, *, residual=None,
                out_dtype=jnp.bfloat16, tm_max=512):
    T, M, Cin = x.shape
    Cout = w_eff.shape[1]
    tm = _choose_tm(M, tm_max)
    grid = (M // tm,)
    x_spec = pl.BlockSpec((T, tm, Cin), lambda i: (0, i, 0))
    w_spec = pl.BlockSpec((Cin, Cout), lambda i: (0, 0))
    b_spec = pl.BlockSpec((1, Cout), lambda i: (0, 0))
    o_spec = pl.BlockSpec((T, tm, Cout), lambda i: (0, i, 0))
    scratch = [pltpu.VMEM((T * tm, Cout), jnp.float32),   # staged conv output
               pltpu.VMEM((tm, Cout), jnp.float32)]       # LIF membrane
    if residual is None:
        return pl.pallas_call(
            partial(_conv_bn_lif_kernel, T=T, thr=thr),
            grid=grid,
            in_specs=[x_spec, w_spec, b_spec],
            out_specs=o_spec,
            out_shape=jax.ShapeDtypeStruct((T, M, Cout), out_dtype),
            scratch_shapes=scratch,
            compiler_params=_compiler_params(),
        )(x, w_eff, b_eff)
    assert residual.shape == (T, M, Cout)
    r_spec = pl.BlockSpec((T, tm, Cout), lambda i: (0, i, 0))
    return pl.pallas_call(
        partial(_conv_bn_lif_res_kernel, T=T, thr=thr),
        grid=grid,
        in_specs=[x_spec, r_spec, w_spec, b_spec],
        out_specs=o_spec,
        out_shape=jax.ShapeDtypeStruct((T, M, Cout), out_dtype),
        scratch_shapes=scratch,
        compiler_params=_compiler_params(),
    )(x, residual, w_eff, b_eff)


# ----------------------------------------------------------------------------
# Kernel 2: spiking self-attention core (all heads of one batch element per
# grid step) + attn LIF (threshold 0.5).
#   qkv:(T, N, 3C) bf16 spikes, mask:(C, C) block-diagonal head mask * 0.125.
#   Per block (T-batched):  kv = k^T @ v ; y = q @ (kv * mask) ; LIF over t.
# ----------------------------------------------------------------------------
def _ssa_attn_lif_kernel(qkv_ref, mask_ref, o_ref, *, T, C, thr):
    q = qkv_ref[:, :, 0:C]                   # (T, N, C) bf16 spike slices
    k = qkv_ref[:, :, C:2 * C]
    v = qkv_ref[:, :, 2 * C:3 * C]
    # kv[t,d,e] = sum_n k[t,n,d] * v[t,n,e]  -- exact integer counts <= N
    kv = jnp.einsum("tnd,tne->tde", k, v, preferred_element_type=jnp.float32)
    # Block-diagonal head mask with the 0.125 scale folded in; entries are
    # n * 0.125 with n <= N (exact in bf16 for N <= 256) -> full-rate bf16 MXU.
    kvm = (kv * mask_ref[...]).astype(jnp.bfloat16)
    y = jnp.einsum("tnd,tde->tne", q, kvm, preferred_element_type=jnp.float32)
    vm = jnp.zeros(o_ref.shape[1:], jnp.float32)
    for t in range(T):
        vm = (vm + y[t]) * 0.5
        spike = vm >= thr
        o_ref[t] = spike.astype(o_ref.dtype)
        vm = jnp.where(spike, 0.0, vm)


def ssa_attention(qkv_s, *, B, N, num_heads, scale=0.125, thr=0.5):
    T, M, C3 = qkv_s.shape
    C = C3 // 3
    assert M == B * N and N % 8 == 0 and C % num_heads == 0
    D = C // num_heads
    head = np.arange(C) // D
    mask = jnp.asarray(np.where(head[:, None] == head[None, :], scale, 0.0)
                       .astype(np.float32))
    return pl.pallas_call(
        partial(_ssa_attn_lif_kernel, T=T, C=C, thr=thr),
        grid=(B,),
        in_specs=[pl.BlockSpec((T, N, C3), lambda b: (0, b, 0)),
                  pl.BlockSpec((C, C), lambda b: (0, 0))],
        out_specs=pl.BlockSpec((T, N, C), lambda b: (0, b, 0)),
        out_shape=jax.ShapeDtypeStruct((T, M, C), jnp.bfloat16),
        compiler_params=_compiler_params(),
    )(qkv_s, mask)


# ----------------------------------------------------------------------------
# Full SpikingTransformer forward (Pallas path).
# ----------------------------------------------------------------------------
def spiking_transformer_forward(x, params, num_heads):
    T, B, C, H, W = x.shape
    # The torch module's final reshape(T,B,C,W,H) is only byte-equivalent to the
    # residual add for H == W.
    assert H == W, "SpikingTransformer (as specified) requires square spatial dims"
    N = H * W
    M = B * N

    # Single entry transpose + cast to bf16 token layout (T, B*N, C).  bf16
    # activations keep every MXU operand on the full-rate bf16 path.
    # (Folding this transpose into the qkv kernel is a further possible win;
    #  here it is left to XLA as one fused cast+transpose pass.)
    x_tok = (x.astype(jnp.bfloat16).reshape(T, B, C, N)
             .transpose(0, 1, 3, 2).reshape(T, M, C))

    # --- Spiking self-attention ---
    # Fused q/k/v conv(+BN)+LIF: single (T*tm, C)@(C, 3C) dot per grid step; the
    # three LIF streams share tau/threshold, so one 3C-wide membrane covers them.
    qkv_s = conv_bn_lif(x_tok, *params["qkv"], thr=1.0)
    attn_s = ssa_attention(qkv_s, B=B, N=N, num_heads=num_heads)
    x1_tok = conv_bn_lif(attn_s, *params["proj"], thr=1.0,
                         residual=x_tok, out_dtype=jnp.bfloat16)     # x + ssa(x)

    # --- MLP ---
    h_s = conv_bn_lif(x1_tok, *params["mlp1"], thr=1.0)
    out_tok = conv_bn_lif(h_s, *params["mlp2"], thr=1.0,
                          residual=x1_tok, out_dtype=jnp.float32)    # x1 + mlp(x1)

    # Single exit transpose back to (T, B, C, H, W).
    return out_tok.reshape(T, B, N, C).transpose(0, 1, 3, 2).reshape(T, B, C, H, W)


# ----------------------------------------------------------------------------
# Pure-JAX reference at matched precision (bf16-rounded activations/weights,
# f32 accumulation): the only kernel/reference delta is matmul summation order.
# ----------------------------------------------------------------------------
def _lif_ref(x, thr):
    v = jnp.zeros_like(x[0])
    outs = []
    for t in range(x.shape[0]):
        v = (v + x[t]) * 0.5
        outs.append((v >= thr).astype(x.dtype))
        v = jnp.where(v >= thr, 0.0, v)
    return jnp.stack(outs, 0)


def spiking_transformer_forward_ref(x, params, num_heads):
    T, B, C, H, W = x.shape
    N = H * W
    M = B * N
    D = C // num_heads
    x_tok = (x.astype(jnp.bfloat16).astype(jnp.float32)
             .reshape(T, B, C, N).transpose(0, 1, 3, 2).reshape(T, M, C))

    def conv_lif(z, w, b, thr):
        return _lif_ref(jnp.einsum("tmc,cd->tmd", z, w.astype(jnp.float32)) + b, thr)

    qkv_spk = conv_lif(x_tok, *params["qkv"], 1.0)               # (T, M, 3C)
    q_s, k_s, v_s = jnp.split(qkv_spk, 3, axis=-1)

    def to_heads(s):                                             # (T,M,C)->(T,B,h,N,D)
        return s.reshape(T, B, N, num_heads, D).transpose(0, 1, 3, 2, 4)

    qh, kh, vh = to_heads(q_s), to_heads(k_s), to_heads(v_s)
    kv = jnp.einsum("tbhnd,tbhne->tbhde", kh, vh)
    y = jnp.einsum("tbhnd,tbhde->tbhne", qh, kv) * 0.125
    attn_s = _lif_ref(y.transpose(0, 1, 3, 2, 4).reshape(T, M, C), 0.5)

    x1 = x_tok + conv_lif(attn_s, *params["proj"], 1.0)
    x1 = x1.astype(jnp.bfloat16).astype(jnp.float32)             # kernel stores x1 in bf16
    h_s = conv_lif(x1, *params["mlp1"], 1.0)
    out_tok = x1 + conv_lif(h_s, *params["mlp2"], 1.0)
    return out_tok.reshape(T, B, N, C).transpose(0, 1, 3, 2).reshape(T, B, C, H, W)


# ----------------------------------------------------------------------------
# Deterministic synthetic parameters + eval-mode BN folding.
# TODO(synk): training-mode BatchNorm (batch statistics) is not reproduced;
# BN is folded with fixed running stats as in inference.
# ----------------------------------------------------------------------------
def _fold_bn(w, b, gamma, beta, mean, var, eps=1e-5):
    scale = gamma / jnp.sqrt(var + eps)
    w_eff = (w * scale[:, None]).T                    # (Cin, Cout)
    b_eff = ((b - mean) * scale + beta)[None, :]      # (1, Cout)
    # Weights feed the MXU in bf16 (full-rate path); biases stay f32.
    return w_eff.astype(jnp.bfloat16), b_eff.astype(jnp.float32)


def init_linear_bn(key, cin, cout, use_bias):
    k1, k2, k3, k4, k5, k6 = jax.random.split(key, 6)
    w = jax.random.normal(k1, (cout, cin), jnp.float32) * (1.0 / np.sqrt(cin))
    b = (0.1 * jax.random.normal(k2, (cout,), jnp.float32)
         if use_bias else jnp.zeros((cout,), jnp.float32))
    gamma = 1.0 + 0.1 * jax.random.normal(k3, (cout,), jnp.float32)
    beta = 0.1 * jax.random.normal(k4, (cout,), jnp.float32)
    mean = 0.1 * jax.random.normal(k5, (cout,), jnp.float32)
    var = 1.0 + 0.5 * jax.random.uniform(k6, (cout,), jnp.float32)
    return _fold_bn(w, b, gamma, beta, mean, var)


if __name__ == "__main__":
    T, B, dim, H, W = 4, 2, 32, 8, 8
    num_heads = 4
    mlp_hidden = int(dim * 4.0)

    key = jax.random.PRNGKey(0)
    kx, kq, kk, kv, kp, km1, km2 = jax.random.split(key, 7)
    x = jax.random.normal(kx, (T, B, dim, H, W), jnp.float32)

    wq, bq = init_linear_bn(kq, dim, dim, use_bias=False)
    wk, bk = init_linear_bn(kk, dim, dim, use_bias=False)
    wv, bv = init_linear_bn(kv, dim, dim, use_bias=False)
    params = {
        "qkv":  (jnp.concatenate([wq, wk, wv], axis=1),    # (C, 3C) bf16
                 jnp.concatenate([bq, bk, bv], axis=1)),    # (1, 3C) f32
        "proj": init_linear_bn(kp, dim, dim, use_bias=True),
        "mlp1": init_linear_bn(km1, dim, mlp_hidden, use_bias=True),
        "mlp2": init_linear_bn(km2, mlp_hidden, dim, use_bias=True),
    }

    fwd = jax.jit(partial(spiking_transformer_forward, num_heads=num_heads))
    out = jax.block_until_ready(fwd(x, params))

    ref = spiking_transformer_forward_ref(x, params, num_heads)
    assert out.shape == x.shape
    assert bool(jnp.all(jnp.isfinite(out)))
    # Spikes are exact 0/1 in both paths; any spike disagreement shows up as a
    # ~1.0 diff.  With matched precision only matmul-rounding boundary flips
    # remain, so allow a negligible fraction.
    mismatch = float(jnp.mean((jnp.abs(out - ref) > 1e-3).astype(jnp.float32)))
    assert mismatch < 0.01, f"mismatch fraction vs reference: {mismatch}"

    print("KERNEL_OK")
</pallas_src>

<mosaic_0001>
module attributes {stable_mosaic.version = 11 : i64} {
  func.func @_conv_bn_lif_kernel(%arg0: i32, %arg1: memref<4x32x32xbf16, #tpu.memory_space<vmem>>, %arg2: memref<32x96xbf16, #tpu.memory_space<vmem>>, %arg3: memref<1x96xf32, #tpu.memory_space<vmem>>, %arg4: memref<4x32x96xbf16, #tpu.memory_space<vmem>>, %arg5: memref<128x96xf32, #tpu.memory_space<vmem>>, %arg6: memref<32x96xf32, #tpu.memory_space<vmem>>) attributes {dimension_semantics = [#tpu.dimension_semantics<parallel>], iteration_bounds = array<i64: 4>, scalar_prefetch = 0 : i64, scratch_operands = 2 : i64, tpu.core_type = #tpu.core_type<tc>, window_params = [{transform_indices = @transform_0, window_bounds = array<i64: 4, 32, 32>}, {pipeline_mode = #tpu.pipeline_mode<synchronous>, transform_indices = @transform_1, window_bounds = array<i64: 32, 96>}, {pipeline_mode = #tpu.pipeline_mode<synchronous>, transform_indices = @transform_2, window_bounds = array<i64: 1, 96>}, {transform_indices = @transform_3, window_bounds = array<i64: 4, 32, 96>}]} {
    %c0 = arith.constant 0 : index
    %c0_0 = arith.constant 0 : index
    %c0_1 = arith.constant 0 : index
    %0 = vector.load %arg1[%c0, %c0_0, %c0_1] : memref<4x32x32xbf16, #tpu.memory_space<vmem>>, vector<4x32x32xbf16>
    %1 = vector.shape_cast %0 : vector<4x32x32xbf16> to vector<128x32xbf16>
    %c0_2 = arith.constant 0 : index
    %c0_3 = arith.constant 0 : index
    %2 = vector.load %arg2[%c0_2, %c0_3] : memref<32x96xbf16, #tpu.memory_space<vmem>>, vector<32x96xbf16>
    %cst = arith.constant dense<0.000000e+00> : vector<128x96xf32>
    %3 = tpu.matmul %1, %2, %cst {dimension_numbers = #tpu.dot_dimension_numbers<[1], [0], [0], [1], [0, 0, 1, 1], [], []>} : vector<128x32xbf16>, vector<32x96xbf16>, vector<128x96xf32> -> vector<128x96xf32>
    %c0_4 = arith.constant 0 : index
    %c0_5 = arith.constant 0 : index
    %4 = vector.load %arg3[%c0_4, %c0_5] : memref<1x96xf32, #tpu.memory_space<vmem>>, vector<1x96xf32>
    %5 = vector.broadcast %4 : vector<1x96xf32> to vector<128x96xf32>
    %6 = arith.addf %3, %5 : vector<128x96xf32>
    %c0_6 = arith.constant 0 : index
    %c0_7 = arith.constant 0 : index
    %7 = vector.load %arg5[%c0_6, %c0_7] : memref<128x96xf32, #tpu.memory_space<vmem>>, vector<128x96xf32>
    tpu.vector_store %arg5[%c0_6, %c0_7], %6 {strides = array<i32>} : memref<128x96xf32, #tpu.memory_space<vmem>>, vector<128x96xf32>,
    %cst_8 = arith.constant 0.000000e+00 : f32
    %8 = vector.broadcast %cst_8 : f32 to vector<32x96xf32>
    %c0_9 = arith.constant 0 : index
    %c0_10 = arith.constant 0 : index
    %9 = vector.load %arg6[%c0_9, %c0_10] : memref<32x96xf32, #tpu.memory_space<vmem>>, vector<32x96xf32>
    tpu.vector_store %arg6[%c0_9, %c0_10], %8 {strides = array<i32>} : memref<32x96xf32, #tpu.memory_space<vmem>>, vector<32x96xf32>,
    %c0_11 = arith.constant 0 : index
    %c0_12 = arith.constant 0 : index
    %10 = vector.load %arg6[%c0_11, %c0_12] : memref<32x96xf32, #tpu.memory_space<vmem>>, vector<32x96xf32>
    %c0_13 = arith.constant 0 : index
    %c0_14 = arith.constant 0 : index
    %11 = vector.load %arg5[%c0_13, %c0_14] : memref<128x96xf32, #tpu.memory_space<vmem>>, vector<32x96xf32>
    %12 = arith.addf %10, %11 : vector<32x96xf32>
    %cst_15 = arith.constant 5.000000e-01 : f32
    %13 = vector.broadcast %cst_15 : f32 to vector<32x96xf32>
    %14 = arith.mulf %12, %13 : vector<32x96xf32>
    %cst_16 = arith.constant 1.000000e+00 : f32
    %15 = vector.broadcast %cst_16 : f32 to vector<32x96xf32>
    %16 = arith.cmpf oge, %14, %15 : vector<32x96xf32>
    %17 = arith.extui %16 : vector<32x96xi1> to vector<32x96xi32>
    %18 = arith.sitofp %17 : vector<32x96xi32> to vector<32x96xf32>
    %19 = arith.truncf %18 : vector<32x96xf32> to vector<32x96xbf16>
    %c0_17 = arith.constant 0 : index
    %c0_18 = arith.constant 0 : index
    %c0_19 = arith.constant 0 : index
    %20 = vector.load %arg4[%c0_17, %c0_18, %c0_19] : memref<4x32x96xbf16, #tpu.memory_space<vmem>>, vector<1x32x96xbf16>
    %21 = vector.shape_cast %20 : vector<1x32x96xbf16> to vector<32x96xbf16>
    %22 = vector.shape_cast %19 : vector<32x96xbf16> to vector<1x32x96xbf16>
    tpu.vector_store %arg4[%c0_17, %c0_18, %c0_19], %22 {strides = array<i32>} : memref<4x32x96xbf16, #tpu.memory_space<vmem>>, vector<1x32x96xbf16>,
    %cst_20 = arith.constant 0.000000e+00 : f32
    %23 = vector.broadcast %cst_20 : f32 to vector<32x96xf32>
    %24 = arith.select %16, %23, %14 : vector<32x96xi1>, vector<32x96xf32>
    %c0_21 = arith.constant 0 : index
    %c0_22 = arith.constant 0 : index
    %25 = vector.load %arg6[%c0_21, %c0_22] : memref<32x96xf32, #tpu.memory_space<vmem>>, vector<32x96xf32>
    tpu.vector_store %arg6[%c0_21, %c0_22], %24 {strides = array<i32>} : memref<32x96xf32, #tpu.memory_space<vmem>>, vector<32x96xf32>,
    %c0_23 = arith.constant 0 : index
    %c0_24 = arith.constant 0 : index
    %26 = vector.load %arg6[%c0_23, %c0_24] : memref<32x96xf32, #tpu.memory_space<vmem>>, vector<32x96xf32>
    %c32 = arith.constant 32 : index
    %c0_25 = arith.constant 0 : index
    %27 = vector.load %arg5[%c32, %c0_25] : memref<128x96xf32, #tpu.memory_space<vmem>>, vector<32x96xf32>
    %28 = arith.addf %26, %27 : vector<32x96xf32>
    %cst_26 = arith.constant 5.000000e-01 : f32
    %29 = vector.broadcast %cst_26 : f32 to vector<32x96xf32>
    %30 = arith.mulf %28, %29 : vector<32x96xf32>
    %cst_27 = arith.constant 1.000000e+00 : f32
    %31 = vector.broadcast %cst_27 : f32 to vector<32x96xf32>
    %32 = arith.cmpf oge, %30, %31 : vector<32x96xf32>
    %33 = arith.extui %32 : vector<32x96xi1> to vector<32x96xi32>
    %34 = arith.sitofp %33 : vector<32x96xi32> to vector<32x96xf32>
    %35 = arith.truncf %34 : vector<32x96xf32> to vector<32x96xbf16>
    %c1 = arith.constant 1 : index
    %c0_28 = arith.constant 0 : index
    %c0_29 = arith.constant 0 : index
    %36 = vector.load %arg4[%c1, %c0_28, %c0_29] : memref<4x32x96xbf16, #tpu.memory_space<vmem>>, vector<1x32x96xbf16>
    %37 = vector.shape_cast %36 : vector<1x32x96xbf16> to vector<32x96xbf16>
    %38 = vector.shape_cast %35 : vector<32x96xbf16> to vector<1x32x96xbf16>
    tpu.vector_store %arg4[%c1, %c0_28, %c0_29], %38 {strides = array<i32>} : memref<4x32x96xbf16, #tpu.memory_space<vmem>>, vector<1x32x96xbf16>,
    %cst_30 = arith.constant 0.000000e+00 : f32
    %39 = vector.broadcast %cst_30 : f32 to vector<32x96xf32>
    %40 = arith.select %32, %39, %30 : vector<32x96xi1>, vector<32x96xf32>
    %c0_31 = arith.constant 0 : index
    %c0_32 = arith.constant 0 : index
    %41 = vector.load %arg6[%c0_31, %c0_32] : memref<32x96xf32, #tpu.memory_space<vmem>>, vector<32x96xf32>
    tpu.vector_store %arg6[%c0_31, %c0_32], %40 {strides = array<i32>} : memref<32x96xf32, #tpu.memory_space<vmem>>, vector<32x96xf32>,
    %c0_33 = arith.constant 0 : index
    %c0_34 = arith.constant 0 : index
    %42 = vector.load %arg6[%c0_33, %c0_34] : memref<32x96xf32, #tpu.memory_space<vmem>>, vector<32x96xf32>
    %c64 = arith.constant 64 : index
    %c0_35 = arith.constant 0 : index
    %43 = vector.load %arg5[%c64, %c0_35] : memref<128x96xf32, #tpu.memory_space<vmem>>, vector<32x96xf32>
    %44 = arith.addf %42, %43 : vector<32x96xf32>
    %cst_36 = arith.constant 5.000000e-01 : f32
    %45 = vector.broadcast %cst_36 : f32 to vector<32x96xf32>
    %46 = arith.mulf %44, %45 : vector<32x96xf32>
    %cst_37 = arith.constant 1.000000e+00 : f32
    %47 = vector.broadcast %cst_37 : f32 to vector<32x96xf32>
    %48 = arith.cmpf oge, %46, %47 : vector<32x96xf32>
    %49 = arith.extui %48 : vector<32x96xi1> to vector<32x96xi32>
    %50 = arith.sitofp %49 : vector<32x96xi32> to vector<32x96xf32>
    %51 = arith.truncf %50 : vector<32x96xf32> to vector<32x96xbf16>
    %c2 = arith.constant 2 : index
    %c0_38 = arith.constant 0 : index
    %c0_39 = arith.constant 0 : index
    %52 = vector.load %arg4[%c2, %c0_38, %c0_39] : memref<4x32x96xbf16, #tpu.memory_space<vmem>>, vector<1x32x96xbf16>
    %53 = vector.shape_cast %52 : vector<1x32x96xbf16> to vector<32x96xbf16>
    %54 = vector.shape_cast %51 : vector<32x96xbf16> to vector<1x32x96xbf16>
    tpu.vector_store %arg4[%c2, %c0_38, %c0_39], %54 {strides = array<i32>} : memref<4x32x96xbf16, #tpu.memory_space<vmem>>, vector<1x32x96xbf16>,
    %cst_40 = arith.constant 0.000000e+00 : f32
    %55 = vector.broadcast %cst_40 : f32 to vector<32x96xf32>
    %56 = arith.select %48, %55, %46 : vector<32x96xi1>, vector<32x96xf32>
    %c0_41 = arith.constant 0 : index
    %c0_42 = arith.constant 0 : index
    %57 = vector.load %arg6[%c0_41, %c0_42] : memref<32x96xf32, #tpu.memory_space<vmem>>, vector<32x96xf32>
    tpu.vector_store %arg6[%c0_41, %c0_42], %56 {strides = array<i32>} : memref<32x96xf32, #tpu.memory_space<vmem>>, vector<32x96xf32>,
    %c0_43 = arith.constant 0 : index
    %c0_44 = arith.constant 0 : index
    %58 = vector.load %arg6[%c0_43, %c0_44] : memref<32x96xf32, #tpu.memory_space<vmem>>, vector<32x96xf32>
    %c96 = arith.constant 96 : index
    %c0_45 = arith.constant 0 : index
    %59 = vector.load %arg5[%c96, %c0_45] : memref<128x96xf32, #tpu.memory_space<vmem>>, vector<32x96xf32>
    %60 = arith.addf %58, %59 : vector<32x96xf32>
    %cst_46 = arith.constant 5.000000e-01 : f32
    %61 = vector.broadcast %cst_46 : f32 to vector<32x96xf32>
    %62 = arith.mulf %60, %61 : vector<32x96xf32>
    %cst_47 = arith.constant 1.000000e+00 : f32
    %63 = vector.broadcast %cst_47 : f32 to vector<32x96xf32>
    %64 = arith.cmpf oge, %62, %63 : vector<32x96xf32>
    %65 = arith.extui %64 : vector<32x96xi1> to vector<32x96xi32>
    %66 = arith.sitofp %65 : vector<32x96xi32> to vector<32x96xf32>
    %67 = arith.truncf %66 : vector<32x96xf32> to vector<32x96xbf16>
    %c3 = arith.constant 3 : index
    %c0_48 = arith.constant 0 : index
    %c0_49 = arith.constant 0 : index
    %68 = vector.load %arg4[%c3, %c0_48, %c0_49] : memref<4x32x96xbf16, #tpu.memory_space<vmem>>, vector<1x32x96xbf16>
    %69 = vector.shape_cast %68 : vector<1x32x96xbf16> to vector<32x96xbf16>
    %70 = vector.shape_cast %67 : vector<32x96xbf16> to vector<1x32x96xbf16>
    tpu.vector_store %arg4[%c3, %c0_48, %c0_49], %70 {strides = array<i32>} : memref<4x32x96xbf16, #tpu.memory_space<vmem>>, vector<1x32x96xbf16>,
    %cst_50 = arith.constant 0.000000e+00 : f32
    %71 = vector.broadcast %cst_50 : f32 to vector<32x96xf32>
    %72 = arith.select %64, %71, %62 : vector<32x96xi1>, vector<32x96xf32>
    %c0_51 = arith.constant 0 : index
    %c0_52 = arith.constant 0 : index
    %73 = vector.load %arg6[%c0_51, %c0_52] : memref<32x96xf32, #tpu.memory_space<vmem>>, vector<32x96xf32>
    tpu.vector_store %arg6[%c0_51, %c0_52], %72 {strides = array<i32>} : memref<32x96xf32, #tpu.memory_space<vmem>>, vector<32x96xf32>,
    return
  }
  func.func @transform_0(%arg0: i32) -> (i32, i32, i32) {
    %c0_i32 = arith.constant 0 : i32
    %c0_i32_0 = arith.constant 0 : i32
    %c0_i32_1 = arith.constant 0 : i32
    return %c0_i32, %arg0, %c0_i32_0 : i32, i32, i32
  }
  func.func @transform_1(%arg0: i32) -> (i32, i32) {
    %c0_i32 = arith.constant 0 : i32
    %c0_i32_0 = arith.constant 0 : i32
    %c0_i32_1 = arith.constant 0 : i32
    return %c0_i32, %c0_i32_0 : i32, i32
  }
  func.func @transform_2(%arg0: i32) -> (i32, i32) {
    %c0_i32 = arith.constant 0 : i32
    %c0_i32_0 = arith.constant 0 : i32
    %c0_i32_1 = arith.constant 0 : i32
    return %c0_i32, %c0_i32_0 : i32, i32
  }
  func.func @transform_3(%arg0: i32) -> (i32, i32, i32) {
    %c0_i32 = arith.constant 0 : i32
    %c0_i32_0 = arith.constant 0 : i32
    %c0_i32_1 = arith.constant 0 : i32
    return %c0_i32, %arg0, %c0_i32_0 : i32, i32, i32
  }
}

module attributes {stable_mosaic.version = 11 : i64} {
  func.func @_ssa_attn_lif_kernel(%arg0: i32, %arg1: memref<4x64x96xbf16, #tpu.memory_space<vmem>>, %arg2: memref<32x32xf32, #tpu.memory_space<vmem>>, %arg3: memref<4x64x32xbf16, #tpu.memory_space<vmem>>) attributes {dimension_semantics = [#tpu.dimension_semantics<parallel>], iteration_bounds = array<i64: 2>, scalar_prefetch = 0 : i64, scratch_operands = 0 : i64, tpu.core_type = #tpu.core_type<tc>, window_params = [{transform_indices = @transform_0, window_bounds = array<i64: 4, 64, 96>}, {pipeline_mode = #tpu.pipeline_mode<synchronous>, transform_indices = @transform_1, window_bounds = array<i64: 32, 32>}, {transform_indices = @transform_2, window_bounds = array<i64: 4, 64, 32>}]} {
    %c0 = arith.constant 0 : index
    %c0_0 = arith.constant 0 : index
    %c0_1 = arith.constant 0 : index
    %0 = vector.load %arg1[%c0, %c0_0, %c0_1] : memref<4x64x96xbf16, #tpu.memory_space<vmem>>, vector<4x64x32xbf16>
    %c0_2 = arith.constant 0 : index
    %c0_3 = arith.constant 0 : index
    %c32 = arith.constant 32 : index
    %1 = vector.load %arg1[%c0_2, %c0_3, %c32] : memref<4x64x96xbf16, #tpu.memory_space<vmem>>, vector<4x64x32xbf16>
    %c0_4 = arith.constant 0 : index
    %c0_5 = arith.constant 0 : index
    %c64 = arith.constant 64 : index
    %2 = vector.load %arg1[%c0_4, %c0_5, %c64] : memref<4x64x96xbf16, #tpu.memory_space<vmem>>, vector<4x64x32xbf16>
    "tpu.trace_start"() <{level = 10 : i32, message = "tnd,tne->tde"}> : () -> ()
    %cst = arith.constant dense<0.000000e+00> : vector<4x32x32xf32>
    %3 = tpu.matmul %1, %2, %cst {dimension_numbers = #tpu.dot_dimension_numbers<[1], [1], [2], [2], [0, 0, 0, 2, 1, 2], [0], [0]>} : vector<4x64x32xbf16>, vector<4x64x32xbf16>, vector<4x32x32xf32> -> vector<4x32x32xf32>
    "tpu.trace_stop"() : () -> ()
    %c0_6 = arith.constant 0 : index
    %c0_7 = arith.constant 0 : index
    %4 = vector.load %arg2[%c0_6, %c0_7] : memref<32x32xf32, #tpu.memory_space<vmem>>, vector<32x32xf32>
    %5 = vector.shape_cast %4 : vector<32x32xf32> to vector<1x32x32xf32>
    %6 = vector.broadcast %5 : vector<1x32x32xf32> to vector<4x32x32xf32>
    %7 = arith.mulf %3, %6 : vector<4x32x32xf32>
    %8 = arith.truncf %7 : vector<4x32x32xf32> to vector<4x32x32xbf16>
    "tpu.trace_start"() <{level = 10 : i32, message = "tnd,tde->tne"}> : () -> ()
    %cst_8 = arith.constant dense<0.000000e+00> : vector<4x64x32xf32>
    %9 = tpu.matmul %0, %8, %cst_8 {dimension_numbers = #tpu.dot_dimension_numbers<[2], [1], [1], [2], [0, 0, 0, 1, 1, 2], [0], [0]>} : vector<4x64x32xbf16>, vector<4x32x32xbf16>, vector<4x64x32xf32> -> vector<4x64x32xf32>
    %cst_9 = arith.constant 0.000000e+00 : f32
    "tpu.trace_stop"() : () -> ()
    %10 = vector.broadcast %cst_9 : f32 to vector<64x32xf32>
    %11 = vector.extract_strided_slice %9 {offsets = [0, 0, 0], sizes = [1, 64, 32], strides = [1, 1, 1]} : vector<4x64x32xf32> to vector<1x64x32xf32>
    %12 = vector.shape_cast %11 : vector<1x64x32xf32> to vector<64x32xf32>
    %13 = arith.addf %10, %12 : vector<64x32xf32>
    %cst_10 = arith.constant 5.000000e-01 : f32
    %14 = vector.broadcast %cst_10 : f32 to vector<64x32xf32>
    %15 = arith.mulf %13, %14 : vector<64x32xf32>
    %cst_11 = arith.constant 5.000000e-01 : f32
    %16 = vector.broadcast %cst_11 : f32 to vector<64x32xf32>
    %17 = arith.cmpf oge, %15, %16 : vector<64x32xf32>
    %18 = arith.extui %17 : vector<64x32xi1> to vector<64x32xi32>
    %19 = arith.sitofp %18 : vector<64x32xi32> to vector<64x32xf32>
    %20 = arith.truncf %19 : vector<64x32xf32> to vector<64x32xbf16>
    %c0_12 = arith.constant 0 : index
    %c0_13 = arith.constant 0 : index
    %c0_14 = arith.constant 0 : index
    %21 = vector.load %arg3[%c0_12, %c0_13, %c0_14] : memref<4x64x32xbf16, #tpu.memory_space<vmem>>, vector<1x64x32xbf16>
    %22 = vector.shape_cast %21 : vector<1x64x32xbf16> to vector<64x32xbf16>
    %23 = vector.shape_cast %20 : vector<64x32xbf16> to vector<1x64x32xbf16>
    tpu.vector_store %arg3[%c0_12, %c0_13, %c0_14], %23 {strides = array<i32>} : memref<4x64x32xbf16, #tpu.memory_space<vmem>>, vector<1x64x32xbf16>,
    %cst_15 = arith.constant 0.000000e+00 : f32
    %24 = vector.broadcast %cst_15 : f32 to vector<64x32xf32>
    %25 = arith.select %17, %24, %15 : vector<64x32xi1>, vector<64x32xf32>
    %26 = vector.extract_strided_slice %9 {offsets = [1, 0, 0], sizes = [1, 64, 32], strides = [1, 1, 1]} : vector<4x64x32xf32> to vector<1x64x32xf32>
    %27 = vector.shape_cast %26 : vector<1x64x32xf32> to vector<64x32xf32>
    %28 = arith.addf %25, %27 : vector<64x32xf32>
    %cst_16 = arith.constant 5.000000e-01 : f32
    %29 = vector.broadcast %cst_16 : f32 to vector<64x32xf32>
    %30 = arith.mulf %28, %29 : vector<64x32xf32>
    %cst_17 = arith.constant 5.000000e-01 : f32
    %31 = vector.broadcast %cst_17 : f32 to vector<64x32xf32>
    %32 = arith.cmpf oge, %30, %31 : vector<64x32xf32>
    %33 = arith.extui %32 : vector<64x32xi1> to vector<64x32xi32>
    %34 = arith.sitofp %33 : vector<64x32xi32> to vector<64x32xf32>
    %35 = arith.truncf %34 : vector<64x32xf32> to vector<64x32xbf16>
    %c1 = arith.constant 1 : index
    %c0_18 = arith.constant 0 : index
    %c0_19 = arith.constant 0 : index
    %36 = vector.load %arg3[%c1, %c0_18, %c0_19] : memref<4x64x32xbf16, #tpu.memory_space<vmem>>, vector<1x64x32xbf16>
    %37 = vector.shape_cast %36 : vector<1x64x32xbf16> to vector<64x32xbf16>
    %38 = vector.shape_cast %35 : vector<64x32xbf16> to vector<1x64x32xbf16>
    tpu.vector_store %arg3[%c1, %c0_18, %c0_19], %38 {strides = array<i32>} : memref<4x64x32xbf16, #tpu.memory_space<vmem>>, vector<1x64x32xbf16>,
    %cst_20 = arith.constant 0.000000e+00 : f32
    %39 = vector.broadcast %cst_20 : f32 to vector<64x32xf32>
    %40 = arith.select %32, %39, %30 : vector<64x32xi1>, vector<64x32xf32>
    %41 = vector.extract_strided_slice %9 {offsets = [2, 0, 0], sizes = [1, 64, 32], strides = [1, 1, 1]} : vector<4x64x32xf32> to vector<1x64x32xf32>
    %42 = vector.shape_cast %41 : vector<1x64x32xf32> to vector<64x32xf32>
    %43 = arith.addf %40, %42 : vector<64x32xf32>
    %cst_21 = arith.constant 5.000000e-01 : f32
    %44 = vector.broadcast %cst_21 : f32 to vector<64x32xf32>
    %45 = arith.mulf %43, %44 : vector<64x32xf32>
    %cst_22 = arith.constant 5.000000e-01 : f32
    %46 = vector.broadcast %cst_22 : f32 to vector<64x32xf32>
    %47 = arith.cmpf oge, %45, %46 : vector<64x32xf32>
    %48 = arith.extui %47 : vector<64x32xi1> to vector<64x32xi32>
    %49 = arith.sitofp %48 : vector<64x32xi32> to vector<64x32xf32>
    %50 = arith.truncf %49 : vector<64x32xf32> to vector<64x32xbf16>
    %c2 = arith.constant 2 : index
    %c0_23 = arith.constant 0 : index
    %c0_24 = arith.constant 0 : index
    %51 = vector.load %arg3[%c2, %c0_23, %c0_24] : memref<4x64x32xbf16, #tpu.memory_space<vmem>>, vector<1x64x32xbf16>
    %52 = vector.shape_cast %51 : vector<1x64x32xbf16> to vector<64x32xbf16>
    %53 = vector.shape_cast %50 : vector<64x32xbf16> to vector<1x64x32xbf16>
    tpu.vector_store %arg3[%c2, %c0_23, %c0_24], %53 {strides = array<i32>} : memref<4x64x32xbf16, #tpu.memory_space<vmem>>, vector<1x64x32xbf16>,
    %cst_25 = arith.constant 0.000000e+00 : f32
    %54 = vector.broadcast %cst_25 : f32 to vector<64x32xf32>
    %55 = arith.select %47, %54, %45 : vector<64x32xi1>, vector<64x32xf32>
    %56 = vector.extract_strided_slice %9 {offsets = [3, 0, 0], sizes = [1, 64, 32], strides = [1, 1, 1]} : vector<4x64x32xf32> to vector<1x64x32xf32>
    %57 = vector.shape_cast %56 : vector<1x64x32xf32> to vector<64x32xf32>
    %58 = arith.addf %55, %57 : vector<64x32xf32>
    %cst_26 = arith.constant 5.000000e-01 : f32
    %59 = vector.broadcast %cst_26 : f32 to vector<64x32xf32>
    %60 = arith.mulf %58, %59 : vector<64x32xf32>
    %cst_27 = arith.constant 5.000000e-01 : f32
    %61 = vector.broadcast %cst_27 : f32 to vector<64x32xf32>
    %62 = arith.cmpf oge, %60, %61 : vector<64x32xf32>
    %63 = arith.extui %62 : vector<64x32xi1> to vector<64x32xi32>
    %64 = arith.sitofp %63 : vector<64x32xi32> to vector<64x32xf32>
    %65 = arith.truncf %64 : vector<64x32xf32> to vector<64x32xbf16>
    %c3 = arith.constant 3 : index
    %c0_28 = arith.constant 0 : index
    %c0_29 = arith.constant 0 : index
    %66 = vector.load %arg3[%c3, %c0_28, %c0_29] : memref<4x64x32xbf16, #tpu.memory_space<vmem>>, vector<1x64x32xbf16>
    %67 = vector.shape_cast %66 : vector<1x64x32xbf16> to vector<64x32xbf16>
    %68 = vector.shape_cast %65 : vector<64x32xbf16> to vector<1x64x32xbf16>
    tpu.vector_store %arg3[%c3, %c0_28, %c0_29], %68 {strides = array<i32>} : memref<4x64x32xbf16, #tpu.memory_space<vmem>>, vector<1x64x32xbf16>,
    return
  }
  func.func @transform_0(%arg0: i32) -> (i32, i32, i32) {
    %c0_i32 = arith.constant 0 : i32
    %c0_i32_0 = arith.constant 0 : i32
    %c0_i32_1 = arith.constant 0 : i32
    return %c0_i32, %arg0, %c0_i32_0 : i32, i32, i32
  }
  func.func @transform_1(%arg0: i32) -> (i32, i32) {
    %c0_i32 = arith.constant 0 : i32
    %c0_i32_0 = arith.constant 0 : i32
    %c0_i32_1 = arith.constant 0 : i32
    return %c0_i32, %c0_i32_0 : i32, i32
  }
  func.func @transform_2(%arg0: i32) -> (i32, i32, i32) {
    %c0_i32 = arith.constant 0 : i32
    %c0_i32_0 = arith.constant 0 : i32
    %c0_i32_1 = arith.constant 0 : i32
    return %c0_i32, %arg0, %c0_i32_0 : i32, i32, i32
  }
}

module attributes {stable_mosaic.version = 11 : i64} {
  func.func @_conv_bn_lif_kernel(%arg0: i32, %arg1: memref<4x32x32xbf16, #tpu.memory_space<vmem>>, %arg2: memref<32x128xbf16, #tpu.memory_space<vmem>>, %arg3: memref<1x128xf32, #tpu.memory_space<vmem>>, %arg4: memref<4x32x128xbf16, #tpu.memory_space<vmem>>, %arg5: memref<128x128xf32, #tpu.memory_space<vmem>>, %arg6: memref<32x128xf32, #tpu.memory_space<vmem>>) attributes {dimension_semantics = [#tpu.dimension_semantics<parallel>], iteration_bounds = array<i64: 4>, scalar_prefetch = 0 : i64, scratch_operands = 2 : i64, tpu.core_type = #tpu.core_type<tc>, window_params = [{transform_indices = @transform_0, window_bounds = array<i64: 4, 32, 32>}, {pipeline_mode = #tpu.pipeline_mode<synchronous>, transform_indices = @transform_1, window_bounds = array<i64: 32, 128>}, {pipeline_mode = #tpu.pipeline_mode<synchronous>, transform_indices = @transform_2, window_bounds = array<i64: 1, 128>}, {transform_indices = @transform_3, window_bounds = array<i64: 4, 32, 128>}]} {
    %c0 = arith.constant 0 : index
    %c0_0 = arith.constant 0 : index
    %c0_1 = arith.constant 0 : index
    %0 = vector.load %arg1[%c0, %c0_0, %c0_1] : memref<4x32x32xbf16, #tpu.memory_space<vmem>>, vector<4x32x32xbf16>
    %1 = vector.shape_cast %0 : vector<4x32x32xbf16> to vector<128x32xbf16>
    %c0_2 = arith.constant 0 : index
    %c0_3 = arith.constant 0 : index
    %2 = vector.load %arg2[%c0_2, %c0_3] : memref<32x128xbf16, #tpu.memory_space<vmem>>, vector<32x128xbf16>
    %cst = arith.constant dense<0.000000e+00> : vector<128x128xf32>
    %3 = tpu.matmul %1, %2, %cst {dimension_numbers = #tpu.dot_dimension_numbers<[1], [0], [0], [1], [0, 0, 1, 1], [], []>} : vector<128x32xbf16>, vector<32x128xbf16>, vector<128x128xf32> -> vector<128x128xf32>
    %c0_4 = arith.constant 0 : index
    %c0_5 = arith.constant 0 : index
    %4 = vector.load %arg3[%c0_4, %c0_5] : memref<1x128xf32, #tpu.memory_space<vmem>>, vector<1x128xf32>
    %5 = vector.broadcast %4 : vector<1x128xf32> to vector<128x128xf32>
    %6 = arith.addf %3, %5 : vector<128x128xf32>
    %c0_6 = arith.constant 0 : index
    %c0_7 = arith.constant 0 : index
    %7 = vector.load %arg5[%c0_6, %c0_7] : memref<128x128xf32, #tpu.memory_space<vmem>>, vector<128x128xf32>
    tpu.vector_store %arg5[%c0_6, %c0_7], %6 {strides = array<i32>} : memref<128x128xf32, #tpu.memory_space<vmem>>, vector<128x128xf32>,
    %cst_8 = arith.constant 0.000000e+00 : f32
    %8 = vector.broadcast %cst_8 : f32 to vector<32x128xf32>
    %c0_9 = arith.constant 0 : index
    %c0_10 = arith.constant 0 : index
    %9 = vector.load %arg6[%c0_9, %c0_10] : memref<32x128xf32, #tpu.memory_space<vmem>>, vector<32x128xf32>
    tpu.vector_store %arg6[%c0_9, %c0_10], %8 {strides = array<i32>} : memref<32x128xf32, #tpu.memory_space<vmem>>, vector<32x128xf32>,
    %c0_11 = arith.constant 0 : index
    %c0_12 = arith.constant 0 : index
    %10 = vector.load %arg6[%c0_11, %c0_12] : memref<32x128xf32, #tpu.memory_space<vmem>>, vector<32x128xf32>
    %c0_13 = arith.constant 0 : index
    %c0_14 = arith.constant 0 : index
    %11 = vector.load %arg5[%c0_13, %c0_14] : memref<128x128xf32, #tpu.memory_space<vmem>>, vector<32x128xf32>
    %12 = arith.addf %10, %11 : vector<32x128xf32>
    %cst_15 = arith.constant 5.000000e-01 : f32
    %13 = vector.broadcast %cst_15 : f32 to vector<32x128xf32>
    %14 = arith.mulf %12, %13 : vector<32x128xf32>
    %cst_16 = arith.constant 1.000000e+00 : f32
    %15 = vector.broadcast %cst_16 : f32 to vector<32x128xf32>
    %16 = arith.cmpf oge, %14, %15 : vector<32x128xf32>
    %17 = arith.extui %16 : vector<32x128xi1> to vector<32x128xi32>
    %18 = arith.sitofp %17 : vector<32x128xi32> to vector<32x128xf32>
    %19 = arith.truncf %18 : vector<32x128xf32> to vector<32x128xbf16>
    %c0_17 = arith.constant 0 : index
    %c0_18 = arith.constant 0 : index
    %c0_19 = arith.constant 0 : index
    %20 = vector.load %arg4[%c0_17, %c0_18, %c0_19] : memref<4x32x128xbf16, #tpu.memory_space<vmem>>, vector<1x32x128xbf16>
    %21 = vector.shape_cast %20 : vector<1x32x128xbf16> to vector<32x128xbf16>
    %22 = vector.shape_cast %19 : vector<32x128xbf16> to vector<1x32x128xbf16>
    tpu.vector_store %arg4[%c0_17, %c0_18, %c0_19], %22 {strides = array<i32>} : memref<4x32x128xbf16, #tpu.memory_space<vmem>>, vector<1x32x128xbf16>,
    %cst_20 = arith.constant 0.000000e+00 : f32
    %23 = vector.broadcast %cst_20 : f32 to vector<32x128xf32>
    %24 = arith.select %16, %23, %14 : vector<32x128xi1>, vector<32x128xf32>
    %c0_21 = arith.constant 0 : index
    %c0_22 = arith.constant 0 : index
    %25 = vector.load %arg6[%c0_21, %c0_22] : memref<32x128xf32, #tpu.memory_space<vmem>>, vector<32x128xf32>
    tpu.vector_store %arg6[%c0_21, %c0_22], %24 {strides = array<i32>} : memref<32x128xf32, #tpu.memory_space<vmem>>, vector<32x128xf32>,
    %c0_23 = arith.constant 0 : index
    %c0_24 = arith.constant 0 : index
    %26 = vector.load %arg6[%c0_23, %c0_24] : memref<32x128xf32, #tpu.memory_space<vmem>>, vector<32x128xf32>
    %c32 = arith.constant 32 : index
    %c0_25 = arith.constant 0 : index
    %27 = vector.load %arg5[%c32, %c0_25] : memref<128x128xf32, #tpu.memory_space<vmem>>, vector<32x128xf32>
    %28 = arith.addf %26, %27 : vector<32x128xf32>
    %cst_26 = arith.constant 5.000000e-01 : f32
    %29 = vector.broadcast %cst_26 : f32 to vector<32x128xf32>
    %30 = arith.mulf %28, %29 : vector<32x128xf32>
    %cst_27 = arith.constant 1.000000e+00 : f32
    %31 = vector.broadcast %cst_27 : f32 to vector<32x128xf32>
    %32 = arith.cmpf oge, %30, %31 : vector<32x128xf32>
    %33 = arith.extui %32 : vector<32x128xi1> to vector<32x128xi32>
    %34 = arith.sitofp %33 : vector<32x128xi32> to vector<32x128xf32>
    %35 = arith.truncf %34 : vector<32x128xf32> to vector<32x128xbf16>
    %c1 = arith.constant 1 : index
    %c0_28 = arith.constant 0 : index
    %c0_29 = arith.constant 0 : index
    %36 = vector.load %arg4[%c1, %c0_28, %c0_29] : memref<4x32x128xbf16, #tpu.memory_space<vmem>>, vector<1x32x128xbf16>
    %37 = vector.shape_cast %36 : vector<1x32x128xbf16> to vector<32x128xbf16>
    %38 = vector.shape_cast %35 : vector<32x128xbf16> to vector<1x32x128xbf16>
    tpu.vector_store %arg4[%c1, %c0_28, %c0_29], %38 {strides = array<i32>} : memref<4x32x128xbf16, #tpu.memory_space<vmem>>, vector<1x32x128xbf16>,
    %cst_30 = arith.constant 0.000000e+00 : f32
    %39 = vector.broadcast %cst_30 : f32 to vector<32x128xf32>
    %40 = arith.select %32, %39, %30 : vector<32x128xi1>, vector<32x128xf32>
    %c0_31 = arith.constant 0 : index
    %c0_32 = arith.constant 0 : index
    %41 = vector.load %arg6[%c0_31, %c0_32] : memref<32x128xf32, #tpu.memory_space<vmem>>, vector<32x128xf32>
    tpu.vector_store %arg6[%c0_31, %c0_32], %40 {strides = array<i32>} : memref<32x128xf32, #tpu.memory_space<vmem>>, vector<32x128xf32>,
    %c0_33 = arith.constant 0 : index
    %c0_34 = arith.constant 0 : index
    %42 = vector.load %arg6[%c0_33, %c0_34] : memref<32x128xf32, #tpu.memory_space<vmem>>, vector<32x128xf32>
    %c64 = arith.constant 64 : index
    %c0_35 = arith.constant 0 : index
    %43 = vector.load %arg5[%c64, %c0_35] : memref<128x128xf32, #tpu.memory_space<vmem>>, vector<32x128xf32>
    %44 = arith.addf %42, %43 : vector<32x128xf32>
    %cst_36 = arith.constant 5.000000e-01 : f32
    %45 = vector.broadcast %cst_36 : f32 to vector<32x128xf32>
    %46 = arith.mulf %44, %45 : vector<32x128xf32>
    %cst_37 = arith.constant 1.000000e+00 : f32
    %47 = vector.broadcast %cst_37 : f32 to vector<32x128xf32>
    %48 = arith.cmpf oge, %46, %47 : vector<32x128xf32>
    %49 = arith.extui %48 : vector<32x128xi1> to vector<32x128xi32>
    %50 = arith.sitofp %49 : vector<32x128xi32> to vector<32x128xf32>
    %51 = arith.truncf %50 : vector<32x128xf32> to vector<32x128xbf16>
    %c2 = arith.constant 2 : index
    %c0_38 = arith.constant 0 : index
    %c0_39 = arith.constant 0 : index
    %52 = vector.load %arg4[%c2, %c0_38, %c0_39] : memref<4x32x128xbf16, #tpu.memory_space<vmem>>, vector<1x32x128xbf16>
    %53 = vector.shape_cast %52 : vector<1x32x128xbf16> to vector<32x128xbf16>
    %54 = vector.shape_cast %51 : vector<32x128xbf16> to vector<1x32x128xbf16>
    tpu.vector_store %arg4[%c2, %c0_38, %c0_39], %54 {strides = array<i32>} : memref<4x32x128xbf16, #tpu.memory_space<vmem>>, vector<1x32x128xbf16>,
    %cst_40 = arith.constant 0.000000e+00 : f32
    %55 = vector.broadcast %cst_40 : f32 to vector<32x128xf32>
    %56 = arith.select %48, %55, %46 : vector<32x128xi1>, vector<32x128xf32>
    %c0_41 = arith.constant 0 : index
    %c0_42 = arith.constant 0 : index
    %57 = vector.load %arg6[%c0_41, %c0_42] : memref<32x128xf32, #tpu.memory_space<vmem>>, vector<32x128xf32>
    tpu.vector_store %arg6[%c0_41, %c0_42], %56 {strides = array<i32>} : memref<32x128xf32, #tpu.memory_space<vmem>>, vector<32x128xf32>,
    %c0_43 = arith.constant 0 : index
    %c0_44 = arith.constant 0 : index
    %58 = vector.load %arg6[%c0_43, %c0_44] : memref<32x128xf32, #tpu.memory_space<vmem>>, vector<32x128xf32>
    %c96 = arith.constant 96 : index
    %c0_45 = arith.constant 0 : index
    %59 = vector.load %arg5[%c96, %c0_45] : memref<128x128xf32, #tpu.memory_space<vmem>>, vector<32x128xf32>
    %60 = arith.addf %58, %59 : vector<32x128xf32>
    %cst_46 = arith.constant 5.000000e-01 : f32
    %61 = vector.broadcast %cst_46 : f32 to vector<32x128xf32>
    %62 = arith.mulf %60, %61 : vector<32x128xf32>
    %cst_47 = arith.constant 1.000000e+00 : f32
    %63 = vector.broadcast %cst_47 : f32 to vector<32x128xf32>
    %64 = arith.cmpf oge, %62, %63 : vector<32x128xf32>
    %65 = arith.extui %64 : vector<32x128xi1> to vector<32x128xi32>
    %66 = arith.sitofp %65 : vector<32x128xi32> to vector<32x128xf32>
    %67 = arith.truncf %66 : vector<32x128xf32> to vector<32x128xbf16>
    %c3 = arith.constant 3 : index
    %c0_48 = arith.constant 0 : index
    %c0_49 = arith.constant 0 : index
    %68 = vector.load %arg4[%c3, %c0_48, %c0_49] : memref<4x32x128xbf16, #tpu.memory_space<vmem>>, vector<1x32x128xbf16>
    %69 = vector.shape_cast %68 : vector<1x32x128xbf16> to vector<32x128xbf16>
    %70 = vector.shape_cast %67 : vector<32x128xbf16> to vector<1x32x128xbf16>
    tpu.vector_store %arg4[%c3, %c0_48, %c0_49], %70 {strides = array<i32>} : memref<4x32x128xbf16, #tpu.memory_space<vmem>>, vector<1x32x128xbf16>,
    %cst_50 = arith.constant 0.000000e+00 : f32
    %71 = vector.broadcast %cst_50 : f32 to vector<32x128xf32>
    %72 = arith.select %64, %71, %62 : vector<32x128xi1>, vector<32x128xf32>
    %c0_51 = arith.constant 0 : index
    %c0_52 = arith.constant 0 : index
    %73 = vector.load %arg6[%c0_51, %c0_52] : memref<32x128xf32, #tpu.memory_space<vmem>>, vector<32x128xf32>
    tpu.vector_store %arg6[%c0_51, %c0_52], %72 {strides = array<i32>} : memref<32x128xf32, #tpu.memory_space<vmem>>, vector<32x128xf32>,
    return
  }
  func.func @transform_0(%arg0: i32) -> (i32, i32, i32) {
    %c0_i32 = arith.constant 0 : i32
    %c0_i32_0 = arith.constant 0 : i32
    %c0_i32_1 = arith.constant 0 : i32
    return %c0_i32, %arg0, %c0_i32_0 : i32, i32, i32
  }
  func.func @transform_1(%arg0: i32) -> (i32, i32) {
    %c0_i32 = arith.constant 0 : i32
    %c0_i32_0 = arith.constant 0 : i32
    %c0_i32_1 = arith.constant 0 : i32
    return %c0_i32, %c0_i32_0 : i32, i32
  }
  func.func @transform_2(%arg0: i32) -> (i32, i32) {
    %c0_i32 = arith.constant 0 : i32
    %c0_i32_0 = arith.constant 0 : i32
    %c0_i32_1 = arith.constant 0 : i32
    return %c0_i32, %c0_i32_0 : i32, i32
  }
  func.func @transform_3(%arg0: i32) -> (i32, i32, i32) {
    %c0_i32 = arith.constant 0 : i32
    %c0_i32_0 = arith.constant 0 : i32
    %c0_i32_1 = arith.constant 0 : i32
    return %c0_i32, %arg0, %c0_i32_0 : i32, i32, i32
  }
}

module attributes {stable_mosaic.version = 11 : i64} {
  func.func @_conv_bn_lif_res_kernel(%arg0: i32, %arg1: memref<4x32x32xbf16, #tpu.memory_space<vmem>>, %arg2: memref<4x32x32xbf16, #tpu.memory_space<vmem>>, %arg3: memref<32x32xbf16, #tpu.memory_space<vmem>>, %arg4: memref<1x32xf32, #tpu.memory_space<vmem>>, %arg5: memref<4x32x32xbf16, #tpu.memory_space<vmem>>, %arg6: memref<128x32xf32, #tpu.memory_space<vmem>>, %arg7: memref<32x32xf32, #tpu.memory_space<vmem>>) attributes {dimension_semantics = [#tpu.dimension_semantics<parallel>], iteration_bounds = array<i64: 4>, scalar_prefetch = 0 : i64, scratch_operands = 2 : i64, tpu.core_type = #tpu.core_type<tc>, window_params = [{transform_indices = @transform_0, window_bounds = array<i64: 4, 32, 32>}, {transform_indices = @transform_1, window_bounds = array<i64: 4, 32, 32>}, {pipeline_mode = #tpu.pipeline_mode<synchronous>, transform_indices = @transform_2, window_bounds = array<i64: 32, 32>}, {pipeline_mode = #tpu.pipeline_mode<synchronous>, transform_indices = @transform_3, window_bounds = array<i64: 1, 32>}, {transform_indices = @transform_4, window_bounds = array<i64: 4, 32, 32>}]} {
    %c0 = arith.constant 0 : index
    %c0_0 = arith.constant 0 : index
    %c0_1 = arith.constant 0 : index
    %0 = vector.load %arg1[%c0, %c0_0, %c0_1] : memref<4x32x32xbf16, #tpu.memory_space<vmem>>, vector<4x32x32xbf16>
    %1 = vector.shape_cast %0 : vector<4x32x32xbf16> to vector<128x32xbf16>
    %c0_2 = arith.constant 0 : index
    %c0_3 = arith.constant 0 : index
    %2 = vector.load %arg3[%c0_2, %c0_3] : memref<32x32xbf16, #tpu.memory_space<vmem>>, vector<32x32xbf16>
    %cst = arith.constant dense<0.000000e+00> : vector<128x32xf32>
    %3 = tpu.matmul %1, %2, %cst {dimension_numbers = #tpu.dot_dimension_numbers<[1], [0], [0], [1], [0, 0, 1, 1], [], []>} : vector<128x32xbf16>, vector<32x32xbf16>, vector<128x32xf32> -> vector<128x32xf32>
    %c0_4 = arith.constant 0 : index
    %c0_5 = arith.constant 0 : index
    %4 = vector.load %arg4[%c0_4, %c0_5] : memref<1x32xf32, #tpu.memory_space<vmem>>, vector<1x32xf32>
    %5 = vector.broadcast %4 : vector<1x32xf32> to vector<128x32xf32>
    %6 = arith.addf %3, %5 : vector<128x32xf32>
    %c0_6 = arith.constant 0 : index
    %c0_7 = arith.constant 0 : index
    %7 = vector.load %arg6[%c0_6, %c0_7] : memref<128x32xf32, #tpu.memory_space<vmem>>, vector<128x32xf32>
    tpu.vector_store %arg6[%c0_6, %c0_7], %6 {strides = array<i32>} : memref<128x32xf32, #tpu.memory_space<vmem>>, vector<128x32xf32>,
    %cst_8 = arith.constant 0.000000e+00 : f32
    %8 = vector.broadcast %cst_8 : f32 to vector<32x32xf32>
    %c0_9 = arith.constant 0 : index
    %c0_10 = arith.constant 0 : index
    %9 = vector.load %arg7[%c0_9, %c0_10] : memref<32x32xf32, #tpu.memory_space<vmem>>, vector<32x32xf32>
    tpu.vector_store %arg7[%c0_9, %c0_10], %8 {strides = array<i32>} : memref<32x32xf32, #tpu.memory_space<vmem>>, vector<32x32xf32>,
    %c0_11 = arith.constant 0 : index
    %c0_12 = arith.constant 0 : index
    %10 = vector.load %arg7[%c0_11, %c0_12] : memref<32x32xf32, #tpu.memory_space<vmem>>, vector<32x32xf32>
    %c0_13 = arith.constant 0 : index
    %c0_14 = arith.constant 0 : index
    %11 = vector.load %arg6[%c0_13, %c0_14] : memref<128x32xf32, #tpu.memory_space<vmem>>, vector<32x32xf32>
    %12 = arith.addf %10, %11 : vector<32x32xf32>
    %cst_15 = arith.constant 5.000000e-01 : f32
    %13 = vector.broadcast %cst_15 : f32 to vector<32x32xf32>
    %14 = arith.mulf %12, %13 : vector<32x32xf32>
    %cst_16 = arith.constant 1.000000e+00 : f32
    %15 = vector.broadcast %cst_16 : f32 to vector<32x32xf32>
    %16 = arith.cmpf oge, %14, %15 : vector<32x32xf32>
    %17 = arith.extui %16 : vector<32x32xi1> to vector<32x32xi32>
    %18 = arith.sitofp %17 : vector<32x32xi32> to vector<32x32xf32>
    %c0_17 = arith.constant 0 : index
    %c0_18 = arith.constant 0 : index
    %c0_19 = arith.constant 0 : index
    %19 = vector.load %arg2[%c0_17, %c0_18, %c0_19] : memref<4x32x32xbf16, #tpu.memory_space<vmem>>, vector<1x32x32xbf16>
    %20 = vector.shape_cast %19 : vector<1x32x32xbf16> to vector<32x32xbf16>
    %21 = arith.extf %20 : vector<32x32xbf16> to vector<32x32xf32>
    %22 = arith.addf %18, %21 : vector<32x32xf32>
    %23 = arith.truncf %22 : vector<32x32xf32> to vector<32x32xbf16>
    %c0_20 = arith.constant 0 : index
    %c0_21 = arith.constant 0 : index
    %c0_22 = arith.constant 0 : index
    %24 = vector.load %arg5[%c0_20, %c0_21, %c0_22] : memref<4x32x32xbf16, #tpu.memory_space<vmem>>, vector<1x32x32xbf16>
    %25 = vector.shape_cast %24 : vector<1x32x32xbf16> to vector<32x32xbf16>
    %26 = vector.shape_cast %23 : vector<32x32xbf16> to vector<1x32x32xbf16>
    tpu.vector_store %arg5[%c0_20, %c0_21, %c0_22], %26 {strides = array<i32>} : memref<4x32x32xbf16, #tpu.memory_space<vmem>>, vector<1x32x32xbf16>,
    %cst_23 = arith.constant 0.000000e+00 : f32
    %27 = vector.broadcast %cst_23 : f32 to vector<32x32xf32>
    %28 = arith.select %16, %27, %14 : vector<32x32xi1>, vector<32x32xf32>
    %c0_24 = arith.constant 0 : index
    %c0_25 = arith.constant 0 : index
    %29 = vector.load %arg7[%c0_24, %c0_25] : memref<32x32xf32, #tpu.memory_space<vmem>>, vector<32x32xf32>
    tpu.vector_store %arg7[%c0_24, %c0_25], %28 {strides = array<i32>} : memref<32x32xf32, #tpu.memory_space<vmem>>, vector<32x32xf32>,
    %c0_26 = arith.constant 0 : index
    %c0_27 = arith.constant 0 : index
    %30 = vector.load %arg7[%c0_26, %c0_27] : memref<32x32xf32, #tpu.memory_space<vmem>>, vector<32x32xf32>
    %c32 = arith.constant 32 : index
    %c0_28 = arith.constant 0 : index
    %31 = vector.load %arg6[%c32, %c0_28] : memref<128x32xf32, #tpu.memory_space<vmem>>, vector<32x32xf32>
    %32 = arith.addf %30, %31 : vector<32x32xf32>
    %cst_29 = arith.constant 5.000000e-01 : f32
    %33 = vector.broadcast %cst_29 : f32 to vector<32x32xf32>
    %34 = arith.mulf %32, %33 : vector<32x32xf32>
    %cst_30 = arith.constant 1.000000e+00 : f32
    %35 = vector.broadcast %cst_30 : f32 to vector<32x32xf32>
    %36 = arith.cmpf oge, %34, %35 : vector<32x32xf32>
    %37 = arith.extui %36 : vector<32x32xi1> to vector<32x32xi32>
    %38 = arith.sitofp %37 : vector<32x32xi32> to vector<32x32xf32>
    %c1 = arith.constant 1 : index
    %c0_31 = arith.constant 0 : index
    %c0_32 = arith.constant 0 : index
    %39 = vector.load %arg2[%c1, %c0_31, %c0_32] : memref<4x32x32xbf16, #tpu.memory_space<vmem>>, vector<1x32x32xbf16>
    %40 = vector.shape_cast %39 : vector<1x32x32xbf16> to vector<32x32xbf16>
    %41 = arith.extf %40 : vector<32x32xbf16> to vector<32x32xf32>
    %42 = arith.addf %38, %41 : vector<32x32xf32>
    %43 = arith.truncf %42 : vector<32x32xf32> to vector<32x32xbf16>
    %c1_33 = arith.constant 1 : index
    %c0_34 = arith.constant 0 : index
    %c0_35 = arith.constant 0 : index
    %44 = vector.load %arg5[%c1_33, %c0_34, %c0_35] : memref<4x32x32xbf16, #tpu.memory_space<vmem>>, vector<1x32x32xbf16>
    %45 = vector.shape_cast %44 : vector<1x32x32xbf16> to vector<32x32xbf16>
    %46 = vector.shape_cast %43 : vector<32x32xbf16> to vector<1x32x32xbf16>
    tpu.vector_store %arg5[%c1_33, %c0_34, %c0_35], %46 {strides = array<i32>} : memref<4x32x32xbf16, #tpu.memory_space<vmem>>, vector<1x32x32xbf16>,
    %cst_36 = arith.constant 0.000000e+00 : f32
    %47 = vector.broadcast %cst_36 : f32 to vector<32x32xf32>
    %48 = arith.select %36, %47, %34 : vector<32x32xi1>, vector<32x32xf32>
    %c0_37 = arith.constant 0 : index
    %c0_38 = arith.constant 0 : index
    %49 = vector.load %arg7[%c0_37, %c0_38] : memref<32x32xf32, #tpu.memory_space<vmem>>, vector<32x32xf32>
    tpu.vector_store %arg7[%c0_37, %c0_38], %48 {strides = array<i32>} : memref<32x32xf32, #tpu.memory_space<vmem>>, vector<32x32xf32>,
    %c0_39 = arith.constant 0 : index
    %c0_40 = arith.constant 0 : index
    %50 = vector.load %arg7[%c0_39, %c0_40] : memref<32x32xf32, #tpu.memory_space<vmem>>, vector<32x32xf32>
    %c64 = arith.constant 64 : index
    %c0_41 = arith.constant 0 : index
    %51 = vector.load %arg6[%c64, %c0_41] : memref<128x32xf32, #tpu.memory_space<vmem>>, vector<32x32xf32>
    %52 = arith.addf %50, %51 : vector<32x32xf32>
    %cst_42 = arith.constant 5.000000e-01 : f32
    %53 = vector.broadcast %cst_42 : f32 to vector<32x32xf32>
    %54 = arith.mulf %52, %53 : vector<32x32xf32>
    %cst_43 = arith.constant 1.000000e+00 : f32
    %55 = vector.broadcast %cst_43 : f32 to vector<32x32xf32>
    %56 = arith.cmpf oge, %54, %55 : vector<32x32xf32>
    %57 = arith.extui %56 : vector<32x32xi1> to vector<32x32xi32>
    %58 = arith.sitofp %57 : vector<32x32xi32> to vector<32x32xf32>
    %c2 = arith.constant 2 : index
    %c0_44 = arith.constant 0 : index
    %c0_45 = arith.constant 0 : index
    %59 = vector.load %arg2[%c2, %c0_44, %c0_45] : memref<4x32x32xbf16, #tpu.memory_space<vmem>>, vector<1x32x32xbf16>
    %60 = vector.shape_cast %59 : vector<1x32x32xbf16> to vector<32x32xbf16>
    %61 = arith.extf %60 : vector<32x32xbf16> to vector<32x32xf32>
    %62 = arith.addf %58, %61 : vector<32x32xf32>
    %63 = arith.truncf %62 : vector<32x32xf32> to vector<32x32xbf16>
    %c2_46 = arith.constant 2 : index
    %c0_47 = arith.constant 0 : index
    %c0_48 = arith.constant 0 : index
    %64 = vector.load %arg5[%c2_46, %c0_47, %c0_48] : memref<4x32x32xbf16, #tpu.memory_space<vmem>>, vector<1x32x32xbf16>
    %65 = vector.shape_cast %64 : vector<1x32x32xbf16> to vector<32x32xbf16>
    %66 = vector.shape_cast %63 : vector<32x32xbf16> to vector<1x32x32xbf16>
    tpu.vector_store %arg5[%c2_46, %c0_47, %c0_48], %66 {strides = array<i32>} : memref<4x32x32xbf16, #tpu.memory_space<vmem>>, vector<1x32x32xbf16>,
    %cst_49 = arith.constant 0.000000e+00 : f32
    %67 = vector.broadcast %cst_49 : f32 to vector<32x32xf32>
    %68 = arith.select %56, %67, %54 : vector<32x32xi1>, vector<32x32xf32>
    %c0_50 = arith.constant 0 : index
    %c0_51 = arith.constant 0 : index
    %69 = vector.load %arg7[%c0_50, %c0_51] : memref<32x32xf32, #tpu.memory_space<vmem>>, vector<32x32xf32>
    tpu.vector_store %arg7[%c0_50, %c0_51], %68 {strides = array<i32>} : memref<32x32xf32, #tpu.memory_space<vmem>>, vector<32x32xf32>,
    %c0_52 = arith.constant 0 : index
    %c0_53 = arith.constant 0 : index
    %70 = vector.load %arg7[%c0_52, %c0_53] : memref<32x32xf32, #tpu.memory_space<vmem>>, vector<32x32xf32>
    %c96 = arith.constant 96 : index
    %c0_54 = arith.constant 0 : index
    %71 = vector.load %arg6[%c96, %c0_54] : memref<128x32xf32, #tpu.memory_space<vmem>>, vector<32x32xf32>
    %72 = arith.addf %70, %71 : vector<32x32xf32>
    %cst_55 = arith.constant 5.000000e-01 : f32
    %73 = vector.broadcast %cst_55 : f32 to vector<32x32xf32>
    %74 = arith.mulf %72, %73 : vector<32x32xf32>
    %cst_56 = arith.constant 1.000000e+00 : f32
    %75 = vector.broadcast %cst_56 : f32 to vector<32x32xf32>
    %76 = arith.cmpf oge, %74, %75 : vector<32x32xf32>
    %77 = arith.extui %76 : vector<32x32xi1> to vector<32x32xi32>
    %78 = arith.sitofp %77 : vector<32x32xi32> to vector<32x32xf32>
    %c3 = arith.constant 3 : index
    %c0_57 = arith.constant 0 : index
    %c0_58 = arith.constant 0 : index
    %79 = vector.load %arg2[%c3, %c0_57, %c0_58] : memref<4x32x32xbf16, #tpu.memory_space<vmem>>, vector<1x32x32xbf16>
    %80 = vector.shape_cast %79 : vector<1x32x32xbf16> to vector<32x32xbf16>
    %81 = arith.extf %80 : vector<32x32xbf16> to vector<32x32xf32>
    %82 = arith.addf %78, %81 : vector<32x32xf32>
    %83 = arith.truncf %82 : vector<32x32xf32> to vector<32x32xbf16>
    %c3_59 = arith.constant 3 : index
    %c0_60 = arith.constant 0 : index
    %c0_61 = arith.constant 0 : index
    %84 = vector.load %arg5[%c3_59, %c0_60, %c0_61] : memref<4x32x32xbf16, #tpu.memory_space<vmem>>, vector<1x32x32xbf16>
    %85 = vector.shape_cast %84 : vector<1x32x32xbf16> to vector<32x32xbf16>
    %86 = vector.shape_cast %83 : vector<32x32xbf16> to vector<1x32x32xbf16>
    tpu.vector_store %arg5[%c3_59, %c0_60, %c0_61], %86 {strides = array<i32>} : memref<4x32x32xbf16, #tpu.memory_space<vmem>>, vector<1x32x32xbf16>,
    %cst_62 = arith.constant 0.000000e+00 : f32
    %87 = vector.broadcast %cst_62 : f32 to vector<32x32xf32>
    %88 = arith.select %76, %87, %74 : vector<32x32xi1>, vector<32x32xf32>
    %c0_63 = arith.constant 0 : index
    %c0_64 = arith.constant 0 : index
    %89 = vector.load %arg7[%c0_63, %c0_64] : memref<32x32xf32, #tpu.memory_space<vmem>>, vector<32x32xf32>
    tpu.vector_store %arg7[%c0_63, %c0_64], %88 {strides = array<i32>} : memref<32x32xf32, #tpu.memory_space<vmem>>, vector<32x32xf32>,
    return
  }
  func.func @transform_0(%arg0: i32) -> (i32, i32, i32) {
    %c0_i32 = arith.constant 0 : i32
    %c0_i32_0 = arith.constant 0 : i32
    %c0_i32_1 = arith.constant 0 : i32
    return %c0_i32, %arg0, %c0_i32_0 : i32, i32, i32
  }
  func.func @transform_1(%arg0: i32) -> (i32, i32, i32) {
    %c0_i32 = arith.constant 0 : i32
    %c0_i32_0 = arith.constant 0 : i32
    %c0_i32_1 = arith.constant 0 : i32
    return %c0_i32, %arg0, %c0_i32_0 : i32, i32, i32
  }
  func.func @transform_2(%arg0: i32) -> (i32, i32) {
    %c0_i32 = arith.constant 0 : i32
    %c0_i32_0 = arith.constant 0 : i32
    %c0_i32_1 = arith.constant 0 : i32
    return %c0_i32, %c0_i32_0 : i32, i32
  }
  func.func @transform_3(%arg0: i32) -> (i32, i32) {
    %c0_i32 = arith.constant 0 : i32
    %c0_i32_0 = arith.constant 0 : i32
    %c0_i32_1 = arith.constant 0 : i32
    return %c0_i32, %c0_i32_0 : i32, i32
  }
  func.func @transform_4(%arg0: i32) -> (i32, i32, i32) {
    %c0_i32 = arith.constant 0 : i32
    %c0_i32_0 = arith.constant 0 : i32
    %c0_i32_1 = arith.constant 0 : i32
    return %c0_i32, %arg0, %c0_i32_0 : i32, i32, i32
  }
}

module attributes {stable_mosaic.version = 11 : i64} {
  func.func @_conv_bn_lif_res_kernel(%arg0: i32, %arg1: memref<4x32x128xbf16, #tpu.memory_space<vmem>>, %arg2: memref<4x32x32xbf16, #tpu.memory_space<vmem>>, %arg3: memref<128x32xbf16, #tpu.memory_space<vmem>>, %arg4: memref<1x32xf32, #tpu.memory_space<vmem>>, %arg5: memref<4x32x32xf32, #tpu.memory_space<vmem>>, %arg6: memref<128x32xf32, #tpu.memory_space<vmem>>, %arg7: memref<32x32xf32, #tpu.memory_space<vmem>>) attributes {dimension_semantics = [#tpu.dimension_semantics<parallel>], iteration_bounds = array<i64: 4>, scalar_prefetch = 0 : i64, scratch_operands = 2 : i64, tpu.core_type = #tpu.core_type<tc>, window_params = [{transform_indices = @transform_0, window_bounds = array<i64: 4, 32, 128>}, {transform_indices = @transform_1, window_bounds = array<i64: 4, 32, 32>}, {pipeline_mode = #tpu.pipeline_mode<synchronous>, transform_indices = @transform_2, window_bounds = array<i64: 128, 32>}, {pipeline_mode = #tpu.pipeline_mode<synchronous>, transform_indices = @transform_3, window_bounds = array<i64: 1, 32>}, {transform_indices = @transform_4, window_bounds = array<i64: 4, 32, 32>}]} {
    %c0 = arith.constant 0 : index
    %c0_0 = arith.constant 0 : index
    %c0_1 = arith.constant 0 : index
    %0 = vector.load %arg1[%c0, %c0_0, %c0_1] : memref<4x32x128xbf16, #tpu.memory_space<vmem>>, vector<4x32x128xbf16>
    %1 = vector.shape_cast %0 : vector<4x32x128xbf16> to vector<128x128xbf16>
    %c0_2 = arith.constant 0 : index
    %c0_3 = arith.constant 0 : index
    %2 = vector.load %arg3[%c0_2, %c0_3] : memref<128x32xbf16, #tpu.memory_space<vmem>>, vector<128x32xbf16>
    %cst = arith.constant dense<0.000000e+00> : vector<128x32xf32>
    %3 = tpu.matmul %1, %2, %cst {dimension_numbers = #tpu.dot_dimension_numbers<[1], [0], [0], [1], [0, 0, 1, 1], [], []>} : vector<128x128xbf16>, vector<128x32xbf16>, vector<128x32xf32> -> vector<128x32xf32>
    %c0_4 = arith.constant 0 : index
    %c0_5 = arith.constant 0 : index
    %4 = vector.load %arg4[%c0_4, %c0_5] : memref<1x32xf32, #tpu.memory_space<vmem>>, vector<1x32xf32>
    %5 = vector.broadcast %4 : vector<1x32xf32> to vector<128x32xf32>
    %6 = arith.addf %3, %5 : vector<128x32xf32>
    %c0_6 = arith.constant 0 : index
    %c0_7 = arith.constant 0 : index
    %7 = vector.load %arg6[%c0_6, %c0_7] : memref<128x32xf32, #tpu.memory_space<vmem>>, vector<128x32xf32>
    tpu.vector_store %arg6[%c0_6, %c0_7], %6 {strides = array<i32>} : memref<128x32xf32, #tpu.memory_space<vmem>>, vector<128x32xf32>,
    %cst_8 = arith.constant 0.000000e+00 : f32
    %8 = vector.broadcast %cst_8 : f32 to vector<32x32xf32>
    %c0_9 = arith.constant 0 : index
    %c0_10 = arith.constant 0 : index
    %9 = vector.load %arg7[%c0_9, %c0_10] : memref<32x32xf32, #tpu.memory_space<vmem>>, vector<32x32xf32>
    tpu.vector_store %arg7[%c0_9, %c0_10], %8 {strides = array<i32>} : memref<32x32xf32, #tpu.memory_space<vmem>>, vector<32x32xf32>,
    %c0_11 = arith.constant 0 : index
    %c0_12 = arith.constant 0 : index
    %10 = vector.load %arg7[%c0_11, %c0_12] : memref<32x32xf32, #tpu.memory_space<vmem>>, vector<32x32xf32>
    %c0_13 = arith.constant 0 : index
    %c0_14 = arith.constant 0 : index
    %11 = vector.load %arg6[%c0_13, %c0_14] : memref<128x32xf32, #tpu.memory_space<vmem>>, vector<32x32xf32>
    %12 = arith.addf %10, %11 : vector<32x32xf32>
    %cst_15 = arith.constant 5.000000e-01 : f32
    %13 = vector.broadcast %cst_15 : f32 to vector<32x32xf32>
    %14 = arith.mulf %12, %13 : vector<32x32xf32>
    %cst_16 = arith.constant 1.000000e+00 : f32
    %15 = vector.broadcast %cst_16 : f32 to vector<32x32xf32>
    %16 = arith.cmpf oge, %14, %15 : vector<32x32xf32>
    %17 = arith.extui %16 : vector<32x32xi1> to vector<32x32xi32>
    %18 = arith.sitofp %17 : vector<32x32xi32> to vector<32x32xf32>
    %c0_17 = arith.constant 0 : index
    %c0_18 = arith.constant 0 : index
    %c0_19 = arith.constant 0 : index
    %19 = vector.load %arg2[%c0_17, %c0_18, %c0_19] : memref<4x32x32xbf16, #tpu.memory_space<vmem>>, vector<1x32x32xbf16>
    %20 = vector.shape_cast %19 : vector<1x32x32xbf16> to vector<32x32xbf16>
    %21 = arith.extf %20 : vector<32x32xbf16> to vector<32x32xf32>
    %22 = arith.addf %18, %21 : vector<32x32xf32>
    %c0_20 = arith.constant 0 : index
    %c0_21 = arith.constant 0 : index
    %c0_22 = arith.constant 0 : index
    %23 = vector.load %arg5[%c0_20, %c0_21, %c0_22] : memref<4x32x32xf32, #tpu.memory_space<vmem>>, vector<1x32x32xf32>
    %24 = vector.shape_cast %23 : vector<1x32x32xf32> to vector<32x32xf32>
    %25 = vector.shape_cast %22 : vector<32x32xf32> to vector<1x32x32xf32>
    tpu.vector_store %arg5[%c0_20, %c0_21, %c0_22], %25 {strides = array<i32>} : memref<4x32x32xf32, #tpu.memory_space<vmem>>, vector<1x32x32xf32>,
    %cst_23 = arith.constant 0.000000e+00 : f32
    %26 = vector.broadcast %cst_23 : f32 to vector<32x32xf32>
    %27 = arith.select %16, %26, %14 : vector<32x32xi1>, vector<32x32xf32>
    %c0_24 = arith.constant 0 : index
    %c0_25 = arith.constant 0 : index
    %28 = vector.load %arg7[%c0_24, %c0_25] : memref<32x32xf32, #tpu.memory_space<vmem>>, vector<32x32xf32>
    tpu.vector_store %arg7[%c0_24, %c0_25], %27 {strides = array<i32>} : memref<32x32xf32, #tpu.memory_space<vmem>>, vector<32x32xf32>,
    %c0_26 = arith.constant 0 : index
    %c0_27 = arith.constant 0 : index
    %29 = vector.load %arg7[%c0_26, %c0_27] : memref<32x32xf32, #tpu.memory_space<vmem>>, vector<32x32xf32>
    %c32 = arith.constant 32 : index
    %c0_28 = arith.constant 0 : index
    %30 = vector.load %arg6[%c32, %c0_28] : memref<128x32xf32, #tpu.memory_space<vmem>>, vector<32x32xf32>
    %31 = arith.addf %29, %30 : vector<32x32xf32>
    %cst_29 = arith.constant 5.000000e-01 : f32
    %32 = vector.broadcast %cst_29 : f32 to vector<32x32xf32>
    %33 = arith.mulf %31, %32 : vector<32x32xf32>
    %cst_30 = arith.constant 1.000000e+00 : f32
    %34 = vector.broadcast %cst_30 : f32 to vector<32x32xf32>
    %35 = arith.cmpf oge, %33, %34 : vector<32x32xf32>
    %36 = arith.extui %35 : vector<32x32xi1> to vector<32x32xi32>
    %37 = arith.sitofp %36 : vector<32x32xi32> to vector<32x32xf32>
    %c1 = arith.constant 1 : index
    %c0_31 = arith.constant 0 : index
    %c0_32 = arith.constant 0 : index
    %38 = vector.load %arg2[%c1, %c0_31, %c0_32] : memref<4x32x32xbf16, #tpu.memory_space<vmem>>, vector<1x32x32xbf16>
    %39 = vector.shape_cast %38 : vector<1x32x32xbf16> to vector<32x32xbf16>
    %40 = arith.extf %39 : vector<32x32xbf16> to vector<32x32xf32>
    %41 = arith.addf %37, %40 : vector<32x32xf32>
    %c1_33 = arith.constant 1 : index
    %c0_34 = arith.constant 0 : index
    %c0_35 = arith.constant 0 : index
    %42 = vector.load %arg5[%c1_33, %c0_34, %c0_35] : memref<4x32x32xf32, #tpu.memory_space<vmem>>, vector<1x32x32xf32>
    %43 = vector.shape_cast %42 : vector<1x32x32xf32> to vector<32x32xf32>
    %44 = vector.shape_cast %41 : vector<32x32xf32> to vector<1x32x32xf32>
    tpu.vector_store %arg5[%c1_33, %c0_34, %c0_35], %44 {strides = array<i32>} : memref<4x32x32xf32, #tpu.memory_space<vmem>>, vector<1x32x32xf32>,
    %cst_36 = arith.constant 0.000000e+00 : f32
    %45 = vector.broadcast %cst_36 : f32 to vector<32x32xf32>
    %46 = arith.select %35, %45, %33 : vector<32x32xi1>, vector<32x32xf32>
    %c0_37 = arith.constant 0 : index
    %c0_38 = arith.constant 0 : index
    %47 = vector.load %arg7[%c0_37, %c0_38] : memref<32x32xf32, #tpu.memory_space<vmem>>, vector<32x32xf32>
    tpu.vector_store %arg7[%c0_37, %c0_38], %46 {strides = array<i32>} : memref<32x32xf32, #tpu.memory_space<vmem>>, vector<32x32xf32>,
    %c0_39 = arith.constant 0 : index
    %c0_40 = arith.constant 0 : index
    %48 = vector.load %arg7[%c0_39, %c0_40] : memref<32x32xf32, #tpu.memory_space<vmem>>, vector<32x32xf32>
    %c64 = arith.constant 64 : index
    %c0_41 = arith.constant 0 : index
    %49 = vector.load %arg6[%c64, %c0_41] : memref<128x32xf32, #tpu.memory_space<vmem>>, vector<32x32xf32>
    %50 = arith.addf %48, %49 : vector<32x32xf32>
    %cst_42 = arith.constant 5.000000e-01 : f32
    %51 = vector.broadcast %cst_42 : f32 to vector<32x32xf32>
    %52 = arith.mulf %50, %51 : vector<32x32xf32>
    %cst_43 = arith.constant 1.000000e+00 : f32
    %53 = vector.broadcast %cst_43 : f32 to vector<32x32xf32>
    %54 = arith.cmpf oge, %52, %53 : vector<32x32xf32>
    %55 = arith.extui %54 : vector<32x32xi1> to vector<32x32xi32>
    %56 = arith.sitofp %55 : vector<32x32xi32> to vector<32x32xf32>
    %c2 = arith.constant 2 : index
    %c0_44 = arith.constant 0 : index
    %c0_45 = arith.constant 0 : index
    %57 = vector.load %arg2[%c2, %c0_44, %c0_45] : memref<4x32x32xbf16, #tpu.memory_space<vmem>>, vector<1x32x32xbf16>
    %58 = vector.shape_cast %57 : vector<1x32x32xbf16> to vector<32x32xbf16>
    %59 = arith.extf %58 : vector<32x32xbf16> to vector<32x32xf32>
    %60 = arith.addf %56, %59 : vector<32x32xf32>
    %c2_46 = arith.constant 2 : index
    %c0_47 = arith.constant 0 : index
    %c0_48 = arith.constant 0 : index
    %61 = vector.load %arg5[%c2_46, %c0_47, %c0_48] : memref<4x32x32xf32, #tpu.memory_space<vmem>>, vector<1x32x32xf32>
    %62 = vector.shape_cast %61 : vector<1x32x32xf32> to vector<32x32xf32>
    %63 = vector.shape_cast %60 : vector<32x32xf32> to vector<1x32x32xf32>
    tpu.vector_store %arg5[%c2_46, %c0_47, %c0_48], %63 {strides = array<i32>} : memref<4x32x32xf32, #tpu.memory_space<vmem>>, vector<1x32x32xf32>,
    %cst_49 = arith.constant 0.000000e+00 : f32
    %64 = vector.broadcast %cst_49 : f32 to vector<32x32xf32>
    %65 = arith.select %54, %64, %52 : vector<32x32xi1>, vector<32x32xf32>
    %c0_50 = arith.constant 0 : index
    %c0_51 = arith.constant 0 : index
    %66 = vector.load %arg7[%c0_50, %c0_51] : memref<32x32xf32, #tpu.memory_space<vmem>>, vector<32x32xf32>
    tpu.vector_store %arg7[%c0_50, %c0_51], %65 {strides = array<i32>} : memref<32x32xf32, #tpu.memory_space<vmem>>, vector<32x32xf32>,
    %c0_52 = arith.constant 0 : index
    %c0_53 = arith.constant 0 : index
    %67 = vector.load %arg7[%c0_52, %c0_53] : memref<32x32xf32, #tpu.memory_space<vmem>>, vector<32x32xf32>
    %c96 = arith.constant 96 : index
    %c0_54 = arith.constant 0 : index
    %68 = vector.load %arg6[%c96, %c0_54] : memref<128x32xf32, #tpu.memory_space<vmem>>, vector<32x32xf32>
    %69 = arith.addf %67, %68 : vector<32x32xf32>
    %cst_55 = arith.constant 5.000000e-01 : f32
    %70 = vector.broadcast %cst_55 : f32 to vector<32x32xf32>
    %71 = arith.mulf %69, %70 : vector<32x32xf32>
    %cst_56 = arith.constant 1.000000e+00 : f32
    %72 = vector.broadcast %cst_56 : f32 to vector<32x32xf32>
    %73 = arith.cmpf oge, %71, %72 : vector<32x32xf32>
    %74 = arith.extui %73 : vector<32x32xi1> to vector<32x32xi32>
    %75 = arith.sitofp %74 : vector<32x32xi32> to vector<32x32xf32>
    %c3 = arith.constant 3 : index
    %c0_57 = arith.constant 0 : index
    %c0_58 = arith.constant 0 : index
    %76 = vector.load %arg2[%c3, %c0_57, %c0_58] : memref<4x32x32xbf16, #tpu.memory_space<vmem>>, vector<1x32x32xbf16>
    %77 = vector.shape_cast %76 : vector<1x32x32xbf16> to vector<32x32xbf16>
    %78 = arith.extf %77 : vector<32x32xbf16> to vector<32x32xf32>
    %79 = arith.addf %75, %78 : vector<32x32xf32>
    %c3_59 = arith.constant 3 : index
    %c0_60 = arith.constant 0 : index
    %c0_61 = arith.constant 0 : index
    %80 = vector.load %arg5[%c3_59, %c0_60, %c0_61] : memref<4x32x32xf32, #tpu.memory_space<vmem>>, vector<1x32x32xf32>
    %81 = vector.shape_cast %80 : vector<1x32x32xf32> to vector<32x32xf32>
    %82 = vector.shape_cast %79 : vector<32x32xf32> to vector<1x32x32xf32>
    tpu.vector_store %arg5[%c3_59, %c0_60, %c0_61], %82 {strides = array<i32>} : memref<4x32x32xf32, #tpu.memory_space<vmem>>, vector<1x32x32xf32>,
    %cst_62 = arith.constant 0.000000e+00 : f32
    %83 = vector.broadcast %cst_62 : f32 to vector<32x32xf32>
    %84 = arith.select %73, %83, %71 : vector<32x32xi1>, vector<32x32xf32>
    %c0_63 = arith.constant 0 : index
    %c0_64 = arith.constant 0 : index
    %85 = vector.load %arg7[%c0_63, %c0_64] : memref<32x32xf32, #tpu.memory_space<vmem>>, vector<32x32xf32>
    tpu.vector_store %arg7[%c0_63, %c0_64], %84 {strides = array<i32>} : memref<32x32xf32, #tpu.memory_space<vmem>>, vector<32x32xf32>,
    return
  }
  func.func @transform_0(%arg0: i32) -> (i32, i32, i32) {
    %c0_i32 = arith.constant 0 : i32
    %c0_i32_0 = arith.constant 0 : i32
    %c0_i32_1 = arith.constant 0 : i32
    return %c0_i32, %arg0, %c0_i32_0 : i32, i32, i32
  }
  func.func @transform_1(%arg0: i32) -> (i32, i32, i32) {
    %c0_i32 = arith.constant 0 : i32
    %c0_i32_0 = arith.constant 0 : i32
    %c0_i32_1 = arith.constant 0 : i32
    return %c0_i32, %arg0, %c0_i32_0 : i32, i32, i32
  }
  func.func @transform_2(%arg0: i32) -> (i32, i32) {
    %c0_i32 = arith.constant 0 : i32
    %c0_i32_0 = arith.constant 0 : i32
    %c0_i32_1 = arith.constant 0 : i32
    return %c0_i32, %c0_i32_0 : i32, i32
  }
  func.func @transform_3(%arg0: i32) -> (i32, i32) {
    %c0_i32 = arith.constant 0 : i32
    %c0_i32_0 = arith.constant 0 : i32
    %c0_i32_1 = arith.constant 0 : i32
    return %c0_i32, %c0_i32_0 : i32, i32
  }
  func.func @transform_4(%arg0: i32) -> (i32, i32, i32) {
    %c0_i32 = arith.constant 0 : i32
    %c0_i32_0 = arith.constant 0 : i32
    %c0_i32_1 = arith.constant 0 : i32
    return %c0_i32, %arg0, %c0_i32_0 : i32, i32, i32
  }
}

</mosaic_0001>

<llo_original>
// kernel: spiking_transformer_forward.5
$region0: #{spiking_transformer_forward.5}
  #allocation0 [shape = 'u32[]', space=smem, size = 0x4, offset = 0x4, fixed_abs, tag = 'smem constant byte address 0x4 - core index']
  #allocation1 [shape = 'u32[144,128]{1,0:T(1,128)}', space=vmem, size = 0x12000, scoped, tag = 'internal scratch']
  #allocation2 [shape = 'f32[128,96]{1,0:T(8,128)}', space=vmem, size = 0x10000, scoped, tag = 'scratch operand']
  #allocation3 [shape = 'f32[32,96]{1,0:T(8,128)}', space=vmem, size = 0x4000, scoped, tag = 'scratch operand']
  %s0 = inlined_call_operand.vmem [shape: bf16[4,128,32], index: 0, kind: input, shape index: {}]
  %s1 = inlined_call_operand.vmem [shape: bf16[32,96], index: 1, kind: input, shape index: {}]
  %s2 = inlined_call_operand.vmem [shape: f32[1,96], index: 2, kind: input, shape index: {}]
  %s3 = inlined_call_operand.vmem [shape: bf16[4,128,96], index: 3, kind: output, shape index: {}]
  %s4 = sld [smem:[#allocation0]]
  $region123: #{spiking_transformer_forward.5} parent=0
    _
  %s6 = ssub.s32 1, %s4
  %s7 = scalar_select 0, %s6, %s4
  $region1: #{spiking_transformer_forward.5} parent=0
    #allocation4 [shape = 'u8[65536]{0}', space=vmem, size = 0x10000, scoped, tag = 'input window, operand 0']
    #allocation5 [shape = 'u8[65536]{0}', space=vmem, size = 0x10000, scoped, tag = 'output window, operand 0']
    loop: start=0, step=1, limit=6
    $region2: #{spiking_transformer_forward.5} parent=1 // loop_pre_header
      _
    $region3: #{spiking_transformer_forward.5} parent=1 // loop_header
      %s9 = sphi 0, %s13
      %p10 = scmp.ge.s32.totalorder %s9, 6
      %s19 = sphi 0, %s21
      %s22 = sphi 0, %s19
      %s23 = sphi 0, %s22
      %s39 = sphi 0, %s23
      %s43 = sphi 0, %s43
      %s45 = sphi 0, %s43
      %s46 = sphi 0, %s45
      %s60 = sphi 0, %s46
      %s64 = sphi 0, %s64
      %s66 = sphi 0, %s64
      %s67 = sphi 0, %s66
      %s81 = sphi 0, %s67
      %s87 = sphi 0, %s89
      %s90 = sphi 0, %s87
      %s91 = sphi 0, %s90
      %s107 = sphi 0, %s91
    $region4: #{spiking_transformer_forward.5} parent=1 // loop_header_branch
      %12 = sbr.rel (%p10) target = $region8
    $region5: #{spiking_transformer_forward.5} parent=1 // loop_body
      %s14 = ssub.s32 %s9, 1
      %s15 = ssub.s32 %s9, 2
      %s16 = sadd.s32 %s9, 1
      %s17 = ssub.s32 %s9, %s16
      %p18 = scmp.eq.s32.totalorder %s17, 0
      %s20 = sadd.s32 %s19, 1
      %s21 = scalar_select %p18, %s19, %s20
      %p24 = pneg %p18
      %p25 = scmp.eq.s32.totalorder %s9, 3
      %p26 = por %p24, %p25
      %p27 = scmp.ne.s32.totalorder %s19, %s22
      %p28 = scmp.eq.s32.totalorder %s9, 0
      %p29 = por %p27, %p28
      %p30 = scmp.ne.s32.totalorder %s19, %s22
      %p31 = scmp.eq.s32.totalorder %s14, 3
      %p32 = por %p30, %p31
      %p33 = scmp.ne.s32.totalorder %s22, %s23
      %p34 = scmp.eq.s32.totalorder %s14, 0
      %p35 = por %p33, %p34
      %p36 = scmp.ne.s32.totalorder %s22, %s23
      %p37 = scmp.eq.s32.totalorder %s15, 3
      %p38 = por %p36, %p37
      %p40 = scmp.ne.s32.totalorder %s23, %s39
      %p41 = scmp.eq.s32.totalorder %s15, 0
      %p42 = por %p40, %p41
      %s44 = sadd.s32 %s43, 1
      %p47 = scmp.eq.s32.totalorder %s9, 3
      %p48 = scmp.ne.s32.totalorder %s43, %s45
      %p49 = scmp.eq.s32.totalorder %s9, 0
      %p50 = por %p48, %p49
      %p51 = scmp.ne.s32.totalorder %s43, %s45
      %p52 = scmp.eq.s32.totalorder %s14, 3
      %p53 = por %p51, %p52
      %p54 = scmp.ne.s32.totalorder %s45, %s46
      %p55 = scmp.eq.s32.totalorder %s14, 0
      %p56 = por %p54, %p55
      %p57 = scmp.ne.s32.totalorder %s45, %s46
      %p58 = scmp.eq.s32.totalorder %s15, 3
      %p59 = por %p57, %p58
      %p61 = scmp.ne.s32.totalorder %s46, %s60
      %p62 = scmp.eq.s32.totalorder %s15, 0
      %p63 = por %p61, %p62
      %s65 = sadd.s32 %s64, 1
      %p68 = scmp.eq.s32.totalorder %s9, 3
      %p69 = scmp.ne.s32.totalorder %s64, %s66
      %p70 = scmp.eq.s32.totalorder %s9, 0
      %p71 = por %p69, %p70
      %p72 = scmp.ne.s32.totalorder %s64, %s66
      %p73 = scmp.eq.s32.totalorder %s14, 3
      %p74 = por %p72, %p73
      %p75 = scmp.ne.s32.totalorder %s66, %s67
      %p76 = scmp.eq.s32.totalorder %s14, 0
      %p77 = por %p75, %p76
      %p78 = scmp.ne.s32.totalorder %s66, %s67
      %p79 = scmp.eq.s32.totalorder %s15, 3
      %p80 = por %p78, %p79
      %p82 = scmp.ne.s32.totalorder %s67, %s81
      %p83 = scmp.eq.s32.totalorder %s15, 0
      %p84 = por %p82, %p83
      %s85 = ssub.s32 %s9, %s16
      %p86 = scmp.eq.s32.totalorder %s85, 0
      %s88 = sadd.s32 %s87, 1
      %s89 = scalar_select %p86, %s87, %s88
      %p92 = pneg %p86
      %p93 = scmp.eq.s32.totalorder %s9, 3
      %p94 = por %p92, %p93
      %p95 = scmp.ne.s32.totalorder %s87, %s90
      %p96 = scmp.eq.s32.totalorder %s9, 0
      %p97 = por %p95, %p96
      %p98 = scmp.ne.s32.totalorder %s87, %s90
      %p99 = scmp.eq.s32.totalorder %s14, 3
      %p100 = por %p98, %p99
      %p101 = scmp.ne.s32.totalorder %s90, %s91
      %p102 = scmp.eq.s32.totalorder %s14, 0
      %p103 = por %p101, %p102
      %p104 = scmp.ne.s32.totalorder %s90, %s91
      %p105 = scmp.eq.s32.totalorder %s15, 3
      %p106 = por %p104, %p105
      %p108 = scmp.ne.s32.totalorder %s91, %s107
      %p109 = scmp.eq.s32.totalorder %s15, 0
      %p110 = por %p108, %p109
      %p111 = scmp.le.s32.totalorder 1, %s9
      %p112 = scmp.lt.s32.totalorder %s9, 5
      %p113 = pnand %p111, %p112
      %p114 = pneg %p113
      // Predicated region
      $region9: #{spiking_transformer_forward.5} parent=5 // pred_check
        _
      $region10: #{spiking_transformer_forward.5} parent=5 // pred_check_branch
        %116 = sbr.rel (%p113) target = $region12
      $region11: #{spiking_transformer_forward.5} parent=5 // pred_region
        %s117 = ssub.s32 %s9, 1
        // Predicated region
        $region13: #{spiking_transformer_forward.5} parent=11 // pred_check
          %p118 = pneg %p56
        $region14: #{spiking_transformer_forward.5} parent=11 // pred_check_branch
          %120 = sbr.rel (%p118) target = $region16
        $region15: #{spiking_transformer_forward.5} parent=11 // pred_region
          _
        $region16: #{spiking_transformer_forward.5} parent=11 // pred_fallthru
          _
        // Predicated region
        $region17: #{spiking_transformer_forward.5} parent=11 // pred_check
          %p121 = pneg %p77
        $region18: #{spiking_transformer_forward.5} parent=11 // pred_check_branch
          %123 = sbr.rel (%p121) target = $region20
        $region19: #{spiking_transformer_forward.5} parent=11 // pred_region
          _
        $region20: #{spiking_transformer_forward.5} parent=11 // pred_fallthru
          _
      $region12: #{spiking_transformer_forward.5} parent=5 // pred_fallthru
        _
      %p124 = scmp.lt.s32.totalorder %s9, 4
      // Predicated region
      $region21: #{spiking_transformer_forward.5} parent=5 // pred_check
        %p125 = pneg %p124
      $region22: #{spiking_transformer_forward.5} parent=5 // pred_check_branch
        %127 = sbr.rel (%p125) target = $region24
      $region23: #{spiking_transformer_forward.5} parent=5 // pred_region
        // Predicated region
        $region25: #{spiking_transformer_forward.5} parent=23 // pred_check
          %p128 = pneg %p29
        $region26: #{spiking_transformer_forward.5} parent=23 // pred_check_branch
          %130 = sbr.rel (%p128) target = $region28
        $region27: #{spiking_transformer_forward.5} parent=23 // pred_region
          %s131 = sand.u32 %s19, 1
          %s132 = sand.u32 %s19, 1
          %s133 = smul.addr %s132, 64
          %s134 = scalar_lea.vmem [#allocation4], %s133
          %s135 = smul.u32 4, %s9
          %s136 = smul.addr %s135, 4
          %s137 = scalar_lea.vmem %s0, %s136
          // Predicated region
          $region29: #{spiking_transformer_forward.5} parent=27 // pred_check
            _
          $region30: #{spiking_transformer_forward.5} parent=27 // pred_check_branch
            %139 = sbr.rel (0) target = $region32
          $region31: #{spiking_transformer_forward.5} parent=27 // pred_region
            // Predicated region
            $region33: #{spiking_transformer_forward.5} parent=31 // pred_check
              _
            $region34: #{spiking_transformer_forward.5} parent=31 // pred_check_branch
              %141 = sbr.rel target = $region36
            $region35: #{spiking_transformer_forward.5} parent=31 // pred_region
              // Predicated region
              $region48: #{spiking_transformer_forward.5} parent=35 // pred_check
                _
              $region49: #{spiking_transformer_forward.5} parent=35 // pred_check_branch
                %186 = sbr.rel (0) target = $region51
              $region50: #{spiking_transformer_forward.5} parent=35 // pred_region
                loop: start=0, step=1, limit=1
                $region52: #{spiking_transformer_forward.5} parent=50 // loop_pre_header
                  _
                $region53: #{spiking_transformer_forward.5} parent=50 // loop_header
                  %s188 = sphi 0, %s192
                  %p189 = scmp.ge.s32.totalorder %s188, 1
                  %s193 = sphi %s137, %s137
                  %s194 = sphi %s134, %s134
                $region54: #{spiking_transformer_forward.5} parent=50 // loop_header_branch
                  %191 = sbr.rel (%p189) target = $region58
                $region55: #{spiking_transformer_forward.5} parent=50 // loop_body
                  _
                $region56: #{spiking_transformer_forward.5} parent=50 // loop_footer
                  %s192 = sadd.s32 1, %s188
                $region57: #{spiking_transformer_forward.5} parent=50 // loop_footer_branch
                  %187 = sbr.rel target = $region53
                $region58: #{spiking_transformer_forward.5} parent=50 // loop_exit
                  _
                loop: start=0, step=1, limit=1
                $region59: #{spiking_transformer_forward.5} parent=50 // loop_pre_header
                  _
                $region60: #{spiking_transformer_forward.5} parent=50 // loop_header
                  %s197 = sphi 0, %s201
                  %p198 = scmp.ge.s32.totalorder %s197, 1
                  %s202 = sphi %s137, %s137
                  %s203 = sphi %s134, %s134
                $region61: #{spiking_transformer_forward.5} parent=50 // loop_header_branch
                  %200 = sbr.rel (%p198) target = $region65
                $region62: #{spiking_transformer_forward.5} parent=50 // loop_body
                  %v204 = vld [vmem:[%s202] sm:$0xf]
                  %205 = vst [vmem:[%s203] sm:$0xf] %v204
                  %v206 = vld [vmem:[%s202 + $0x4] sm:$0xf]
                  %207 = vst [vmem:[%s203 + $0x4] sm:$0xf] %v206
                  %v208 = vld [vmem:[%s202 + $0x8] sm:$0xf]
                  %209 = vst [vmem:[%s203 + $0x8] sm:$0xf] %v208
                  %v210 = vld [vmem:[%s202 + $0xc] sm:$0xf]
                  %211 = vst [vmem:[%s203 + $0xc] sm:$0xf] %v210
                  %v212 = vld [vmem:[%s202 + $0x40] sm:$0xf]
                  %213 = vst [vmem:[%s203 + $0x10] sm:$0xf] %v212
                  %v214 = vld [vmem:[%s202 + $0x44] sm:$0xf]
                  %215 = vst [vmem:[%s203 + $0x14] sm:$0xf] %v214
                  %v216 = vld [vmem:[%s202 + $0x48] sm:$0xf]
                  %217 = vst [vmem:[%s203 + $0x18] sm:$0xf] %v216
                  %v218 = vld [vmem:[%s202 + $0x4c] sm:$0xf]
                  %219 = vst [vmem:[%s203 + $0x1c] sm:$0xf] %v218
                  %v220 = vld [vmem:[%s202 + $0x80] sm:$0xf]
                  %221 = vst [vmem:[%s203 + $0x20] sm:$0xf] %v220
                  %v222 = vld [vmem:[%s202 + $0x84] sm:$0xf]
                  %223 = vst [vmem:[%s203 + $0x24] sm:$0xf] %v222
                  %v224 = vld [vmem:[%s202 + $0x88] sm:$0xf]
                  %225 = vst [vmem:[%s203 + $0x28] sm:$0xf] %v224
                  %v226 = vld [vmem:[%s202 + $0x8c] sm:$0xf]
                  %227 = vst [vmem:[%s203 + $0x2c] sm:$0xf] %v226
                  %v228 = vld [vmem:[%s202 + $0xc0] sm:$0xf]
                  %229 = vst [vmem:[%s203 + $0x30] sm:$0xf] %v228
                  %v230 = vld [vmem:[%s202 + $0xc4] sm:$0xf]
                  %231 = vst [vmem:[%s203 + $0x34] sm:$0xf] %v230
                  %v232 = vld [vmem:[%s202 + $0xc8] sm:$0xf]
                  %233 = vst [vmem:[%s203 + $0x38] sm:$0xf] %v232
                  %v234 = vld [vmem:[%s202 + $0xcc] sm:$0xf]
                  %235 = vst [vmem:[%s203 + $0x3c] sm:$0xf] %v234
                $region63: #{spiking_transformer_forward.5} parent=50 // loop_footer
                  %s201 = sadd.s32 1, %s197
                $region64: #{spiking_transformer_forward.5} parent=50 // loop_footer_branch
                  %196 = sbr.rel target = $region60
                $region65: #{spiking_transformer_forward.5} parent=50 // loop_exit
                  _
              $region51: #{spiking_transformer_forward.5} parent=35 // pred_fallthru
                _
            $region36: #{spiking_transformer_forward.5} parent=31 // pred_fallthru
              _
            // Predicated region
            $region37: #{spiking_transformer_forward.5} parent=31 // pred_check
              _
            $region38: #{spiking_transformer_forward.5} parent=31 // pred_check_branch
              %143 = sbr.rel (0) target = $region40
            $region39: #{spiking_transformer_forward.5} parent=31 // pred_region
              loop: start=0, step=1, limit=1
              $region41: #{spiking_transformer_forward.5} parent=39 // loop_pre_header
                _
              $region42: #{spiking_transformer_forward.5} parent=39 // loop_header
                %s146 = sphi 0, %s150
                %p147 = scmp.ge.s32.totalorder %s146, 1
                %s151 = sphi %s137, %s137
                %s152 = sphi %s134, %s134
              $region43: #{spiking_transformer_forward.5} parent=39 // loop_header_branch
                %149 = sbr.rel (%p147) target = $region47
              $region44: #{spiking_transformer_forward.5} parent=39 // loop_body
                %v153 = vld [vmem:[%s151] sm:$0xf]
                %154 = vst [vmem:[%s152] sm:$0xf] %v153
                %v155 = vld [vmem:[%s151 + $0x4] sm:$0xf]
                %156 = vst [vmem:[%s152 + $0x4] sm:$0xf] %v155
                %v157 = vld [vmem:[%s151 + $0x8] sm:$0xf]
                %158 = vst [vmem:[%s152 + $0x8] sm:$0xf] %v157
                %v159 = vld [vmem:[%s151 + $0xc] sm:$0xf]
                %160 = vst [vmem:[%s152 + $0xc] sm:$0xf] %v159
                %v161 = vld [vmem:[%s151 + $0x40] sm:$0xf]
                %162 = vst [vmem:[%s152 + $0x10] sm:$0xf] %v161
                %v163 = vld [vmem:[%s151 + $0x44] sm:$0xf]
                %164 = vst [vmem:[%s152 + $0x14] sm:$0xf] %v163
                %v165 = vld [vmem:[%s151 + $0x48] sm:$0xf]
                %166 = vst [vmem:[%s152 + $0x18] sm:$0xf] %v165
                %v167 = vld [vmem:[%s151 + $0x4c] sm:$0xf]
                %168 = vst [vmem:[%s152 + $0x1c] sm:$0xf] %v167
                %v169 = vld [vmem:[%s151 + $0x80] sm:$0xf]
                %170 = vst [vmem:[%s152 + $0x20] sm:$0xf] %v169
                %v171 = vld [vmem:[%s151 + $0x84] sm:$0xf]
                %172 = vst [vmem:[%s152 + $0x24] sm:$0xf] %v171
                %v173 = vld [vmem:[%s151 + $0x88] sm:$0xf]
                %174 = vst [vmem:[%s152 + $0x28] sm:$0xf] %v173
                %v175 = vld [vmem:[%s151 + $0x8c] sm:$0xf]
                %176 = vst [vmem:[%s152 + $0x2c] sm:$0xf] %v175
                %v177 = vld [vmem:[%s151 + $0xc0] sm:$0xf]
                %178 = vst [vmem:[%s152 + $0x30] sm:$0xf] %v177
                %v179 = vld [vmem:[%s151 + $0xc4] sm:$0xf]
                %180 = vst [vmem:[%s152 + $0x34] sm:$0xf] %v179
                %v181 = vld [vmem:[%s151 + $0xc8] sm:$0xf]
                %182 = vst [vmem:[%s152 + $0x38] sm:$0xf] %v181
                %v183 = vld [vmem:[%s151 + $0xcc] sm:$0xf]
                %184 = vst [vmem:[%s152 + $0x3c] sm:$0xf] %v183
              $region45: #{spiking_transformer_forward.5} parent=39 // loop_footer
                %s150 = sadd.s32 1, %s146
              $region46: #{spiking_transformer_forward.5} parent=39 // loop_footer_branch
                %145 = sbr.rel target = $region42
              $region47: #{spiking_transformer_forward.5} parent=39 // loop_exit
                _
            $region40: #{spiking_transformer_forward.5} parent=31 // pred_fallthru
              _
          $region32: #{spiking_transformer_forward.5} parent=27 // pred_fallthru
            _
          %236 = vnop
        $region28: #{spiking_transformer_forward.5} parent=23 // pred_fallthru
          _
      $region24: #{spiking_transformer_forward.5} parent=5 // pred_fallthru
        _
      %p237 = scmp.le.s32.totalorder 1, %s9
      %p238 = scmp.lt.s32.totalorder %s9, 5
      %p239 = pnand %p237, %p238
      %p240 = pneg %p239
      // Predicated region
      $region66: #{spiking_transformer_forward.5} parent=5 // pred_check
        _
      $region67: #{spiking_transformer_forward.5} parent=5 // pred_check_branch
        %242 = sbr.rel (%p239) target = $region69
      $region68: #{spiking_transformer_forward.5} parent=5 // pred_region
        %s243 = ssub.s32 %s9, 1
        %s244 = sand.u32 %s22, 1
        %s245 = sand.u32 %s22, 1
        %s246 = smul.addr %s245, 64
        %s247 = scalar_lea.vmem [#allocation4], %s246
        // Predicated region
        $region70: #{spiking_transformer_forward.5} parent=68 // pred_check
          %p248 = pneg %p35
        $region71: #{spiking_transformer_forward.5} parent=68 // pred_check_branch
          %250 = sbr.rel (%p248) target = $region73
        $region72: #{spiking_transformer_forward.5} parent=68 // pred_region
          _
        $region73: #{spiking_transformer_forward.5} parent=68 // pred_fallthru
          _
        %s251 = sand.u32 %s22, 1
        %s252 = sand.u32 %s22, 1
        %s253 = smul.addr %s252, 64
        %s254 = scalar_lea.vmem [#allocation4], %s253
        %p255 = pneg %p35
        %p256 = pneg %p32
        %p257 = pneg %p56
        %p258 = pneg %p53
        %p259 = pneg %p77
        %p260 = pneg %p74
        %p261 = pneg %p103
        %p262 = pneg %p100
        %s263 = sand.u32 %s90, 1
        %s264 = sand.u32 %s90, 1
        %s265 = smul.addr %s264, 64
        %s266 = scalar_lea.vmem [#allocation5], %s265
        %s267 = smul.u32 4, %s14
        %s268 = smul.u32 4, %s14
        %v270 = vld [vmem:[%s247] sm:$0xf]
        %v271 = vld [vmem:[%s247 + $0x4] sm:$0xf]
        %v272 = vld [vmem:[%s247 + $0x8] sm:$0xf]
        %v273 = vld [vmem:[%s247 + $0xc] sm:$0xf]
        %v274 = vld [vmem:[%s247 + $0x10] sm:$0xf]
        %v275 = vld [vmem:[%s247 + $0x14] sm:$0xf]
        %v276 = vld [vmem:[%s247 + $0x18] sm:$0xf]
        %v277 = vld [vmem:[%s247 + $0x1c] sm:$0xf]
        %v278 = vld [vmem:[%s247 + $0x20] sm:$0xf]
        %v279 = vld [vmem:[%s247 + $0x24] sm:$0xf]
        %v280 = vld [vmem:[%s247 + $0x28] sm:$0xf]
        %v281 = vld [vmem:[%s247 + $0x2c] sm:$0xf]
        %v282 = vld [vmem:[%s247 + $0x30] sm:$0xf]
        %v283 = vld [vmem:[%s247 + $0x34] sm:$0xf]
        %v284 = vld [vmem:[%s247 + $0x38] sm:$0xf]
        %v285 = vld [vmem:[%s247 + $0x3c] sm:$0xf]
        %v286 = vld [vmem:[%s1] sm:$0xf]
        %v287 = vld [vmem:[%s1 + $0x4] sm:$0xf]
        %v288 = vld [vmem:[%s1 + $0x8] sm:$0xf]
        %v289 = vld [vmem:[%s1 + $0xc] sm:$0xf]
        %v290 = vld [vmem:[%s2] sm:$0x1]
        %v292 = vlaneseq
        %v293 = vshrl.u32 %v292, 7
        %v294 = vsub.s32 0, %v293
        %v295 = vrot.slane %v290, %v294
        %v313 = vunpack.c.l.b16 %v270
        %v314 = vunpack.c.l.b16 %v271
        %v315 = vunpack.c.l.b16 %v272
        %v316 = vunpack.c.l.b16 %v273
        %v317 = vunpack.c.l.b16 %v274
        %v318 = vunpack.c.l.b16 %v275
        %v319 = vunpack.c.l.b16 %v276
        %v320 = vunpack.c.l.b16 %v277
        %v321 = vunpack.c.l.b16 %v278
        %v322 = vunpack.c.l.b16 %v279
        %v323 = vunpack.c.l.b16 %v280
        %v324 = vunpack.c.l.b16 %v281
        %v325 = vunpack.c.l.b16 %v282
        %v326 = vunpack.c.l.b16 %v283
        %v327 = vunpack.c.l.b16 %v284
        %v328 = vunpack.c.l.b16 %v285
        %v329 = vpack.c.b16 %v314, %v313
        %v330 = vpack.c.b16 %v316, %v315
        %v331 = vpack.c.b16 %v318, %v317
        %v332 = vpack.c.b16 %v320, %v319
        %v333 = vpack.c.b16 %v322, %v321
        %v334 = vpack.c.b16 %v324, %v323
        %v335 = vpack.c.b16 %v326, %v325
        %v336 = vpack.c.b16 %v328, %v327
        %v341 = vunpack.c.l.b16 %v286
        %v342 = vunpack.c.l.b16 %v287
        %v343 = vunpack.c.l.b16 %v288
        %v344 = vunpack.c.l.b16 %v289
        %v345 = vpack.c.b16 %v342, %v341
        %v346 = vpack.c.b16 %v344, %v343
        %vm349 = vcmask 261120
        %v351 = vsel %vm349, %v329, 0
        %v354 = vsel %vm349, %v330, 0
        %v357 = vsel %vm349, %v331, 0
        %v360 = vsel %vm349, %v332, 0
        %v363 = vsel %vm349, %v333, 0
        %v366 = vsel %vm349, %v334, 0
        %v369 = vsel %vm349, %v335, 0
        %v372 = vsel %vm349, %v336, 0
        %374 = vmatprep.subr.bf16.mxu0 0
        %375 = vmatpush1.bf16.msra.mxu0 %v345
        %376 = vmatprep.subr.bf16.mxu0 0
        %377 = vmatpush1.bf16.msra.mxu0 %v346
        %378 = vmatprep.subr.bf16.mxu0 0
        %379 = vmatpush1.bf16.msra.mxu0 0
        %380 = vmatprep.subr.bf16.mxu0 0
        %381 = vmatpush1.bf16.msra.mxu0 0
        %382 = vmatprep.subr.bf16.mxu0 0
        %383 = vmatpush1.bf16.msra.mxu0 0
        %384 = vmatprep.subr.bf16.mxu0 0
        %385 = vmatpush1.bf16.msra.mxu0 0
        %386 = vmatprep.subr.bf16.mxu0 0
        %387 = vmatpush1.bf16.msra.mxu0 0
        %388 = vmatprep.subr.bf16.mxu0 0
        %389 = vmatpush1.bf16.msra.mxu0 0
        %390 = vmatprep.subr.bf16.mxu0 0
        %391 = vmatpush1.bf16.msra.mxu0 0
        %392 = vmatprep.subr.bf16.mxu0 0
        %393 = vmatpush1.bf16.msra.mxu0 0
        %394 = vmatprep.subr.bf16.mxu0 0
        %395 = vmatpush1.bf16.msra.mxu0 0
        %396 = vmatprep.subr.bf16.mxu0 0
        %397 = vmatpush1.bf16.msra.mxu0 0
        %398 = vmatprep.subr.bf16.mxu0 0
        %399 = vmatpush1.bf16.msra.mxu0 0
        %400 = vmatprep.subr.bf16.mxu0 0
        %401 = vmatpush1.bf16.msra.mxu0 0
        %402 = vmatprep.subr.bf16.mxu0 0
        %403 = vmatpush1.bf16.msra.mxu0 0
        %404 = vmatprep.subr.bf16.mxu0 0
        %405 = vmatpush1.bf16.msra.mxu0 0
        %406 = vmatprep.mubr.bf16.mxu0 0
        %407 = vmatmul.mubr.bf16.gmra.mrb[0].mxu0 %v351
        %v408 = vpop.f32.mrb[0].mxu0
        %v409 = vadd.f32 %v295, %v408
        %v410 = vpop.f32.mrb[0].mxu0
        %v411 = vpop.f32.mrb[0].mxu0
        %v412 = vadd.f32 %v295, %v411
        %v413 = vpop.f32.mrb[0].mxu0
        %414 = vmatprep.mubr.bf16.mxu0 0
        %415 = vmatmul.mubr.bf16.gmra.mrb[0].mxu0 %v354
        %v416 = vpop.f32.mrb[0].mxu0
        %v417 = vadd.f32 %v295, %v416
        %v418 = vpop.f32.mrb[0].mxu0
        %v419 = vpop.f32.mrb[0].mxu0
        %v420 = vadd.f32 %v295, %v419
        %v421 = vpop.f32.mrb[0].mxu0
        %422 = vmatprep.mubr.bf16.mxu0 0
        %423 = vmatmul.mubr.bf16.gmra.mrb[0].mxu0 %v357
        %v424 = vpop.f32.mrb[0].mxu0
        %v425 = vadd.f32 %v295, %v424
        %v426 = vpop.f32.mrb[0].mxu0
        %v427 = vpop.f32.mrb[0].mxu0
        %v428 = vadd.f32 %v295, %v427
        %v429 = vpop.f32.mrb[0].mxu0
        %430 = vmatprep.mubr.bf16.mxu0 0
        %431 = vmatmul.mubr.bf16.gmra.mrb[0].mxu0 %v360
        %v432 = vpop.f32.mrb[0].mxu0
        %v433 = vadd.f32 %v295, %v432
        %v434 = vpop.f32.mrb[0].mxu0
        %v435 = vpop.f32.mrb[0].mxu0
        %v436 = vadd.f32 %v295, %v435
        %v437 = vpop.f32.mrb[0].mxu0
        %438 = vmatprep.mubr.bf16.mxu0 0
        %439 = vmatmul.mubr.bf16.gmra.mrb[0].mxu0 %v363
        %v440 = vpop.f32.mrb[0].mxu0
        %v441 = vadd.f32 %v295, %v440
        %v442 = vpop.f32.mrb[0].mxu0
        %v443 = vpop.f32.mrb[0].mxu0
        %v444 = vadd.f32 %v295, %v443
        %v445 = vpop.f32.mrb[0].mxu0
        %446 = vmatprep.mubr.bf16.mxu0 0
        %447 = vmatmul.mubr.bf16.gmra.mrb[0].mxu0 %v366
        %v448 = vpop.f32.mrb[0].mxu0
        %v449 = vadd.f32 %v295, %v448
        %v450 = vpop.f32.mrb[0].mxu0
        %v451 = vpop.f32.mrb[0].mxu0
        %v452 = vadd.f32 %v295, %v451
        %v453 = vpop.f32.mrb[0].mxu0
        %454 = vmatprep.mubr.bf16.mxu0 0
        %455 = vmatmul.mubr.bf16.gmra.mrb[0].mxu0 %v369
        %v456 = vpop.f32.mrb[0].mxu0
        %v457 = vadd.f32 %v295, %v456
        %v458 = vpop.f32.mrb[0].mxu0
        %v459 = vpop.f32.mrb[0].mxu0
        %v460 = vadd.f32 %v295, %v459
        %v461 = vpop.f32.mrb[0].mxu0
        %462 = vmatprep.mubr.bf16.mxu0 0
        %463 = vmatmul.mubr.bf16.gmra.mrb[0].mxu0 %v372
        %v464 = vpop.f32.mrb[0].mxu0
        %v465 = vadd.f32 %v295, %v464
        %v466 = vpop.f32.mrb[0].mxu0
        %v467 = vpop.f32.mrb[0].mxu0
        %v468 = vadd.f32 %v295, %v467
        %v469 = vpop.f32.mrb[0].mxu0
        %470 = vdwg.mxu0
        %vm471 = vcmask 785408
        %472 = vst.msk [vmem:[#allocation2] sm:$0xff] %vm471, %v409
        %473 = vst.msk [vmem:[#allocation2 + $0x8] sm:$0xff] %vm471, %v412
        %474 = vst.msk [vmem:[#allocation2 + $0x10] sm:$0xff] %vm471, %v417
        %475 = vst.msk [vmem:[#allocation2 + $0x18] sm:$0xff] %vm471, %v420
        %476 = vst.msk [vmem:[#allocation2 + $0x20] sm:$0xff] %vm471, %v425
        %477 = vst.msk [vmem:[#allocation2 + $0x28] sm:$0xff] %vm471, %v428
        %478 = vst.msk [vmem:[#allocation2 + $0x30] sm:$0xff] %vm471, %v433
        %479 = vst.msk [vmem:[#allocation2 + $0x38] sm:$0xff] %vm471, %v436
        %480 = vst.msk [vmem:[#allocation2 + $0x40] sm:$0xff] %vm471, %v441
        %481 = vst.msk [vmem:[#allocation2 + $0x48] sm:$0xff] %vm471, %v444
        %482 = vst.msk [vmem:[#allocation2 + $0x50] sm:$0xff] %vm471, %v449
        %483 = vst.msk [vmem:[#allocation2 + $0x58] sm:$0xff] %vm471, %v452
        %484 = vst.msk [vmem:[#allocation2 + $0x60] sm:$0xff] %vm471, %v457
        %485 = vst.msk [vmem:[#allocation2 + $0x68] sm:$0xff] %vm471, %v460
        %486 = vst.msk [vmem:[#allocation2 + $0x70] sm:$0xff] %vm471, %v465
        %487 = vst.msk [vmem:[#allocation2 + $0x78] sm:$0xff] %vm471, %v468
        %488 = vst.msk [vmem:[#allocation3] sm:$0xff] %vm471, 0.0
        %489 = vst.msk [vmem:[#allocation3 + $0x8] sm:$0xff] %vm471, 0.0
        %490 = vst.msk [vmem:[#allocation3 + $0x10] sm:$0xff] %vm471, 0.0
        %491 = vst.msk [vmem:[#allocation3 + $0x18] sm:$0xff] %vm471, 0.0
        %v492 = vld [vmem:[#allocation3] sm:$0xff]
        %v493 = vld [vmem:[#allocation3 + $0x8] sm:$0xff]
        %v494 = vld [vmem:[#allocation3 + $0x10] sm:$0xff]
        %v495 = vld [vmem:[#allocation3 + $0x18] sm:$0xff]
        %v496 = vld [vmem:[#allocation2] sm:$0xff]
        %v497 = vld [vmem:[#allocation2 + $0x8] sm:$0xff]
        %v498 = vld [vmem:[#allocation2 + $0x10] sm:$0xff]
        %v499 = vld [vmem:[#allocation2 + $0x18] sm:$0xff]
        %v500 = vadd.f32 %v492, %v496
        %v501 = vadd.f32 %v493, %v497
        %v502 = vadd.f32 %v494, %v498
        %v503 = vadd.f32 %v495, %v499
        %v504 = vmul.f32 %v500, 0.5
        %v505 = vmul.f32 %v501, 0.5
        %v506 = vmul.f32 %v502, 0.5
        %v507 = vmul.f32 %v503, 0.5
        %vm508 = vcmp.ge.f32.partialorder %v504, 1.0
        %vm509 = vcmp.ge.f32.partialorder %v505, 1.0
        %vm510 = vcmp.ge.f32.partialorder %v506, 1.0
        %vm511 = vcmp.ge.f32.partialorder %v507, 1.0
        %v512 = vsel %vm508, 1, 0
        %v513 = vsel %vm509, 1, 0
        %v514 = vsel %vm510, 1, 0
        %v515 = vsel %vm511, 1, 0
        %v516 = vcvt.s32.f32 %v512
        %v517 = vcvt.s32.f32 %v513
        %v518 = vcvt.s32.f32 %v514
        %v519 = vcvt.s32.f32 %v515
        %v520 = vpack.c.bf16 %v517, %v516
        %v521 = vpack.c.bf16 %v519, %v518
        %v524 = vunpack.c.l.b16 %v520
        %v525 = vunpack.c.h.b16 %v520
        %v526 = vunpack.c.l.b16 %v521
        %v527 = vunpack.c.h.b16 %v521
        %v528 = vpack.c.b16 %v524, %v524
        %v529 = vpack.c.b16 %v525, %v525
        %v530 = vpack.c.b16 %v526, %v526
        %v531 = vpack.c.b16 %v527, %v527
        %vm536 = vcmask 781312
        %537 = vst.msk [vmem:[%s266] sm:$0xf] %vm536, %v528
        %538 = vst.msk [vmem:[%s266 + $0x4] sm:$0xf] %vm536, %v529
        %539 = vst.msk [vmem:[%s266 + $0x8] sm:$0xf] %vm536, %v530
        %540 = vst.msk [vmem:[%s266 + $0xc] sm:$0xf] %vm536, %v531
        %v541 = vsel %vm508, 0.0, %v504
        %v542 = vsel %vm509, 0.0, %v505
        %v543 = vsel %vm510, 0.0, %v506
        %v544 = vsel %vm511, 0.0, %v507
        %545 = vst.msk [vmem:[#allocation3] sm:$0xff] %vm471, %v541
        %546 = vst.msk [vmem:[#allocation3 + $0x8] sm:$0xff] %vm471, %v542
        %547 = vst.msk [vmem:[#allocation3 + $0x10] sm:$0xff] %vm471, %v543
        %548 = vst.msk [vmem:[#allocation3 + $0x18] sm:$0xff] %vm471, %v544
        %v549 = vld [vmem:[#allocation3] sm:$0xff]
        %v550 = vld [vmem:[#allocation3 + $0x8] sm:$0xff]
        %v551 = vld [vmem:[#allocation3 + $0x10] sm:$0xff]
        %v552 = vld [vmem:[#allocation3 + $0x18] sm:$0xff]
        %v553 = vld [vmem:[#allocation2 + $0x20] sm:$0xff]
        %v554 = vld [vmem:[#allocation2 + $0x28] sm:$0xff]
        %v555 = vld [vmem:[#allocation2 + $0x30] sm:$0xff]
        %v556 = vld [vmem:[#allocation2 + $0x38] sm:$0xff]
        %v557 = vadd.f32 %v549, %v553
        %v558 = vadd.f32 %v550, %v554
        %v559 = vadd.f32 %v551, %v555
        %v560 = vadd.f32 %v552, %v556
        %v561 = vmul.f32 %v557, 0.5
        %v562 = vmul.f32 %v558, 0.5
        %v563 = vmul.f32 %v559, 0.5
        %v564 = vmul.f32 %v560, 0.5
        %vm565 = vcmp.ge.f32.partialorder %v561, 1.0
        %vm566 = vcmp.ge.f32.partialorder %v562, 1.0
        %vm567 = vcmp.ge.f32.partialorder %v563, 1.0
        %vm568 = vcmp.ge.f32.partialorder %v564, 1.0
        %v569 = vsel %vm565, 1, 0
        %v570 = vsel %vm566, 1, 0
        %v571 = vsel %vm567, 1, 0
        %v572 = vsel %vm568, 1, 0
        %v573 = vcvt.s32.f32 %v569
        %v574 = vcvt.s32.f32 %v570
        %v575 = vcvt.s32.f32 %v571
        %v576 = vcvt.s32.f32 %v572
        %v577 = vpack.c.bf16 %v574, %v573
        %v578 = vpack.c.bf16 %v576, %v575
        %v581 = vunpack.c.l.b16 %v577
        %v582 = vunpack.c.h.b16 %v577
        %v583 = vunpack.c.l.b16 %v578
        %v584 = vunpack.c.h.b16 %v578
        %v585 = vpack.c.b16 %v581, %v581
        %v586 = vpack.c.b16 %v582, %v582
        %v587 = vpack.c.b16 %v583, %v583
        %v588 = vpack.c.b16 %v584, %v584
        %s593 = scalar_lea.vmem %s266, 16 [#allocation5]
        %594 = vst.msk [vmem:[%s593] sm:$0xf] %vm536, %v585
        %595 = vst.msk [vmem:[%s593 + $0x4] sm:$0xf] %vm536, %v586
        %596 = vst.msk [vmem:[%s593 + $0x8] sm:$0xf] %vm536, %v587
        %597 = vst.msk [vmem:[%s593 + $0xc] sm:$0xf] %vm536, %v588
        %v598 = vsel %vm565, 0.0, %v561
        %v599 = vsel %vm566, 0.0, %v562
        %v600 = vsel %vm567, 0.0, %v563
        %v601 = vsel %vm568, 0.0, %v564
        %602 = vst.msk [vmem:[#allocation3] sm:$0xff] %vm471, %v598
        %603 = vst.msk [vmem:[#allocation3 + $0x8] sm:$0xff] %vm471, %v599
        %604 = vst.msk [vmem:[#allocation3 + $0x10] sm:$0xff] %vm471, %v600
        %605 = vst.msk [vmem:[#allocation3 + $0x18] sm:$0xff] %vm471, %v601
        %v606 = vld [vmem:[#allocation3] sm:$0xff]
        %v607 = vld [vmem:[#allocation3 + $0x8] sm:$0xff]
        %v608 = vld [vmem:[#allocation3 + $0x10] sm:$0xff]
        %v609 = vld [vmem:[#allocation3 + $0x18] sm:$0xff]
        %v610 = vld [vmem:[#allocation2 + $0x40] sm:$0xff]
        %v611 = vld [vmem:[#allocation2 + $0x48] sm:$0xff]
        %v612 = vld [vmem:[#allocation2 + $0x50] sm:$0xff]
        %v613 = vld [vmem:[#allocation2 + $0x58] sm:$0xff]
        %v614 = vadd.f32 %v606, %v610
        %v615 = vadd.f32 %v607, %v611
        %v616 = vadd.f32 %v608, %v612
        %v617 = vadd.f32 %v609, %v613
        %v618 = vmul.f32 %v614, 0.5
        %v619 = vmul.f32 %v615, 0.5
        %v620 = vmul.f32 %v616, 0.5
        %v621 = vmul.f32 %v617, 0.5
        %vm622 = vcmp.ge.f32.partialorder %v618, 1.0
        %vm623 = vcmp.ge.f32.partialorder %v619, 1.0
        %vm624 = vcmp.ge.f32.partialorder %v620, 1.0
        %vm625 = vcmp.ge.f32.partialorder %v621, 1.0
        %v626 = vsel %vm622, 1, 0
        %v627 = vsel %vm623, 1, 0
        %v628 = vsel %vm624, 1, 0
        %v629 = vsel %vm625, 1, 0
        %v630 = vcvt.s32.f32 %v626
        %v631 = vcvt.s32.f32 %v627
        %v632 = vcvt.s32.f32 %v628
        %v633 = vcvt.s32.f32 %v629
        %v634 = vpack.c.bf16 %v631, %v630
        %v635 = vpack.c.bf16 %v633, %v632
        %v638 = vunpack.c.l.b16 %v634
        %v639 = vunpack.c.h.b16 %v634
        %v640 = vunpack.c.l.b16 %v635
        %v641 = vunpack.c.h.b16 %v635
        %v642 = vpack.c.b16 %v638, %v638
        %v643 = vpack.c.b16 %v639, %v639
        %v644 = vpack.c.b16 %v640, %v640
        %v645 = vpack.c.b16 %v641, %v641
        %s650 = scalar_lea.vmem %s266, 32 [#allocation5]
        %651 = vst.msk [vmem:[%s650] sm:$0xf] %vm536, %v642
        %652 = vst.msk [vmem:[%s650 + $0x4] sm:$0xf] %vm536, %v643
        %653 = vst.msk [vmem:[%s650 + $0x8] sm:$0xf] %vm536, %v644
        %654 = vst.msk [vmem:[%s650 + $0xc] sm:$0xf] %vm536, %v645
        %v655 = vsel %vm622, 0.0, %v618
        %v656 = vsel %vm623, 0.0, %v619
        %v657 = vsel %vm624, 0.0, %v620
        %v658 = vsel %vm625, 0.0, %v621
        %659 = vst.msk [vmem:[#allocation3] sm:$0xff] %vm471, %v655
        %660 = vst.msk [vmem:[#allocation3 + $0x8] sm:$0xff] %vm471, %v656
        %661 = vst.msk [vmem:[#allocation3 + $0x10] sm:$0xff] %vm471, %v657
        %662 = vst.msk [vmem:[#allocation3 + $0x18] sm:$0xff] %vm471, %v658
        %v663 = vld [vmem:[#allocation3] sm:$0xff]
        %v664 = vld [vmem:[#allocation3 + $0x8] sm:$0xff]
        %v665 = vld [vmem:[#allocation3 + $0x10] sm:$0xff]
        %v666 = vld [vmem:[#allocation3 + $0x18] sm:$0xff]
        %v667 = vld [vmem:[#allocation2 + $0x60] sm:$0xff]
        %v668 = vld [vmem:[#allocation2 + $0x68] sm:$0xff]
        %v669 = vld [vmem:[#allocation2 + $0x70] sm:$0xff]
        %v670 = vld [vmem:[#allocation2 + $0x78] sm:$0xff]
        %v671 = vadd.f32 %v663, %v667
        %v672 = vadd.f32 %v664, %v668
        %v673 = vadd.f32 %v665, %v669
        %v674 = vadd.f32 %v666, %v670
        %v675 = vmul.f32 %v671, 0.5
        %v676 = vmul.f32 %v672, 0.5
        %v677 = vmul.f32 %v673, 0.5
        %v678 = vmul.f32 %v674, 0.5
        %vm679 = vcmp.ge.f32.partialorder %v675, 1.0
        %vm680 = vcmp.ge.f32.partialorder %v676, 1.0
        %vm681 = vcmp.ge.f32.partialorder %v677, 1.0
        %vm682 = vcmp.ge.f32.partialorder %v678, 1.0
        %v683 = vsel %vm679, 1, 0
        %v684 = vsel %vm680, 1, 0
        %v685 = vsel %vm681, 1, 0
        %v686 = vsel %vm682, 1, 0
        %v687 = vcvt.s32.f32 %v683
        %v688 = vcvt.s32.f32 %v684
        %v689 = vcvt.s32.f32 %v685
        %v690 = vcvt.s32.f32 %v686
        %v691 = vpack.c.bf16 %v688, %v687
        %v692 = vpack.c.bf16 %v690, %v689
        %v695 = vunpack.c.l.b16 %v691
        %v696 = vunpack.c.h.b16 %v691
        %v697 = vunpack.c.l.b16 %v692
        %v698 = vunpack.c.h.b16 %v692
        %v699 = vpack.c.b16 %v695, %v695
        %v700 = vpack.c.b16 %v696, %v696
        %v701 = vpack.c.b16 %v697, %v697
        %v702 = vpack.c.b16 %v698, %v698
        %s707 = scalar_lea.vmem %s266, 48 [#allocation5]
        %708 = vst.msk [vmem:[%s707] sm:$0xf] %vm536, %v699
        %709 = vst.msk [vmem:[%s707 + $0x4] sm:$0xf] %vm536, %v700
        %710 = vst.msk [vmem:[%s707 + $0x8] sm:$0xf] %vm536, %v701
        %711 = vst.msk [vmem:[%s707 + $0xc] sm:$0xf] %vm536, %v702
        %v712 = vsel %vm679, 0.0, %v675
        %v713 = vsel %vm680, 0.0, %v676
        %v714 = vsel %vm681, 0.0, %v677
        %v715 = vsel %vm682, 0.0, %v678
        %716 = vst.msk [vmem:[#allocation3] sm:$0xff] %vm471, %v712
        %717 = vst.msk [vmem:[#allocation3 + $0x8] sm:$0xff] %vm471, %v713
        %718 = vst.msk [vmem:[#allocation3 + $0x10] sm:$0xff] %vm471, %v714
        %719 = vst.msk [vmem:[#allocation3 + $0x18] sm:$0xff] %vm471, %v715
        %s720 = sand.u32 %s90, 1
        %s721 = sand.u32 %s90, 1
        %s722 = smul.addr %s721, 64
        %s723 = scalar_lea.vmem [#allocation5], %s722
        // Predicated region
        $region74: #{spiking_transformer_forward.5} parent=68 // pred_check
          %p724 = pneg %p100
        $region75: #{spiking_transformer_forward.5} parent=68 // pred_check_branch
          %726 = sbr.rel (%p724) target = $region77
        $region76: #{spiking_transformer_forward.5} parent=68 // pred_region
          %s727 = smul.u32 4, %s14
          %s728 = smul.addr %s727, 4
          %s729 = scalar_lea.vmem %s3, %s728
          // Predicated region
          $region78: #{spiking_transformer_forward.5} parent=76 // pred_check
            _
          $region79: #{spiking_transformer_forward.5} parent=76 // pred_check_branch
            %731 = sbr.rel (0) target = $region81
          $region80: #{spiking_transformer_forward.5} parent=76 // pred_region
            // Predicated region
            $region82: #{spiking_transformer_forward.5} parent=80 // pred_check
              _
            $region83: #{spiking_transformer_forward.5} parent=80 // pred_check_branch
              %733 = sbr.rel target = $region85
            $region84: #{spiking_transformer_forward.5} parent=80 // pred_region
              // Predicated region
              $region97: #{spiking_transformer_forward.5} parent=84 // pred_check
                _
              $region98: #{spiking_transformer_forward.5} parent=84 // pred_check_branch
                %778 = sbr.rel (0) target = $region100
              $region99: #{spiking_transformer_forward.5} parent=84 // pred_region
                loop: start=0, step=1, limit=1
                $region101: #{spiking_transformer_forward.5} parent=99 // loop_pre_header
                  _
                $region102: #{spiking_transformer_forward.5} parent=99 // loop_header
                  %s780 = sphi 0, %s784
                  %p781 = scmp.ge.s32.totalorder %s780, 1
                  %s785 = sphi %s723, %s723
                  %s786 = sphi %s729, %s729
                $region103: #{spiking_transformer_forward.5} parent=99 // loop_header_branch
                  %783 = sbr.rel (%p781) target = $region107
                $region104: #{spiking_transformer_forward.5} parent=99 // loop_body
                  _
                $region105: #{spiking_transformer_forward.5} parent=99 // loop_footer
                  %s784 = sadd.s32 1, %s780
                $region106: #{spiking_transformer_forward.5} parent=99 // loop_footer_branch
                  %779 = sbr.rel target = $region102
                $region107: #{spiking_transformer_forward.5} parent=99 // loop_exit
                  _
                loop: start=0, step=1, limit=1
                $region108: #{spiking_transformer_forward.5} parent=99 // loop_pre_header
                  _
                $region109: #{spiking_transformer_forward.5} parent=99 // loop_header
                  %s789 = sphi 0, %s793
                  %p790 = scmp.ge.s32.totalorder %s789, 1
                  %s794 = sphi %s723, %s723
                  %s795 = sphi %s729, %s729
                $region110: #{spiking_transformer_forward.5} parent=99 // loop_header_branch
                  %792 = sbr.rel (%p790) target = $region114
                $region111: #{spiking_transformer_forward.5} parent=99 // loop_body
                  %v796 = vld [vmem:[%s794] sm:$0xf]
                  %797 = vst [vmem:[%s795] sm:$0xf] %v796
                  %v798 = vld [vmem:[%s794 + $0x4] sm:$0xf]
                  %799 = vst [vmem:[%s795 + $0x4] sm:$0xf] %v798
                  %v800 = vld [vmem:[%s794 + $0x8] sm:$0xf]
                  %801 = vst [vmem:[%s795 + $0x8] sm:$0xf] %v800
                  %v802 = vld [vmem:[%s794 + $0xc] sm:$0xf]
                  %803 = vst [vmem:[%s795 + $0xc] sm:$0xf] %v802
                  %v804 = vld [vmem:[%s794 + $0x10] sm:$0xf]
                  %805 = vst [vmem:[%s795 + $0x40] sm:$0xf] %v804
                  %v806 = vld [vmem:[%s794 + $0x14] sm:$0xf]
                  %807 = vst [vmem:[%s795 + $0x44] sm:$0xf] %v806
                  %v808 = vld [vmem:[%s794 + $0x18] sm:$0xf]
                  %809 = vst [vmem:[%s795 + $0x48] sm:$0xf] %v808
                  %v810 = vld [vmem:[%s794 + $0x1c] sm:$0xf]
                  %811 = vst [vmem:[%s795 + $0x4c] sm:$0xf] %v810
                  %v812 = vld [vmem:[%s794 + $0x20] sm:$0xf]
                  %813 = vst [vmem:[%s795 + $0x80] sm:$0xf] %v812
                  %v814 = vld [vmem:[%s794 + $0x24] sm:$0xf]
                  %815 = vst [vmem:[%s795 + $0x84] sm:$0xf] %v814
                  %v816 = vld [vmem:[%s794 + $0x28] sm:$0xf]
                  %817 = vst [vmem:[%s795 + $0x88] sm:$0xf] %v816
                  %v818 = vld [vmem:[%s794 + $0x2c] sm:$0xf]
                  %819 = vst [vmem:[%s795 + $0x8c] sm:$0xf] %v818
                  %v820 = vld [vmem:[%s794 + $0x30] sm:$0xf]
                  %821 = vst [vmem:[%s795 + $0xc0] sm:$0xf] %v820
                  %v822 = vld [vmem:[%s794 + $0x34] sm:$0xf]
                  %823 = vst [vmem:[%s795 + $0xc4] sm:$0xf] %v822
                  %v824 = vld [vmem:[%s794 + $0x38] sm:$0xf]
                  %825 = vst [vmem:[%s795 + $0xc8] sm:$0xf] %v824
                  %v826 = vld [vmem:[%s794 + $0x3c] sm:$0xf]
                  %827 = vst [vmem:[%s795 + $0xcc] sm:$0xf] %v826
                $region112: #{spiking_transformer_forward.5} parent=99 // loop_footer
                  %s793 = sadd.s32 1, %s789
                $region113: #{spiking_transformer_forward.5} parent=99 // loop_footer_branch
                  %788 = sbr.rel target = $region109
                $region114: #{spiking_transformer_forward.5} parent=99 // loop_exit
                  _
              $region100: #{spiking_transformer_forward.5} parent=84 // pred_fallthru
                _
            $region85: #{spiking_transformer_forward.5} parent=80 // pred_fallthru
              _
            // Predicated region
            $region86: #{spiking_transformer_forward.5} parent=80 // pred_check
              _
            $region87: #{spiking_transformer_forward.5} parent=80 // pred_check_branch
              %735 = sbr.rel (0) target = $region89
            $region88: #{spiking_transformer_forward.5} parent=80 // pred_region
              loop: start=0, step=1, limit=1
              $region90: #{spiking_transformer_forward.5} parent=88 // loop_pre_header
                _
              $region91: #{spiking_transformer_forward.5} parent=88 // loop_header
                %s738 = sphi 0, %s742
                %p739 = scmp.ge.s32.totalorder %s738, 1
                %s743 = sphi %s723, %s723
                %s744 = sphi %s729, %s729
              $region92: #{spiking_transformer_forward.5} parent=88 // loop_header_branch
                %741 = sbr.rel (%p739) target = $region96
              $region93: #{spiking_transformer_forward.5} parent=88 // loop_body
                %v745 = vld [vmem:[%s743] sm:$0xf]
                %746 = vst [vmem:[%s744] sm:$0xf] %v745
                %v747 = vld [vmem:[%s743 + $0x4] sm:$0xf]
                %748 = vst [vmem:[%s744 + $0x4] sm:$0xf] %v747
                %v749 = vld [vmem:[%s743 + $0x8] sm:$0xf]
                %750 = vst [vmem:[%s744 + $0x8] sm:$0xf] %v749
                %v751 = vld [vmem:[%s743 + $0xc] sm:$0xf]
                %752 = vst [vmem:[%s744 + $0xc] sm:$0xf] %v751
                %v753 = vld [vmem:[%s743 + $0x10] sm:$0xf]
                %754 = vst [vmem:[%s744 + $0x40] sm:$0xf] %v753
                %v755 = vld [vmem:[%s743 + $0x14] sm:$0xf]
                %756 = vst [vmem:[%s744 + $0x44] sm:$0xf] %v755
                %v757 = vld [vmem:[%s743 + $0x18] sm:$0xf]
                %758 = vst [vmem:[%s744 + $0x48] sm:$0xf] %v757
                %v759 = vld [vmem:[%s743 + $0x1c] sm:$0xf]
                %760 = vst [vmem:[%s744 + $0x4c] sm:$0xf] %v759
                %v761 = vld [vmem:[%s743 + $0x20] sm:$0xf]
                %762 = vst [vmem:[%s744 + $0x80] sm:$0xf] %v761
                %v763 = vld [vmem:[%s743 + $0x24] sm:$0xf]
                %764 = vst [vmem:[%s744 + $0x84] sm:$0xf] %v763
                %v765 = vld [vmem:[%s743 + $0x28] sm:$0xf]
                %766 = vst [vmem:[%s744 + $0x88] sm:$0xf] %v765
                %v767 = vld [vmem:[%s743 + $0x2c] sm:$0xf]
                %768 = vst [vmem:[%s744 + $0x8c] sm:$0xf] %v767
                %v769 = vld [vmem:[%s743 + $0x30] sm:$0xf]
                %770 = vst [vmem:[%s744 + $0xc0] sm:$0xf] %v769
                %v771 = vld [vmem:[%s743 + $0x34] sm:$0xf]
                %772 = vst [vmem:[%s744 + $0xc4] sm:$0xf] %v771
                %v773 = vld [vmem:[%s743 + $0x38] sm:$0xf]
                %774 = vst [vmem:[%s744 + $0xc8] sm:$0xf] %v773
                %v775 = vld [vmem:[%s743 + $0x3c] sm:$0xf]
                %776 = vst [vmem:[%s744 + $0xcc] sm:$0xf] %v775
              $region94: #{spiking_transformer_forward.5} parent=88 // loop_footer
                %s742 = sadd.s32 1, %s738
              $region95: #{spiking_transformer_forward.5} parent=88 // loop_footer_branch
                %737 = sbr.rel target = $region91
              $region96: #{spiking_transformer_forward.5} parent=88 // loop_exit
                _
            $region89: #{spiking_transformer_forward.5} parent=80 // pred_fallthru
              _
          $region81: #{spiking_transformer_forward.5} parent=76 // pred_fallthru
            _
          %828 = vnop
        $region77: #{spiking_transformer_forward.5} parent=68 // pred_fallthru
          _
      $region69: #{spiking_transformer_forward.5} parent=5 // pred_fallthru
        _
      %p829 = scmp.le.s32.totalorder 2, %s9
      // Predicated region
      $region115: #{spiking_transformer_forward.5} parent=5 // pred_check
        %p830 = pneg %p829
      $region116: #{spiking_transformer_forward.5} parent=5 // pred_check_branch
        %832 = sbr.rel (%p830) target = $region118
      $region117: #{spiking_transformer_forward.5} parent=5 // pred_region
        %s833 = ssub.s32 %s9, 2
        // Predicated region
        $region119: #{spiking_transformer_forward.5} parent=117 // pred_check
          %p834 = pneg %p106
        $region120: #{spiking_transformer_forward.5} parent=117 // pred_check_branch
          %836 = sbr.rel (%p834) target = $region122
        $region121: #{spiking_transformer_forward.5} parent=117 // pred_region
          %s837 = sand.u32 %s91, 1
          %s838 = sand.u32 %s91, 1
          %s839 = smul.addr %s838, 64
          %s840 = scalar_lea.vmem [#allocation5], %s839
        $region122: #{spiking_transformer_forward.5} parent=117 // pred_fallthru
          _
      $region118: #{spiking_transformer_forward.5} parent=5 // pred_fallthru
        _
    $region6: #{spiking_transformer_forward.5} parent=1 // loop_footer
      %s13 = sadd.s32 1, %s9
    $region7: #{spiking_transformer_forward.5} parent=1 // loop_footer_branch
      %8 = sbr.rel target = $region3
    $region8: #{spiking_transformer_forward.5} parent=1 // loop_exit
      _

// kernel: spiking_transformer_forward.8
$region0: #{spiking_transformer_forward.8}
  #allocation0 [shape = 'u32[]', space=smem, size = 0x4, offset = 0x4, fixed_abs, tag = 'smem constant byte address 0x4 - core index']
  #allocation1 [shape = 'u32[144,128]{1,0:T(1,128)}', space=vmem, size = 0x12000, scoped, tag = 'internal scratch']
  #allocation2 [shape = 'f32[128,128]{1,0:T(8,128)}', space=vmem, size = 0x10000, scoped, tag = 'scratch operand']
  #allocation3 [shape = 'f32[32,128]{1,0:T(8,128)}', space=vmem, size = 0x4000, scoped, tag = 'scratch operand']
  %s0 = inlined_call_operand.vmem [shape: bf16[4,128,32], index: 0, kind: input, shape index: {}]
  %s1 = inlined_call_operand.vmem [shape: bf16[32,128], index: 1, kind: input, shape index: {}]
  %s2 = inlined_call_operand.vmem [shape: f32[1,128], index: 2, kind: input, shape index: {}]
  %s3 = inlined_call_operand.vmem [shape: bf16[4,128,128], index: 3, kind: output, shape index: {}]
  %s4 = sld [smem:[#allocation0]]
  $region123: #{spiking_transformer_forward.8} parent=0
    _
  %s6 = ssub.s32 1, %s4
  %s7 = scalar_select 0, %s6, %s4
  $region1: #{spiking_transformer_forward.8} parent=0
    #allocation4 [shape = 'u8[65536]{0}', space=vmem, size = 0x10000, scoped, tag = 'input window, operand 0']
    #allocation5 [shape = 'u8[65536]{0}', space=vmem, size = 0x10000, scoped, tag = 'output window, operand 0']
    loop: start=0, step=1, limit=6
    $region2: #{spiking_transformer_forward.8} parent=1 // loop_pre_header
      _
    $region3: #{spiking_transformer_forward.8} parent=1 // loop_header
      %s9 = sphi 0, %s13
      %p10 = scmp.ge.s32.totalorder %s9, 6
      %s19 = sphi 0, %s21
      %s22 = sphi 0, %s19
      %s23 = sphi 0, %s22
      %s39 = sphi 0, %s23
      %s43 = sphi 0, %s43
      %s45 = sphi 0, %s43
      %s46 = sphi 0, %s45
      %s60 = sphi 0, %s46
      %s64 = sphi 0, %s64
      %s66 = sphi 0, %s64
      %s67 = sphi 0, %s66
      %s81 = sphi 0, %s67
      %s87 = sphi 0, %s89
      %s90 = sphi 0, %s87
      %s91 = sphi 0, %s90
      %s107 = sphi 0, %s91
    $region4: #{spiking_transformer_forward.8} parent=1 // loop_header_branch
      %12 = sbr.rel (%p10) target = $region8
    $region5: #{spiking_transformer_forward.8} parent=1 // loop_body
      %s14 = ssub.s32 %s9, 1
      %s15 = ssub.s32 %s9, 2
      %s16 = sadd.s32 %s9, 1
      %s17 = ssub.s32 %s9, %s16
      %p18 = scmp.eq.s32.totalorder %s17, 0
      %s20 = sadd.s32 %s19, 1
      %s21 = scalar_select %p18, %s19, %s20
      %p24 = pneg %p18
      %p25 = scmp.eq.s32.totalorder %s9, 3
      %p26 = por %p24, %p25
      %p27 = scmp.ne.s32.totalorder %s19, %s22
      %p28 = scmp.eq.s32.totalorder %s9, 0
      %p29 = por %p27, %p28
      %p30 = scmp.ne.s32.totalorder %s19, %s22
      %p31 = scmp.eq.s32.totalorder %s14, 3
      %p32 = por %p30, %p31
      %p33 = scmp.ne.s32.totalorder %s22, %s23
      %p34 = scmp.eq.s32.totalorder %s14, 0
      %p35 = por %p33, %p34
      %p36 = scmp.ne.s32.totalorder %s22, %s23
      %p37 = scmp.eq.s32.totalorder %s15, 3
      %p38 = por %p36, %p37
      %p40 = scmp.ne.s32.totalorder %s23, %s39
      %p41 = scmp.eq.s32.totalorder %s15, 0
      %p42 = por %p40, %p41
      %s44 = sadd.s32 %s43, 1
      %p47 = scmp.eq.s32.totalorder %s9, 3
      %p48 = scmp.ne.s32.totalorder %s43, %s45
      %p49 = scmp.eq.s32.totalorder %s9, 0
      %p50 = por %p48, %p49
      %p51 = scmp.ne.s32.totalorder %s43, %s45
      %p52 = scmp.eq.s32.totalorder %s14, 3
      %p53 = por %p51, %p52
      %p54 = scmp.ne.s32.totalorder %s45, %s46
      %p55 = scmp.eq.s32.totalorder %s14, 0
      %p56 = por %p54, %p55
      %p57 = scmp.ne.s32.totalorder %s45, %s46
      %p58 = scmp.eq.s32.totalorder %s15, 3
      %p59 = por %p57, %p58
      %p61 = scmp.ne.s32.totalorder %s46, %s60
      %p62 = scmp.eq.s32.totalorder %s15, 0
      %p63 = por %p61, %p62
      %s65 = sadd.s32 %s64, 1
      %p68 = scmp.eq.s32.totalorder %s9, 3
      %p69 = scmp.ne.s32.totalorder %s64, %s66
      %p70 = scmp.eq.s32.totalorder %s9, 0
      %p71 = por %p69, %p70
      %p72 = scmp.ne.s32.totalorder %s64, %s66
      %p73 = scmp.eq.s32.totalorder %s14, 3
      %p74 = por %p72, %p73
      %p75 = scmp.ne.s32.totalorder %s66, %s67
      %p76 = scmp.eq.s32.totalorder %s14, 0
      %p77 = por %p75, %p76
      %p78 = scmp.ne.s32.totalorder %s66, %s67
      %p79 = scmp.eq.s32.totalorder %s15, 3
      %p80 = por %p78, %p79
      %p82 = scmp.ne.s32.totalorder %s67, %s81
      %p83 = scmp.eq.s32.totalorder %s15, 0
      %p84 = por %p82, %p83
      %s85 = ssub.s32 %s9, %s16
      %p86 = scmp.eq.s32.totalorder %s85, 0
      %s88 = sadd.s32 %s87, 1
      %s89 = scalar_select %p86, %s87, %s88
      %p92 = pneg %p86
      %p93 = scmp.eq.s32.totalorder %s9, 3
      %p94 = por %p92, %p93
      %p95 = scmp.ne.s32.totalorder %s87, %s90
      %p96 = scmp.eq.s32.totalorder %s9, 0
      %p97 = por %p95, %p96
      %p98 = scmp.ne.s32.totalorder %s87, %s90
      %p99 = scmp.eq.s32.totalorder %s14, 3
      %p100 = por %p98, %p99
      %p101 = scmp.ne.s32.totalorder %s90, %s91
      %p102 = scmp.eq.s32.totalorder %s14, 0
      %p103 = por %p101, %p102
      %p104 = scmp.ne.s32.totalorder %s90, %s91
      %p105 = scmp.eq.s32.totalorder %s15, 3
      %p106 = por %p104, %p105
      %p108 = scmp.ne.s32.totalorder %s91, %s107
      %p109 = scmp.eq.s32.totalorder %s15, 0
      %p110 = por %p108, %p109
      %p111 = scmp.le.s32.totalorder 1, %s9
      %p112 = scmp.lt.s32.totalorder %s9, 5
      %p113 = pnand %p111, %p112
      %p114 = pneg %p113
      // Predicated region
      $region9: #{spiking_transformer_forward.8} parent=5 // pred_check
        _
      $region10: #{spiking_transformer_forward.8} parent=5 // pred_check_branch
        %116 = sbr.rel (%p113) target = $region12
      $region11: #{spiking_transformer_forward.8} parent=5 // pred_region
        %s117 = ssub.s32 %s9, 1
        // Predicated region
        $region13: #{spiking_transformer_forward.8} parent=11 // pred_check
          %p118 = pneg %p56
        $region14: #{spiking_transformer_forward.8} parent=11 // pred_check_branch
          %120 = sbr.rel (%p118) target = $region16
        $region15: #{spiking_transformer_forward.8} parent=11 // pred_region
          _
        $region16: #{spiking_transformer_forward.8} parent=11 // pred_fallthru
          _
        // Predicated region
        $region17: #{spiking_transformer_forward.8} parent=11 // pred_check
          %p121 = pneg %p77
        $region18: #{spiking_transformer_forward.8} parent=11 // pred_check_branch
          %123 = sbr.rel (%p121) target = $region20
        $region19: #{spiking_transformer_forward.8} parent=11 // pred_region
          _
        $region20: #{spiking_transformer_forward.8} parent=11 // pred_fallthru
          _
      $region12: #{spiking_transformer_forward.8} parent=5 // pred_fallthru
        _
      %p124 = scmp.lt.s32.totalorder %s9, 4
      // Predicated region
      $region21: #{spiking_transformer_forward.8} parent=5 // pred_check
        %p125 = pneg %p124
      $region22: #{spiking_transformer_forward.8} parent=5 // pred_check_branch
        %127 = sbr.rel (%p125) target = $region24
      $region23: #{spiking_transformer_forward.8} parent=5 // pred_region
        // Predicated region
        $region25: #{spiking_transformer_forward.8} parent=23 // pred_check
          %p128 = pneg %p29
        $region26: #{spiking_transformer_forward.8} parent=23 // pred_check_branch
          %130 = sbr.rel (%p128) target = $region28
        $region27: #{spiking_transformer_forward.8} parent=23 // pred_region
          %s131 = sand.u32 %s19, 1
          %s132 = sand.u32 %s19, 1
          %s133 = smul.addr %s132, 64
          %s134 = scalar_lea.vmem [#allocation4], %s133
          %s135 = smul.u32 4, %s9
          %s136 = smul.addr %s135, 4
          %s137 = scalar_lea.vmem %s0, %s136
          // Predicated region
          $region29: #{spiking_transformer_forward.8} parent=27 // pred_check
            _
          $region30: #{spiking_transformer_forward.8} parent=27 // pred_check_branch
            %139 = sbr.rel (0) target = $region32
          $region31: #{spiking_transformer_forward.8} parent=27 // pred_region
            // Predicated region
            $region33: #{spiking_transformer_forward.8} parent=31 // pred_check
              _
            $region34: #{spiking_transformer_forward.8} parent=31 // pred_check_branch
              %141 = sbr.rel target = $region36
            $region35: #{spiking_transformer_forward.8} parent=31 // pred_region
              // Predicated region
              $region48: #{spiking_transformer_forward.8} parent=35 // pred_check
                _
              $region49: #{spiking_transformer_forward.8} parent=35 // pred_check_branch
                %186 = sbr.rel (0) target = $region51
              $region50: #{spiking_transformer_forward.8} parent=35 // pred_region
                loop: start=0, step=1, limit=1
                $region52: #{spiking_transformer_forward.8} parent=50 // loop_pre_header
                  _
                $region53: #{spiking_transformer_forward.8} parent=50 // loop_header
                  %s188 = sphi 0, %s192
                  %p189 = scmp.ge.s32.totalorder %s188, 1
                  %s193 = sphi %s137, %s137
                  %s194 = sphi %s134, %s134
                $region54: #{spiking_transformer_forward.8} parent=50 // loop_header_branch
                  %191 = sbr.rel (%p189) target = $region58
                $region55: #{spiking_transformer_forward.8} parent=50 // loop_body
                  _
                $region56: #{spiking_transformer_forward.8} parent=50 // loop_footer
                  %s192 = sadd.s32 1, %s188
                $region57: #{spiking_transformer_forward.8} parent=50 // loop_footer_branch
                  %187 = sbr.rel target = $region53
                $region58: #{spiking_transformer_forward.8} parent=50 // loop_exit
                  _
                loop: start=0, step=1, limit=1
                $region59: #{spiking_transformer_forward.8} parent=50 // loop_pre_header
                  _
                $region60: #{spiking_transformer_forward.8} parent=50 // loop_header
                  %s197 = sphi 0, %s201
                  %p198 = scmp.ge.s32.totalorder %s197, 1
                  %s202 = sphi %s137, %s137
                  %s203 = sphi %s134, %s134
                $region61: #{spiking_transformer_forward.8} parent=50 // loop_header_branch
                  %200 = sbr.rel (%p198) target = $region65
                $region62: #{spiking_transformer_forward.8} parent=50 // loop_body
                  %v204 = vld [vmem:[%s202] sm:$0xf]
                  %205 = vst [vmem:[%s203] sm:$0xf] %v204
                  %v206 = vld [vmem:[%s202 + $0x4] sm:$0xf]
                  %207 = vst [vmem:[%s203 + $0x4] sm:$0xf] %v206
                  %v208 = vld [vmem:[%s202 + $0x8] sm:$0xf]
                  %209 = vst [vmem:[%s203 + $0x8] sm:$0xf] %v208
                  %v210 = vld [vmem:[%s202 + $0xc] sm:$0xf]
                  %211 = vst [vmem:[%s203 + $0xc] sm:$0xf] %v210
                  %v212 = vld [vmem:[%s202 + $0x40] sm:$0xf]
                  %213 = vst [vmem:[%s203 + $0x10] sm:$0xf] %v212
                  %v214 = vld [vmem:[%s202 + $0x44] sm:$0xf]
                  %215 = vst [vmem:[%s203 + $0x14] sm:$0xf] %v214
                  %v216 = vld [vmem:[%s202 + $0x48] sm:$0xf]
                  %217 = vst [vmem:[%s203 + $0x18] sm:$0xf] %v216
                  %v218 = vld [vmem:[%s202 + $0x4c] sm:$0xf]
                  %219 = vst [vmem:[%s203 + $0x1c] sm:$0xf] %v218
                  %v220 = vld [vmem:[%s202 + $0x80] sm:$0xf]
                  %221 = vst [vmem:[%s203 + $0x20] sm:$0xf] %v220
                  %v222 = vld [vmem:[%s202 + $0x84] sm:$0xf]
                  %223 = vst [vmem:[%s203 + $0x24] sm:$0xf] %v222
                  %v224 = vld [vmem:[%s202 + $0x88] sm:$0xf]
                  %225 = vst [vmem:[%s203 + $0x28] sm:$0xf] %v224
                  %v226 = vld [vmem:[%s202 + $0x8c] sm:$0xf]
                  %227 = vst [vmem:[%s203 + $0x2c] sm:$0xf] %v226
                  %v228 = vld [vmem:[%s202 + $0xc0] sm:$0xf]
                  %229 = vst [vmem:[%s203 + $0x30] sm:$0xf] %v228
                  %v230 = vld [vmem:[%s202 + $0xc4] sm:$0xf]
                  %231 = vst [vmem:[%s203 + $0x34] sm:$0xf] %v230
                  %v232 = vld [vmem:[%s202 + $0xc8] sm:$0xf]
                  %233 = vst [vmem:[%s203 + $0x38] sm:$0xf] %v232
                  %v234 = vld [vmem:[%s202 + $0xcc] sm:$0xf]
                  %235 = vst [vmem:[%s203 + $0x3c] sm:$0xf] %v234
                $region63: #{spiking_transformer_forward.8} parent=50 // loop_footer
                  %s201 = sadd.s32 1, %s197
                $region64: #{spiking_transformer_forward.8} parent=50 // loop_footer_branch
                  %196 = sbr.rel target = $region60
                $region65: #{spiking_transformer_forward.8} parent=50 // loop_exit
                  _
              $region51: #{spiking_transformer_forward.8} parent=35 // pred_fallthru
                _
            $region36: #{spiking_transformer_forward.8} parent=31 // pred_fallthru
              _
            // Predicated region
            $region37: #{spiking_transformer_forward.8} parent=31 // pred_check
              _
            $region38: #{spiking_transformer_forward.8} parent=31 // pred_check_branch
              %143 = sbr.rel (0) target = $region40
            $region39: #{spiking_transformer_forward.8} parent=31 // pred_region
              loop: start=0, step=1, limit=1
              $region41: #{spiking_transformer_forward.8} parent=39 // loop_pre_header
                _
              $region42: #{spiking_transformer_forward.8} parent=39 // loop_header
                %s146 = sphi 0, %s150
                %p147 = scmp.ge.s32.totalorder %s146, 1
                %s151 = sphi %s137, %s137
                %s152 = sphi %s134, %s134
              $region43: #{spiking_transformer_forward.8} parent=39 // loop_header_branch
                %149 = sbr.rel (%p147) target = $region47
              $region44: #{spiking_transformer_forward.8} parent=39 // loop_body
                %v153 = vld [vmem:[%s151] sm:$0xf]
                %154 = vst [vmem:[%s152] sm:$0xf] %v153
                %v155 = vld [vmem:[%s151 + $0x4] sm:$0xf]
                %156 = vst [vmem:[%s152 + $0x4] sm:$0xf] %v155
                %v157 = vld [vmem:[%s151 + $0x8] sm:$0xf]
                %158 = vst [vmem:[%s152 + $0x8] sm:$0xf] %v157
                %v159 = vld [vmem:[%s151 + $0xc] sm:$0xf]
                %160 = vst [vmem:[%s152 + $0xc] sm:$0xf] %v159
                %v161 = vld [vmem:[%s151 + $0x40] sm:$0xf]
                %162 = vst [vmem:[%s152 + $0x10] sm:$0xf] %v161
                %v163 = vld [vmem:[%s151 + $0x44] sm:$0xf]
                %164 = vst [vmem:[%s152 + $0x14] sm:$0xf] %v163
                %v165 = vld [vmem:[%s151 + $0x48] sm:$0xf]
                %166 = vst [vmem:[%s152 + $0x18] sm:$0xf] %v165
                %v167 = vld [vmem:[%s151 + $0x4c] sm:$0xf]
                %168 = vst [vmem:[%s152 + $0x1c] sm:$0xf] %v167
                %v169 = vld [vmem:[%s151 + $0x80] sm:$0xf]
                %170 = vst [vmem:[%s152 + $0x20] sm:$0xf] %v169
                %v171 = vld [vmem:[%s151 + $0x84] sm:$0xf]
                %172 = vst [vmem:[%s152 + $0x24] sm:$0xf] %v171
                %v173 = vld [vmem:[%s151 + $0x88] sm:$0xf]
                %174 = vst [vmem:[%s152 + $0x28] sm:$0xf] %v173
                %v175 = vld [vmem:[%s151 + $0x8c] sm:$0xf]
                %176 = vst [vmem:[%s152 + $0x2c] sm:$0xf] %v175
                %v177 = vld [vmem:[%s151 + $0xc0] sm:$0xf]
                %178 = vst [vmem:[%s152 + $0x30] sm:$0xf] %v177
                %v179 = vld [vmem:[%s151 + $0xc4] sm:$0xf]
                %180 = vst [vmem:[%s152 + $0x34] sm:$0xf] %v179
                %v181 = vld [vmem:[%s151 + $0xc8] sm:$0xf]
                %182 = vst [vmem:[%s152 + $0x38] sm:$0xf] %v181
                %v183 = vld [vmem:[%s151 + $0xcc] sm:$0xf]
                %184 = vst [vmem:[%s152 + $0x3c] sm:$0xf] %v183
              $region45: #{spiking_transformer_forward.8} parent=39 // loop_footer
                %s150 = sadd.s32 1, %s146
              $region46: #{spiking_transformer_forward.8} parent=39 // loop_footer_branch
                %145 = sbr.rel target = $region42
              $region47: #{spiking_transformer_forward.8} parent=39 // loop_exit
                _
            $region40: #{spiking_transformer_forward.8} parent=31 // pred_fallthru
              _
          $region32: #{spiking_transformer_forward.8} parent=27 // pred_fallthru
            _
          %236 = vnop
        $region28: #{spiking_transformer_forward.8} parent=23 // pred_fallthru
          _
      $region24: #{spiking_transformer_forward.8} parent=5 // pred_fallthru
        _
      %p237 = scmp.le.s32.totalorder 1, %s9
      %p238 = scmp.lt.s32.totalorder %s9, 5
      %p239 = pnand %p237, %p238
      %p240 = pneg %p239
      // Predicated region
      $region66: #{spiking_transformer_forward.8} parent=5 // pred_check
        _
      $region67: #{spiking_transformer_forward.8} parent=5 // pred_check_branch
        %242 = sbr.rel (%p239) target = $region69
      $region68: #{spiking_transformer_forward.8} parent=5 // pred_region
        %s243 = ssub.s32 %s9, 1
        %s244 = sand.u32 %s22, 1
        %s245 = sand.u32 %s22, 1
        %s246 = smul.addr %s245, 64
        %s247 = scalar_lea.vmem [#allocation4], %s246
        // Predicated region
        $region70: #{spiking_transformer_forward.8} parent=68 // pred_check
          %p248 = pneg %p35
        $region71: #{spiking_transformer_forward.8} parent=68 // pred_check_branch
          %250 = sbr.rel (%p248) target = $region73
        $region72: #{spiking_transformer_forward.8} parent=68 // pred_region
          _
        $region73: #{spiking_transformer_forward.8} parent=68 // pred_fallthru
          _
        %s251 = sand.u32 %s22, 1
        %s252 = sand.u32 %s22, 1
        %s253 = smul.addr %s252, 64
        %s254 = scalar_lea.vmem [#allocation4], %s253
        %p255 = pneg %p35
        %p256 = pneg %p32
        %p257 = pneg %p56
        %p258 = pneg %p53
        %p259 = pneg %p77
        %p260 = pneg %p74
        %p261 = pneg %p103
        %p262 = pneg %p100
        %s263 = sand.u32 %s90, 1
        %s264 = sand.u32 %s90, 1
        %s265 = smul.addr %s264, 64
        %s266 = scalar_lea.vmem [#allocation5], %s265
        %s267 = smul.u32 4, %s14
        %s268 = smul.u32 4, %s14
        %v270 = vld [vmem:[%s247] sm:$0xf]
        %v271 = vld [vmem:[%s247 + $0x4] sm:$0xf]
        %v272 = vld [vmem:[%s247 + $0x8] sm:$0xf]
        %v273 = vld [vmem:[%s247 + $0xc] sm:$0xf]
        %v274 = vld [vmem:[%s247 + $0x10] sm:$0xf]
        %v275 = vld [vmem:[%s247 + $0x14] sm:$0xf]
        %v276 = vld [vmem:[%s247 + $0x18] sm:$0xf]
        %v277 = vld [vmem:[%s247 + $0x1c] sm:$0xf]
        %v278 = vld [vmem:[%s247 + $0x20] sm:$0xf]
        %v279 = vld [vmem:[%s247 + $0x24] sm:$0xf]
        %v280 = vld [vmem:[%s247 + $0x28] sm:$0xf]
        %v281 = vld [vmem:[%s247 + $0x2c] sm:$0xf]
        %v282 = vld [vmem:[%s247 + $0x30] sm:$0xf]
        %v283 = vld [vmem:[%s247 + $0x34] sm:$0xf]
        %v284 = vld [vmem:[%s247 + $0x38] sm:$0xf]
        %v285 = vld [vmem:[%s247 + $0x3c] sm:$0xf]
        %v286 = vld [vmem:[%s1] sm:$0xf]
        %v287 = vld [vmem:[%s1 + $0x4] sm:$0xf]
        %v288 = vld [vmem:[%s1 + $0x8] sm:$0xf]
        %v289 = vld [vmem:[%s1 + $0xc] sm:$0xf]
        %v290 = vld [vmem:[%s2] sm:$0x1]
        %v292 = vlaneseq
        %v293 = vshrl.u32 %v292, 7
        %v294 = vsub.s32 0, %v293
        %v295 = vrot.slane %v290, %v294
        %v313 = vunpack.c.l.b16 %v270
        %v314 = vunpack.c.l.b16 %v271
        %v315 = vunpack.c.l.b16 %v272
        %v316 = vunpack.c.l.b16 %v273
        %v317 = vunpack.c.l.b16 %v274
        %v318 = vunpack.c.l.b16 %v275
        %v319 = vunpack.c.l.b16 %v276
        %v320 = vunpack.c.l.b16 %v277
        %v321 = vunpack.c.l.b16 %v278
        %v322 = vunpack.c.l.b16 %v279
        %v323 = vunpack.c.l.b16 %v280
        %v324 = vunpack.c.l.b16 %v281
        %v325 = vunpack.c.l.b16 %v282
        %v326 = vunpack.c.l.b16 %v283
        %v327 = vunpack.c.l.b16 %v284
        %v328 = vunpack.c.l.b16 %v285
        %v329 = vpack.c.b16 %v314, %v313
        %v330 = vpack.c.b16 %v316, %v315
        %v331 = vpack.c.b16 %v318, %v317
        %v332 = vpack.c.b16 %v320, %v319
        %v333 = vpack.c.b16 %v322, %v321
        %v334 = vpack.c.b16 %v324, %v323
        %v335 = vpack.c.b16 %v326, %v325
        %v336 = vpack.c.b16 %v328, %v327
        %v341 = vunpack.c.l.b16 %v286
        %v342 = vunpack.c.l.b16 %v287
        %v343 = vunpack.c.l.b16 %v288
        %v344 = vunpack.c.l.b16 %v289
        %v345 = vpack.c.b16 %v342, %v341
        %v346 = vpack.c.b16 %v344, %v343
        %vm349 = vcmask 261120
        %v351 = vsel %vm349, %v329, 0
        %v354 = vsel %vm349, %v330, 0
        %v357 = vsel %vm349, %v331, 0
        %v360 = vsel %vm349, %v332, 0
        %v363 = vsel %vm349, %v333, 0
        %v366 = vsel %vm349, %v334, 0
        %v369 = vsel %vm349, %v335, 0
        %v372 = vsel %vm349, %v336, 0
        %374 = vmatprep.subr.bf16.mxu0 0
        %375 = vmatpush1.bf16.msra.mxu0 %v345
        %376 = vmatprep.subr.bf16.mxu0 0
        %377 = vmatpush1.bf16.msra.mxu0 %v346
        %378 = vmatprep.subr.bf16.mxu0 0
        %379 = vmatpush1.bf16.msra.mxu0 0
        %380 = vmatprep.subr.bf16.mxu0 0
        %381 = vmatpush1.bf16.msra.mxu0 0
        %382 = vmatprep.subr.bf16.mxu0 0
        %383 = vmatpush1.bf16.msra.mxu0 0
        %384 = vmatprep.subr.bf16.mxu0 0
        %385 = vmatpush1.bf16.msra.mxu0 0
        %386 = vmatprep.subr.bf16.mxu0 0
        %387 = vmatpush1.bf16.msra.mxu0 0
        %388 = vmatprep.subr.bf16.mxu0 0
        %389 = vmatpush1.bf16.msra.mxu0 0
        %390 = vmatprep.subr.bf16.mxu0 0
        %391 = vmatpush1.bf16.msra.mxu0 0
        %392 = vmatprep.subr.bf16.mxu0 0
        %393 = vmatpush1.bf16.msra.mxu0 0
        %394 = vmatprep.subr.bf16.mxu0 0
        %395 = vmatpush1.bf16.msra.mxu0 0
        %396 = vmatprep.subr.bf16.mxu0 0
        %397 = vmatpush1.bf16.msra.mxu0 0
        %398 = vmatprep.subr.bf16.mxu0 0
        %399 = vmatpush1.bf16.msra.mxu0 0
        %400 = vmatprep.subr.bf16.mxu0 0
        %401 = vmatpush1.bf16.msra.mxu0 0
        %402 = vmatprep.subr.bf16.mxu0 0
        %403 = vmatpush1.bf16.msra.mxu0 0
        %404 = vmatprep.subr.bf16.mxu0 0
        %405 = vmatpush1.bf16.msra.mxu0 0
        %406 = vmatprep.mubr.bf16.mxu0 0
        %407 = vmatmul.mubr.bf16.gmra.mrb[0].mxu0 %v351
        %v408 = vpop.f32.mrb[0].mxu0
        %v409 = vadd.f32 %v295, %v408
        %v410 = vpop.f32.mrb[0].mxu0
        %v411 = vpop.f32.mrb[0].mxu0
        %v412 = vadd.f32 %v295, %v411
        %v413 = vpop.f32.mrb[0].mxu0
        %414 = vmatprep.mubr.bf16.mxu0 0
        %415 = vmatmul.mubr.bf16.gmra.mrb[0].mxu0 %v354
        %v416 = vpop.f32.mrb[0].mxu0
        %v417 = vadd.f32 %v295, %v416
        %v418 = vpop.f32.mrb[0].mxu0
        %v419 = vpop.f32.mrb[0].mxu0
        %v420 = vadd.f32 %v295, %v419
        %v421 = vpop.f32.mrb[0].mxu0
        %422 = vmatprep.mubr.bf16.mxu0 0
        %423 = vmatmul.mubr.bf16.gmra.mrb[0].mxu0 %v357
        %v424 = vpop.f32.mrb[0].mxu0
        %v425 = vadd.f32 %v295, %v424
        %v426 = vpop.f32.mrb[0].mxu0
        %v427 = vpop.f32.mrb[0].mxu0
        %v428 = vadd.f32 %v295, %v427
        %v429 = vpop.f32.mrb[0].mxu0
        %430 = vmatprep.mubr.bf16.mxu0 0
        %431 = vmatmul.mubr.bf16.gmra.mrb[0].mxu0 %v360
        %v432 = vpop.f32.mrb[0].mxu0
        %v433 = vadd.f32 %v295, %v432
        %v434 = vpop.f32.mrb[0].mxu0
        %v435 = vpop.f32.mrb[0].mxu0
        %v436 = vadd.f32 %v295, %v435
        %v437 = vpop.f32.mrb[0].mxu0
        %438 = vmatprep.mubr.bf16.mxu0 0
        %439 = vmatmul.mubr.bf16.gmra.mrb[0].mxu0 %v363
        %v440 = vpop.f32.mrb[0].mxu0
        %v441 = vadd.f32 %v295, %v440
        %v442 = vpop.f32.mrb[0].mxu0
        %v443 = vpop.f32.mrb[0].mxu0
        %v444 = vadd.f32 %v295, %v443
        %v445 = vpop.f32.mrb[0].mxu0
        %446 = vmatprep.mubr.bf16.mxu0 0
        %447 = vmatmul.mubr.bf16.gmra.mrb[0].mxu0 %v366
        %v448 = vpop.f32.mrb[0].mxu0
        %v449 = vadd.f32 %v295, %v448
        %v450 = vpop.f32.mrb[0].mxu0
        %v451 = vpop.f32.mrb[0].mxu0
        %v452 = vadd.f32 %v295, %v451
        %v453 = vpop.f32.mrb[0].mxu0
        %454 = vmatprep.mubr.bf16.mxu0 0
        %455 = vmatmul.mubr.bf16.gmra.mrb[0].mxu0 %v369
        %v456 = vpop.f32.mrb[0].mxu0
        %v457 = vadd.f32 %v295, %v456
        %v458 = vpop.f32.mrb[0].mxu0
        %v459 = vpop.f32.mrb[0].mxu0
        %v460 = vadd.f32 %v295, %v459
        %v461 = vpop.f32.mrb[0].mxu0
        %462 = vmatprep.mubr.bf16.mxu0 0
        %463 = vmatmul.mubr.bf16.gmra.mrb[0].mxu0 %v372
        %v464 = vpop.f32.mrb[0].mxu0
        %v465 = vadd.f32 %v295, %v464
        %v466 = vpop.f32.mrb[0].mxu0
        %v467 = vpop.f32.mrb[0].mxu0
        %v468 = vadd.f32 %v295, %v467
        %v469 = vpop.f32.mrb[0].mxu0
        %470 = vdwg.mxu0
        %471 = vst [vmem:[#allocation2] sm:$0xff] %v409
        %472 = vst [vmem:[#allocation2 + $0x8] sm:$0xff] %v412
        %473 = vst [vmem:[#allocation2 + $0x10] sm:$0xff] %v417
        %474 = vst [vmem:[#allocation2 + $0x18] sm:$0xff] %v420
        %475 = vst [vmem:[#allocation2 + $0x20] sm:$0xff] %v425
        %476 = vst [vmem:[#allocation2 + $0x28] sm:$0xff] %v428
        %477 = vst [vmem:[#allocation2 + $0x30] sm:$0xff] %v433
        %478 = vst [vmem:[#allocation2 + $0x38] sm:$0xff] %v436
        %479 = vst [vmem:[#allocation2 + $0x40] sm:$0xff] %v441
        %480 = vst [vmem:[#allocation2 + $0x48] sm:$0xff] %v444
        %481 = vst [vmem:[#allocation2 + $0x50] sm:$0xff] %v449
        %482 = vst [vmem:[#allocation2 + $0x58] sm:$0xff] %v452
        %483 = vst [vmem:[#allocation2 + $0x60] sm:$0xff] %v457
        %484 = vst [vmem:[#allocation2 + $0x68] sm:$0xff] %v460
        %485 = vst [vmem:[#allocation2 + $0x70] sm:$0xff] %v465
        %486 = vst [vmem:[#allocation2 + $0x78] sm:$0xff] %v468
        %487 = vst [vmem:[#allocation3] sm:$0xff] 0.0
        %488 = vst [vmem:[#allocation3 + $0x8] sm:$0xff] 0.0
        %489 = vst [vmem:[#allocation3 + $0x10] sm:$0xff] 0.0
        %490 = vst [vmem:[#allocation3 + $0x18] sm:$0xff] 0.0
        %v491 = vld [vmem:[#allocation3] sm:$0xff]
        %v492 = vld [vmem:[#allocation3 + $0x8] sm:$0xff]
        %v493 = vld [vmem:[#allocation3 + $0x10] sm:$0xff]
        %v494 = vld [vmem:[#allocation3 + $0x18] sm:$0xff]
        %v495 = vld [vmem:[#allocation2] sm:$0xff]
        %v496 = vld [vmem:[#allocation2 + $0x8] sm:$0xff]
        %v497 = vld [vmem:[#allocation2 + $0x10] sm:$0xff]
        %v498 = vld [vmem:[#allocation2 + $0x18] sm:$0xff]
        %v499 = vadd.f32 %v491, %v495
        %v500 = vadd.f32 %v492, %v496
        %v501 = vadd.f32 %v493, %v497
        %v502 = vadd.f32 %v494, %v498
        %v503 = vmul.f32 %v499, 0.5
        %v504 = vmul.f32 %v500, 0.5
        %v505 = vmul.f32 %v501, 0.5
        %v506 = vmul.f32 %v502, 0.5
        %vm507 = vcmp.ge.f32.partialorder %v503, 1.0
        %vm508 = vcmp.ge.f32.partialorder %v504, 1.0
        %vm509 = vcmp.ge.f32.partialorder %v505, 1.0
        %vm510 = vcmp.ge.f32.partialorder %v506, 1.0
        %v511 = vsel %vm507, 1, 0
        %v512 = vsel %vm508, 1, 0
        %v513 = vsel %vm509, 1, 0
        %v514 = vsel %vm510, 1, 0
        %v515 = vcvt.s32.f32 %v511
        %v516 = vcvt.s32.f32 %v512
        %v517 = vcvt.s32.f32 %v513
        %v518 = vcvt.s32.f32 %v514
        %v519 = vpack.c.bf16 %v516, %v515
        %v520 = vpack.c.bf16 %v518, %v517
        %v523 = vunpack.c.l.b16 %v519
        %v524 = vunpack.c.h.b16 %v519
        %v525 = vunpack.c.l.b16 %v520
        %v526 = vunpack.c.h.b16 %v520
        %v527 = vpack.c.b16 %v523, %v523
        %v528 = vpack.c.b16 %v524, %v524
        %v529 = vpack.c.b16 %v525, %v525
        %v530 = vpack.c.b16 %v526, %v526
        %535 = vst [vmem:[%s266] sm:$0xf] %v527
        %536 = vst [vmem:[%s266 + $0x4] sm:$0xf] %v528
        %537 = vst [vmem:[%s266 + $0x8] sm:$0xf] %v529
        %538 = vst [vmem:[%s266 + $0xc] sm:$0xf] %v530
        %v539 = vsel %vm507, 0.0, %v503
        %v540 = vsel %vm508, 0.0, %v504
        %v541 = vsel %vm509, 0.0, %v505
        %v542 = vsel %vm510, 0.0, %v506
        %543 = vst [vmem:[#allocation3] sm:$0xff] %v539
        %544 = vst [vmem:[#allocation3 + $0x8] sm:$0xff] %v540
        %545 = vst [vmem:[#allocation3 + $0x10] sm:$0xff] %v541
        %546 = vst [vmem:[#allocation3 + $0x18] sm:$0xff] %v542
        %v547 = vld [vmem:[#allocation3] sm:$0xff]
        %v548 = vld [vmem:[#allocation3 + $0x8] sm:$0xff]
        %v549 = vld [vmem:[#allocation3 + $0x10] sm:$0xff]
        %v550 = vld [vmem:[#allocation3 + $0x18] sm:$0xff]
        %v551 = vld [vmem:[#allocation2 + $0x20] sm:$0xff]
        %v552 = vld [vmem:[#allocation2 + $0x28] sm:$0xff]
        %v553 = vld [vmem:[#allocation2 + $0x30] sm:$0xff]
        %v554 = vld [vmem:[#allocation2 + $0x38] sm:$0xff]
        %v555 = vadd.f32 %v547, %v551
        %v556 = vadd.f32 %v548, %v552
        %v557 = vadd.f32 %v549, %v553
        %v558 = vadd.f32 %v550, %v554
        %v559 = vmul.f32 %v555, 0.5
        %v560 = vmul.f32 %v556, 0.5
        %v561 = vmul.f32 %v557, 0.5
        %v562 = vmul.f32 %v558, 0.5
        %vm563 = vcmp.ge.f32.partialorder %v559, 1.0
        %vm564 = vcmp.ge.f32.partialorder %v560, 1.0
        %vm565 = vcmp.ge.f32.partialorder %v561, 1.0
        %vm566 = vcmp.ge.f32.partialorder %v562, 1.0
        %v567 = vsel %vm563, 1, 0
        %v568 = vsel %vm564, 1, 0
        %v569 = vsel %vm565, 1, 0
        %v570 = vsel %vm566, 1, 0
        %v571 = vcvt.s32.f32 %v567
        %v572 = vcvt.s32.f32 %v568
        %v573 = vcvt.s32.f32 %v569
        %v574 = vcvt.s32.f32 %v570
        %v575 = vpack.c.bf16 %v572, %v571
        %v576 = vpack.c.bf16 %v574, %v573
        %v579 = vunpack.c.l.b16 %v575
        %v580 = vunpack.c.h.b16 %v575
        %v581 = vunpack.c.l.b16 %v576
        %v582 = vunpack.c.h.b16 %v576
        %v583 = vpack.c.b16 %v579, %v579
        %v584 = vpack.c.b16 %v580, %v580
        %v585 = vpack.c.b16 %v581, %v581
        %v586 = vpack.c.b16 %v582, %v582
        %s591 = scalar_lea.vmem %s266, 16 [#allocation5]
        %592 = vst [vmem:[%s591] sm:$0xf] %v583
        %593 = vst [vmem:[%s591 + $0x4] sm:$0xf] %v584
        %594 = vst [vmem:[%s591 + $0x8] sm:$0xf] %v585
        %595 = vst [vmem:[%s591 + $0xc] sm:$0xf] %v586
        %v596 = vsel %vm563, 0.0, %v559
        %v597 = vsel %vm564, 0.0, %v560
        %v598 = vsel %vm565, 0.0, %v561
        %v599 = vsel %vm566, 0.0, %v562
        %600 = vst [vmem:[#allocation3] sm:$0xff] %v596
        %601 = vst [vmem:[#allocation3 + $0x8] sm:$0xff] %v597
        %602 = vst [vmem:[#allocation3 + $0x10] sm:$0xff] %v598
        %603 = vst [vmem:[#allocation3 + $0x18] sm:$0xff] %v599
        %v604 = vld [vmem:[#allocation3] sm:$0xff]
        %v605 = vld [vmem:[#allocation3 + $0x8] sm:$0xff]
        %v606 = vld [vmem:[#allocation3 + $0x10] sm:$0xff]
        %v607 = vld [vmem:[#allocation3 + $0x18] sm:$0xff]
        %v608 = vld [vmem:[#allocation2 + $0x40] sm:$0xff]
        %v609 = vld [vmem:[#allocation2 + $0x48] sm:$0xff]
        %v610 = vld [vmem:[#allocation2 + $0x50] sm:$0xff]
        %v611 = vld [vmem:[#allocation2 + $0x58] sm:$0xff]
        %v612 = vadd.f32 %v604, %v608
        %v613 = vadd.f32 %v605, %v609
        %v614 = vadd.f32 %v606, %v610
        %v615 = vadd.f32 %v607, %v611
        %v616 = vmul.f32 %v612, 0.5
        %v617 = vmul.f32 %v613, 0.5
        %v618 = vmul.f32 %v614, 0.5
        %v619 = vmul.f32 %v615, 0.5
        %vm620 = vcmp.ge.f32.partialorder %v616, 1.0
        %vm621 = vcmp.ge.f32.partialorder %v617, 1.0
        %vm622 = vcmp.ge.f32.partialorder %v618, 1.0
        %vm623 = vcmp.ge.f32.partialorder %v619, 1.0
        %v624 = vsel %vm620, 1, 0
        %v625 = vsel %vm621, 1, 0
        %v626 = vsel %vm622, 1, 0
        %v627 = vsel %vm623, 1, 0
        %v628 = vcvt.s32.f32 %v624
        %v629 = vcvt.s32.f32 %v625
        %v630 = vcvt.s32.f32 %v626
        %v631 = vcvt.s32.f32 %v627
        %v632 = vpack.c.bf16 %v629, %v628
        %v633 = vpack.c.bf16 %v631, %v630
        %v636 = vunpack.c.l.b16 %v632
        %v637 = vunpack.c.h.b16 %v632
        %v638 = vunpack.c.l.b16 %v633
        %v639 = vunpack.c.h.b16 %v633
        %v640 = vpack.c.b16 %v636, %v636
        %v641 = vpack.c.b16 %v637, %v637
        %v642 = vpack.c.b16 %v638, %v638
        %v643 = vpack.c.b16 %v639, %v639
        %s648 = scalar_lea.vmem %s266, 32 [#allocation5]
        %649 = vst [vmem:[%s648] sm:$0xf] %v640
        %650 = vst [vmem:[%s648 + $0x4] sm:$0xf] %v641
        %651 = vst [vmem:[%s648 + $0x8] sm:$0xf] %v642
        %652 = vst [vmem:[%s648 + $0xc] sm:$0xf] %v643
        %v653 = vsel %vm620, 0.0, %v616
        %v654 = vsel %vm621, 0.0, %v617
        %v655 = vsel %vm622, 0.0, %v618
        %v656 = vsel %vm623, 0.0, %v619
        %657 = vst [vmem:[#allocation3] sm:$0xff] %v653
        %658 = vst [vmem:[#allocation3 + $0x8] sm:$0xff] %v654
        %659 = vst [vmem:[#allocation3 + $0x10] sm:$0xff] %v655
        %660 = vst [vmem:[#allocation3 + $0x18] sm:$0xff] %v656
        %v661 = vld [vmem:[#allocation3] sm:$0xff]
        %v662 = vld [vmem:[#allocation3 + $0x8] sm:$0xff]
        %v663 = vld [vmem:[#allocation3 + $0x10] sm:$0xff]
        %v664 = vld [vmem:[#allocation3 + $0x18] sm:$0xff]
        %v665 = vld [vmem:[#allocation2 + $0x60] sm:$0xff]
        %v666 = vld [vmem:[#allocation2 + $0x68] sm:$0xff]
        %v667 = vld [vmem:[#allocation2 + $0x70] sm:$0xff]
        %v668 = vld [vmem:[#allocation2 + $0x78] sm:$0xff]
        %v669 = vadd.f32 %v661, %v665
        %v670 = vadd.f32 %v662, %v666
        %v671 = vadd.f32 %v663, %v667
        %v672 = vadd.f32 %v664, %v668
        %v673 = vmul.f32 %v669, 0.5
        %v674 = vmul.f32 %v670, 0.5
        %v675 = vmul.f32 %v671, 0.5
        %v676 = vmul.f32 %v672, 0.5
        %vm677 = vcmp.ge.f32.partialorder %v673, 1.0
        %vm678 = vcmp.ge.f32.partialorder %v674, 1.0
        %vm679 = vcmp.ge.f32.partialorder %v675, 1.0
        %vm680 = vcmp.ge.f32.partialorder %v676, 1.0
        %v681 = vsel %vm677, 1, 0
        %v682 = vsel %vm678, 1, 0
        %v683 = vsel %vm679, 1, 0
        %v684 = vsel %vm680, 1, 0
        %v685 = vcvt.s32.f32 %v681
        %v686 = vcvt.s32.f32 %v682
        %v687 = vcvt.s32.f32 %v683
        %v688 = vcvt.s32.f32 %v684
        %v689 = vpack.c.bf16 %v686, %v685
        %v690 = vpack.c.bf16 %v688, %v687
        %v693 = vunpack.c.l.b16 %v689
        %v694 = vunpack.c.h.b16 %v689
        %v695 = vunpack.c.l.b16 %v690
        %v696 = vunpack.c.h.b16 %v690
        %v697 = vpack.c.b16 %v693, %v693
        %v698 = vpack.c.b16 %v694, %v694
        %v699 = vpack.c.b16 %v695, %v695
        %v700 = vpack.c.b16 %v696, %v696
        %s705 = scalar_lea.vmem %s266, 48 [#allocation5]
        %706 = vst [vmem:[%s705] sm:$0xf] %v697
        %707 = vst [vmem:[%s705 + $0x4] sm:$0xf] %v698
        %708 = vst [vmem:[%s705 + $0x8] sm:$0xf] %v699
        %709 = vst [vmem:[%s705 + $0xc] sm:$0xf] %v700
        %v710 = vsel %vm677, 0.0, %v673
        %v711 = vsel %vm678, 0.0, %v674
        %v712 = vsel %vm679, 0.0, %v675
        %v713 = vsel %vm680, 0.0, %v676
        %714 = vst [vmem:[#allocation3] sm:$0xff] %v710
        %715 = vst [vmem:[#allocation3 + $0x8] sm:$0xff] %v711
        %716 = vst [vmem:[#allocation3 + $0x10] sm:$0xff] %v712
        %717 = vst [vmem:[#allocation3 + $0x18] sm:$0xff] %v713
        %s718 = sand.u32 %s90, 1
        %s719 = sand.u32 %s90, 1
        %s720 = smul.addr %s719, 64
        %s721 = scalar_lea.vmem [#allocation5], %s720
        // Predicated region
        $region74: #{spiking_transformer_forward.8} parent=68 // pred_check
          %p722 = pneg %p100
        $region75: #{spiking_transformer_forward.8} parent=68 // pred_check_branch
          %724 = sbr.rel (%p722) target = $region77
        $region76: #{spiking_transformer_forward.8} parent=68 // pred_region
          %s725 = smul.u32 4, %s14
          %s726 = smul.addr %s725, 4
          %s727 = scalar_lea.vmem %s3, %s726
          // Predicated region
          $region78: #{spiking_transformer_forward.8} parent=76 // pred_check
            _
          $region79: #{spiking_transformer_forward.8} parent=76 // pred_check_branch
            %729 = sbr.rel (0) target = $region81
          $region80: #{spiking_transformer_forward.8} parent=76 // pred_region
            // Predicated region
            $region82: #{spiking_transformer_forward.8} parent=80 // pred_check
              _
            $region83: #{spiking_transformer_forward.8} parent=80 // pred_check_branch
              %731 = sbr.rel target = $region85
            $region84: #{spiking_transformer_forward.8} parent=80 // pred_region
              // Predicated region
              $region97: #{spiking_transformer_forward.8} parent=84 // pred_check
                _
              $region98: #{spiking_transformer_forward.8} parent=84 // pred_check_branch
                %776 = sbr.rel (0) target = $region100
              $region99: #{spiking_transformer_forward.8} parent=84 // pred_region
                loop: start=0, step=1, limit=1
                $region101: #{spiking_transformer_forward.8} parent=99 // loop_pre_header
                  _
                $region102: #{spiking_transformer_forward.8} parent=99 // loop_header
                  %s778 = sphi 0, %s782
                  %p779 = scmp.ge.s32.totalorder %s778, 1
                  %s783 = sphi %s721, %s721
                  %s784 = sphi %s727, %s727
                $region103: #{spiking_transformer_forward.8} parent=99 // loop_header_branch
                  %781 = sbr.rel (%p779) target = $region107
                $region104: #{spiking_transformer_forward.8} parent=99 // loop_body
                  _
                $region105: #{spiking_transformer_forward.8} parent=99 // loop_footer
                  %s782 = sadd.s32 1, %s778
                $region106: #{spiking_transformer_forward.8} parent=99 // loop_footer_branch
                  %777 = sbr.rel target = $region102
                $region107: #{spiking_transformer_forward.8} parent=99 // loop_exit
                  _
                loop: start=0, step=1, limit=1
                $region108: #{spiking_transformer_forward.8} parent=99 // loop_pre_header
                  _
                $region109: #{spiking_transformer_forward.8} parent=99 // loop_header
                  %s787 = sphi 0, %s791
                  %p788 = scmp.ge.s32.totalorder %s787, 1
                  %s792 = sphi %s721, %s721
                  %s793 = sphi %s727, %s727
                $region110: #{spiking_transformer_forward.8} parent=99 // loop_header_branch
                  %790 = sbr.rel (%p788) target = $region114
                $region111: #{spiking_transformer_forward.8} parent=99 // loop_body
                  %v794 = vld [vmem:[%s792] sm:$0xf]
                  %795 = vst [vmem:[%s793] sm:$0xf] %v794
                  %v796 = vld [vmem:[%s792 + $0x4] sm:$0xf]
                  %797 = vst [vmem:[%s793 + $0x4] sm:$0xf] %v796
                  %v798 = vld [vmem:[%s792 + $0x8] sm:$0xf]
                  %799 = vst [vmem:[%s793 + $0x8] sm:$0xf] %v798
                  %v800 = vld [vmem:[%s792 + $0xc] sm:$0xf]
                  %801 = vst [vmem:[%s793 + $0xc] sm:$0xf] %v800
                  %v802 = vld [vmem:[%s792 + $0x10] sm:$0xf]
                  %803 = vst [vmem:[%s793 + $0x40] sm:$0xf] %v802
                  %v804 = vld [vmem:[%s792 + $0x14] sm:$0xf]
                  %805 = vst [vmem:[%s793 + $0x44] sm:$0xf] %v804
                  %v806 = vld [vmem:[%s792 + $0x18] sm:$0xf]
                  %807 = vst [vmem:[%s793 + $0x48] sm:$0xf] %v806
                  %v808 = vld [vmem:[%s792 + $0x1c] sm:$0xf]
                  %809 = vst [vmem:[%s793 + $0x4c] sm:$0xf] %v808
                  %v810 = vld [vmem:[%s792 + $0x20] sm:$0xf]
                  %811 = vst [vmem:[%s793 + $0x80] sm:$0xf] %v810
                  %v812 = vld [vmem:[%s792 + $0x24] sm:$0xf]
                  %813 = vst [vmem:[%s793 + $0x84] sm:$0xf] %v812
                  %v814 = vld [vmem:[%s792 + $0x28] sm:$0xf]
                  %815 = vst [vmem:[%s793 + $0x88] sm:$0xf] %v814
                  %v816 = vld [vmem:[%s792 + $0x2c] sm:$0xf]
                  %817 = vst [vmem:[%s793 + $0x8c] sm:$0xf] %v816
                  %v818 = vld [vmem:[%s792 + $0x30] sm:$0xf]
                  %819 = vst [vmem:[%s793 + $0xc0] sm:$0xf] %v818
                  %v820 = vld [vmem:[%s792 + $0x34] sm:$0xf]
                  %821 = vst [vmem:[%s793 + $0xc4] sm:$0xf] %v820
                  %v822 = vld [vmem:[%s792 + $0x38] sm:$0xf]
                  %823 = vst [vmem:[%s793 + $0xc8] sm:$0xf] %v822
                  %v824 = vld [vmem:[%s792 + $0x3c] sm:$0xf]
                  %825 = vst [vmem:[%s793 + $0xcc] sm:$0xf] %v824
                $region112: #{spiking_transformer_forward.8} parent=99 // loop_footer
                  %s791 = sadd.s32 1, %s787
                $region113: #{spiking_transformer_forward.8} parent=99 // loop_footer_branch
                  %786 = sbr.rel target = $region109
                $region114: #{spiking_transformer_forward.8} parent=99 // loop_exit
                  _
              $region100: #{spiking_transformer_forward.8} parent=84 // pred_fallthru
                _
            $region85: #{spiking_transformer_forward.8} parent=80 // pred_fallthru
              _
            // Predicated region
            $region86: #{spiking_transformer_forward.8} parent=80 // pred_check
              _
            $region87: #{spiking_transformer_forward.8} parent=80 // pred_check_branch
              %733 = sbr.rel (0) target = $region89
            $region88: #{spiking_transformer_forward.8} parent=80 // pred_region
              loop: start=0, step=1, limit=1
              $region90: #{spiking_transformer_forward.8} parent=88 // loop_pre_header
                _
              $region91: #{spiking_transformer_forward.8} parent=88 // loop_header
                %s736 = sphi 0, %s740
                %p737 = scmp.ge.s32.totalorder %s736, 1
                %s741 = sphi %s721, %s721
                %s742 = sphi %s727, %s727
              $region92: #{spiking_transformer_forward.8} parent=88 // loop_header_branch
                %739 = sbr.rel (%p737) target = $region96
              $region93: #{spiking_transformer_forward.8} parent=88 // loop_body
                %v743 = vld [vmem:[%s741] sm:$0xf]
                %744 = vst [vmem:[%s742] sm:$0xf] %v743
                %v745 = vld [vmem:[%s741 + $0x4] sm:$0xf]
                %746 = vst [vmem:[%s742 + $0x4] sm:$0xf] %v745
                %v747 = vld [vmem:[%s741 + $0x8] sm:$0xf]
                %748 = vst [vmem:[%s742 + $0x8] sm:$0xf] %v747
                %v749 = vld [vmem:[%s741 + $0xc] sm:$0xf]
                %750 = vst [vmem:[%s742 + $0xc] sm:$0xf] %v749
                %v751 = vld [vmem:[%s741 + $0x10] sm:$0xf]
                %752 = vst [vmem:[%s742 + $0x40] sm:$0xf] %v751
                %v753 = vld [vmem:[%s741 + $0x14] sm:$0xf]
                %754 = vst [vmem:[%s742 + $0x44] sm:$0xf] %v753
                %v755 = vld [vmem:[%s741 + $0x18] sm:$0xf]
                %756 = vst [vmem:[%s742 + $0x48] sm:$0xf] %v755
                %v757 = vld [vmem:[%s741 + $0x1c] sm:$0xf]
                %758 = vst [vmem:[%s742 + $0x4c] sm:$0xf] %v757
                %v759 = vld [vmem:[%s741 + $0x20] sm:$0xf]
                %760 = vst [vmem:[%s742 + $0x80] sm:$0xf] %v759
                %v761 = vld [vmem:[%s741 + $0x24] sm:$0xf]
                %762 = vst [vmem:[%s742 + $0x84] sm:$0xf] %v761
                %v763 = vld [vmem:[%s741 + $0x28] sm:$0xf]
                %764 = vst [vmem:[%s742 + $0x88] sm:$0xf] %v763
                %v765 = vld [vmem:[%s741 + $0x2c] sm:$0xf]
                %766 = vst [vmem:[%s742 + $0x8c] sm:$0xf] %v765
                %v767 = vld [vmem:[%s741 + $0x30] sm:$0xf]
                %768 = vst [vmem:[%s742 + $0xc0] sm:$0xf] %v767
                %v769 = vld [vmem:[%s741 + $0x34] sm:$0xf]
                %770 = vst [vmem:[%s742 + $0xc4] sm:$0xf] %v769
                %v771 = vld [vmem:[%s741 + $0x38] sm:$0xf]
                %772 = vst [vmem:[%s742 + $0xc8] sm:$0xf] %v771
                %v773 = vld [vmem:[%s741 + $0x3c] sm:$0xf]
                %774 = vst [vmem:[%s742 + $0xcc] sm:$0xf] %v773
              $region94: #{spiking_transformer_forward.8} parent=88 // loop_footer
                %s740 = sadd.s32 1, %s736
              $region95: #{spiking_transformer_forward.8} parent=88 // loop_footer_branch
                %735 = sbr.rel target = $region91
              $region96: #{spiking_transformer_forward.8} parent=88 // loop_exit
                _
            $region89: #{spiking_transformer_forward.8} parent=80 // pred_fallthru
              _
          $region81: #{spiking_transformer_forward.8} parent=76 // pred_fallthru
            _
          %826 = vnop
        $region77: #{spiking_transformer_forward.8} parent=68 // pred_fallthru
          _
      $region69: #{spiking_transformer_forward.8} parent=5 // pred_fallthru
        _
      %p827 = scmp.le.s32.totalorder 2, %s9
      // Predicated region
      $region115: #{spiking_transformer_forward.8} parent=5 // pred_check
        %p828 = pneg %p827
      $region116: #{spiking_transformer_forward.8} parent=5 // pred_check_branch
        %830 = sbr.rel (%p828) target = $region118
      $region117: #{spiking_transformer_forward.8} parent=5 // pred_region
        %s831 = ssub.s32 %s9, 2
        // Predicated region
        $region119: #{spiking_transformer_forward.8} parent=117 // pred_check
          %p832 = pneg %p106
        $region120: #{spiking_transformer_forward.8} parent=117 // pred_check_branch
          %834 = sbr.rel (%p832) target = $region122
        $region121: #{spiking_transformer_forward.8} parent=117 // pred_region
          %s835 = sand.u32 %s91, 1
          %s836 = sand.u32 %s91, 1
          %s837 = smul.addr %s836, 64
          %s838 = scalar_lea.vmem [#allocation5], %s837
        $region122: #{spiking_transformer_forward.8} parent=117 // pred_fallthru
          _
      $region118: #{spiking_transformer_forward.8} parent=5 // pred_fallthru
        _
    $region6: #{spiking_transformer_forward.8} parent=1 // loop_footer
      %s13 = sadd.s32 1, %s9
    $region7: #{spiking_transformer_forward.8} parent=1 // loop_footer_branch
      %8 = sbr.rel target = $region3
    $region8: #{spiking_transformer_forward.8} parent=1 // loop_exit
      _

// kernel: spiking_transformer_forward.6
$region0: #{spiking_transformer_forward.6}
  #allocation0 [shape = 'u32[]', space=smem, size = 0x4, offset = 0x4, fixed_abs, tag = 'smem constant byte address 0x4 - core index']
  #allocation1 [shape = 'u32[144,128]{1,0:T(1,128)}', space=vmem, size = 0x12000, scoped, tag = 'internal scratch']
  %s0 = inlined_call_operand.vmem [shape: bf16[4,128,96], index: 0, kind: input, shape index: {}]
  %s1 = inlined_call_operand.vmem [shape: f32[32,32], index: 1, kind: input, shape index: {}]
  %s2 = inlined_call_operand.vmem [shape: bf16[4,128,32], index: 2, kind: output, shape index: {}]
  %s3 = sld [smem:[#allocation0]]
  $region119: #{spiking_transformer_forward.6} parent=0
    _
  %s5 = ssub.s32 1, %s3
  %s6 = scalar_select 0, %s5, %s3
  $region1: #{spiking_transformer_forward.6} parent=0
    #allocation2 [shape = 'u8[131072]{0}', space=vmem, size = 0x20000, scoped, tag = 'input window, operand 0']
    #allocation3 [shape = 'u8[131072]{0}', space=vmem, size = 0x20000, scoped, tag = 'output window, operand 0']
    loop: start=0, step=1, limit=4
    $region2: #{spiking_transformer_forward.6} parent=1 // loop_pre_header
      _
    $region3: #{spiking_transformer_forward.6} parent=1 // loop_header
      %s8 = sphi 0, %s12
      %p9 = scmp.ge.s32.totalorder %s8, 4
      %s18 = sphi 0, %s20
      %s21 = sphi 0, %s18
      %s22 = sphi 0, %s21
      %s38 = sphi 0, %s22
      %s42 = sphi 0, %s42
      %s44 = sphi 0, %s42
      %s45 = sphi 0, %s44
      %s59 = sphi 0, %s45
      %s65 = sphi 0, %s67
      %s68 = sphi 0, %s65
      %s69 = sphi 0, %s68
      %s85 = sphi 0, %s69
    $region4: #{spiking_transformer_forward.6} parent=1 // loop_header_branch
      %11 = sbr.rel (%p9) target = $region8
    $region5: #{spiking_transformer_forward.6} parent=1 // loop_body
      %s13 = ssub.s32 %s8, 1
      %s14 = ssub.s32 %s8, 2
      %s15 = sadd.s32 %s8, 1
      %s16 = ssub.s32 %s8, %s15
      %p17 = scmp.eq.s32.totalorder %s16, 0
      %s19 = sadd.s32 %s18, 1
      %s20 = scalar_select %p17, %s18, %s19
      %p23 = pneg %p17
      %p24 = scmp.eq.s32.totalorder %s8, 1
      %p25 = por %p23, %p24
      %p26 = scmp.ne.s32.totalorder %s18, %s21
      %p27 = scmp.eq.s32.totalorder %s8, 0
      %p28 = por %p26, %p27
      %p29 = scmp.ne.s32.totalorder %s18, %s21
      %p30 = scmp.eq.s32.totalorder %s13, 1
      %p31 = por %p29, %p30
      %p32 = scmp.ne.s32.totalorder %s21, %s22
      %p33 = scmp.eq.s32.totalorder %s13, 0
      %p34 = por %p32, %p33
      %p35 = scmp.ne.s32.totalorder %s21, %s22
      %p36 = scmp.eq.s32.totalorder %s14, 1
      %p37 = por %p35, %p36
      %p39 = scmp.ne.s32.totalorder %s22, %s38
      %p40 = scmp.eq.s32.totalorder %s14, 0
      %p41 = por %p39, %p40
      %s43 = sadd.s32 %s42, 1
      %p46 = scmp.eq.s32.totalorder %s8, 1
      %p47 = scmp.ne.s32.totalorder %s42, %s44
      %p48 = scmp.eq.s32.totalorder %s8, 0
      %p49 = por %p47, %p48
      %p50 = scmp.ne.s32.totalorder %s42, %s44
      %p51 = scmp.eq.s32.totalorder %s13, 1
      %p52 = por %p50, %p51
      %p53 = scmp.ne.s32.totalorder %s44, %s45
      %p54 = scmp.eq.s32.totalorder %s13, 0
      %p55 = por %p53, %p54
      %p56 = scmp.ne.s32.totalorder %s44, %s45
      %p57 = scmp.eq.s32.totalorder %s14, 1
      %p58 = por %p56, %p57
      %p60 = scmp.ne.s32.totalorder %s45, %s59
      %p61 = scmp.eq.s32.totalorder %s14, 0
      %p62 = por %p60, %p61
      %s63 = ssub.s32 %s8, %s15
      %p64 = scmp.eq.s32.totalorder %s63, 0
      %s66 = sadd.s32 %s65, 1
      %s67 = scalar_select %p64, %s65, %s66
      %p70 = pneg %p64
      %p71 = scmp.eq.s32.totalorder %s8, 1
      %p72 = por %p70, %p71
      %p73 = scmp.ne.s32.totalorder %s65, %s68
      %p74 = scmp.eq.s32.totalorder %s8, 0
      %p75 = por %p73, %p74
      %p76 = scmp.ne.s32.totalorder %s65, %s68
      %p77 = scmp.eq.s32.totalorder %s13, 1
      %p78 = por %p76, %p77
      %p79 = scmp.ne.s32.totalorder %s68, %s69
      %p80 = scmp.eq.s32.totalorder %s13, 0
      %p81 = por %p79, %p80
      %p82 = scmp.ne.s32.totalorder %s68, %s69
      %p83 = scmp.eq.s32.totalorder %s14, 1
      %p84 = por %p82, %p83
      %p86 = scmp.ne.s32.totalorder %s69, %s85
      %p87 = scmp.eq.s32.totalorder %s14, 0
      %p88 = por %p86, %p87
      %p89 = scmp.le.s32.totalorder 1, %s8
      %p90 = scmp.lt.s32.totalorder %s8, 3
      %p91 = pnand %p89, %p90
      %p92 = pneg %p91
      // Predicated region
      $region9: #{spiking_transformer_forward.6} parent=5 // pred_check
        _
      $region10: #{spiking_transformer_forward.6} parent=5 // pred_check_branch
        %94 = sbr.rel (%p91) target = $region12
      $region11: #{spiking_transformer_forward.6} parent=5 // pred_region
        %s95 = ssub.s32 %s8, 1
        // Predicated region
        $region13: #{spiking_transformer_forward.6} parent=11 // pred_check
          %p96 = pneg %p55
        $region14: #{spiking_transformer_forward.6} parent=11 // pred_check_branch
          %98 = sbr.rel (%p96) target = $region16
        $region15: #{spiking_transformer_forward.6} parent=11 // pred_region
          _
        $region16: #{spiking_transformer_forward.6} parent=11 // pred_fallthru
          _
      $region12: #{spiking_transformer_forward.6} parent=5 // pred_fallthru
        _
      %p99 = scmp.lt.s32.totalorder %s8, 2
      // Predicated region
      $region17: #{spiking_transformer_forward.6} parent=5 // pred_check
        %p100 = pneg %p99
      $region18: #{spiking_transformer_forward.6} parent=5 // pred_check_branch
        %102 = sbr.rel (%p100) target = $region20
      $region19: #{spiking_transformer_forward.6} parent=5 // pred_region
        // Predicated region
        $region21: #{spiking_transformer_forward.6} parent=19 // pred_check
          %p103 = pneg %p28
        $region22: #{spiking_transformer_forward.6} parent=19 // pred_check_branch
          %105 = sbr.rel (%p103) target = $region24
        $region23: #{spiking_transformer_forward.6} parent=19 // pred_region
          %s106 = sand.u32 %s18, 1
          %s107 = sand.u32 %s18, 1
          %s108 = smul.addr %s107, 128
          %s109 = scalar_lea.vmem [#allocation2], %s108
          %s110 = smul.u32 8, %s8
          %s111 = smul.addr %s110, 4
          %s112 = scalar_lea.vmem %s0, %s111
          // Predicated region
          $region25: #{spiking_transformer_forward.6} parent=23 // pred_check
            _
          $region26: #{spiking_transformer_forward.6} parent=23 // pred_check_branch
            %114 = sbr.rel (0) target = $region28
          $region27: #{spiking_transformer_forward.6} parent=23 // pred_region
            // Predicated region
            $region29: #{spiking_transformer_forward.6} parent=27 // pred_check
              _
            $region30: #{spiking_transformer_forward.6} parent=27 // pred_check_branch
              %116 = sbr.rel target = $region32
            $region31: #{spiking_transformer_forward.6} parent=27 // pred_region
              // Predicated region
              $region44: #{spiking_transformer_forward.6} parent=31 // pred_check
                _
              $region45: #{spiking_transformer_forward.6} parent=31 // pred_check_branch
                %193 = sbr.rel (0) target = $region47
              $region46: #{spiking_transformer_forward.6} parent=31 // pred_region
                loop: start=0, step=1, limit=1
                $region48: #{spiking_transformer_forward.6} parent=46 // loop_pre_header
                  _
                $region49: #{spiking_transformer_forward.6} parent=46 // loop_header
                  %s195 = sphi 0, %s199
                  %p196 = scmp.ge.s32.totalorder %s195, 1
                  %s200 = sphi %s112, %s112
                  %s201 = sphi %s109, %s109
                $region50: #{spiking_transformer_forward.6} parent=46 // loop_header_branch
                  %198 = sbr.rel (%p196) target = $region54
                $region51: #{spiking_transformer_forward.6} parent=46 // loop_body
                  _
                $region52: #{spiking_transformer_forward.6} parent=46 // loop_footer
                  %s199 = sadd.s32 1, %s195
                $region53: #{spiking_transformer_forward.6} parent=46 // loop_footer_branch
                  %194 = sbr.rel target = $region49
                $region54: #{spiking_transformer_forward.6} parent=46 // loop_exit
                  _
                loop: start=0, step=1, limit=1
                $region55: #{spiking_transformer_forward.6} parent=46 // loop_pre_header
                  _
                $region56: #{spiking_transformer_forward.6} parent=46 // loop_header
                  %s204 = sphi 0, %s208
                  %p205 = scmp.ge.s32.totalorder %s204, 1
                  %s209 = sphi %s112, %s112
                  %s210 = sphi %s109, %s109
                $region57: #{spiking_transformer_forward.6} parent=46 // loop_header_branch
                  %207 = sbr.rel (%p205) target = $region61
                $region58: #{spiking_transformer_forward.6} parent=46 // loop_body
                  %v211 = vld [vmem:[%s209] sm:$0xf]
                  %212 = vst [vmem:[%s210] sm:$0xf] %v211
                  %v213 = vld [vmem:[%s209 + $0x4] sm:$0xf]
                  %214 = vst [vmem:[%s210 + $0x4] sm:$0xf] %v213
                  %v215 = vld [vmem:[%s209 + $0x8] sm:$0xf]
                  %216 = vst [vmem:[%s210 + $0x8] sm:$0xf] %v215
                  %v217 = vld [vmem:[%s209 + $0xc] sm:$0xf]
                  %218 = vst [vmem:[%s210 + $0xc] sm:$0xf] %v217
                  %v219 = vld [vmem:[%s209 + $0x10] sm:$0xf]
                  %220 = vst [vmem:[%s210 + $0x10] sm:$0xf] %v219
                  %v221 = vld [vmem:[%s209 + $0x14] sm:$0xf]
                  %222 = vst [vmem:[%s210 + $0x14] sm:$0xf] %v221
                  %v223 = vld [vmem:[%s209 + $0x18] sm:$0xf]
                  %224 = vst [vmem:[%s210 + $0x18] sm:$0xf] %v223
                  %v225 = vld [vmem:[%s209 + $0x1c] sm:$0xf]
                  %226 = vst [vmem:[%s210 + $0x1c] sm:$0xf] %v225
                  %v227 = vld [vmem:[%s209 + $0x40] sm:$0xf]
                  %228 = vst [vmem:[%s210 + $0x20] sm:$0xf] %v227
                  %v229 = vld [vmem:[%s209 + $0x44] sm:$0xf]
                  %230 = vst [vmem:[%s210 + $0x24] sm:$0xf] %v229
                  %v231 = vld [vmem:[%s209 + $0x48] sm:$0xf]
                  %232 = vst [vmem:[%s210 + $0x28] sm:$0xf] %v231
                  %v233 = vld [vmem:[%s209 + $0x4c] sm:$0xf]
                  %234 = vst [vmem:[%s210 + $0x2c] sm:$0xf] %v233
                  %v235 = vld [vmem:[%s209 + $0x50] sm:$0xf]
                  %236 = vst [vmem:[%s210 + $0x30] sm:$0xf] %v235
                  %v237 = vld [vmem:[%s209 + $0x54] sm:$0xf]
                  %238 = vst [vmem:[%s210 + $0x34] sm:$0xf] %v237
                  %v239 = vld [vmem:[%s209 + $0x58] sm:$0xf]
                  %240 = vst [vmem:[%s210 + $0x38] sm:$0xf] %v239
                  %v241 = vld [vmem:[%s209 + $0x5c] sm:$0xf]
                  %242 = vst [vmem:[%s210 + $0x3c] sm:$0xf] %v241
                  %v243 = vld [vmem:[%s209 + $0x80] sm:$0xf]
                  %244 = vst [vmem:[%s210 + $0x40] sm:$0xf] %v243
                  %v245 = vld [vmem:[%s209 + $0x84] sm:$0xf]
                  %246 = vst [vmem:[%s210 + $0x44] sm:$0xf] %v245
                  %v247 = vld [vmem:[%s209 + $0x88] sm:$0xf]
                  %248 = vst [vmem:[%s210 + $0x48] sm:$0xf] %v247
                  %v249 = vld [vmem:[%s209 + $0x8c] sm:$0xf]
                  %250 = vst [vmem:[%s210 + $0x4c] sm:$0xf] %v249
                  %v251 = vld [vmem:[%s209 + $0x90] sm:$0xf]
                  %252 = vst [vmem:[%s210 + $0x50] sm:$0xf] %v251
                  %v253 = vld [vmem:[%s209 + $0x94] sm:$0xf]
                  %254 = vst [vmem:[%s210 + $0x54] sm:$0xf] %v253
                  %v255 = vld [vmem:[%s209 + $0x98] sm:$0xf]
                  %256 = vst [vmem:[%s210 + $0x58] sm:$0xf] %v255
                  %v257 = vld [vmem:[%s209 + $0x9c] sm:$0xf]
                  %258 = vst [vmem:[%s210 + $0x5c] sm:$0xf] %v257
                  %v259 = vld [vmem:[%s209 + $0xc0] sm:$0xf]
                  %260 = vst [vmem:[%s210 + $0x60] sm:$0xf] %v259
                  %v261 = vld [vmem:[%s209 + $0xc4] sm:$0xf]
                  %262 = vst [vmem:[%s210 + $0x64] sm:$0xf] %v261
                  %v263 = vld [vmem:[%s209 + $0xc8] sm:$0xf]
                  %264 = vst [vmem:[%s210 + $0x68] sm:$0xf] %v263
                  %v265 = vld [vmem:[%s209 + $0xcc] sm:$0xf]
                  %266 = vst [vmem:[%s210 + $0x6c] sm:$0xf] %v265
                  %v267 = vld [vmem:[%s209 + $0xd0] sm:$0xf]
                  %268 = vst [vmem:[%s210 + $0x70] sm:$0xf] %v267
                  %v269 = vld [vmem:[%s209 + $0xd4] sm:$0xf]
                  %270 = vst [vmem:[%s210 + $0x74] sm:$0xf] %v269
                  %v271 = vld [vmem:[%s209 + $0xd8] sm:$0xf]
                  %272 = vst [vmem:[%s210 + $0x78] sm:$0xf] %v271
                  %v273 = vld [vmem:[%s209 + $0xdc] sm:$0xf]
                  %274 = vst [vmem:[%s210 + $0x7c] sm:$0xf] %v273
                $region59: #{spiking_transformer_forward.6} parent=46 // loop_footer
                  %s208 = sadd.s32 1, %s204
                $region60: #{spiking_transformer_forward.6} parent=46 // loop_footer_branch
                  %203 = sbr.rel target = $region56
                $region61: #{spiking_transformer_forward.6} parent=46 // loop_exit
                  _
              $region47: #{spiking_transformer_forward.6} parent=31 // pred_fallthru
                _
            $region32: #{spiking_transformer_forward.6} parent=27 // pred_fallthru
              _
            // Predicated region
            $region33: #{spiking_transformer_forward.6} parent=27 // pred_check
              _
            $region34: #{spiking_transformer_forward.6} parent=27 // pred_check_branch
              %118 = sbr.rel (0) target = $region36
            $region35: #{spiking_transformer_forward.6} parent=27 // pred_region
              loop: start=0, step=1, limit=1
              $region37: #{spiking_transformer_forward.6} parent=35 // loop_pre_header
                _
              $region38: #{spiking_transformer_forward.6} parent=35 // loop_header
                %s121 = sphi 0, %s125
                %p122 = scmp.ge.s32.totalorder %s121, 1
                %s126 = sphi %s112, %s112
                %s127 = sphi %s109, %s109
              $region39: #{spiking_transformer_forward.6} parent=35 // loop_header_branch
                %124 = sbr.rel (%p122) target = $region43
              $region40: #{spiking_transformer_forward.6} parent=35 // loop_body
                %v128 = vld [vmem:[%s126] sm:$0xf]
                %129 = vst [vmem:[%s127] sm:$0xf] %v128
                %v130 = vld [vmem:[%s126 + $0x4] sm:$0xf]
                %131 = vst [vmem:[%s127 + $0x4] sm:$0xf] %v130
                %v132 = vld [vmem:[%s126 + $0x8] sm:$0xf]
                %133 = vst [vmem:[%s127 + $0x8] sm:$0xf] %v132
                %v134 = vld [vmem:[%s126 + $0xc] sm:$0xf]
                %135 = vst [vmem:[%s127 + $0xc] sm:$0xf] %v134
                %v136 = vld [vmem:[%s126 + $0x10] sm:$0xf]
                %137 = vst [vmem:[%s127 + $0x10] sm:$0xf] %v136
                %v138 = vld [vmem:[%s126 + $0x14] sm:$0xf]
                %139 = vst [vmem:[%s127 + $0x14] sm:$0xf] %v138
                %v140 = vld [vmem:[%s126 + $0x18] sm:$0xf]
                %141 = vst [vmem:[%s127 + $0x18] sm:$0xf] %v140
                %v142 = vld [vmem:[%s126 + $0x1c] sm:$0xf]
                %143 = vst [vmem:[%s127 + $0x1c] sm:$0xf] %v142
                %v144 = vld [vmem:[%s126 + $0x40] sm:$0xf]
                %145 = vst [vmem:[%s127 + $0x20] sm:$0xf] %v144
                %v146 = vld [vmem:[%s126 + $0x44] sm:$0xf]
                %147 = vst [vmem:[%s127 + $0x24] sm:$0xf] %v146
                %v148 = vld [vmem:[%s126 + $0x48] sm:$0xf]
                %149 = vst [vmem:[%s127 + $0x28] sm:$0xf] %v148
                %v150 = vld [vmem:[%s126 + $0x4c] sm:$0xf]
                %151 = vst [vmem:[%s127 + $0x2c] sm:$0xf] %v150
                %v152 = vld [vmem:[%s126 + $0x50] sm:$0xf]
                %153 = vst [vmem:[%s127 + $0x30] sm:$0xf] %v152
                %v154 = vld [vmem:[%s126 + $0x54] sm:$0xf]
                %155 = vst [vmem:[%s127 + $0x34] sm:$0xf] %v154
                %v156 = vld [vmem:[%s126 + $0x58] sm:$0xf]
                %157 = vst [vmem:[%s127 + $0x38] sm:$0xf] %v156
                %v158 = vld [vmem:[%s126 + $0x5c] sm:$0xf]
                %159 = vst [vmem:[%s127 + $0x3c] sm:$0xf] %v158
                %v160 = vld [vmem:[%s126 + $0x80] sm:$0xf]
                %161 = vst [vmem:[%s127 + $0x40] sm:$0xf] %v160
                %v162 = vld [vmem:[%s126 + $0x84] sm:$0xf]
                %163 = vst [vmem:[%s127 + $0x44] sm:$0xf] %v162
                %v164 = vld [vmem:[%s126 + $0x88] sm:$0xf]
                %165 = vst [vmem:[%s127 + $0x48] sm:$0xf] %v164
                %v166 = vld [vmem:[%s126 + $0x8c] sm:$0xf]
                %167 = vst [vmem:[%s127 + $0x4c] sm:$0xf] %v166
                %v168 = vld [vmem:[%s126 + $0x90] sm:$0xf]
                %169 = vst [vmem:[%s127 + $0x50] sm:$0xf] %v168
                %v170 = vld [vmem:[%s126 + $0x94] sm:$0xf]
                %171 = vst [vmem:[%s127 + $0x54] sm:$0xf] %v170
                %v172 = vld [vmem:[%s126 + $0x98] sm:$0xf]
                %173 = vst [vmem:[%s127 + $0x58] sm:$0xf] %v172
                %v174 = vld [vmem:[%s126 + $0x9c] sm:$0xf]
                %175 = vst [vmem:[%s127 + $0x5c] sm:$0xf] %v174
                %v176 = vld [vmem:[%s126 + $0xc0] sm:$0xf]
                %177 = vst [vmem:[%s127 + $0x60] sm:$0xf] %v176
                %v178 = vld [vmem:[%s126 + $0xc4] sm:$0xf]
                %179 = vst [vmem:[%s127 + $0x64] sm:$0xf] %v178
                %v180 = vld [vmem:[%s126 + $0xc8] sm:$0xf]
                %181 = vst [vmem:[%s127 + $0x68] sm:$0xf] %v180
                %v182 = vld [vmem:[%s126 + $0xcc] sm:$0xf]
                %183 = vst [vmem:[%s127 + $0x6c] sm:$0xf] %v182
                %v184 = vld [vmem:[%s126 + $0xd0] sm:$0xf]
                %185 = vst [vmem:[%s127 + $0x70] sm:$0xf] %v184
                %v186 = vld [vmem:[%s126 + $0xd4] sm:$0xf]
                %187 = vst [vmem:[%s127 + $0x74] sm:$0xf] %v186
                %v188 = vld [vmem:[%s126 + $0xd8] sm:$0xf]
                %189 = vst [vmem:[%s127 + $0x78] sm:$0xf] %v188
                %v190 = vld [vmem:[%s126 + $0xdc] sm:$0xf]
                %191 = vst [vmem:[%s127 + $0x7c] sm:$0xf] %v190
              $region41: #{spiking_transformer_forward.6} parent=35 // loop_footer
                %s125 = sadd.s32 1, %s121
              $region42: #{spiking_transformer_forward.6} parent=35 // loop_footer_branch
                %120 = sbr.rel target = $region38
              $region43: #{spiking_transformer_forward.6} parent=35 // loop_exit
                _
            $region36: #{spiking_transformer_forward.6} parent=27 // pred_fallthru
              _
          $region28: #{spiking_transformer_forward.6} parent=23 // pred_fallthru
            _
          %275 = vnop
        $region24: #{spiking_transformer_forward.6} parent=19 // pred_fallthru
          _
      $region20: #{spiking_transformer_forward.6} parent=5 // pred_fallthru
        _
      %p276 = scmp.le.s32.totalorder 1, %s8
      %p277 = scmp.lt.s32.totalorder %s8, 3
      %p278 = pnand %p276, %p277
      %p279 = pneg %p278
      // Predicated region
      $region62: #{spiking_transformer_forward.6} parent=5 // pred_check
        _
      $region63: #{spiking_transformer_forward.6} parent=5 // pred_check_branch
        %281 = sbr.rel (%p278) target = $region65
      $region64: #{spiking_transformer_forward.6} parent=5 // pred_region
        %s282 = ssub.s32 %s8, 1
        %s283 = sand.u32 %s21, 1
        %s284 = sand.u32 %s21, 1
        %s285 = smul.addr %s284, 128
        %s286 = scalar_lea.vmem [#allocation2], %s285
        // Predicated region
        $region66: #{spiking_transformer_forward.6} parent=64 // pred_check
          %p287 = pneg %p34
        $region67: #{spiking_transformer_forward.6} parent=64 // pred_check_branch
          %289 = sbr.rel (%p287) target = $region69
        $region68: #{spiking_transformer_forward.6} parent=64 // pred_region
          _
        $region69: #{spiking_transformer_forward.6} parent=64 // pred_fallthru
          _
        %s290 = sand.u32 %s21, 1
        %s291 = sand.u32 %s21, 1
        %s292 = smul.addr %s291, 128
        %s293 = scalar_lea.vmem [#allocation2], %s292
        %p294 = pneg %p34
        %p295 = pneg %p31
        %p296 = pneg %p55
        %p297 = pneg %p52
        %p298 = pneg %p81
        %p299 = pneg %p78
        %s300 = sand.u32 %s68, 1
        %s301 = sand.u32 %s68, 1
        %s302 = smul.addr %s301, 128
        %s303 = scalar_lea.vmem [#allocation3], %s302
        %s304 = smul.u32 8, %s13
        %s305 = smul.u32 8, %s13
        %v307 = vld [vmem:[%s286] sm:$0xf]
        %v308 = vld [vmem:[%s286 + $0x4] sm:$0xf]
        %v309 = vld [vmem:[%s286 + $0x8] sm:$0xf]
        %v310 = vld [vmem:[%s286 + $0xc] sm:$0xf]
        %v311 = vld [vmem:[%s286 + $0x10] sm:$0xf]
        %v312 = vld [vmem:[%s286 + $0x14] sm:$0xf]
        %v313 = vld [vmem:[%s286 + $0x18] sm:$0xf]
        %v314 = vld [vmem:[%s286 + $0x1c] sm:$0xf]
        %v315 = vld [vmem:[%s286 + $0x20] sm:$0xf]
        %v316 = vld [vmem:[%s286 + $0x24] sm:$0xf]
        %v317 = vld [vmem:[%s286 + $0x28] sm:$0xf]
        %v318 = vld [vmem:[%s286 + $0x2c] sm:$0xf]
        %v319 = vld [vmem:[%s286 + $0x30] sm:$0xf]
        %v320 = vld [vmem:[%s286 + $0x34] sm:$0xf]
        %v321 = vld [vmem:[%s286 + $0x38] sm:$0xf]
        %v322 = vld [vmem:[%s286 + $0x3c] sm:$0xf]
        %v323 = vld [vmem:[%s286 + $0x40] sm:$0xf]
        %v324 = vld [vmem:[%s286 + $0x44] sm:$0xf]
        %v325 = vld [vmem:[%s286 + $0x48] sm:$0xf]
        %v326 = vld [vmem:[%s286 + $0x4c] sm:$0xf]
        %v327 = vld [vmem:[%s286 + $0x50] sm:$0xf]
        %v328 = vld [vmem:[%s286 + $0x54] sm:$0xf]
        %v329 = vld [vmem:[%s286 + $0x58] sm:$0xf]
        %v330 = vld [vmem:[%s286 + $0x5c] sm:$0xf]
        %v331 = vld [vmem:[%s286 + $0x60] sm:$0xf]
        %v332 = vld [vmem:[%s286 + $0x64] sm:$0xf]
        %v333 = vld [vmem:[%s286 + $0x68] sm:$0xf]
        %v334 = vld [vmem:[%s286 + $0x6c] sm:$0xf]
        %v335 = vld [vmem:[%s286 + $0x70] sm:$0xf]
        %v336 = vld [vmem:[%s286 + $0x74] sm:$0xf]
        %v337 = vld [vmem:[%s286 + $0x78] sm:$0xf]
        %v338 = vld [vmem:[%s286 + $0x7c] sm:$0xf]
        %v347 = vunpack.c.l.b16 %v307
        %v348 = vunpack.c.l.b16 %v308
        %v349 = vunpack.c.l.b16 %v309
        %v350 = vunpack.c.l.b16 %v310
        %v351 = vunpack.c.l.b16 %v311
        %v352 = vunpack.c.l.b16 %v312
        %v353 = vunpack.c.l.b16 %v313
        %v354 = vunpack.c.l.b16 %v314
        %v355 = vpack.c.b16 %v348, %v347
        %v356 = vpack.c.b16 %v350, %v349
        %v357 = vpack.c.b16 %v352, %v351
        %v358 = vpack.c.b16 %v354, %v353
        %359 = vrot.lane.b32.xlu0 %v355, 96
        %v360 = vpop.permute.xlu0 %359
        %361 = vrot.lane.b32.xlu0 %v356, 96
        %v362 = vpop.permute.xlu0 %361
        %363 = vrot.lane.b32.xlu0 %v357, 96
        %v364 = vpop.permute.xlu0 %363
        %365 = vrot.lane.b32.xlu0 %v358, 96
        %v366 = vpop.permute.xlu0 %365
        %371 = vxpose.xlu0.c.b16.start [1/8] %v360, 128
        %372 = vxpose.xlu0.c.b16.cont [2/8] %v362, 128
        %373 = vxpose.xlu0.c.b16.cont [3/8] %v364, 128
        %374 = vxpose.xlu0.c.b16.cont [4/8] %v366, 128
        %375 = vxpose.xlu0.c.b16.cont [5/8] 0, 128
        %376 = vxpose.xlu0.c.b16.cont [6/8] 0, 128
        %377 = vxpose.xlu0.c.b16.cont [7/8] 0, 128
        %378 = vxpose.xlu0.c.b16.end [8/8] 0, 128
        %v379 = vpop.trf.xlu0
        %v380 = vpop.trf.xlu0
        %v381 = vpop.trf.xlu0
        %v382 = vpop.trf.xlu0
        %v383 = vpop.trf.xlu0
        %v384 = vpop.trf.xlu0
        %v385 = vpop.trf.xlu0
        %v386 = vpop.trf.xlu0
        %387 = vrot.lane.b32.xlu0 %v355, 64
        %v388 = vpop.permute.xlu0 %387
        %389 = vrot.lane.b32.xlu0 %v356, 64
        %v390 = vpop.permute.xlu0 %389
        %391 = vrot.lane.b32.xlu0 %v357, 64
        %v392 = vpop.permute.xlu0 %391
        %393 = vrot.lane.b32.xlu0 %v358, 64
        %v394 = vpop.permute.xlu0 %393
        %vm399 = vcmask 523264
        %v401 = vsel %vm399, %v379, 0
        %v404 = vsel %vm399, %v380, 0
        %406 = vmatprep.subr.bf16.mxu0 0
        %407 = vmatpush1.bf16.msra.mxu0 %v388
        %408 = vmatprep.subr.bf16.mxu0 0
        %409 = vmatpush1.bf16.msra.mxu0 %v390
        %410 = vmatprep.subr.bf16.mxu0 0
        %411 = vmatpush1.bf16.msra.mxu0 %v392
        %412 = vmatprep.subr.bf16.mxu0 0
        %413 = vmatpush1.bf16.msra.mxu0 %v394
        %414 = vmatprep.subr.bf16.mxu0 0
        %415 = vmatpush1.bf16.msra.mxu0 0
        %416 = vmatprep.subr.bf16.mxu0 0
        %417 = vmatpush1.bf16.msra.mxu0 0
        %418 = vmatprep.subr.bf16.mxu0 0
        %419 = vmatpush1.bf16.msra.mxu0 0
        %420 = vmatprep.subr.bf16.mxu0 0
        %421 = vmatpush1.bf16.msra.mxu0 0
        %422 = vmatprep.subr.bf16.mxu0 0
        %423 = vmatpush1.bf16.msra.mxu0 0
        %424 = vmatprep.subr.bf16.mxu0 0
        %425 = vmatpush1.bf16.msra.mxu0 0
        %426 = vmatprep.subr.bf16.mxu0 0
        %427 = vmatpush1.bf16.msra.mxu0 0
        %428 = vmatprep.subr.bf16.mxu0 0
        %429 = vmatpush1.bf16.msra.mxu0 0
        %430 = vmatprep.subr.bf16.mxu0 0
        %431 = vmatpush1.bf16.msra.mxu0 0
        %432 = vmatprep.subr.bf16.mxu0 0
        %433 = vmatpush1.bf16.msra.mxu0 0
        %434 = vmatprep.subr.bf16.mxu0 0
        %435 = vmatpush1.bf16.msra.mxu0 0
        %436 = vmatprep.subr.bf16.mxu0 0
        %437 = vmatpush1.bf16.msra.mxu0 0
        %438 = vmatprep.mubr.bf16.mxu0 0
        %439 = vmatmul.mubr.bf16.gmra.mrb[0].mxu0 %v401
        %v440 = vpop.f32.mrb[0].mxu0
        %v441 = vadd.f32 0.0, %v440
        %v442 = vpop.f32.mrb[0].mxu0
        %v443 = vpop.f32.mrb[0].mxu0
        %v444 = vadd.f32 0.0, %v443
        %v445 = vpop.f32.mrb[0].mxu0
        %446 = vmatprep.mubr.bf16.mxu0 0
        %447 = vmatmul.mubr.bf16.gmra.mrb[0].mxu0 %v404
        %v448 = vpop.f32.mrb[0].mxu0
        %v449 = vadd.f32 0.0, %v448
        %v450 = vpop.f32.mrb[0].mxu0
        %v451 = vpop.f32.mrb[0].mxu0
        %v452 = vadd.f32 0.0, %v451
        %v453 = vpop.f32.mrb[0].mxu0
        %454 = vdwg.mxu0
        %v463 = vunpack.c.l.b16 %v315
        %v464 = vunpack.c.l.b16 %v316
        %v465 = vunpack.c.l.b16 %v317
        %v466 = vunpack.c.l.b16 %v318
        %v467 = vunpack.c.l.b16 %v319
        %v468 = vunpack.c.l.b16 %v320
        %v469 = vunpack.c.l.b16 %v321
        %v470 = vunpack.c.l.b16 %v322
        %v471 = vpack.c.b16 %v464, %v463
        %v472 = vpack.c.b16 %v466, %v465
        %v473 = vpack.c.b16 %v468, %v467
        %v474 = vpack.c.b16 %v470, %v469
        %475 = vrot.lane.b32.xlu0 %v471, 96
        %v476 = vpop.permute.xlu0 %475
        %477 = vrot.lane.b32.xlu0 %v472, 96
        %v478 = vpop.permute.xlu0 %477
        %479 = vrot.lane.b32.xlu0 %v473, 96
        %v480 = vpop.permute.xlu0 %479
        %481 = vrot.lane.b32.xlu0 %v474, 96
        %v482 = vpop.permute.xlu0 %481
        %487 = vxpose.xlu0.c.b16.start [1/8] %v476, 128
        %488 = vxpose.xlu0.c.b16.cont [2/8] %v478, 128
        %489 = vxpose.xlu0.c.b16.cont [3/8] %v480, 128
        %490 = vxpose.xlu0.c.b16.cont [4/8] %v482, 128
        %491 = vxpose.xlu0.c.b16.cont [5/8] 0, 128
        %492 = vxpose.xlu0.c.b16.cont [6/8] 0, 128
        %493 = vxpose.xlu0.c.b16.cont [7/8] 0, 128
        %494 = vxpose.xlu0.c.b16.end [8/8] 0, 128
        %v495 = vpop.trf.xlu0
        %v496 = vpop.trf.xlu0
        %v497 = vpop.trf.xlu0
        %v498 = vpop.trf.xlu0
        %v499 = vpop.trf.xlu0
        %v500 = vpop.trf.xlu0
        %v501 = vpop.trf.xlu0
        %v502 = vpop.trf.xlu0
        %503 = vrot.lane.b32.xlu0 %v471, 64
        %v504 = vpop.permute.xlu0 %503
        %505 = vrot.lane.b32.xlu0 %v472, 64
        %v506 = vpop.permute.xlu0 %505
        %507 = vrot.lane.b32.xlu0 %v473, 64
        %v508 = vpop.permute.xlu0 %507
        %509 = vrot.lane.b32.xlu0 %v474, 64
        %v510 = vpop.permute.xlu0 %509
        %v516 = vsel %vm399, %v495, 0
        %v519 = vsel %vm399, %v496, 0
        %521 = vmatprep.subr.bf16.mxu0 0
        %522 = vmatpush1.bf16.msra.mxu0 %v504
        %523 = vmatprep.subr.bf16.mxu0 0
        %524 = vmatpush1.bf16.msra.mxu0 %v506
        %525 = vmatprep.subr.bf16.mxu0 0
        %526 = vmatpush1.bf16.msra.mxu0 %v508
        %527 = vmatprep.subr.bf16.mxu0 0
        %528 = vmatpush1.bf16.msra.mxu0 %v510
        %529 = vmatprep.subr.bf16.mxu0 0
        %530 = vmatpush1.bf16.msra.mxu0 0
        %531 = vmatprep.subr.bf16.mxu0 0
        %532 = vmatpush1.bf16.msra.mxu0 0
        %533 = vmatprep.subr.bf16.mxu0 0
        %534 = vmatpush1.bf16.msra.mxu0 0
        %535 = vmatprep.subr.bf16.mxu0 0
        %536 = vmatpush1.bf16.msra.mxu0 0
        %537 = vmatprep.subr.bf16.mxu0 0
        %538 = vmatpush1.bf16.msra.mxu0 0
        %539 = vmatprep.subr.bf16.mxu0 0
        %540 = vmatpush1.bf16.msra.mxu0 0
        %541 = vmatprep.subr.bf16.mxu0 0
        %542 = vmatpush1.bf16.msra.mxu0 0
        %543 = vmatprep.subr.bf16.mxu0 0
        %544 = vmatpush1.bf16.msra.mxu0 0
        %545 = vmatprep.subr.bf16.mxu0 0
        %546 = vmatpush1.bf16.msra.mxu0 0
        %547 = vmatprep.subr.bf16.mxu0 0
        %548 = vmatpush1.bf16.msra.mxu0 0
        %549 = vmatprep.subr.bf16.mxu0 0
        %550 = vmatpush1.bf16.msra.mxu0 0
        %551 = vmatprep.subr.bf16.mxu0 0
        %552 = vmatpush1.bf16.msra.mxu0 0
        %553 = vmatprep.mubr.bf16.mxu0 0
        %554 = vmatmul.mubr.bf16.gmra.mrb[0].mxu0 %v516
        %v555 = vpop.f32.mrb[0].mxu0
        %v556 = vadd.f32 0.0, %v555
        %v557 = vpop.f32.mrb[0].mxu0
        %v558 = vpop.f32.mrb[0].mxu0
        %v559 = vadd.f32 0.0, %v558
        %v560 = vpop.f32.mrb[0].mxu0
        %561 = vmatprep.mubr.bf16.mxu0 0
        %562 = vmatmul.mubr.bf16.gmra.mrb[0].mxu0 %v519
        %v563 = vpop.f32.mrb[0].mxu0
        %v564 = vadd.f32 0.0, %v563
        %v565 = vpop.f32.mrb[0].mxu0
        %v566 = vpop.f32.mrb[0].mxu0
        %v567 = vadd.f32 0.0, %v566
        %v568 = vpop.f32.mrb[0].mxu0
        %569 = vdwg.mxu0
        %v578 = vunpack.c.l.b16 %v323
        %v579 = vunpack.c.l.b16 %v324
        %v580 = vunpack.c.l.b16 %v325
        %v581 = vunpack.c.l.b16 %v326
        %v582 = vunpack.c.l.b16 %v327
        %v583 = vunpack.c.l.b16 %v328
        %v584 = vunpack.c.l.b16 %v329
        %v585 = vunpack.c.l.b16 %v330
        %v586 = vpack.c.b16 %v579, %v578
        %v587 = vpack.c.b16 %v581, %v580
        %v588 = vpack.c.b16 %v583, %v582
        %v589 = vpack.c.b16 %v585, %v584
        %590 = vrot.lane.b32.xlu0 %v586, 96
        %v591 = vpop.permute.xlu0 %590
        %592 = vrot.lane.b32.xlu0 %v587, 96
        %v593 = vpop.permute.xlu0 %592
        %594 = vrot.lane.b32.xlu0 %v588, 96
        %v595 = vpop.permute.xlu0 %594
        %596 = vrot.lane.b32.xlu0 %v589, 96
        %v597 = vpop.permute.xlu0 %596
        %602 = vxpose.xlu0.c.b16.start [1/8] %v591, 128
        %603 = vxpose.xlu0.c.b16.cont [2/8] %v593, 128
        %604 = vxpose.xlu0.c.b16.cont [3/8] %v595, 128
        %605 = vxpose.xlu0.c.b16.cont [4/8] %v597, 128
        %606 = vxpose.xlu0.c.b16.cont [5/8] 0, 128
        %607 = vxpose.xlu0.c.b16.cont [6/8] 0, 128
        %608 = vxpose.xlu0.c.b16.cont [7/8] 0, 128
        %609 = vxpose.xlu0.c.b16.end [8/8] 0, 128
        %v610 = vpop.trf.xlu0
        %v611 = vpop.trf.xlu0
        %v612 = vpop.trf.xlu0
        %v613 = vpop.trf.xlu0
        %v614 = vpop.trf.xlu0
        %v615 = vpop.trf.xlu0
        %v616 = vpop.trf.xlu0
        %v617 = vpop.trf.xlu0
        %618 = vrot.lane.b32.xlu0 %v586, 64
        %v619 = vpop.permute.xlu0 %618
        %620 = vrot.lane.b32.xlu0 %v587, 64
        %v621 = vpop.permute.xlu0 %620
        %622 = vrot.lane.b32.xlu0 %v588, 64
        %v623 = vpop.permute.xlu0 %622
        %624 = vrot.lane.b32.xlu0 %v589, 64
        %v625 = vpop.permute.xlu0 %624
        %v631 = vsel %vm399, %v610, 0
        %v634 = vsel %vm399, %v611, 0
        %636 = vmatprep.subr.bf16.mxu0 0
        %637 = vmatpush1.bf16.msra.mxu0 %v619
        %638 = vmatprep.subr.bf16.mxu0 0
        %639 = vmatpush1.bf16.msra.mxu0 %v621
        %640 = vmatprep.subr.bf16.mxu0 0
        %641 = vmatpush1.bf16.msra.mxu0 %v623
        %642 = vmatprep.subr.bf16.mxu0 0
        %643 = vmatpush1.bf16.msra.mxu0 %v625
        %644 = vmatprep.subr.bf16.mxu0 0
        %645 = vmatpush1.bf16.msra.mxu0 0
        %646 = vmatprep.subr.bf16.mxu0 0
        %647 = vmatpush1.bf16.msra.mxu0 0
        %648 = vmatprep.subr.bf16.mxu0 0
        %649 = vmatpush1.bf16.msra.mxu0 0
        %650 = vmatprep.subr.bf16.mxu0 0
        %651 = vmatpush1.bf16.msra.mxu0 0
        %652 = vmatprep.subr.bf16.mxu0 0
        %653 = vmatpush1.bf16.msra.mxu0 0
        %654 = vmatprep.subr.bf16.mxu0 0
        %655 = vmatpush1.bf16.msra.mxu0 0
        %656 = vmatprep.subr.bf16.mxu0 0
        %657 = vmatpush1.bf16.msra.mxu0 0
        %658 = vmatprep.subr.bf16.mxu0 0
        %659 = vmatpush1.bf16.msra.mxu0 0
        %660 = vmatprep.subr.bf16.mxu0 0
        %661 = vmatpush1.bf16.msra.mxu0 0
        %662 = vmatprep.subr.bf16.mxu0 0
        %663 = vmatpush1.bf16.msra.mxu0 0
        %664 = vmatprep.subr.bf16.mxu0 0
        %665 = vmatpush1.bf16.msra.mxu0 0
        %666 = vmatprep.subr.bf16.mxu0 0
        %667 = vmatpush1.bf16.msra.mxu0 0
        %668 = vmatprep.mubr.bf16.mxu0 0
        %669 = vmatmul.mubr.bf16.gmra.mrb[0].mxu0 %v631
        %v670 = vpop.f32.mrb[0].mxu0
        %v671 = vadd.f32 0.0, %v670
        %v672 = vpop.f32.mrb[0].mxu0
        %v673 = vpop.f32.mrb[0].mxu0
        %v674 = vadd.f32 0.0, %v673
        %v675 = vpop.f32.mrb[0].mxu0
        %676 = vmatprep.mubr.bf16.mxu0 0
        %677 = vmatmul.mubr.bf16.gmra.mrb[0].mxu0 %v634
        %v678 = vpop.f32.mrb[0].mxu0
        %v679 = vadd.f32 0.0, %v678
        %v680 = vpop.f32.mrb[0].mxu0
        %v681 = vpop.f32.mrb[0].mxu0
        %v682 = vadd.f32 0.0, %v681
        %v683 = vpop.f32.mrb[0].mxu0
        %684 = vdwg.mxu0
        %v693 = vunpack.c.l.b16 %v331
        %v694 = vunpack.c.l.b16 %v332
        %v695 = vunpack.c.l.b16 %v333
        %v696 = vunpack.c.l.b16 %v334
        %v697 = vunpack.c.l.b16 %v335
        %v698 = vunpack.c.l.b16 %v336
        %v699 = vunpack.c.l.b16 %v337
        %v700 = vunpack.c.l.b16 %v338
        %v701 = vpack.c.b16 %v694, %v693
        %v702 = vpack.c.b16 %v696, %v695
        %v703 = vpack.c.b16 %v698, %v697
        %v704 = vpack.c.b16 %v700, %v699
        %705 = vrot.lane.b32.xlu0 %v701, 96
        %v706 = vpop.permute.xlu0 %705
        %707 = vrot.lane.b32.xlu0 %v702, 96
        %v708 = vpop.permute.xlu0 %707
        %709 = vrot.lane.b32.xlu0 %v703, 96
        %v710 = vpop.permute.xlu0 %709
        %711 = vrot.lane.b32.xlu0 %v704, 96
        %v712 = vpop.permute.xlu0 %711
        %717 = vxpose.xlu0.c.b16.start [1/8] %v706, 128
        %718 = vxpose.xlu0.c.b16.cont [2/8] %v708, 128
        %719 = vxpose.xlu0.c.b16.cont [3/8] %v710, 128
        %720 = vxpose.xlu0.c.b16.cont [4/8] %v712, 128
        %721 = vxpose.xlu0.c.b16.cont [5/8] 0, 128
        %722 = vxpose.xlu0.c.b16.cont [6/8] 0, 128
        %723 = vxpose.xlu0.c.b16.cont [7/8] 0, 128
        %724 = vxpose.xlu0.c.b16.end [8/8] 0, 128
        %v725 = vpop.trf.xlu0
        %v726 = vpop.trf.xlu0
        %v727 = vpop.trf.xlu0
        %v728 = vpop.trf.xlu0
        %v729 = vpop.trf.xlu0
        %v730 = vpop.trf.xlu0
        %v731 = vpop.trf.xlu0
        %v732 = vpop.trf.xlu0
        %733 = vrot.lane.b32.xlu0 %v701, 64
        %v734 = vpop.permute.xlu0 %733
        %735 = vrot.lane.b32.xlu0 %v702, 64
        %v736 = vpop.permute.xlu0 %735
        %737 = vrot.lane.b32.xlu0 %v703, 64
        %v738 = vpop.permute.xlu0 %737
        %739 = vrot.lane.b32.xlu0 %v704, 64
        %v740 = vpop.permute.xlu0 %739
        %v746 = vsel %vm399, %v725, 0
        %v749 = vsel %vm399, %v726, 0
        %751 = vmatprep.subr.bf16.mxu0 0
        %752 = vmatpush1.bf16.msra.mxu0 %v734
        %753 = vmatprep.subr.bf16.mxu0 0
        %754 = vmatpush1.bf16.msra.mxu0 %v736
        %755 = vmatprep.subr.bf16.mxu0 0
        %756 = vmatpush1.bf16.msra.mxu0 %v738
        %757 = vmatprep.subr.bf16.mxu0 0
        %758 = vmatpush1.bf16.msra.mxu0 %v740
        %759 = vmatprep.subr.bf16.mxu0 0
        %760 = vmatpush1.bf16.msra.mxu0 0
        %761 = vmatprep.subr.bf16.mxu0 0
        %762 = vmatpush1.bf16.msra.mxu0 0
        %763 = vmatprep.subr.bf16.mxu0 0
        %764 = vmatpush1.bf16.msra.mxu0 0
        %765 = vmatprep.subr.bf16.mxu0 0
        %766 = vmatpush1.bf16.msra.mxu0 0
        %767 = vmatprep.subr.bf16.mxu0 0
        %768 = vmatpush1.bf16.msra.mxu0 0
        %769 = vmatprep.subr.bf16.mxu0 0
        %770 = vmatpush1.bf16.msra.mxu0 0
        %771 = vmatprep.subr.bf16.mxu0 0
        %772 = vmatpush1.bf16.msra.mxu0 0
        %773 = vmatprep.subr.bf16.mxu0 0
        %774 = vmatpush1.bf16.msra.mxu0 0
        %775 = vmatprep.subr.bf16.mxu0 0
        %776 = vmatpush1.bf16.msra.mxu0 0
        %777 = vmatprep.subr.bf16.mxu0 0
        %778 = vmatpush1.bf16.msra.mxu0 0
        %779 = vmatprep.subr.bf16.mxu0 0
        %780 = vmatpush1.bf16.msra.mxu0 0
        %781 = vmatprep.subr.bf16.mxu0 0
        %782 = vmatpush1.bf16.msra.mxu0 0
        %783 = vmatprep.mubr.bf16.mxu0 0
        %784 = vmatmul.mubr.bf16.gmra.mrb[0].mxu0 %v746
        %v785 = vpop.f32.mrb[0].mxu0
        %v786 = vadd.f32 0.0, %v785
        %v787 = vpop.f32.mrb[0].mxu0
        %v788 = vpop.f32.mrb[0].mxu0
        %v789 = vadd.f32 0.0, %v788
        %v790 = vpop.f32.mrb[0].mxu0
        %791 = vmatprep.mubr.bf16.mxu0 0
        %792 = vmatmul.mubr.bf16.gmra.mrb[0].mxu0 %v749
        %v793 = vpop.f32.mrb[0].mxu0
        %v794 = vadd.f32 0.0, %v793
        %v795 = vpop.f32.mrb[0].mxu0
        %v796 = vpop.f32.mrb[0].mxu0
        %v797 = vadd.f32 0.0, %v796
        %v798 = vpop.f32.mrb[0].mxu0
        %799 = vdwg.mxu0
        %v800 = vld [vmem:[%s1] sm:$0xff]
        %v801 = vld [vmem:[%s1 + $0x8] sm:$0xff]
        %v802 = vld [vmem:[%s1 + $0x10] sm:$0xff]
        %v803 = vld [vmem:[%s1 + $0x18] sm:$0xff]
        %v804 = vmul.f32 %v441, %v800
        %v805 = vmul.f32 %v444, %v801
        %v806 = vmul.f32 %v449, %v802
        %v807 = vmul.f32 %v452, %v803
        %v808 = vmul.f32 %v556, %v800
        %v809 = vmul.f32 %v559, %v801
        %v810 = vmul.f32 %v564, %v802
        %v811 = vmul.f32 %v567, %v803
        %v812 = vmul.f32 %v671, %v800
        %v813 = vmul.f32 %v674, %v801
        %v814 = vmul.f32 %v679, %v802
        %v815 = vmul.f32 %v682, %v803
        %v816 = vmul.f32 %v786, %v800
        %v817 = vmul.f32 %v789, %v801
        %v818 = vmul.f32 %v794, %v802
        %v819 = vmul.f32 %v797, %v803
        %v820 = vpack.c.bf16 %v805, %v804
        %v821 = vpack.c.bf16 %v807, %v806
        %v822 = vpack.c.bf16 %v809, %v808
        %v823 = vpack.c.bf16 %v811, %v810
        %v824 = vpack.c.bf16 %v813, %v812
        %v825 = vpack.c.bf16 %v815, %v814
        %v826 = vpack.c.bf16 %v817, %v816
        %v827 = vpack.c.bf16 %v819, %v818
        %vm828 = vcmask 261120
        %v830 = vsel %vm828, %v355, 0
        %v833 = vsel %vm828, %v356, 0
        %v836 = vsel %vm828, %v357, 0
        %v839 = vsel %vm828, %v358, 0
        %841 = vmatprep.subr.bf16.mxu0 0
        %842 = vmatpush1.bf16.msra.mxu0 %v820
        %843 = vmatprep.subr.bf16.mxu0 0
        %844 = vmatpush1.bf16.msra.mxu0 %v821
        %845 = vmatprep.subr.bf16.mxu0 0
        %846 = vmatpush1.bf16.msra.mxu0 0
        %847 = vmatprep.subr.bf16.mxu0 0
        %848 = vmatpush1.bf16.msra.mxu0 0
        %849 = vmatprep.subr.bf16.mxu0 0
        %850 = vmatpush1.bf16.msra.mxu0 0
        %851 = vmatprep.subr.bf16.mxu0 0
        %852 = vmatpush1.bf16.msra.mxu0 0
        %853 = vmatprep.subr.bf16.mxu0 0
        %854 = vmatpush1.bf16.msra.mxu0 0
        %855 = vmatprep.subr.bf16.mxu0 0
        %856 = vmatpush1.bf16.msra.mxu0 0
        %857 = vmatprep.subr.bf16.mxu0 0
        %858 = vmatpush1.bf16.msra.mxu0 0
        %859 = vmatprep.subr.bf16.mxu0 0
        %860 = vmatpush1.bf16.msra.mxu0 0
        %861 = vmatprep.subr.bf16.mxu0 0
        %862 = vmatpush1.bf16.msra.mxu0 0
        %863 = vmatprep.subr.bf16.mxu0 0
        %864 = vmatpush1.bf16.msra.mxu0 0
        %865 = vmatprep.subr.bf16.mxu0 0
        %866 = vmatpush1.bf16.msra.mxu0 0
        %867 = vmatprep.subr.bf16.mxu0 0
        %868 = vmatpush1.bf16.msra.mxu0 0
        %869 = vmatprep.subr.bf16.mxu0 0
        %870 = vmatpush1.bf16.msra.mxu0 0
        %871 = vmatprep.subr.bf16.mxu0 0
        %872 = vmatpush1.bf16.msra.mxu0 0
        %873 = vmatprep.mubr.bf16.mxu0 0
        %874 = vmatmul.mubr.bf16.gmra.mrb[0].mxu0 %v830
        %v875 = vpop.f32.mrb[0].mxu0
        %v876 = vadd.f32 0.0, %v875
        %v877 = vpop.f32.mrb[0].mxu0
        %v878 = vpop.f32.mrb[0].mxu0
        %v879 = vadd.f32 0.0, %v878
        %v880 = vpop.f32.mrb[0].mxu0
        %881 = vmatprep.mubr.bf16.mxu0 0
        %882 = vmatmul.mubr.bf16.gmra.mrb[0].mxu0 %v833
        %v883 = vpop.f32.mrb[0].mxu0
        %v884 = vadd.f32 0.0, %v883
        %v885 = vpop.f32.mrb[0].mxu0
        %v886 = vpop.f32.mrb[0].mxu0
        %v887 = vadd.f32 0.0, %v886
        %v888 = vpop.f32.mrb[0].mxu0
        %889 = vmatprep.mubr.bf16.mxu0 0
        %890 = vmatmul.mubr.bf16.gmra.mrb[0].mxu0 %v836
        %v891 = vpop.f32.mrb[0].mxu0
        %v892 = vadd.f32 0.0, %v891
        %v893 = vpop.f32.mrb[0].mxu0
        %v894 = vpop.f32.mrb[0].mxu0
        %v895 = vadd.f32 0.0, %v894
        %v896 = vpop.f32.mrb[0].mxu0
        %897 = vmatprep.mubr.bf16.mxu0 0
        %898 = vmatmul.mubr.bf16.gmra.mrb[0].mxu0 %v839
        %v899 = vpop.f32.mrb[0].mxu0
        %v900 = vadd.f32 0.0, %v899
        %v901 = vpop.f32.mrb[0].mxu0
        %v902 = vpop.f32.mrb[0].mxu0
        %v903 = vadd.f32 0.0, %v902
        %v904 = vpop.f32.mrb[0].mxu0
        %905 = vdwg.mxu0
        %v907 = vsel %vm828, %v471, 0
        %v910 = vsel %vm828, %v472, 0
        %v913 = vsel %vm828, %v473, 0
        %v916 = vsel %vm828, %v474, 0
        %918 = vmatprep.subr.bf16.mxu0 0
        %919 = vmatpush1.bf16.msra.mxu0 %v822
        %920 = vmatprep.subr.bf16.mxu0 0
        %921 = vmatpush1.bf16.msra.mxu0 %v823
        %922 = vmatprep.subr.bf16.mxu0 0
        %923 = vmatpush1.bf16.msra.mxu0 0
        %924 = vmatprep.subr.bf16.mxu0 0
        %925 = vmatpush1.bf16.msra.mxu0 0
        %926 = vmatprep.subr.bf16.mxu0 0
        %927 = vmatpush1.bf16.msra.mxu0 0
        %928 = vmatprep.subr.bf16.mxu0 0
        %929 = vmatpush1.bf16.msra.mxu0 0
        %930 = vmatprep.subr.bf16.mxu0 0
        %931 = vmatpush1.bf16.msra.mxu0 0
        %932 = vmatprep.subr.bf16.mxu0 0
        %933 = vmatpush1.bf16.msra.mxu0 0
        %934 = vmatprep.subr.bf16.mxu0 0
        %935 = vmatpush1.bf16.msra.mxu0 0
        %936 = vmatprep.subr.bf16.mxu0 0
        %937 = vmatpush1.bf16.msra.mxu0 0
        %938 = vmatprep.subr.bf16.mxu0 0
        %939 = vmatpush1.bf16.msra.mxu0 0
        %940 = vmatprep.subr.bf16.mxu0 0
        %941 = vmatpush1.bf16.msra.mxu0 0
        %942 = vmatprep.subr.bf16.mxu0 0
        %943 = vmatpush1.bf16.msra.mxu0 0
        %944 = vmatprep.subr.bf16.mxu0 0
        %945 = vmatpush1.bf16.msra.mxu0 0
        %946 = vmatprep.subr.bf16.mxu0 0
        %947 = vmatpush1.bf16.msra.mxu0 0
        %948 = vmatprep.subr.bf16.mxu0 0
        %949 = vmatpush1.bf16.msra.mxu0 0
        %950 = vmatprep.mubr.bf16.mxu0 0
        %951 = vmatmul.mubr.bf16.gmra.mrb[0].mxu0 %v907
        %v952 = vpop.f32.mrb[0].mxu0
        %v953 = vadd.f32 0.0, %v952
        %v954 = vpop.f32.mrb[0].mxu0
        %v955 = vpop.f32.mrb[0].mxu0
        %v956 = vadd.f32 0.0, %v955
        %v957 = vpop.f32.mrb[0].mxu0
        %958 = vmatprep.mubr.bf16.mxu0 0
        %959 = vmatmul.mubr.bf16.gmra.mrb[0].mxu0 %v910
        %v960 = vpop.f32.mrb[0].mxu0
        %v961 = vadd.f32 0.0, %v960
        %v962 = vpop.f32.mrb[0].mxu0
        %v963 = vpop.f32.mrb[0].mxu0
        %v964 = vadd.f32 0.0, %v963
        %v965 = vpop.f32.mrb[0].mxu0
        %966 = vmatprep.mubr.bf16.mxu0 0
        %967 = vmatmul.mubr.bf16.gmra.mrb[0].mxu0 %v913
        %v968 = vpop.f32.mrb[0].mxu0
        %v969 = vadd.f32 0.0, %v968
        %v970 = vpop.f32.mrb[0].mxu0
        %v971 = vpop.f32.mrb[0].mxu0
        %v972 = vadd.f32 0.0, %v971
        %v973 = vpop.f32.mrb[0].mxu0
        %974 = vmatprep.mubr.bf16.mxu0 0
        %975 = vmatmul.mubr.bf16.gmra.mrb[0].mxu0 %v916
        %v976 = vpop.f32.mrb[0].mxu0
        %v977 = vadd.f32 0.0, %v976
        %v978 = vpop.f32.mrb[0].mxu0
        %v979 = vpop.f32.mrb[0].mxu0
        %v980 = vadd.f32 0.0, %v979
        %v981 = vpop.f32.mrb[0].mxu0
        %982 = vdwg.mxu0
        %v984 = vsel %vm828, %v586, 0
        %v987 = vsel %vm828, %v587, 0
        %v990 = vsel %vm828, %v588, 0
        %v993 = vsel %vm828, %v589, 0
        %995 = vmatprep.subr.bf16.mxu0 0
        %996 = vmatpush1.bf16.msra.mxu0 %v824
        %997 = vmatprep.subr.bf16.mxu0 0
        %998 = vmatpush1.bf16.msra.mxu0 %v825
        %999 = vmatprep.subr.bf16.mxu0 0
        %1000 = vmatpush1.bf16.msra.mxu0 0
        %1001 = vmatprep.subr.bf16.mxu0 0
        %1002 = vmatpush1.bf16.msra.mxu0 0
        %1003 = vmatprep.subr.bf16.mxu0 0
        %1004 = vmatpush1.bf16.msra.mxu0 0
        %1005 = vmatprep.subr.bf16.mxu0 0
        %1006 = vmatpush1.bf16.msra.mxu0 0
        %1007 = vmatprep.subr.bf16.mxu0 0
        %1008 = vmatpush1.bf16.msra.mxu0 0
        %1009 = vmatprep.subr.bf16.mxu0 0
        %1010 = vmatpush1.bf16.msra.mxu0 0
        %1011 = vmatprep.subr.bf16.mxu0 0
        %1012 = vmatpush1.bf16.msra.mxu0 0
        %1013 = vmatprep.subr.bf16.mxu0 0
        %1014 = vmatpush1.bf16.msra.mxu0 0
        %1015 = vmatprep.subr.bf16.mxu0 0
        %1016 = vmatpush1.bf16.msra.mxu0 0
        %1017 = vmatprep.subr.bf16.mxu0 0
        %1018 = vmatpush1.bf16.msra.mxu0 0
        %1019 = vmatprep.subr.bf16.mxu0 0
        %1020 = vmatpush1.bf16.msra.mxu0 0
        %1021 = vmatprep.subr.bf16.mxu0 0
        %1022 = vmatpush1.bf16.msra.mxu0 0
        %1023 = vmatprep.subr.bf16.mxu0 0
        %1024 = vmatpush1.bf16.msra.mxu0 0
        %1025 = vmatprep.subr.bf16.mxu0 0
        %1026 = vmatpush1.bf16.msra.mxu0 0
        %1027 = vmatprep.mubr.bf16.mxu0 0
        %1028 = vmatmul.mubr.bf16.gmra.mrb[0].mxu0 %v984
        %v1029 = vpop.f32.mrb[0].mxu0
        %v1030 = vadd.f32 0.0, %v1029
        %v1031 = vpop.f32.mrb[0].mxu0
        %v1032 = vpop.f32.mrb[0].mxu0
        %v1033 = vadd.f32 0.0, %v1032
        %v1034 = vpop.f32.mrb[0].mxu0
        %1035 = vmatprep.mubr.bf16.mxu0 0
        %1036 = vmatmul.mubr.bf16.gmra.mrb[0].mxu0 %v987
        %v1037 = vpop.f32.mrb[0].mxu0
        %v1038 = vadd.f32 0.0, %v1037
        %v1039 = vpop.f32.mrb[0].mxu0
        %v1040 = vpop.f32.mrb[0].mxu0
        %v1041 = vadd.f32 0.0, %v1040
        %v1042 = vpop.f32.mrb[0].mxu0
        %1043 = vmatprep.mubr.bf16.mxu0 0
        %1044 = vmatmul.mubr.bf16.gmra.mrb[0].mxu0 %v990
        %v1045 = vpop.f32.mrb[0].mxu0
        %v1046 = vadd.f32 0.0, %v1045
        %v1047 = vpop.f32.mrb[0].mxu0
        %v1048 = vpop.f32.mrb[0].mxu0
        %v1049 = vadd.f32 0.0, %v1048
        %v1050 = vpop.f32.mrb[0].mxu0
        %1051 = vmatprep.mubr.bf16.mxu0 0
        %1052 = vmatmul.mubr.bf16.gmra.mrb[0].mxu0 %v993
        %v1053 = vpop.f32.mrb[0].mxu0
        %v1054 = vadd.f32 0.0, %v1053
        %v1055 = vpop.f32.mrb[0].mxu0
        %v1056 = vpop.f32.mrb[0].mxu0
        %v1057 = vadd.f32 0.0, %v1056
        %v1058 = vpop.f32.mrb[0].mxu0
        %1059 = vdwg.mxu0
        %v1061 = vsel %vm828, %v701, 0
        %v1064 = vsel %vm828, %v702, 0
        %v1067 = vsel %vm828, %v703, 0
        %v1070 = vsel %vm828, %v704, 0
        %1072 = vmatprep.subr.bf16.mxu0 0
        %1073 = vmatpush1.bf16.msra.mxu0 %v826
        %1074 = vmatprep.subr.bf16.mxu0 0
        %1075 = vmatpush1.bf16.msra.mxu0 %v827
        %1076 = vmatprep.subr.bf16.mxu0 0
        %1077 = vmatpush1.bf16.msra.mxu0 0
        %1078 = vmatprep.subr.bf16.mxu0 0
        %1079 = vmatpush1.bf16.msra.mxu0 0
        %1080 = vmatprep.subr.bf16.mxu0 0
        %1081 = vmatpush1.bf16.msra.mxu0 0
        %1082 = vmatprep.subr.bf16.mxu0 0
        %1083 = vmatpush1.bf16.msra.mxu0 0
        %1084 = vmatprep.subr.bf16.mxu0 0
        %1085 = vmatpush1.bf16.msra.mxu0 0
        %1086 = vmatprep.subr.bf16.mxu0 0
        %1087 = vmatpush1.bf16.msra.mxu0 0
        %1088 = vmatprep.subr.bf16.mxu0 0
        %1089 = vmatpush1.bf16.msra.mxu0 0
        %1090 = vmatprep.subr.bf16.mxu0 0
        %1091 = vmatpush1.bf16.msra.mxu0 0
        %1092 = vmatprep.subr.bf16.mxu0 0
        %1093 = vmatpush1.bf16.msra.mxu0 0
        %1094 = vmatprep.subr.bf16.mxu0 0
        %1095 = vmatpush1.bf16.msra.mxu0 0
        %1096 = vmatprep.subr.bf16.mxu0 0
        %1097 = vmatpush1.bf16.msra.mxu0 0
        %1098 = vmatprep.subr.bf16.mxu0 0
        %1099 = vmatpush1.bf16.msra.mxu0 0
        %1100 = vmatprep.subr.bf16.mxu0 0
        %1101 = vmatpush1.bf16.msra.mxu0 0
        %1102 = vmatprep.subr.bf16.mxu0 0
        %1103 = vmatpush1.bf16.msra.mxu0 0
        %1104 = vmatprep.mubr.bf16.mxu0 0
        %1105 = vmatmul.mubr.bf16.gmra.mrb[0].mxu0 %v1061
        %v1106 = vpop.f32.mrb[0].mxu0
        %v1107 = vadd.f32 0.0, %v1106
        %v1108 = vpop.f32.mrb[0].mxu0
        %v1109 = vpop.f32.mrb[0].mxu0
        %v1110 = vadd.f32 0.0, %v1109
        %v1111 = vpop.f32.mrb[0].mxu0
        %1112 = vmatprep.mubr.bf16.mxu0 0
        %1113 = vmatmul.mubr.bf16.gmra.mrb[0].mxu0 %v1064
        %v1114 = vpop.f32.mrb[0].mxu0
        %v1115 = vadd.f32 0.0, %v1114
        %v1116 = vpop.f32.mrb[0].mxu0
        %v1117 = vpop.f32.mrb[0].mxu0
        %v1118 = vadd.f32 0.0, %v1117
        %v1119 = vpop.f32.mrb[0].mxu0
        %1120 = vmatprep.mubr.bf16.mxu0 0
        %1121 = vmatmul.mubr.bf16.gmra.mrb[0].mxu0 %v1067
        %v1122 = vpop.f32.mrb[0].mxu0
        %v1123 = vadd.f32 0.0, %v1122
        %v1124 = vpop.f32.mrb[0].mxu0
        %v1125 = vpop.f32.mrb[0].mxu0
        %v1126 = vadd.f32 0.0, %v1125
        %v1127 = vpop.f32.mrb[0].mxu0
        %1128 = vmatprep.mubr.bf16.mxu0 0
        %1129 = vmatmul.mubr.bf16.gmra.mrb[0].mxu0 %v1070
        %v1130 = vpop.f32.mrb[0].mxu0
        %v1131 = vadd.f32 0.0, %v1130
        %v1132 = vpop.f32.mrb[0].mxu0
        %v1133 = vpop.f32.mrb[0].mxu0
        %v1134 = vadd.f32 0.0, %v1133
        %v1135 = vpop.f32.mrb[0].mxu0
        %1136 = vdwg.mxu0
        %v1137 = vadd.f32 %v876, 0.0
        %v1138 = vadd.f32 %v879, 0.0
        %v1139 = vadd.f32 %v884, 0.0
        %v1140 = vadd.f32 %v887, 0.0
        %v1141 = vadd.f32 %v892, 0.0
        %v1142 = vadd.f32 %v895, 0.0
        %v1143 = vadd.f32 %v900, 0.0
        %v1144 = vadd.f32 %v903, 0.0
        %v1145 = vmul.f32 %v1137, 0.5
        %v1146 = vmul.f32 %v1138, 0.5
        %v1147 = vmul.f32 %v1139, 0.5
        %v1148 = vmul.f32 %v1140, 0.5
        %v1149 = vmul.f32 %v1141, 0.5
        %v1150 = vmul.f32 %v1142, 0.5
        %v1151 = vmul.f32 %v1143, 0.5
        %v1152 = vmul.f32 %v1144, 0.5
        %vm1153 = vcmp.ge.f32.partialorder %v1145, 0.5
        %vm1154 = vcmp.ge.f32.partialorder %v1146, 0.5
        %vm1155 = vcmp.ge.f32.partialorder %v1147, 0.5
        %vm1156 = vcmp.ge.f32.partialorder %v1148, 0.5
        %vm1157 = vcmp.ge.f32.partialorder %v1149, 0.5
        %vm1158 = vcmp.ge.f32.partialorder %v1150, 0.5
        %vm1159 = vcmp.ge.f32.partialorder %v1151, 0.5
        %vm1160 = vcmp.ge.f32.partialorder %v1152, 0.5
        %v1161 = vsel %vm1153, 1, 0
        %v1162 = vsel %vm1154, 1, 0
        %v1163 = vsel %vm1155, 1, 0
        %v1164 = vsel %vm1156, 1, 0
        %v1165 = vsel %vm1157, 1, 0
        %v1166 = vsel %vm1158, 1, 0
        %v1167 = vsel %vm1159, 1, 0
        %v1168 = vsel %vm1160, 1, 0
        %v1169 = vcvt.s32.f32 %v1161
        %v1170 = vcvt.s32.f32 %v1162
        %v1171 = vcvt.s32.f32 %v1163
        %v1172 = vcvt.s32.f32 %v1164
        %v1173 = vcvt.s32.f32 %v1165
        %v1174 = vcvt.s32.f32 %v1166
        %v1175 = vcvt.s32.f32 %v1167
        %v1176 = vcvt.s32.f32 %v1168
        %v1177 = vpack.c.bf16 %v1170, %v1169
        %v1178 = vpack.c.bf16 %v1172, %v1171
        %v1179 = vpack.c.bf16 %v1174, %v1173
        %v1180 = vpack.c.bf16 %v1176, %v1175
        %v1185 = vunpack.c.l.b16 %v1177
        %v1186 = vunpack.c.h.b16 %v1177
        %v1187 = vunpack.c.l.b16 %v1178
        %v1188 = vunpack.c.h.b16 %v1178
        %v1189 = vunpack.c.l.b16 %v1179
        %v1190 = vunpack.c.h.b16 %v1179
        %v1191 = vunpack.c.l.b16 %v1180
        %v1192 = vunpack.c.h.b16 %v1180
        %v1193 = vpack.c.b16 %v1185, %v1185
        %v1194 = vpack.c.b16 %v1186, %v1186
        %v1195 = vpack.c.b16 %v1187, %v1187
        %v1196 = vpack.c.b16 %v1188, %v1188
        %v1197 = vpack.c.b16 %v1189, %v1189
        %v1198 = vpack.c.b16 %v1190, %v1190
        %v1199 = vpack.c.b16 %v1191, %v1191
        %v1200 = vpack.c.b16 %v1192, %v1192
        %vm1209 = vcmask 257024
        %1210 = vst.msk [vmem:[%s303] sm:$0xf] %vm1209, %v1193
        %1211 = vst.msk [vmem:[%s303 + $0x4] sm:$0xf] %vm1209, %v1194
        %1212 = vst.msk [vmem:[%s303 + $0x8] sm:$0xf] %vm1209, %v1195
        %1213 = vst.msk [vmem:[%s303 + $0xc] sm:$0xf] %vm1209, %v1196
        %1214 = vst.msk [vmem:[%s303 + $0x10] sm:$0xf] %vm1209, %v1197
        %1215 = vst.msk [vmem:[%s303 + $0x14] sm:$0xf] %vm1209, %v1198
        %1216 = vst.msk [vmem:[%s303 + $0x18] sm:$0xf] %vm1209, %v1199
        %1217 = vst.msk [vmem:[%s303 + $0x1c] sm:$0xf] %vm1209, %v1200
        %v1218 = vsel %vm1153, 0.0, %v1145
        %v1219 = vsel %vm1154, 0.0, %v1146
        %v1220 = vsel %vm1155, 0.0, %v1147
        %v1221 = vsel %vm1156, 0.0, %v1148
        %v1222 = vsel %vm1157, 0.0, %v1149
        %v1223 = vsel %vm1158, 0.0, %v1150
        %v1224 = vsel %vm1159, 0.0, %v1151
        %v1225 = vsel %vm1160, 0.0, %v1152
        %v1226 = vadd.f32 %v1218, %v953
        %v1227 = vadd.f32 %v1219, %v956
        %v1228 = vadd.f32 %v1220, %v961
        %v1229 = vadd.f32 %v1221, %v964
        %v1230 = vadd.f32 %v1222, %v969
        %v1231 = vadd.f32 %v1223, %v972
        %v1232 = vadd.f32 %v1224, %v977
        %v1233 = vadd.f32 %v1225, %v980
        %v1234 = vmul.f32 %v1226, 0.5
        %v1235 = vmul.f32 %v1227, 0.5
        %v1236 = vmul.f32 %v1228, 0.5
        %v1237 = vmul.f32 %v1229, 0.5
        %v1238 = vmul.f32 %v1230, 0.5
        %v1239 = vmul.f32 %v1231, 0.5
        %v1240 = vmul.f32 %v1232, 0.5
        %v1241 = vmul.f32 %v1233, 0.5
        %vm1242 = vcmp.ge.f32.partialorder %v1234, 0.5
        %vm1243 = vcmp.ge.f32.partialorder %v1235, 0.5
        %vm1244 = vcmp.ge.f32.partialorder %v1236, 0.5
        %vm1245 = vcmp.ge.f32.partialorder %v1237, 0.5
        %vm1246 = vcmp.ge.f32.partialorder %v1238, 0.5
        %vm1247 = vcmp.ge.f32.partialorder %v1239, 0.5
        %vm1248 = vcmp.ge.f32.partialorder %v1240, 0.5
        %vm1249 = vcmp.ge.f32.partialorder %v1241, 0.5
        %v1250 = vsel %vm1242, 1, 0
        %v1251 = vsel %vm1243, 1, 0
        %v1252 = vsel %vm1244, 1, 0
        %v1253 = vsel %vm1245, 1, 0
        %v1254 = vsel %vm1246, 1, 0
        %v1255 = vsel %vm1247, 1, 0
        %v1256 = vsel %vm1248, 1, 0
        %v1257 = vsel %vm1249, 1, 0
        %v1258 = vcvt.s32.f32 %v1250
        %v1259 = vcvt.s32.f32 %v1251
        %v1260 = vcvt.s32.f32 %v1252
        %v1261 = vcvt.s32.f32 %v1253
        %v1262 = vcvt.s32.f32 %v1254
        %v1263 = vcvt.s32.f32 %v1255
        %v1264 = vcvt.s32.f32 %v1256
        %v1265 = vcvt.s32.f32 %v1257
        %v1266 = vpack.c.bf16 %v1259, %v1258
        %v1267 = vpack.c.bf16 %v1261, %v1260
        %v1268 = vpack.c.bf16 %v1263, %v1262
        %v1269 = vpack.c.bf16 %v1265, %v1264
        %v1274 = vunpack.c.l.b16 %v1266
        %v1275 = vunpack.c.h.b16 %v1266
        %v1276 = vunpack.c.l.b16 %v1267
        %v1277 = vunpack.c.h.b16 %v1267
        %v1278 = vunpack.c.l.b16 %v1268
        %v1279 = vunpack.c.h.b16 %v1268
        %v1280 = vunpack.c.l.b16 %v1269
        %v1281 = vunpack.c.h.b16 %v1269
        %v1282 = vpack.c.b16 %v1274, %v1274
        %v1283 = vpack.c.b16 %v1275, %v1275
        %v1284 = vpack.c.b16 %v1276, %v1276
        %v1285 = vpack.c.b16 %v1277, %v1277
        %v1286 = vpack.c.b16 %v1278, %v1278
        %v1287 = vpack.c.b16 %v1279, %v1279
        %v1288 = vpack.c.b16 %v1280, %v1280
        %v1289 = vpack.c.b16 %v1281, %v1281
        %s1298 = scalar_lea.vmem %s303, 32 [#allocation3]
        %1299 = vst.msk [vmem:[%s1298] sm:$0xf] %vm1209, %v1282
        %1300 = vst.msk [vmem:[%s1298 + $0x4] sm:$0xf] %vm1209, %v1283
        %1301 = vst.msk [vmem:[%s1298 + $0x8] sm:$0xf] %vm1209, %v1284
        %1302 = vst.msk [vmem:[%s1298 + $0xc] sm:$0xf] %vm1209, %v1285
        %1303 = vst.msk [vmem:[%s1298 + $0x10] sm:$0xf] %vm1209, %v1286
        %1304 = vst.msk [vmem:[%s1298 + $0x14] sm:$0xf] %vm1209, %v1287
        %1305 = vst.msk [vmem:[%s1298 + $0x18] sm:$0xf] %vm1209, %v1288
        %1306 = vst.msk [vmem:[%s1298 + $0x1c] sm:$0xf] %vm1209, %v1289
        %v1307 = vsel %vm1242, 0.0, %v1234
        %v1308 = vsel %vm1243, 0.0, %v1235
        %v1309 = vsel %vm1244, 0.0, %v1236
        %v1310 = vsel %vm1245, 0.0, %v1237
        %v1311 = vsel %vm1246, 0.0, %v1238
        %v1312 = vsel %vm1247, 0.0, %v1239
        %v1313 = vsel %vm1248, 0.0, %v1240
        %v1314 = vsel %vm1249, 0.0, %v1241
        %v1315 = vadd.f32 %v1307, %v1030
        %v1316 = vadd.f32 %v1308, %v1033
        %v1317 = vadd.f32 %v1309, %v1038
        %v1318 = vadd.f32 %v1310, %v1041
        %v1319 = vadd.f32 %v1311, %v1046
        %v1320 = vadd.f32 %v1312, %v1049
        %v1321 = vadd.f32 %v1313, %v1054
        %v1322 = vadd.f32 %v1314, %v1057
        %v1323 = vmul.f32 %v1315, 0.5
        %v1324 = vmul.f32 %v1316, 0.5
        %v1325 = vmul.f32 %v1317, 0.5
        %v1326 = vmul.f32 %v1318, 0.5
        %v1327 = vmul.f32 %v1319, 0.5
        %v1328 = vmul.f32 %v1320, 0.5
        %v1329 = vmul.f32 %v1321, 0.5
        %v1330 = vmul.f32 %v1322, 0.5
        %vm1331 = vcmp.ge.f32.partialorder %v1323, 0.5
        %vm1332 = vcmp.ge.f32.partialorder %v1324, 0.5
        %vm1333 = vcmp.ge.f32.partialorder %v1325, 0.5
        %vm1334 = vcmp.ge.f32.partialorder %v1326, 0.5
        %vm1335 = vcmp.ge.f32.partialorder %v1327, 0.5
        %vm1336 = vcmp.ge.f32.partialorder %v1328, 0.5
        %vm1337 = vcmp.ge.f32.partialorder %v1329, 0.5
        %vm1338 = vcmp.ge.f32.partialorder %v1330, 0.5
        %v1339 = vsel %vm1331, 1, 0
        %v1340 = vsel %vm1332, 1, 0
        %v1341 = vsel %vm1333, 1, 0
        %v1342 = vsel %vm1334, 1, 0
        %v1343 = vsel %vm1335, 1, 0
        %v1344 = vsel %vm1336, 1, 0
        %v1345 = vsel %vm1337, 1, 0
        %v1346 = vsel %vm1338, 1, 0
        %v1347 = vcvt.s32.f32 %v1339
        %v1348 = vcvt.s32.f32 %v1340
        %v1349 = vcvt.s32.f32 %v1341
        %v1350 = vcvt.s32.f32 %v1342
        %v1351 = vcvt.s32.f32 %v1343
        %v1352 = vcvt.s32.f32 %v1344
        %v1353 = vcvt.s32.f32 %v1345
        %v1354 = vcvt.s32.f32 %v1346
        %v1355 = vpack.c.bf16 %v1348, %v1347
        %v1356 = vpack.c.bf16 %v1350, %v1349
        %v1357 = vpack.c.bf16 %v1352, %v1351
        %v1358 = vpack.c.bf16 %v1354, %v1353
        %v1363 = vunpack.c.l.b16 %v1355
        %v1364 = vunpack.c.h.b16 %v1355
        %v1365 = vunpack.c.l.b16 %v1356
        %v1366 = vunpack.c.h.b16 %v1356
        %v1367 = vunpack.c.l.b16 %v1357
        %v1368 = vunpack.c.h.b16 %v1357
        %v1369 = vunpack.c.l.b16 %v1358
        %v1370 = vunpack.c.h.b16 %v1358
        %v1371 = vpack.c.b16 %v1363, %v1363
        %v1372 = vpack.c.b16 %v1364, %v1364
        %v1373 = vpack.c.b16 %v1365, %v1365
        %v1374 = vpack.c.b16 %v1366, %v1366
        %v1375 = vpack.c.b16 %v1367, %v1367
        %v1376 = vpack.c.b16 %v1368, %v1368
        %v1377 = vpack.c.b16 %v1369, %v1369
        %v1378 = vpack.c.b16 %v1370, %v1370
        %s1387 = scalar_lea.vmem %s303, 64 [#allocation3]
        %1388 = vst.msk [vmem:[%s1387] sm:$0xf] %vm1209, %v1371
        %1389 = vst.msk [vmem:[%s1387 + $0x4] sm:$0xf] %vm1209, %v1372
        %1390 = vst.msk [vmem:[%s1387 + $0x8] sm:$0xf] %vm1209, %v1373
        %1391 = vst.msk [vmem:[%s1387 + $0xc] sm:$0xf] %vm1209, %v1374
        %1392 = vst.msk [vmem:[%s1387 + $0x10] sm:$0xf] %vm1209, %v1375
        %1393 = vst.msk [vmem:[%s1387 + $0x14] sm:$0xf] %vm1209, %v1376
        %1394 = vst.msk [vmem:[%s1387 + $0x18] sm:$0xf] %vm1209, %v1377
        %1395 = vst.msk [vmem:[%s1387 + $0x1c] sm:$0xf] %vm1209, %v1378
        %v1396 = vsel %vm1331, 0.0, %v1323
        %v1397 = vsel %vm1332, 0.0, %v1324
        %v1398 = vsel %vm1333, 0.0, %v1325
        %v1399 = vsel %vm1334, 0.0, %v1326
        %v1400 = vsel %vm1335, 0.0, %v1327
        %v1401 = vsel %vm1336, 0.0, %v1328
        %v1402 = vsel %vm1337, 0.0, %v1329
        %v1403 = vsel %vm1338, 0.0, %v1330
        %v1404 = vadd.f32 %v1396, %v1107
        %v1405 = vadd.f32 %v1397, %v1110
        %v1406 = vadd.f32 %v1398, %v1115
        %v1407 = vadd.f32 %v1399, %v1118
        %v1408 = vadd.f32 %v1400, %v1123
        %v1409 = vadd.f32 %v1401, %v1126
        %v1410 = vadd.f32 %v1402, %v1131
        %v1411 = vadd.f32 %v1403, %v1134
        %v1412 = vmul.f32 %v1404, 0.5
        %v1413 = vmul.f32 %v1405, 0.5
        %v1414 = vmul.f32 %v1406, 0.5
        %v1415 = vmul.f32 %v1407, 0.5
        %v1416 = vmul.f32 %v1408, 0.5
        %v1417 = vmul.f32 %v1409, 0.5
        %v1418 = vmul.f32 %v1410, 0.5
        %v1419 = vmul.f32 %v1411, 0.5
        %vm1420 = vcmp.ge.f32.partialorder %v1412, 0.5
        %vm1421 = vcmp.ge.f32.partialorder %v1413, 0.5
        %vm1422 = vcmp.ge.f32.partialorder %v1414, 0.5
        %vm1423 = vcmp.ge.f32.partialorder %v1415, 0.5
        %vm1424 = vcmp.ge.f32.partialorder %v1416, 0.5
        %vm1425 = vcmp.ge.f32.partialorder %v1417, 0.5
        %vm1426 = vcmp.ge.f32.partialorder %v1418, 0.5
        %vm1427 = vcmp.ge.f32.partialorder %v1419, 0.5
        %v1428 = vsel %vm1420, 1, 0
        %v1429 = vsel %vm1421, 1, 0
        %v1430 = vsel %vm1422, 1, 0
        %v1431 = vsel %vm1423, 1, 0
        %v1432 = vsel %vm1424, 1, 0
        %v1433 = vsel %vm1425, 1, 0
        %v1434 = vsel %vm1426, 1, 0
        %v1435 = vsel %vm1427, 1, 0
        %v1436 = vcvt.s32.f32 %v1428
        %v1437 = vcvt.s32.f32 %v1429
        %v1438 = vcvt.s32.f32 %v1430
        %v1439 = vcvt.s32.f32 %v1431
        %v1440 = vcvt.s32.f32 %v1432
        %v1441 = vcvt.s32.f32 %v1433
        %v1442 = vcvt.s32.f32 %v1434
        %v1443 = vcvt.s32.f32 %v1435
        %v1444 = vpack.c.bf16 %v1437, %v1436
        %v1445 = vpack.c.bf16 %v1439, %v1438
        %v1446 = vpack.c.bf16 %v1441, %v1440
        %v1447 = vpack.c.bf16 %v1443, %v1442
        %v1452 = vunpack.c.l.b16 %v1444
        %v1453 = vunpack.c.h.b16 %v1444
        %v1454 = vunpack.c.l.b16 %v1445
        %v1455 = vunpack.c.h.b16 %v1445
        %v1456 = vunpack.c.l.b16 %v1446
        %v1457 = vunpack.c.h.b16 %v1446
        %v1458 = vunpack.c.l.b16 %v1447
        %v1459 = vunpack.c.h.b16 %v1447
        %v1460 = vpack.c.b16 %v1452, %v1452
        %v1461 = vpack.c.b16 %v1453, %v1453
        %v1462 = vpack.c.b16 %v1454, %v1454
        %v1463 = vpack.c.b16 %v1455, %v1455
        %v1464 = vpack.c.b16 %v1456, %v1456
        %v1465 = vpack.c.b16 %v1457, %v1457
        %v1466 = vpack.c.b16 %v1458, %v1458
        %v1467 = vpack.c.b16 %v1459, %v1459
        %s1476 = scalar_lea.vmem %s303, 96 [#allocation3]
        %1477 = vst.msk [vmem:[%s1476] sm:$0xf] %vm1209, %v1460
        %1478 = vst.msk [vmem:[%s1476 + $0x4] sm:$0xf] %vm1209, %v1461
        %1479 = vst.msk [vmem:[%s1476 + $0x8] sm:$0xf] %vm1209, %v1462
        %1480 = vst.msk [vmem:[%s1476 + $0xc] sm:$0xf] %vm1209, %v1463
        %1481 = vst.msk [vmem:[%s1476 + $0x10] sm:$0xf] %vm1209, %v1464
        %1482 = vst.msk [vmem:[%s1476 + $0x14] sm:$0xf] %vm1209, %v1465
        %1483 = vst.msk [vmem:[%s1476 + $0x18] sm:$0xf] %vm1209, %v1466
        %1484 = vst.msk [vmem:[%s1476 + $0x1c] sm:$0xf] %vm1209, %v1467
        %s1485 = sand.u32 %s68, 1
        %s1486 = sand.u32 %s68, 1
        %s1487 = smul.addr %s1486, 128
        %s1488 = scalar_lea.vmem [#allocation3], %s1487
        // Predicated region
        $region70: #{spiking_transformer_forward.6} parent=64 // pred_check
          %p1489 = pneg %p78
        $region71: #{spiking_transformer_forward.6} parent=64 // pred_check_branch
          %1491 = sbr.rel (%p1489) target = $region73
        $region72: #{spiking_transformer_forward.6} parent=64 // pred_region
          %s1492 = smul.u32 8, %s13
          %s1493 = smul.addr %s1492, 4
          %s1494 = scalar_lea.vmem %s2, %s1493
          // Predicated region
          $region74: #{spiking_transformer_forward.6} parent=72 // pred_check
            _
          $region75: #{spiking_transformer_forward.6} parent=72 // pred_check_branch
            %1496 = sbr.rel (0) target = $region77
          $region76: #{spiking_transformer_forward.6} parent=72 // pred_region
            // Predicated region
            $region78: #{spiking_transformer_forward.6} parent=76 // pred_check
              _
            $region79: #{spiking_transformer_forward.6} parent=76 // pred_check_branch
              %1498 = sbr.rel target = $region81
            $region80: #{spiking_transformer_forward.6} parent=76 // pred_region
              // Predicated region
              $region93: #{spiking_transformer_forward.6} parent=80 // pred_check
                _
              $region94: #{spiking_transformer_forward.6} parent=80 // pred_check_branch
                %1575 = sbr.rel (0) target = $region96
              $region95: #{spiking_transformer_forward.6} parent=80 // pred_region
                loop: start=0, step=1, limit=1
                $region97: #{spiking_transformer_forward.6} parent=95 // loop_pre_header
                  _
                $region98: #{spiking_transformer_forward.6} parent=95 // loop_header
                  %s1577 = sphi 0, %s1581
                  %p1578 = scmp.ge.s32.totalorder %s1577, 1
                  %s1582 = sphi %s1488, %s1488
                  %s1583 = sphi %s1494, %s1494
                $region99: #{spiking_transformer_forward.6} parent=95 // loop_header_branch
                  %1580 = sbr.rel (%p1578) target = $region103
                $region100: #{spiking_transformer_forward.6} parent=95 // loop_body
                  _
                $region101: #{spiking_transformer_forward.6} parent=95 // loop_footer
                  %s1581 = sadd.s32 1, %s1577
                $region102: #{spiking_transformer_forward.6} parent=95 // loop_footer_branch
                  %1576 = sbr.rel target = $region98
                $region103: #{spiking_transformer_forward.6} parent=95 // loop_exit
                  _
                loop: start=0, step=1, limit=1
                $region104: #{spiking_transformer_forward.6} parent=95 // loop_pre_header
                  _
                $region105: #{spiking_transformer_forward.6} parent=95 // loop_header
                  %s1586 = sphi 0, %s1590
                  %p1587 = scmp.ge.s32.totalorder %s1586, 1
                  %s1591 = sphi %s1488, %s1488
                  %s1592 = sphi %s1494, %s1494
                $region106: #{spiking_transformer_forward.6} parent=95 // loop_header_branch
                  %1589 = sbr.rel (%p1587) target = $region110
                $region107: #{spiking_transformer_forward.6} parent=95 // loop_body
                  %v1593 = vld [vmem:[%s1591] sm:$0xf]
                  %1594 = vst [vmem:[%s1592] sm:$0xf] %v1593
                  %v1595 = vld [vmem:[%s1591 + $0x4] sm:$0xf]
                  %1596 = vst [vmem:[%s1592 + $0x4] sm:$0xf] %v1595
                  %v1597 = vld [vmem:[%s1591 + $0x8] sm:$0xf]
                  %1598 = vst [vmem:[%s1592 + $0x8] sm:$0xf] %v1597
                  %v1599 = vld [vmem:[%s1591 + $0xc] sm:$0xf]
                  %1600 = vst [vmem:[%s1592 + $0xc] sm:$0xf] %v1599
                  %v1601 = vld [vmem:[%s1591 + $0x10] sm:$0xf]
                  %1602 = vst [vmem:[%s1592 + $0x10] sm:$0xf] %v1601
                  %v1603 = vld [vmem:[%s1591 + $0x14] sm:$0xf]
                  %1604 = vst [vmem:[%s1592 + $0x14] sm:$0xf] %v1603
                  %v1605 = vld [vmem:[%s1591 + $0x18] sm:$0xf]
                  %1606 = vst [vmem:[%s1592 + $0x18] sm:$0xf] %v1605
                  %v1607 = vld [vmem:[%s1591 + $0x1c] sm:$0xf]
                  %1608 = vst [vmem:[%s1592 + $0x1c] sm:$0xf] %v1607
                  %v1609 = vld [vmem:[%s1591 + $0x20] sm:$0xf]
                  %1610 = vst [vmem:[%s1592 + $0x40] sm:$0xf] %v1609
                  %v1611 = vld [vmem:[%s1591 + $0x24] sm:$0xf]
                  %1612 = vst [vmem:[%s1592 + $0x44] sm:$0xf] %v1611
                  %v1613 = vld [vmem:[%s1591 + $0x28] sm:$0xf]
                  %1614 = vst [vmem:[%s1592 + $0x48] sm:$0xf] %v1613
                  %v1615 = vld [vmem:[%s1591 + $0x2c] sm:$0xf]
                  %1616 = vst [vmem:[%s1592 + $0x4c] sm:$0xf] %v1615
                  %v1617 = vld [vmem:[%s1591 + $0x30] sm:$0xf]
                  %1618 = vst [vmem:[%s1592 + $0x50] sm:$0xf] %v1617
                  %v1619 = vld [vmem:[%s1591 + $0x34] sm:$0xf]
                  %1620 = vst [vmem:[%s1592 + $0x54] sm:$0xf] %v1619
                  %v1621 = vld [vmem:[%s1591 + $0x38] sm:$0xf]
                  %1622 = vst [vmem:[%s1592 + $0x58] sm:$0xf] %v1621
                  %v1623 = vld [vmem:[%s1591 + $0x3c] sm:$0xf]
                  %1624 = vst [vmem:[%s1592 + $0x5c] sm:$0xf] %v1623
                  %v1625 = vld [vmem:[%s1591 + $0x40] sm:$0xf]
                  %1626 = vst [vmem:[%s1592 + $0x80] sm:$0xf] %v1625
                  %v1627 = vld [vmem:[%s1591 + $0x44] sm:$0xf]
                  %1628 = vst [vmem:[%s1592 + $0x84] sm:$0xf] %v1627
                  %v1629 = vld [vmem:[%s1591 + $0x48] sm:$0xf]
                  %1630 = vst [vmem:[%s1592 + $0x88] sm:$0xf] %v1629
                  %v1631 = vld [vmem:[%s1591 + $0x4c] sm:$0xf]
                  %1632 = vst [vmem:[%s1592 + $0x8c] sm:$0xf] %v1631
                  %v1633 = vld [vmem:[%s1591 + $0x50] sm:$0xf]
                  %1634 = vst [vmem:[%s1592 + $0x90] sm:$0xf] %v1633
                  %v1635 = vld [vmem:[%s1591 + $0x54] sm:$0xf]
                  %1636 = vst [vmem:[%s1592 + $0x94] sm:$0xf] %v1635
                  %v1637 = vld [vmem:[%s1591 + $0x58] sm:$0xf]
                  %1638 = vst [vmem:[%s1592 + $0x98] sm:$0xf] %v1637
                  %v1639 = vld [vmem:[%s1591 + $0x5c] sm:$0xf]
                  %1640 = vst [vmem:[%s1592 + $0x9c] sm:$0xf] %v1639
                  %v1641 = vld [vmem:[%s1591 + $0x60] sm:$0xf]
                  %1642 = vst [vmem:[%s1592 + $0xc0] sm:$0xf] %v1641
                  %v1643 = vld [vmem:[%s1591 + $0x64] sm:$0xf]
                  %1644 = vst [vmem:[%s1592 + $0xc4] sm:$0xf] %v1643
                  %v1645 = vld [vmem:[%s1591 + $0x68] sm:$0xf]
                  %1646 = vst [vmem:[%s1592 + $0xc8] sm:$0xf] %v1645
                  %v1647 = vld [vmem:[%s1591 + $0x6c] sm:$0xf]
                  %1648 = vst [vmem:[%s1592 + $0xcc] sm:$0xf] %v1647
                  %v1649 = vld [vmem:[%s1591 + $0x70] sm:$0xf]
                  %1650 = vst [vmem:[%s1592 + $0xd0] sm:$0xf] %v1649
                  %v1651 = vld [vmem:[%s1591 + $0x74] sm:$0xf]
                  %1652 = vst [vmem:[%s1592 + $0xd4] sm:$0xf] %v1651
                  %v1653 = vld [vmem:[%s1591 + $0x78] sm:$0xf]
                  %1654 = vst [vmem:[%s1592 + $0xd8] sm:$0xf] %v1653
                  %v1655 = vld [vmem:[%s1591 + $0x7c] sm:$0xf]
                  %1656 = vst [vmem:[%s1592 + $0xdc] sm:$0xf] %v1655
                $region108: #{spiking_transformer_forward.6} parent=95 // loop_footer
                  %s1590 = sadd.s32 1, %s1586
                $region109: #{spiking_transformer_forward.6} parent=95 // loop_footer_branch
                  %1585 = sbr.rel target = $region105
                $region110: #{spiking_transformer_forward.6} parent=95 // loop_exit
                  _
              $region96: #{spiking_transformer_forward.6} parent=80 // pred_fallthru
                _
            $region81: #{spiking_transformer_forward.6} parent=76 // pred_fallthru
              _
            // Predicated region
            $region82: #{spiking_transformer_forward.6} parent=76 // pred_check
              _
            $region83: #{spiking_transformer_forward.6} parent=76 // pred_check_branch
              %1500 = sbr.rel (0) target = $region85
            $region84: #{spiking_transformer_forward.6} parent=76 // pred_region
              loop: start=0, step=1, limit=1
              $region86: #{spiking_transformer_forward.6} parent=84 // loop_pre_header
                _
              $region87: #{spiking_transformer_forward.6} parent=84 // loop_header
                %s1503 = sphi 0, %s1507
                %p1504 = scmp.ge.s32.totalorder %s1503, 1
                %s1508 = sphi %s1488, %s1488
                %s1509 = sphi %s1494, %s1494
              $region88: #{spiking_transformer_forward.6} parent=84 // loop_header_branch
                %1506 = sbr.rel (%p1504) target = $region92
              $region89: #{spiking_transformer_forward.6} parent=84 // loop_body
                %v1510 = vld [vmem:[%s1508] sm:$0xf]
                %1511 = vst [vmem:[%s1509] sm:$0xf] %v1510
                %v1512 = vld [vmem:[%s1508 + $0x4] sm:$0xf]
                %1513 = vst [vmem:[%s1509 + $0x4] sm:$0xf] %v1512
                %v1514 = vld [vmem:[%s1508 + $0x8] sm:$0xf]
                %1515 = vst [vmem:[%s1509 + $0x8] sm:$0xf] %v1514
                %v1516 = vld [vmem:[%s1508 + $0xc] sm:$0xf]
                %1517 = vst [vmem:[%s1509 + $0xc] sm:$0xf] %v1516
                %v1518 = vld [vmem:[%s1508 + $0x10] sm:$0xf]
                %1519 = vst [vmem:[%s1509 + $0x10] sm:$0xf] %v1518
                %v1520 = vld [vmem:[%s1508 + $0x14] sm:$0xf]
                %1521 = vst [vmem:[%s1509 + $0x14] sm:$0xf] %v1520
                %v1522 = vld [vmem:[%s1508 + $0x18] sm:$0xf]
                %1523 = vst [vmem:[%s1509 + $0x18] sm:$0xf] %v1522
                %v1524 = vld [vmem:[%s1508 + $0x1c] sm:$0xf]
                %1525 = vst [vmem:[%s1509 + $0x1c] sm:$0xf] %v1524
                %v1526 = vld [vmem:[%s1508 + $0x20] sm:$0xf]
                %1527 = vst [vmem:[%s1509 + $0x40] sm:$0xf] %v1526
                %v1528 = vld [vmem:[%s1508 + $0x24] sm:$0xf]
                %1529 = vst [vmem:[%s1509 + $0x44] sm:$0xf] %v1528
                %v1530 = vld [vmem:[%s1508 + $0x28] sm:$0xf]
                %1531 = vst [vmem:[%s1509 + $0x48] sm:$0xf] %v1530
                %v1532 = vld [vmem:[%s1508 + $0x2c] sm:$0xf]
                %1533 = vst [vmem:[%s1509 + $0x4c] sm:$0xf] %v1532
                %v1534 = vld [vmem:[%s1508 + $0x30] sm:$0xf]
                %1535 = vst [vmem:[%s1509 + $0x50] sm:$0xf] %v1534
                %v1536 = vld [vmem:[%s1508 + $0x34] sm:$0xf]
                %1537 = vst [vmem:[%s1509 + $0x54] sm:$0xf] %v1536
                %v1538 = vld [vmem:[%s1508 + $0x38] sm:$0xf]
                %1539 = vst [vmem:[%s1509 + $0x58] sm:$0xf] %v1538
                %v1540 = vld [vmem:[%s1508 + $0x3c] sm:$0xf]
                %1541 = vst [vmem:[%s1509 + $0x5c] sm:$0xf] %v1540
                %v1542 = vld [vmem:[%s1508 + $0x40] sm:$0xf]
                %1543 = vst [vmem:[%s1509 + $0x80] sm:$0xf] %v1542
                %v1544 = vld [vmem:[%s1508 + $0x44] sm:$0xf]
                %1545 = vst [vmem:[%s1509 + $0x84] sm:$0xf] %v1544
                %v1546 = vld [vmem:[%s1508 + $0x48] sm:$0xf]
                %1547 = vst [vmem:[%s1509 + $0x88] sm:$0xf] %v1546
                %v1548 = vld [vmem:[%s1508 + $0x4c] sm:$0xf]
                %1549 = vst [vmem:[%s1509 + $0x8c] sm:$0xf] %v1548
                %v1550 = vld [vmem:[%s1508 + $0x50] sm:$0xf]
                %1551 = vst [vmem:[%s1509 + $0x90] sm:$0xf] %v1550
                %v1552 = vld [vmem:[%s1508 + $0x54] sm:$0xf]
                %1553 = vst [vmem:[%s1509 + $0x94] sm:$0xf] %v1552
                %v1554 = vld [vmem:[%s1508 + $0x58] sm:$0xf]
                %1555 = vst [vmem:[%s1509 + $0x98] sm:$0xf] %v1554
                %v1556 = vld [vmem:[%s1508 + $0x5c] sm:$0xf]
                %1557 = vst [vmem:[%s1509 + $0x9c] sm:$0xf] %v1556
                %v1558 = vld [vmem:[%s1508 + $0x60] sm:$0xf]
                %1559 = vst [vmem:[%s1509 + $0xc0] sm:$0xf] %v1558
                %v1560 = vld [vmem:[%s1508 + $0x64] sm:$0xf]
                %1561 = vst [vmem:[%s1509 + $0xc4] sm:$0xf] %v1560
                %v1562 = vld [vmem:[%s1508 + $0x68] sm:$0xf]
                %1563 = vst [vmem:[%s1509 + $0xc8] sm:$0xf] %v1562
                %v1564 = vld [vmem:[%s1508 + $0x6c] sm:$0xf]
                %1565 = vst [vmem:[%s1509 + $0xcc] sm:$0xf] %v1564
                %v1566 = vld [vmem:[%s1508 + $0x70] sm:$0xf]
                %1567 = vst [vmem:[%s1509 + $0xd0] sm:$0xf] %v1566
                %v1568 = vld [vmem:[%s1508 + $0x74] sm:$0xf]
                %1569 = vst [vmem:[%s1509 + $0xd4] sm:$0xf] %v1568
                %v1570 = vld [vmem:[%s1508 + $0x78] sm:$0xf]
                %1571 = vst [vmem:[%s1509 + $0xd8] sm:$0xf] %v1570
                %v1572 = vld [vmem:[%s1508 + $0x7c] sm:$0xf]
                %1573 = vst [vmem:[%s1509 + $0xdc] sm:$0xf] %v1572
              $region90: #{spiking_transformer_forward.6} parent=84 // loop_footer
                %s1507 = sadd.s32 1, %s1503
              $region91: #{spiking_transformer_forward.6} parent=84 // loop_footer_branch
                %1502 = sbr.rel target = $region87
              $region92: #{spiking_transformer_forward.6} parent=84 // loop_exit
                _
            $region85: #{spiking_transformer_forward.6} parent=76 // pred_fallthru
              _
          $region77: #{spiking_transformer_forward.6} parent=72 // pred_fallthru
            _
          %1657 = vnop
        $region73: #{spiking_transformer_forward.6} parent=64 // pred_fallthru
          _
      $region65: #{spiking_transformer_forward.6} parent=5 // pred_fallthru
        _
      %p1658 = scmp.le.s32.totalorder 2, %s8
      // Predicated region
      $region111: #{spiking_transformer_forward.6} parent=5 // pred_check
        %p1659 = pneg %p1658
      $region112: #{spiking_transformer_forward.6} parent=5 // pred_check_branch
        %1661 = sbr.rel (%p1659) target = $region114
      $region113: #{spiking_transformer_forward.6} parent=5 // pred_region
        %s1662 = ssub.s32 %s8, 2
        // Predicated region
        $region115: #{spiking_transformer_forward.6} parent=113 // pred_check
          %p1663 = pneg %p84
        $region116: #{spiking_transformer_forward.6} parent=113 // pred_check_branch
          %1665 = sbr.rel (%p1663) target = $region118
        $region117: #{spiking_transformer_forward.6} parent=113 // pred_region
          %s1666 = sand.u32 %s69, 1
          %s1667 = sand.u32 %s69, 1
          %s1668 = smul.addr %s1667, 128
          %s1669 = scalar_lea.vmem [#allocation3], %s1668
        $region118: #{spiking_transformer_forward.6} parent=113 // pred_fallthru
          _
      $region114: #{spiking_transformer_forward.6} parent=5 // pred_fallthru
        _
    $region6: #{spiking_transformer_forward.6} parent=1 // loop_footer
      %s12 = sadd.s32 1, %s8
    $region7: #{spiking_transformer_forward.6} parent=1 // loop_footer_branch
      %7 = sbr.rel target = $region3
    $region8: #{spiking_transformer_forward.6} parent=1 // loop_exit
      _

// kernel: spiking_transformer_forward.7
$region0: #{spiking_transformer_forward.7}
  #allocation0 [shape = 'u32[]', space=smem, size = 0x4, offset = 0x4, fixed_abs, tag = 'smem constant byte address 0x4 - core index']
  #allocation1 [shape = 'u32[144,128]{1,0:T(1,128)}', space=vmem, size = 0x12000, scoped, tag = 'internal scratch']
  #allocation2 [shape = 'f32[128,32]{1,0:T(8,128)}', space=vmem, size = 0x10000, scoped, tag = 'scratch operand']
  #allocation3 [shape = 'f32[32,32]{1,0:T(8,128)}', space=vmem, size = 0x4000, scoped, tag = 'scratch operand']
  %s0 = inlined_call_operand.vmem [shape: bf16[4,128,32], index: 0, kind: input, shape index: {}]
  %s1 = inlined_call_operand.vmem [shape: bf16[4,128,32], index: 1, kind: input, shape index: {}]
  %s2 = inlined_call_operand.vmem [shape: bf16[32,32], index: 2, kind: input, shape index: {}]
  %s3 = inlined_call_operand.vmem [shape: f32[1,32], index: 3, kind: input, shape index: {}]
  %s4 = inlined_call_operand.vmem [shape: bf16[4,128,32], index: 4, kind: output, shape index: {}]
  %s5 = sld [smem:[#allocation0]]
  $region168: #{spiking_transformer_forward.7} parent=0
    _
  %s7 = ssub.s32 1, %s5
  %s8 = scalar_select 0, %s7, %s5
  $region1: #{spiking_transformer_forward.7} parent=0
    #allocation4 [shape = 'u8[65536]{0}', space=vmem, size = 0x10000, scoped, tag = 'input window, operand 0']
    #allocation5 [shape = 'u8[65536]{0}', space=vmem, size = 0x10000, scoped, tag = 'input window, operand 1']
    #allocation6 [shape = 'u8[65536]{0}', space=vmem, size = 0x10000, scoped, tag = 'output window, operand 0']
    loop: start=0, step=1, limit=6
    $region2: #{spiking_transformer_forward.7} parent=1 // loop_pre_header
      _
    $region3: #{spiking_transformer_forward.7} parent=1 // loop_header
      %s10 = sphi 0, %s14
      %p11 = scmp.ge.s32.totalorder %s10, 6
      %s20 = sphi 0, %s22
      %s23 = sphi 0, %s20
      %s24 = sphi 0, %s23
      %s40 = sphi 0, %s24
      %s46 = sphi 0, %s48
      %s49 = sphi 0, %s46
      %s50 = sphi 0, %s49
      %s66 = sphi 0, %s50
      %s70 = sphi 0, %s70
      %s72 = sphi 0, %s70
      %s73 = sphi 0, %s72
      %s87 = sphi 0, %s73
      %s91 = sphi 0, %s91
      %s93 = sphi 0, %s91
      %s94 = sphi 0, %s93
      %s108 = sphi 0, %s94
      %s114 = sphi 0, %s116
      %s117 = sphi 0, %s114
      %s118 = sphi 0, %s117
      %s134 = sphi 0, %s118
    $region4: #{spiking_transformer_forward.7} parent=1 // loop_header_branch
      %13 = sbr.rel (%p11) target = $region8
    $region5: #{spiking_transformer_forward.7} parent=1 // loop_body
      %s15 = ssub.s32 %s10, 1
      %s16 = ssub.s32 %s10, 2
      %s17 = sadd.s32 %s10, 1
      %s18 = ssub.s32 %s10, %s17
      %p19 = scmp.eq.s32.totalorder %s18, 0
      %s21 = sadd.s32 %s20, 1
      %s22 = scalar_select %p19, %s20, %s21
      %p25 = pneg %p19
      %p26 = scmp.eq.s32.totalorder %s10, 3
      %p27 = por %p25, %p26
      %p28 = scmp.ne.s32.totalorder %s20, %s23
      %p29 = scmp.eq.s32.totalorder %s10, 0
      %p30 = por %p28, %p29
      %p31 = scmp.ne.s32.totalorder %s20, %s23
      %p32 = scmp.eq.s32.totalorder %s15, 3
      %p33 = por %p31, %p32
      %p34 = scmp.ne.s32.totalorder %s23, %s24
      %p35 = scmp.eq.s32.totalorder %s15, 0
      %p36 = por %p34, %p35
      %p37 = scmp.ne.s32.totalorder %s23, %s24
      %p38 = scmp.eq.s32.totalorder %s16, 3
      %p39 = por %p37, %p38
      %p41 = scmp.ne.s32.totalorder %s24, %s40
      %p42 = scmp.eq.s32.totalorder %s16, 0
      %p43 = por %p41, %p42
      %s44 = ssub.s32 %s10, %s17
      %p45 = scmp.eq.s32.totalorder %s44, 0
      %s47 = sadd.s32 %s46, 1
      %s48 = scalar_select %p45, %s46, %s47
      %p51 = pneg %p45
      %p52 = scmp.eq.s32.totalorder %s10, 3
      %p53 = por %p51, %p52
      %p54 = scmp.ne.s32.totalorder %s46, %s49
      %p55 = scmp.eq.s32.totalorder %s10, 0
      %p56 = por %p54, %p55
      %p57 = scmp.ne.s32.totalorder %s46, %s49
      %p58 = scmp.eq.s32.totalorder %s15, 3
      %p59 = por %p57, %p58
      %p60 = scmp.ne.s32.totalorder %s49, %s50
      %p61 = scmp.eq.s32.totalorder %s15, 0
      %p62 = por %p60, %p61
      %p63 = scmp.ne.s32.totalorder %s49, %s50
      %p64 = scmp.eq.s32.totalorder %s16, 3
      %p65 = por %p63, %p64
      %p67 = scmp.ne.s32.totalorder %s50, %s66
      %p68 = scmp.eq.s32.totalorder %s16, 0
      %p69 = por %p67, %p68
      %s71 = sadd.s32 %s70, 1
      %p74 = scmp.eq.s32.totalorder %s10, 3
      %p75 = scmp.ne.s32.totalorder %s70, %s72
      %p76 = scmp.eq.s32.totalorder %s10, 0
      %p77 = por %p75, %p76
      %p78 = scmp.ne.s32.totalorder %s70, %s72
      %p79 = scmp.eq.s32.totalorder %s15, 3
      %p80 = por %p78, %p79
      %p81 = scmp.ne.s32.totalorder %s72, %s73
      %p82 = scmp.eq.s32.totalorder %s15, 0
      %p83 = por %p81, %p82
      %p84 = scmp.ne.s32.totalorder %s72, %s73
      %p85 = scmp.eq.s32.totalorder %s16, 3
      %p86 = por %p84, %p85
      %p88 = scmp.ne.s32.totalorder %s73, %s87
      %p89 = scmp.eq.s32.totalorder %s16, 0
      %p90 = por %p88, %p89
      %s92 = sadd.s32 %s91, 1
      %p95 = scmp.eq.s32.totalorder %s10, 3
      %p96 = scmp.ne.s32.totalorder %s91, %s93
      %p97 = scmp.eq.s32.totalorder %s10, 0
      %p98 = por %p96, %p97
      %p99 = scmp.ne.s32.totalorder %s91, %s93
      %p100 = scmp.eq.s32.totalorder %s15, 3
      %p101 = por %p99, %p100
      %p102 = scmp.ne.s32.totalorder %s93, %s94
      %p103 = scmp.eq.s32.totalorder %s15, 0
      %p104 = por %p102, %p103
      %p105 = scmp.ne.s32.totalorder %s93, %s94
      %p106 = scmp.eq.s32.totalorder %s16, 3
      %p107 = por %p105, %p106
      %p109 = scmp.ne.s32.totalorder %s94, %s108
      %p110 = scmp.eq.s32.totalorder %s16, 0
      %p111 = por %p109, %p110
      %s112 = ssub.s32 %s10, %s17
      %p113 = scmp.eq.s32.totalorder %s112, 0
      %s115 = sadd.s32 %s114, 1
      %s116 = scalar_select %p113, %s114, %s115
      %p119 = pneg %p113
      %p120 = scmp.eq.s32.totalorder %s10, 3
      %p121 = por %p119, %p120
      %p122 = scmp.ne.s32.totalorder %s114, %s117
      %p123 = scmp.eq.s32.totalorder %s10, 0
      %p124 = por %p122, %p123
      %p125 = scmp.ne.s32.totalorder %s114, %s117
      %p126 = scmp.eq.s32.totalorder %s15, 3
      %p127 = por %p125, %p126
      %p128 = scmp.ne.s32.totalorder %s117, %s118
      %p129 = scmp.eq.s32.totalorder %s15, 0
      %p130 = por %p128, %p129
      %p131 = scmp.ne.s32.totalorder %s117, %s118
      %p132 = scmp.eq.s32.totalorder %s16, 3
      %p133 = por %p131, %p132
      %p135 = scmp.ne.s32.totalorder %s118, %s134
      %p136 = scmp.eq.s32.totalorder %s16, 0
      %p137 = por %p135, %p136
      %p138 = scmp.le.s32.totalorder 1, %s10
      %p139 = scmp.lt.s32.totalorder %s10, 5
      %p140 = pnand %p138, %p139
      %p141 = pneg %p140
      // Predicated region
      $region9: #{spiking_transformer_forward.7} parent=5 // pred_check
        _
      $region10: #{spiking_transformer_forward.7} parent=5 // pred_check_branch
        %143 = sbr.rel (%p140) target = $region12
      $region11: #{spiking_transformer_forward.7} parent=5 // pred_region
        %s144 = ssub.s32 %s10, 1
        // Predicated region
        $region13: #{spiking_transformer_forward.7} parent=11 // pred_check
          %p145 = pneg %p83
        $region14: #{spiking_transformer_forward.7} parent=11 // pred_check_branch
          %147 = sbr.rel (%p145) target = $region16
        $region15: #{spiking_transformer_forward.7} parent=11 // pred_region
          _
        $region16: #{spiking_transformer_forward.7} parent=11 // pred_fallthru
          _
        // Predicated region
        $region17: #{spiking_transformer_forward.7} parent=11 // pred_check
          %p148 = pneg %p104
        $region18: #{spiking_transformer_forward.7} parent=11 // pred_check_branch
          %150 = sbr.rel (%p148) target = $region20
        $region19: #{spiking_transformer_forward.7} parent=11 // pred_region
          _
        $region20: #{spiking_transformer_forward.7} parent=11 // pred_fallthru
          _
      $region12: #{spiking_transformer_forward.7} parent=5 // pred_fallthru
        _
      %p151 = scmp.lt.s32.totalorder %s10, 4
      // Predicated region
      $region21: #{spiking_transformer_forward.7} parent=5 // pred_check
        %p152 = pneg %p151
      $region22: #{spiking_transformer_forward.7} parent=5 // pred_check_branch
        %154 = sbr.rel (%p152) target = $region24
      $region23: #{spiking_transformer_forward.7} parent=5 // pred_region
        // Predicated region
        $region25: #{spiking_transformer_forward.7} parent=23 // pred_check
          %p155 = pneg %p30
        $region26: #{spiking_transformer_forward.7} parent=23 // pred_check_branch
          %157 = sbr.rel (%p155) target = $region28
        $region27: #{spiking_transformer_forward.7} parent=23 // pred_region
          %s158 = sand.u32 %s20, 1
          %s159 = sand.u32 %s20, 1
          %s160 = smul.addr %s159, 64
          %s161 = scalar_lea.vmem [#allocation4], %s160
          %s162 = smul.u32 4, %s10
          %s163 = smul.addr %s162, 4
          %s164 = scalar_lea.vmem %s0, %s163
          // Predicated region
          $region29: #{spiking_transformer_forward.7} parent=27 // pred_check
            _
          $region30: #{spiking_transformer_forward.7} parent=27 // pred_check_branch
            %166 = sbr.rel (0) target = $region32
          $region31: #{spiking_transformer_forward.7} parent=27 // pred_region
            // Predicated region
            $region33: #{spiking_transformer_forward.7} parent=31 // pred_check
              _
            $region34: #{spiking_transformer_forward.7} parent=31 // pred_check_branch
              %168 = sbr.rel target = $region36
            $region35: #{spiking_transformer_forward.7} parent=31 // pred_region
              // Predicated region
              $region48: #{spiking_transformer_forward.7} parent=35 // pred_check
                _
              $region49: #{spiking_transformer_forward.7} parent=35 // pred_check_branch
                %213 = sbr.rel (0) target = $region51
              $region50: #{spiking_transformer_forward.7} parent=35 // pred_region
                loop: start=0, step=1, limit=1
                $region52: #{spiking_transformer_forward.7} parent=50 // loop_pre_header
                  _
                $region53: #{spiking_transformer_forward.7} parent=50 // loop_header
                  %s215 = sphi 0, %s219
                  %p216 = scmp.ge.s32.totalorder %s215, 1
                  %s220 = sphi %s164, %s164
                  %s221 = sphi %s161, %s161
                $region54: #{spiking_transformer_forward.7} parent=50 // loop_header_branch
                  %218 = sbr.rel (%p216) target = $region58
                $region55: #{spiking_transformer_forward.7} parent=50 // loop_body
                  _
                $region56: #{spiking_transformer_forward.7} parent=50 // loop_footer
                  %s219 = sadd.s32 1, %s215
                $region57: #{spiking_transformer_forward.7} parent=50 // loop_footer_branch
                  %214 = sbr.rel target = $region53
                $region58: #{spiking_transformer_forward.7} parent=50 // loop_exit
                  _
                loop: start=0, step=1, limit=1
                $region59: #{spiking_transformer_forward.7} parent=50 // loop_pre_header
                  _
                $region60: #{spiking_transformer_forward.7} parent=50 // loop_header
                  %s224 = sphi 0, %s228
                  %p225 = scmp.ge.s32.totalorder %s224, 1
                  %s229 = sphi %s164, %s164
                  %s230 = sphi %s161, %s161
                $region61: #{spiking_transformer_forward.7} parent=50 // loop_header_branch
                  %227 = sbr.rel (%p225) target = $region65
                $region62: #{spiking_transformer_forward.7} parent=50 // loop_body
                  %v231 = vld [vmem:[%s229] sm:$0xf]
                  %232 = vst [vmem:[%s230] sm:$0xf] %v231
                  %v233 = vld [vmem:[%s229 + $0x4] sm:$0xf]
                  %234 = vst [vmem:[%s230 + $0x4] sm:$0xf] %v233
                  %v235 = vld [vmem:[%s229 + $0x8] sm:$0xf]
                  %236 = vst [vmem:[%s230 + $0x8] sm:$0xf] %v235
                  %v237 = vld [vmem:[%s229 + $0xc] sm:$0xf]
                  %238 = vst [vmem:[%s230 + $0xc] sm:$0xf] %v237
                  %v239 = vld [vmem:[%s229 + $0x40] sm:$0xf]
                  %240 = vst [vmem:[%s230 + $0x10] sm:$0xf] %v239
                  %v241 = vld [vmem:[%s229 + $0x44] sm:$0xf]
                  %242 = vst [vmem:[%s230 + $0x14] sm:$0xf] %v241
                  %v243 = vld [vmem:[%s229 + $0x48] sm:$0xf]
                  %244 = vst [vmem:[%s230 + $0x18] sm:$0xf] %v243
                  %v245 = vld [vmem:[%s229 + $0x4c] sm:$0xf]
                  %246 = vst [vmem:[%s230 + $0x1c] sm:$0xf] %v245
                  %v247 = vld [vmem:[%s229 + $0x80] sm:$0xf]
                  %248 = vst [vmem:[%s230 + $0x20] sm:$0xf] %v247
                  %v249 = vld [vmem:[%s229 + $0x84] sm:$0xf]
                  %250 = vst [vmem:[%s230 + $0x24] sm:$0xf] %v249
                  %v251 = vld [vmem:[%s229 + $0x88] sm:$0xf]
                  %252 = vst [vmem:[%s230 + $0x28] sm:$0xf] %v251
                  %v253 = vld [vmem:[%s229 + $0x8c] sm:$0xf]
                  %254 = vst [vmem:[%s230 + $0x2c] sm:$0xf] %v253
                  %v255 = vld [vmem:[%s229 + $0xc0] sm:$0xf]
                  %256 = vst [vmem:[%s230 + $0x30] sm:$0xf] %v255
                  %v257 = vld [vmem:[%s229 + $0xc4] sm:$0xf]
                  %258 = vst [vmem:[%s230 + $0x34] sm:$0xf] %v257
                  %v259 = vld [vmem:[%s229 + $0xc8] sm:$0xf]
                  %260 = vst [vmem:[%s230 + $0x38] sm:$0xf] %v259
                  %v261 = vld [vmem:[%s229 + $0xcc] sm:$0xf]
                  %262 = vst [vmem:[%s230 + $0x3c] sm:$0xf] %v261
                $region63: #{spiking_transformer_forward.7} parent=50 // loop_footer
                  %s228 = sadd.s32 1, %s224
                $region64: #{spiking_transformer_forward.7} parent=50 // loop_footer_branch
                  %223 = sbr.rel target = $region60
                $region65: #{spiking_transformer_forward.7} parent=50 // loop_exit
                  _
              $region51: #{spiking_transformer_forward.7} parent=35 // pred_fallthru
                _
            $region36: #{spiking_transformer_forward.7} parent=31 // pred_fallthru
              _
            // Predicated region
            $region37: #{spiking_transformer_forward.7} parent=31 // pred_check
              _
            $region38: #{spiking_transformer_forward.7} parent=31 // pred_check_branch
              %170 = sbr.rel (0) target = $region40
            $region39: #{spiking_transformer_forward.7} parent=31 // pred_region
              loop: start=0, step=1, limit=1
              $region41: #{spiking_transformer_forward.7} parent=39 // loop_pre_header
                _
              $region42: #{spiking_transformer_forward.7} parent=39 // loop_header
                %s173 = sphi 0, %s177
                %p174 = scmp.ge.s32.totalorder %s173, 1
                %s178 = sphi %s164, %s164
                %s179 = sphi %s161, %s161
              $region43: #{spiking_transformer_forward.7} parent=39 // loop_header_branch
                %176 = sbr.rel (%p174) target = $region47
              $region44: #{spiking_transformer_forward.7} parent=39 // loop_body
                %v180 = vld [vmem:[%s178] sm:$0xf]
                %181 = vst [vmem:[%s179] sm:$0xf] %v180
                %v182 = vld [vmem:[%s178 + $0x4] sm:$0xf]
                %183 = vst [vmem:[%s179 + $0x4] sm:$0xf] %v182
                %v184 = vld [vmem:[%s178 + $0x8] sm:$0xf]
                %185 = vst [vmem:[%s179 + $0x8] sm:$0xf] %v184
                %v186 = vld [vmem:[%s178 + $0xc] sm:$0xf]
                %187 = vst [vmem:[%s179 + $0xc] sm:$0xf] %v186
                %v188 = vld [vmem:[%s178 + $0x40] sm:$0xf]
                %189 = vst [vmem:[%s179 + $0x10] sm:$0xf] %v188
                %v190 = vld [vmem:[%s178 + $0x44] sm:$0xf]
                %191 = vst [vmem:[%s179 + $0x14] sm:$0xf] %v190
                %v192 = vld [vmem:[%s178 + $0x48] sm:$0xf]
                %193 = vst [vmem:[%s179 + $0x18] sm:$0xf] %v192
                %v194 = vld [vmem:[%s178 + $0x4c] sm:$0xf]
                %195 = vst [vmem:[%s179 + $0x1c] sm:$0xf] %v194
                %v196 = vld [vmem:[%s178 + $0x80] sm:$0xf]
                %197 = vst [vmem:[%s179 + $0x20] sm:$0xf] %v196
                %v198 = vld [vmem:[%s178 + $0x84] sm:$0xf]
                %199 = vst [vmem:[%s179 + $0x24] sm:$0xf] %v198
                %v200 = vld [vmem:[%s178 + $0x88] sm:$0xf]
                %201 = vst [vmem:[%s179 + $0x28] sm:$0xf] %v200
                %v202 = vld [vmem:[%s178 + $0x8c] sm:$0xf]
                %203 = vst [vmem:[%s179 + $0x2c] sm:$0xf] %v202
                %v204 = vld [vmem:[%s178 + $0xc0] sm:$0xf]
                %205 = vst [vmem:[%s179 + $0x30] sm:$0xf] %v204
                %v206 = vld [vmem:[%s178 + $0xc4] sm:$0xf]
                %207 = vst [vmem:[%s179 + $0x34] sm:$0xf] %v206
                %v208 = vld [vmem:[%s178 + $0xc8] sm:$0xf]
                %209 = vst [vmem:[%s179 + $0x38] sm:$0xf] %v208
                %v210 = vld [vmem:[%s178 + $0xcc] sm:$0xf]
                %211 = vst [vmem:[%s179 + $0x3c] sm:$0xf] %v210
              $region45: #{spiking_transformer_forward.7} parent=39 // loop_footer
                %s177 = sadd.s32 1, %s173
              $region46: #{spiking_transformer_forward.7} parent=39 // loop_footer_branch
                %172 = sbr.rel target = $region42
              $region47: #{spiking_transformer_forward.7} parent=39 // loop_exit
                _
            $region40: #{spiking_transformer_forward.7} parent=31 // pred_fallthru
              _
          $region32: #{spiking_transformer_forward.7} parent=27 // pred_fallthru
            _
          %263 = vnop
        $region28: #{spiking_transformer_forward.7} parent=23 // pred_fallthru
          _
        // Predicated region
        $region66: #{spiking_transformer_forward.7} parent=23 // pred_check
          %p264 = pneg %p56
        $region67: #{spiking_transformer_forward.7} parent=23 // pred_check_branch
          %266 = sbr.rel (%p264) target = $region69
        $region68: #{spiking_transformer_forward.7} parent=23 // pred_region
          %s267 = sand.u32 %s46, 1
          %s268 = sand.u32 %s46, 1
          %s269 = smul.addr %s268, 64
          %s270 = scalar_lea.vmem [#allocation5], %s269
          %s271 = smul.u32 4, %s10
          %s272 = smul.addr %s271, 4
          %s273 = scalar_lea.vmem %s1, %s272
          // Predicated region
          $region70: #{spiking_transformer_forward.7} parent=68 // pred_check
            _
          $region71: #{spiking_transformer_forward.7} parent=68 // pred_check_branch
            %275 = sbr.rel (0) target = $region73
          $region72: #{spiking_transformer_forward.7} parent=68 // pred_region
            // Predicated region
            $region74: #{spiking_transformer_forward.7} parent=72 // pred_check
              _
            $region75: #{spiking_transformer_forward.7} parent=72 // pred_check_branch
              %277 = sbr.rel target = $region77
            $region76: #{spiking_transformer_forward.7} parent=72 // pred_region
              // Predicated region
              $region89: #{spiking_transformer_forward.7} parent=76 // pred_check
                _
              $region90: #{spiking_transformer_forward.7} parent=76 // pred_check_branch
                %322 = sbr.rel (0) target = $region92
              $region91: #{spiking_transformer_forward.7} parent=76 // pred_region
                loop: start=0, step=1, limit=1
                $region93: #{spiking_transformer_forward.7} parent=91 // loop_pre_header
                  _
                $region94: #{spiking_transformer_forward.7} parent=91 // loop_header
                  %s324 = sphi 0, %s328
                  %p325 = scmp.ge.s32.totalorder %s324, 1
                  %s329 = sphi %s273, %s273
                  %s330 = sphi %s270, %s270
                $region95: #{spiking_transformer_forward.7} parent=91 // loop_header_branch
                  %327 = sbr.rel (%p325) target = $region99
                $region96: #{spiking_transformer_forward.7} parent=91 // loop_body
                  _
                $region97: #{spiking_transformer_forward.7} parent=91 // loop_footer
                  %s328 = sadd.s32 1, %s324
                $region98: #{spiking_transformer_forward.7} parent=91 // loop_footer_branch
                  %323 = sbr.rel target = $region94
                $region99: #{spiking_transformer_forward.7} parent=91 // loop_exit
                  _
                loop: start=0, step=1, limit=1
                $region100: #{spiking_transformer_forward.7} parent=91 // loop_pre_header
                  _
                $region101: #{spiking_transformer_forward.7} parent=91 // loop_header
                  %s333 = sphi 0, %s337
                  %p334 = scmp.ge.s32.totalorder %s333, 1
                  %s338 = sphi %s273, %s273
                  %s339 = sphi %s270, %s270
                $region102: #{spiking_transformer_forward.7} parent=91 // loop_header_branch
                  %336 = sbr.rel (%p334) target = $region106
                $region103: #{spiking_transformer_forward.7} parent=91 // loop_body
                  %v340 = vld [vmem:[%s338] sm:$0xf]
                  %341 = vst [vmem:[%s339] sm:$0xf] %v340
                  %v342 = vld [vmem:[%s338 + $0x4] sm:$0xf]
                  %343 = vst [vmem:[%s339 + $0x4] sm:$0xf] %v342
                  %v344 = vld [vmem:[%s338 + $0x8] sm:$0xf]
                  %345 = vst [vmem:[%s339 + $0x8] sm:$0xf] %v344
                  %v346 = vld [vmem:[%s338 + $0xc] sm:$0xf]
                  %347 = vst [vmem:[%s339 + $0xc] sm:$0xf] %v346
                  %v348 = vld [vmem:[%s338 + $0x40] sm:$0xf]
                  %349 = vst [vmem:[%s339 + $0x10] sm:$0xf] %v348
                  %v350 = vld [vmem:[%s338 + $0x44] sm:$0xf]
                  %351 = vst [vmem:[%s339 + $0x14] sm:$0xf] %v350
                  %v352 = vld [vmem:[%s338 + $0x48] sm:$0xf]
                  %353 = vst [vmem:[%s339 + $0x18] sm:$0xf] %v352
                  %v354 = vld [vmem:[%s338 + $0x4c] sm:$0xf]
                  %355 = vst [vmem:[%s339 + $0x1c] sm:$0xf] %v354
                  %v356 = vld [vmem:[%s338 + $0x80] sm:$0xf]
                  %357 = vst [vmem:[%s339 + $0x20] sm:$0xf] %v356
                  %v358 = vld [vmem:[%s338 + $0x84] sm:$0xf]
                  %359 = vst [vmem:[%s339 + $0x24] sm:$0xf] %v358
                  %v360 = vld [vmem:[%s338 + $0x88] sm:$0xf]
                  %361 = vst [vmem:[%s339 + $0x28] sm:$0xf] %v360
                  %v362 = vld [vmem:[%s338 + $0x8c] sm:$0xf]
                  %363 = vst [vmem:[%s339 + $0x2c] sm:$0xf] %v362
                  %v364 = vld [vmem:[%s338 + $0xc0] sm:$0xf]
                  %365 = vst [vmem:[%s339 + $0x30] sm:$0xf] %v364
                  %v366 = vld [vmem:[%s338 + $0xc4] sm:$0xf]
                  %367 = vst [vmem:[%s339 + $0x34] sm:$0xf] %v366
                  %v368 = vld [vmem:[%s338 + $0xc8] sm:$0xf]
                  %369 = vst [vmem:[%s339 + $0x38] sm:$0xf] %v368
                  %v370 = vld [vmem:[%s338 + $0xcc] sm:$0xf]
                  %371 = vst [vmem:[%s339 + $0x3c] sm:$0xf] %v370
                $region104: #{spiking_transformer_forward.7} parent=91 // loop_footer
                  %s337 = sadd.s32 1, %s333
                $region105: #{spiking_transformer_forward.7} parent=91 // loop_footer_branch
                  %332 = sbr.rel target = $region101
                $region106: #{spiking_transformer_forward.7} parent=91 // loop_exit
                  _
              $region92: #{spiking_transformer_forward.7} parent=76 // pred_fallthru
                _
            $region77: #{spiking_transformer_forward.7} parent=72 // pred_fallthru
              _
            // Predicated region
            $region78: #{spiking_transformer_forward.7} parent=72 // pred_check
              _
            $region79: #{spiking_transformer_forward.7} parent=72 // pred_check_branch
              %279 = sbr.rel (0) target = $region81
            $region80: #{spiking_transformer_forward.7} parent=72 // pred_region
              loop: start=0, step=1, limit=1
              $region82: #{spiking_transformer_forward.7} parent=80 // loop_pre_header
                _
              $region83: #{spiking_transformer_forward.7} parent=80 // loop_header
                %s282 = sphi 0, %s286
                %p283 = scmp.ge.s32.totalorder %s282, 1
                %s287 = sphi %s273, %s273
                %s288 = sphi %s270, %s270
              $region84: #{spiking_transformer_forward.7} parent=80 // loop_header_branch
                %285 = sbr.rel (%p283) target = $region88
              $region85: #{spiking_transformer_forward.7} parent=80 // loop_body
                %v289 = vld [vmem:[%s287] sm:$0xf]
                %290 = vst [vmem:[%s288] sm:$0xf] %v289
                %v291 = vld [vmem:[%s287 + $0x4] sm:$0xf]
                %292 = vst [vmem:[%s288 + $0x4] sm:$0xf] %v291
                %v293 = vld [vmem:[%s287 + $0x8] sm:$0xf]
                %294 = vst [vmem:[%s288 + $0x8] sm:$0xf] %v293
                %v295 = vld [vmem:[%s287 + $0xc] sm:$0xf]
                %296 = vst [vmem:[%s288 + $0xc] sm:$0xf] %v295
                %v297 = vld [vmem:[%s287 + $0x40] sm:$0xf]
                %298 = vst [vmem:[%s288 + $0x10] sm:$0xf] %v297
                %v299 = vld [vmem:[%s287 + $0x44] sm:$0xf]
                %300 = vst [vmem:[%s288 + $0x14] sm:$0xf] %v299
                %v301 = vld [vmem:[%s287 + $0x48] sm:$0xf]
                %302 = vst [vmem:[%s288 + $0x18] sm:$0xf] %v301
                %v303 = vld [vmem:[%s287 + $0x4c] sm:$0xf]
                %304 = vst [vmem:[%s288 + $0x1c] sm:$0xf] %v303
                %v305 = vld [vmem:[%s287 + $0x80] sm:$0xf]
                %306 = vst [vmem:[%s288 + $0x20] sm:$0xf] %v305
                %v307 = vld [vmem:[%s287 + $0x84] sm:$0xf]
                %308 = vst [vmem:[%s288 + $0x24] sm:$0xf] %v307
                %v309 = vld [vmem:[%s287 + $0x88] sm:$0xf]
                %310 = vst [vmem:[%s288 + $0x28] sm:$0xf] %v309
                %v311 = vld [vmem:[%s287 + $0x8c] sm:$0xf]
                %312 = vst [vmem:[%s288 + $0x2c] sm:$0xf] %v311
                %v313 = vld [vmem:[%s287 + $0xc0] sm:$0xf]
                %314 = vst [vmem:[%s288 + $0x30] sm:$0xf] %v313
                %v315 = vld [vmem:[%s287 + $0xc4] sm:$0xf]
                %316 = vst [vmem:[%s288 + $0x34] sm:$0xf] %v315
                %v317 = vld [vmem:[%s287 + $0xc8] sm:$0xf]
                %318 = vst [vmem:[%s288 + $0x38] sm:$0xf] %v317
                %v319 = vld [vmem:[%s287 + $0xcc] sm:$0xf]
                %320 = vst [vmem:[%s288 + $0x3c] sm:$0xf] %v319
              $region86: #{spiking_transformer_forward.7} parent=80 // loop_footer
                %s286 = sadd.s32 1, %s282
              $region87: #{spiking_transformer_forward.7} parent=80 // loop_footer_branch
                %281 = sbr.rel target = $region83
              $region88: #{spiking_transformer_forward.7} parent=80 // loop_exit
                _
            $region81: #{spiking_transformer_forward.7} parent=72 // pred_fallthru
              _
          $region73: #{spiking_transformer_forward.7} parent=68 // pred_fallthru
            _
          %372 = vnop
        $region69: #{spiking_transformer_forward.7} parent=23 // pred_fallthru
          _
      $region24: #{spiking_transformer_forward.7} parent=5 // pred_fallthru
        _
      %p373 = scmp.le.s32.totalorder 1, %s10
      %p374 = scmp.lt.s32.totalorder %s10, 5
      %p375 = pnand %p373, %p374
      %p376 = pneg %p375
      // Predicated region
      $region107: #{spiking_transformer_forward.7} parent=5 // pred_check
        _
      $region108: #{spiking_transformer_forward.7} parent=5 // pred_check_branch
        %378 = sbr.rel (%p375) target = $region110
      $region109: #{spiking_transformer_forward.7} parent=5 // pred_region
        %s379 = ssub.s32 %s10, 1
        %s380 = sand.u32 %s23, 1
        %s381 = sand.u32 %s23, 1
        %s382 = smul.addr %s381, 64
        %s383 = scalar_lea.vmem [#allocation4], %s382
        // Predicated region
        $region111: #{spiking_transformer_forward.7} parent=109 // pred_check
          %p384 = pneg %p36
        $region112: #{spiking_transformer_forward.7} parent=109 // pred_check_branch
          %386 = sbr.rel (%p384) target = $region114
        $region113: #{spiking_transformer_forward.7} parent=109 // pred_region
          _
        $region114: #{spiking_transformer_forward.7} parent=109 // pred_fallthru
          _
        %s387 = sand.u32 %s49, 1
        %s388 = sand.u32 %s49, 1
        %s389 = smul.addr %s388, 64
        %s390 = scalar_lea.vmem [#allocation5], %s389
        // Predicated region
        $region115: #{spiking_transformer_forward.7} parent=109 // pred_check
          %p391 = pneg %p62
        $region116: #{spiking_transformer_forward.7} parent=109 // pred_check_branch
          %393 = sbr.rel (%p391) target = $region118
        $region117: #{spiking_transformer_forward.7} parent=109 // pred_region
          _
        $region118: #{spiking_transformer_forward.7} parent=109 // pred_fallthru
          _
        %s394 = sand.u32 %s23, 1
        %s395 = sand.u32 %s23, 1
        %s396 = smul.addr %s395, 64
        %s397 = scalar_lea.vmem [#allocation4], %s396
        %p398 = pneg %p36
        %p399 = pneg %p33
        %s400 = sand.u32 %s49, 1
        %s401 = sand.u32 %s49, 1
        %s402 = smul.addr %s401, 64
        %s403 = scalar_lea.vmem [#allocation5], %s402
        %p404 = pneg %p62
        %p405 = pneg %p59
        %p406 = pneg %p83
        %p407 = pneg %p80
        %p408 = pneg %p104
        %p409 = pneg %p101
        %p410 = pneg %p130
        %p411 = pneg %p127
        %s412 = sand.u32 %s117, 1
        %s413 = sand.u32 %s117, 1
        %s414 = smul.addr %s413, 64
        %s415 = scalar_lea.vmem [#allocation6], %s414
        %s416 = smul.u32 4, %s15
        %s417 = smul.u32 4, %s15
        %s418 = smul.u32 4, %s15
        %v420 = vld [vmem:[%s383] sm:$0xf]
        %v421 = vld [vmem:[%s383 + $0x4] sm:$0xf]
        %v422 = vld [vmem:[%s383 + $0x8] sm:$0xf]
        %v423 = vld [vmem:[%s383 + $0xc] sm:$0xf]
        %v424 = vld [vmem:[%s383 + $0x10] sm:$0xf]
        %v425 = vld [vmem:[%s383 + $0x14] sm:$0xf]
        %v426 = vld [vmem:[%s383 + $0x18] sm:$0xf]
        %v427 = vld [vmem:[%s383 + $0x1c] sm:$0xf]
        %v428 = vld [vmem:[%s383 + $0x20] sm:$0xf]
        %v429 = vld [vmem:[%s383 + $0x24] sm:$0xf]
        %v430 = vld [vmem:[%s383 + $0x28] sm:$0xf]
        %v431 = vld [vmem:[%s383 + $0x2c] sm:$0xf]
        %v432 = vld [vmem:[%s383 + $0x30] sm:$0xf]
        %v433 = vld [vmem:[%s383 + $0x34] sm:$0xf]
        %v434 = vld [vmem:[%s383 + $0x38] sm:$0xf]
        %v435 = vld [vmem:[%s383 + $0x3c] sm:$0xf]
        %v436 = vld [vmem:[%s2] sm:$0xf]
        %v437 = vld [vmem:[%s2 + $0x4] sm:$0xf]
        %v438 = vld [vmem:[%s2 + $0x8] sm:$0xf]
        %v439 = vld [vmem:[%s2 + $0xc] sm:$0xf]
        %v440 = vld [vmem:[%s3] sm:$0x1]
        %v442 = vlaneseq
        %v443 = vshrl.u32 %v442, 7
        %v444 = vsub.s32 0, %v443
        %v445 = vrot.slane %v440, %v444
        %v463 = vunpack.c.l.b16 %v420
        %v464 = vunpack.c.l.b16 %v421
        %v465 = vunpack.c.l.b16 %v422
        %v466 = vunpack.c.l.b16 %v423
        %v467 = vunpack.c.l.b16 %v424
        %v468 = vunpack.c.l.b16 %v425
        %v469 = vunpack.c.l.b16 %v426
        %v470 = vunpack.c.l.b16 %v427
        %v471 = vunpack.c.l.b16 %v428
        %v472 = vunpack.c.l.b16 %v429
        %v473 = vunpack.c.l.b16 %v430
        %v474 = vunpack.c.l.b16 %v431
        %v475 = vunpack.c.l.b16 %v432
        %v476 = vunpack.c.l.b16 %v433
        %v477 = vunpack.c.l.b16 %v434
        %v478 = vunpack.c.l.b16 %v435
        %v479 = vpack.c.b16 %v464, %v463
        %v480 = vpack.c.b16 %v466, %v465
        %v481 = vpack.c.b16 %v468, %v467
        %v482 = vpack.c.b16 %v470, %v469
        %v483 = vpack.c.b16 %v472, %v471
        %v484 = vpack.c.b16 %v474, %v473
        %v485 = vpack.c.b16 %v476, %v475
        %v486 = vpack.c.b16 %v478, %v477
        %v491 = vunpack.c.l.b16 %v436
        %v492 = vunpack.c.l.b16 %v437
        %v493 = vunpack.c.l.b16 %v438
        %v494 = vunpack.c.l.b16 %v439
        %v495 = vpack.c.b16 %v492, %v491
        %v496 = vpack.c.b16 %v494, %v493
        %vm499 = vcmask 261120
        %v501 = vsel %vm499, %v479, 0
        %v504 = vsel %vm499, %v480, 0
        %v507 = vsel %vm499, %v481, 0
        %v510 = vsel %vm499, %v482, 0
        %v513 = vsel %vm499, %v483, 0
        %v516 = vsel %vm499, %v484, 0
        %v519 = vsel %vm499, %v485, 0
        %v522 = vsel %vm499, %v486, 0
        %524 = vmatprep.subr.bf16.mxu0 0
        %525 = vmatpush1.bf16.msra.mxu0 %v495
        %526 = vmatprep.subr.bf16.mxu0 0
        %527 = vmatpush1.bf16.msra.mxu0 %v496
        %528 = vmatprep.subr.bf16.mxu0 0
        %529 = vmatpush1.bf16.msra.mxu0 0
        %530 = vmatprep.subr.bf16.mxu0 0
        %531 = vmatpush1.bf16.msra.mxu0 0
        %532 = vmatprep.subr.bf16.mxu0 0
        %533 = vmatpush1.bf16.msra.mxu0 0
        %534 = vmatprep.subr.bf16.mxu0 0
        %535 = vmatpush1.bf16.msra.mxu0 0
        %536 = vmatprep.subr.bf16.mxu0 0
        %537 = vmatpush1.bf16.msra.mxu0 0
        %538 = vmatprep.subr.bf16.mxu0 0
        %539 = vmatpush1.bf16.msra.mxu0 0
        %540 = vmatprep.subr.bf16.mxu0 0
        %541 = vmatpush1.bf16.msra.mxu0 0
        %542 = vmatprep.subr.bf16.mxu0 0
        %543 = vmatpush1.bf16.msra.mxu0 0
        %544 = vmatprep.subr.bf16.mxu0 0
        %545 = vmatpush1.bf16.msra.mxu0 0
        %546 = vmatprep.subr.bf16.mxu0 0
        %547 = vmatpush1.bf16.msra.mxu0 0
        %548 = vmatprep.subr.bf16.mxu0 0
        %549 = vmatpush1.bf16.msra.mxu0 0
        %550 = vmatprep.subr.bf16.mxu0 0
        %551 = vmatpush1.bf16.msra.mxu0 0
        %552 = vmatprep.subr.bf16.mxu0 0
        %553 = vmatpush1.bf16.msra.mxu0 0
        %554 = vmatprep.subr.bf16.mxu0 0
        %555 = vmatpush1.bf16.msra.mxu0 0
        %556 = vmatprep.mubr.bf16.mxu0 0
        %557 = vmatmul.mubr.bf16.gmra.mrb[0].mxu0 %v501
        %v558 = vpop.f32.mrb[0].mxu0
        %v559 = vadd.f32 %v445, %v558
        %v560 = vpop.f32.mrb[0].mxu0
        %v561 = vpop.f32.mrb[0].mxu0
        %v562 = vadd.f32 %v445, %v561
        %v563 = vpop.f32.mrb[0].mxu0
        %564 = vmatprep.mubr.bf16.mxu0 0
        %565 = vmatmul.mubr.bf16.gmra.mrb[0].mxu0 %v504
        %v566 = vpop.f32.mrb[0].mxu0
        %v567 = vadd.f32 %v445, %v566
        %v568 = vpop.f32.mrb[0].mxu0
        %v569 = vpop.f32.mrb[0].mxu0
        %v570 = vadd.f32 %v445, %v569
        %v571 = vpop.f32.mrb[0].mxu0
        %572 = vmatprep.mubr.bf16.mxu0 0
        %573 = vmatmul.mubr.bf16.gmra.mrb[0].mxu0 %v507
        %v574 = vpop.f32.mrb[0].mxu0
        %v575 = vadd.f32 %v445, %v574
        %v576 = vpop.f32.mrb[0].mxu0
        %v577 = vpop.f32.mrb[0].mxu0
        %v578 = vadd.f32 %v445, %v577
        %v579 = vpop.f32.mrb[0].mxu0
        %580 = vmatprep.mubr.bf16.mxu0 0
        %581 = vmatmul.mubr.bf16.gmra.mrb[0].mxu0 %v510
        %v582 = vpop.f32.mrb[0].mxu0
        %v583 = vadd.f32 %v445, %v582
        %v584 = vpop.f32.mrb[0].mxu0
        %v585 = vpop.f32.mrb[0].mxu0
        %v586 = vadd.f32 %v445, %v585
        %v587 = vpop.f32.mrb[0].mxu0
        %588 = vmatprep.mubr.bf16.mxu0 0
        %589 = vmatmul.mubr.bf16.gmra.mrb[0].mxu0 %v513
        %v590 = vpop.f32.mrb[0].mxu0
        %v591 = vadd.f32 %v445, %v590
        %v592 = vpop.f32.mrb[0].mxu0
        %v593 = vpop.f32.mrb[0].mxu0
        %v594 = vadd.f32 %v445, %v593
        %v595 = vpop.f32.mrb[0].mxu0
        %596 = vmatprep.mubr.bf16.mxu0 0
        %597 = vmatmul.mubr.bf16.gmra.mrb[0].mxu0 %v516
        %v598 = vpop.f32.mrb[0].mxu0
        %v599 = vadd.f32 %v445, %v598
        %v600 = vpop.f32.mrb[0].mxu0
        %v601 = vpop.f32.mrb[0].mxu0
        %v602 = vadd.f32 %v445, %v601
        %v603 = vpop.f32.mrb[0].mxu0
        %604 = vmatprep.mubr.bf16.mxu0 0
        %605 = vmatmul.mubr.bf16.gmra.mrb[0].mxu0 %v519
        %v606 = vpop.f32.mrb[0].mxu0
        %v607 = vadd.f32 %v445, %v606
        %v608 = vpop.f32.mrb[0].mxu0
        %v609 = vpop.f32.mrb[0].mxu0
        %v610 = vadd.f32 %v445, %v609
        %v611 = vpop.f32.mrb[0].mxu0
        %612 = vmatprep.mubr.bf16.mxu0 0
        %613 = vmatmul.mubr.bf16.gmra.mrb[0].mxu0 %v522
        %v614 = vpop.f32.mrb[0].mxu0
        %v615 = vadd.f32 %v445, %v614
        %v616 = vpop.f32.mrb[0].mxu0
        %v617 = vpop.f32.mrb[0].mxu0
        %v618 = vadd.f32 %v445, %v617
        %v619 = vpop.f32.mrb[0].mxu0
        %620 = vdwg.mxu0
        %621 = vst.msk [vmem:[#allocation2] sm:$0xff] %vm499, %v559
        %622 = vst.msk [vmem:[#allocation2 + $0x8] sm:$0xff] %vm499, %v562
        %623 = vst.msk [vmem:[#allocation2 + $0x10] sm:$0xff] %vm499, %v567
        %624 = vst.msk [vmem:[#allocation2 + $0x18] sm:$0xff] %vm499, %v570
        %625 = vst.msk [vmem:[#allocation2 + $0x20] sm:$0xff] %vm499, %v575
        %626 = vst.msk [vmem:[#allocation2 + $0x28] sm:$0xff] %vm499, %v578
        %627 = vst.msk [vmem:[#allocation2 + $0x30] sm:$0xff] %vm499, %v583
        %628 = vst.msk [vmem:[#allocation2 + $0x38] sm:$0xff] %vm499, %v586
        %629 = vst.msk [vmem:[#allocation2 + $0x40] sm:$0xff] %vm499, %v591
        %630 = vst.msk [vmem:[#allocation2 + $0x48] sm:$0xff] %vm499, %v594
        %631 = vst.msk [vmem:[#allocation2 + $0x50] sm:$0xff] %vm499, %v599
        %632 = vst.msk [vmem:[#allocation2 + $0x58] sm:$0xff] %vm499, %v602
        %633 = vst.msk [vmem:[#allocation2 + $0x60] sm:$0xff] %vm499, %v607
        %634 = vst.msk [vmem:[#allocation2 + $0x68] sm:$0xff] %vm499, %v610
        %635 = vst.msk [vmem:[#allocation2 + $0x70] sm:$0xff] %vm499, %v615
        %636 = vst.msk [vmem:[#allocation2 + $0x78] sm:$0xff] %vm499, %v618
        %637 = vst.msk [vmem:[#allocation3] sm:$0xff] %vm499, 0.0
        %638 = vst.msk [vmem:[#allocation3 + $0x8] sm:$0xff] %vm499, 0.0
        %639 = vst.msk [vmem:[#allocation3 + $0x10] sm:$0xff] %vm499, 0.0
        %640 = vst.msk [vmem:[#allocation3 + $0x18] sm:$0xff] %vm499, 0.0
        %v641 = vld [vmem:[#allocation3] sm:$0xff]
        %v642 = vld [vmem:[#allocation3 + $0x8] sm:$0xff]
        %v643 = vld [vmem:[#allocation3 + $0x10] sm:$0xff]
        %v644 = vld [vmem:[#allocation3 + $0x18] sm:$0xff]
        %v645 = vld [vmem:[#allocation2] sm:$0xff]
        %v646 = vld [vmem:[#allocation2 + $0x8] sm:$0xff]
        %v647 = vld [vmem:[#allocation2 + $0x10] sm:$0xff]
        %v648 = vld [vmem:[#allocation2 + $0x18] sm:$0xff]
        %v649 = vadd.f32 %v641, %v645
        %v650 = vadd.f32 %v642, %v646
        %v651 = vadd.f32 %v643, %v647
        %v652 = vadd.f32 %v644, %v648
        %v653 = vmul.f32 %v649, 0.5
        %v654 = vmul.f32 %v650, 0.5
        %v655 = vmul.f32 %v651, 0.5
        %v656 = vmul.f32 %v652, 0.5
        %vm657 = vcmp.ge.f32.partialorder %v653, 1.0
        %vm658 = vcmp.ge.f32.partialorder %v654, 1.0
        %vm659 = vcmp.ge.f32.partialorder %v655, 1.0
        %vm660 = vcmp.ge.f32.partialorder %v656, 1.0
        %v661 = vsel %vm657, 1, 0
        %v662 = vsel %vm658, 1, 0
        %v663 = vsel %vm659, 1, 0
        %v664 = vsel %vm660, 1, 0
        %v665 = vcvt.s32.f32 %v661
        %v666 = vcvt.s32.f32 %v662
        %v667 = vcvt.s32.f32 %v663
        %v668 = vcvt.s32.f32 %v664
        %v669 = vld [vmem:[%s390] sm:$0xf]
        %v670 = vld [vmem:[%s390 + $0x4] sm:$0xf]
        %v671 = vld [vmem:[%s390 + $0x8] sm:$0xf]
        %v672 = vld [vmem:[%s390 + $0xc] sm:$0xf]
        %v673 = vunpack.c.l.bf16 %v669
        %v674 = vunpack.c.l.bf16 %v670
        %v675 = vunpack.c.l.bf16 %v671
        %v676 = vunpack.c.l.bf16 %v672
        %v677 = vadd.f32 %v665, %v673
        %v678 = vadd.f32 %v666, %v674
        %v679 = vadd.f32 %v667, %v675
        %v680 = vadd.f32 %v668, %v676
        %v681 = vpack.c.bf16 %v678, %v677
        %v682 = vpack.c.bf16 %v680, %v679
        %v685 = vunpack.c.l.b16 %v681
        %v686 = vunpack.c.h.b16 %v681
        %v687 = vunpack.c.l.b16 %v682
        %v688 = vunpack.c.h.b16 %v682
        %v689 = vpack.c.b16 %v685, %v685
        %v690 = vpack.c.b16 %v686, %v686
        %v691 = vpack.c.b16 %v687, %v687
        %v692 = vpack.c.b16 %v688, %v688
        %vm697 = vcmask 257024
        %698 = vst.msk [vmem:[%s415] sm:$0xf] %vm697, %v689
        %699 = vst.msk [vmem:[%s415 + $0x4] sm:$0xf] %vm697, %v690
        %700 = vst.msk [vmem:[%s415 + $0x8] sm:$0xf] %vm697, %v691
        %701 = vst.msk [vmem:[%s415 + $0xc] sm:$0xf] %vm697, %v692
        %v702 = vsel %vm657, 0.0, %v653
        %v703 = vsel %vm658, 0.0, %v654
        %v704 = vsel %vm659, 0.0, %v655
        %v705 = vsel %vm660, 0.0, %v656
        %706 = vst.msk [vmem:[#allocation3] sm:$0xff] %vm499, %v702
        %707 = vst.msk [vmem:[#allocation3 + $0x8] sm:$0xff] %vm499, %v703
        %708 = vst.msk [vmem:[#allocation3 + $0x10] sm:$0xff] %vm499, %v704
        %709 = vst.msk [vmem:[#allocation3 + $0x18] sm:$0xff] %vm499, %v705
        %v710 = vld [vmem:[#allocation3] sm:$0xff]
        %v711 = vld [vmem:[#allocation3 + $0x8] sm:$0xff]
        %v712 = vld [vmem:[#allocation3 + $0x10] sm:$0xff]
        %v713 = vld [vmem:[#allocation3 + $0x18] sm:$0xff]
        %v714 = vld [vmem:[#allocation2 + $0x20] sm:$0xff]
        %v715 = vld [vmem:[#allocation2 + $0x28] sm:$0xff]
        %v716 = vld [vmem:[#allocation2 + $0x30] sm:$0xff]
        %v717 = vld [vmem:[#allocation2 + $0x38] sm:$0xff]
        %v718 = vadd.f32 %v710, %v714
        %v719 = vadd.f32 %v711, %v715
        %v720 = vadd.f32 %v712, %v716
        %v721 = vadd.f32 %v713, %v717
        %v722 = vmul.f32 %v718, 0.5
        %v723 = vmul.f32 %v719, 0.5
        %v724 = vmul.f32 %v720, 0.5
        %v725 = vmul.f32 %v721, 0.5
        %vm726 = vcmp.ge.f32.partialorder %v722, 1.0
        %vm727 = vcmp.ge.f32.partialorder %v723, 1.0
        %vm728 = vcmp.ge.f32.partialorder %v724, 1.0
        %vm729 = vcmp.ge.f32.partialorder %v725, 1.0
        %v730 = vsel %vm726, 1, 0
        %v731 = vsel %vm727, 1, 0
        %v732 = vsel %vm728, 1, 0
        %v733 = vsel %vm729, 1, 0
        %v734 = vcvt.s32.f32 %v730
        %v735 = vcvt.s32.f32 %v731
        %v736 = vcvt.s32.f32 %v732
        %v737 = vcvt.s32.f32 %v733
        %s738 = scalar_lea.vmem %s390, 16 [#allocation5]
        %v739 = vld [vmem:[%s738] sm:$0xf]
        %v740 = vld [vmem:[%s738 + $0x4] sm:$0xf]
        %v741 = vld [vmem:[%s738 + $0x8] sm:$0xf]
        %v742 = vld [vmem:[%s738 + $0xc] sm:$0xf]
        %v743 = vunpack.c.l.bf16 %v739
        %v744 = vunpack.c.l.bf16 %v740
        %v745 = vunpack.c.l.bf16 %v741
        %v746 = vunpack.c.l.bf16 %v742
        %v747 = vadd.f32 %v734, %v743
        %v748 = vadd.f32 %v735, %v744
        %v749 = vadd.f32 %v736, %v745
        %v750 = vadd.f32 %v737, %v746
        %v751 = vpack.c.bf16 %v748, %v747
        %v752 = vpack.c.bf16 %v750, %v749
        %v755 = vunpack.c.l.b16 %v751
        %v756 = vunpack.c.h.b16 %v751
        %v757 = vunpack.c.l.b16 %v752
        %v758 = vunpack.c.h.b16 %v752
        %v759 = vpack.c.b16 %v755, %v755
        %v760 = vpack.c.b16 %v756, %v756
        %v761 = vpack.c.b16 %v757, %v757
        %v762 = vpack.c.b16 %v758, %v758
        %s767 = scalar_lea.vmem %s415, 16 [#allocation6]
        %768 = vst.msk [vmem:[%s767] sm:$0xf] %vm697, %v759
        %769 = vst.msk [vmem:[%s767 + $0x4] sm:$0xf] %vm697, %v760
        %770 = vst.msk [vmem:[%s767 + $0x8] sm:$0xf] %vm697, %v761
        %771 = vst.msk [vmem:[%s767 + $0xc] sm:$0xf] %vm697, %v762
        %v772 = vsel %vm726, 0.0, %v722
        %v773 = vsel %vm727, 0.0, %v723
        %v774 = vsel %vm728, 0.0, %v724
        %v775 = vsel %vm729, 0.0, %v725
        %776 = vst.msk [vmem:[#allocation3] sm:$0xff] %vm499, %v772
        %777 = vst.msk [vmem:[#allocation3 + $0x8] sm:$0xff] %vm499, %v773
        %778 = vst.msk [vmem:[#allocation3 + $0x10] sm:$0xff] %vm499, %v774
        %779 = vst.msk [vmem:[#allocation3 + $0x18] sm:$0xff] %vm499, %v775
        %v780 = vld [vmem:[#allocation3] sm:$0xff]
        %v781 = vld [vmem:[#allocation3 + $0x8] sm:$0xff]
        %v782 = vld [vmem:[#allocation3 + $0x10] sm:$0xff]
        %v783 = vld [vmem:[#allocation3 + $0x18] sm:$0xff]
        %v784 = vld [vmem:[#allocation2 + $0x40] sm:$0xff]
        %v785 = vld [vmem:[#allocation2 + $0x48] sm:$0xff]
        %v786 = vld [vmem:[#allocation2 + $0x50] sm:$0xff]
        %v787 = vld [vmem:[#allocation2 + $0x58] sm:$0xff]
        %v788 = vadd.f32 %v780, %v784
        %v789 = vadd.f32 %v781, %v785
        %v790 = vadd.f32 %v782, %v786
        %v791 = vadd.f32 %v783, %v787
        %v792 = vmul.f32 %v788, 0.5
        %v793 = vmul.f32 %v789, 0.5
        %v794 = vmul.f32 %v790, 0.5
        %v795 = vmul.f32 %v791, 0.5
        %vm796 = vcmp.ge.f32.partialorder %v792, 1.0
        %vm797 = vcmp.ge.f32.partialorder %v793, 1.0
        %vm798 = vcmp.ge.f32.partialorder %v794, 1.0
        %vm799 = vcmp.ge.f32.partialorder %v795, 1.0
        %v800 = vsel %vm796, 1, 0
        %v801 = vsel %vm797, 1, 0
        %v802 = vsel %vm798, 1, 0
        %v803 = vsel %vm799, 1, 0
        %v804 = vcvt.s32.f32 %v800
        %v805 = vcvt.s32.f32 %v801
        %v806 = vcvt.s32.f32 %v802
        %v807 = vcvt.s32.f32 %v803
        %s808 = scalar_lea.vmem %s390, 32 [#allocation5]
        %v809 = vld [vmem:[%s808] sm:$0xf]
        %v810 = vld [vmem:[%s808 + $0x4] sm:$0xf]
        %v811 = vld [vmem:[%s808 + $0x8] sm:$0xf]
        %v812 = vld [vmem:[%s808 + $0xc] sm:$0xf]
        %v813 = vunpack.c.l.bf16 %v809
        %v814 = vunpack.c.l.bf16 %v810
        %v815 = vunpack.c.l.bf16 %v811
        %v816 = vunpack.c.l.bf16 %v812
        %v817 = vadd.f32 %v804, %v813
        %v818 = vadd.f32 %v805, %v814
        %v819 = vadd.f32 %v806, %v815
        %v820 = vadd.f32 %v807, %v816
        %v821 = vpack.c.bf16 %v818, %v817
        %v822 = vpack.c.bf16 %v820, %v819
        %v825 = vunpack.c.l.b16 %v821
        %v826 = vunpack.c.h.b16 %v821
        %v827 = vunpack.c.l.b16 %v822
        %v828 = vunpack.c.h.b16 %v822
        %v829 = vpack.c.b16 %v825, %v825
        %v830 = vpack.c.b16 %v826, %v826
        %v831 = vpack.c.b16 %v827, %v827
        %v832 = vpack.c.b16 %v828, %v828
        %s837 = scalar_lea.vmem %s415, 32 [#allocation6]
        %838 = vst.msk [vmem:[%s837] sm:$0xf] %vm697, %v829
        %839 = vst.msk [vmem:[%s837 + $0x4] sm:$0xf] %vm697, %v830
        %840 = vst.msk [vmem:[%s837 + $0x8] sm:$0xf] %vm697, %v831
        %841 = vst.msk [vmem:[%s837 + $0xc] sm:$0xf] %vm697, %v832
        %v842 = vsel %vm796, 0.0, %v792
        %v843 = vsel %vm797, 0.0, %v793
        %v844 = vsel %vm798, 0.0, %v794
        %v845 = vsel %vm799, 0.0, %v795
        %846 = vst.msk [vmem:[#allocation3] sm:$0xff] %vm499, %v842
        %847 = vst.msk [vmem:[#allocation3 + $0x8] sm:$0xff] %vm499, %v843
        %848 = vst.msk [vmem:[#allocation3 + $0x10] sm:$0xff] %vm499, %v844
        %849 = vst.msk [vmem:[#allocation3 + $0x18] sm:$0xff] %vm499, %v845
        %v850 = vld [vmem:[#allocation3] sm:$0xff]
        %v851 = vld [vmem:[#allocation3 + $0x8] sm:$0xff]
        %v852 = vld [vmem:[#allocation3 + $0x10] sm:$0xff]
        %v853 = vld [vmem:[#allocation3 + $0x18] sm:$0xff]
        %v854 = vld [vmem:[#allocation2 + $0x60] sm:$0xff]
        %v855 = vld [vmem:[#allocation2 + $0x68] sm:$0xff]
        %v856 = vld [vmem:[#allocation2 + $0x70] sm:$0xff]
        %v857 = vld [vmem:[#allocation2 + $0x78] sm:$0xff]
        %v858 = vadd.f32 %v850, %v854
        %v859 = vadd.f32 %v851, %v855
        %v860 = vadd.f32 %v852, %v856
        %v861 = vadd.f32 %v853, %v857
        %v862 = vmul.f32 %v858, 0.5
        %v863 = vmul.f32 %v859, 0.5
        %v864 = vmul.f32 %v860, 0.5
        %v865 = vmul.f32 %v861, 0.5
        %vm866 = vcmp.ge.f32.partialorder %v862, 1.0
        %vm867 = vcmp.ge.f32.partialorder %v863, 1.0
        %vm868 = vcmp.ge.f32.partialorder %v864, 1.0
        %vm869 = vcmp.ge.f32.partialorder %v865, 1.0
        %v870 = vsel %vm866, 1, 0
        %v871 = vsel %vm867, 1, 0
        %v872 = vsel %vm868, 1, 0
        %v873 = vsel %vm869, 1, 0
        %v874 = vcvt.s32.f32 %v870
        %v875 = vcvt.s32.f32 %v871
        %v876 = vcvt.s32.f32 %v872
        %v877 = vcvt.s32.f32 %v873
        %s878 = scalar_lea.vmem %s390, 48 [#allocation5]
        %v879 = vld [vmem:[%s878] sm:$0xf]
        %v880 = vld [vmem:[%s878 + $0x4] sm:$0xf]
        %v881 = vld [vmem:[%s878 + $0x8] sm:$0xf]
        %v882 = vld [vmem:[%s878 + $0xc] sm:$0xf]
        %v883 = vunpack.c.l.bf16 %v879
        %v884 = vunpack.c.l.bf16 %v880
        %v885 = vunpack.c.l.bf16 %v881
        %v886 = vunpack.c.l.bf16 %v882
        %v887 = vadd.f32 %v874, %v883
        %v888 = vadd.f32 %v875, %v884
        %v889 = vadd.f32 %v876, %v885
        %v890 = vadd.f32 %v877, %v886
        %v891 = vpack.c.bf16 %v888, %v887
        %v892 = vpack.c.bf16 %v890, %v889
        %v895 = vunpack.c.l.b16 %v891
        %v896 = vunpack.c.h.b16 %v891
        %v897 = vunpack.c.l.b16 %v892
        %v898 = vunpack.c.h.b16 %v892
        %v899 = vpack.c.b16 %v895, %v895
        %v900 = vpack.c.b16 %v896, %v896
        %v901 = vpack.c.b16 %v897, %v897
        %v902 = vpack.c.b16 %v898, %v898
        %s907 = scalar_lea.vmem %s415, 48 [#allocation6]
        %908 = vst.msk [vmem:[%s907] sm:$0xf] %vm697, %v899
        %909 = vst.msk [vmem:[%s907 + $0x4] sm:$0xf] %vm697, %v900
        %910 = vst.msk [vmem:[%s907 + $0x8] sm:$0xf] %vm697, %v901
        %911 = vst.msk [vmem:[%s907 + $0xc] sm:$0xf] %vm697, %v902
        %v912 = vsel %vm866, 0.0, %v862
        %v913 = vsel %vm867, 0.0, %v863
        %v914 = vsel %vm868, 0.0, %v864
        %v915 = vsel %vm869, 0.0, %v865
        %916 = vst.msk [vmem:[#allocation3] sm:$0xff] %vm499, %v912
        %917 = vst.msk [vmem:[#allocation3 + $0x8] sm:$0xff] %vm499, %v913
        %918 = vst.msk [vmem:[#allocation3 + $0x10] sm:$0xff] %vm499, %v914
        %919 = vst.msk [vmem:[#allocation3 + $0x18] sm:$0xff] %vm499, %v915
        %s920 = sand.u32 %s117, 1
        %s921 = sand.u32 %s117, 1
        %s922 = smul.addr %s921, 64
        %s923 = scalar_lea.vmem [#allocation6], %s922
        // Predicated region
        $region119: #{spiking_transformer_forward.7} parent=109 // pred_check
          %p924 = pneg %p127
        $region120: #{spiking_transformer_forward.7} parent=109 // pred_check_branch
          %926 = sbr.rel (%p924) target = $region122
        $region121: #{spiking_transformer_forward.7} parent=109 // pred_region
          %s927 = smul.u32 4, %s15
          %s928 = smul.addr %s927, 4
          %s929 = scalar_lea.vmem %s4, %s928
          // Predicated region
          $region123: #{spiking_transformer_forward.7} parent=121 // pred_check
            _
          $region124: #{spiking_transformer_forward.7} parent=121 // pred_check_branch
            %931 = sbr.rel (0) target = $region126
          $region125: #{spiking_transformer_forward.7} parent=121 // pred_region
            // Predicated region
            $region127: #{spiking_transformer_forward.7} parent=125 // pred_check
              _
            $region128: #{spiking_transformer_forward.7} parent=125 // pred_check_branch
              %933 = sbr.rel target = $region130
            $region129: #{spiking_transformer_forward.7} parent=125 // pred_region
              // Predicated region
              $region142: #{spiking_transformer_forward.7} parent=129 // pred_check
                _
              $region143: #{spiking_transformer_forward.7} parent=129 // pred_check_branch
                %978 = sbr.rel (0) target = $region145
              $region144: #{spiking_transformer_forward.7} parent=129 // pred_region
                loop: start=0, step=1, limit=1
                $region146: #{spiking_transformer_forward.7} parent=144 // loop_pre_header
                  _
                $region147: #{spiking_transformer_forward.7} parent=144 // loop_header
                  %s980 = sphi 0, %s984
                  %p981 = scmp.ge.s32.totalorder %s980, 1
                  %s985 = sphi %s923, %s923
                  %s986 = sphi %s929, %s929
                $region148: #{spiking_transformer_forward.7} parent=144 // loop_header_branch
                  %983 = sbr.rel (%p981) target = $region152
                $region149: #{spiking_transformer_forward.7} parent=144 // loop_body
                  _
                $region150: #{spiking_transformer_forward.7} parent=144 // loop_footer
                  %s984 = sadd.s32 1, %s980
                $region151: #{spiking_transformer_forward.7} parent=144 // loop_footer_branch
                  %979 = sbr.rel target = $region147
                $region152: #{spiking_transformer_forward.7} parent=144 // loop_exit
                  _
                loop: start=0, step=1, limit=1
                $region153: #{spiking_transformer_forward.7} parent=144 // loop_pre_header
                  _
                $region154: #{spiking_transformer_forward.7} parent=144 // loop_header
                  %s989 = sphi 0, %s993
                  %p990 = scmp.ge.s32.totalorder %s989, 1
                  %s994 = sphi %s923, %s923
                  %s995 = sphi %s929, %s929
                $region155: #{spiking_transformer_forward.7} parent=144 // loop_header_branch
                  %992 = sbr.rel (%p990) target = $region159
                $region156: #{spiking_transformer_forward.7} parent=144 // loop_body
                  %v996 = vld [vmem:[%s994] sm:$0xf]
                  %997 = vst [vmem:[%s995] sm:$0xf] %v996
                  %v998 = vld [vmem:[%s994 + $0x4] sm:$0xf]
                  %999 = vst [vmem:[%s995 + $0x4] sm:$0xf] %v998
                  %v1000 = vld [vmem:[%s994 + $0x8] sm:$0xf]
                  %1001 = vst [vmem:[%s995 + $0x8] sm:$0xf] %v1000
                  %v1002 = vld [vmem:[%s994 + $0xc] sm:$0xf]
                  %1003 = vst [vmem:[%s995 + $0xc] sm:$0xf] %v1002
                  %v1004 = vld [vmem:[%s994 + $0x10] sm:$0xf]
                  %1005 = vst [vmem:[%s995 + $0x40] sm:$0xf] %v1004
                  %v1006 = vld [vmem:[%s994 + $0x14] sm:$0xf]
                  %1007 = vst [vmem:[%s995 + $0x44] sm:$0xf] %v1006
                  %v1008 = vld [vmem:[%s994 + $0x18] sm:$0xf]
                  %1009 = vst [vmem:[%s995 + $0x48] sm:$0xf] %v1008
                  %v1010 = vld [vmem:[%s994 + $0x1c] sm:$0xf]
                  %1011 = vst [vmem:[%s995 + $0x4c] sm:$0xf] %v1010
                  %v1012 = vld [vmem:[%s994 + $0x20] sm:$0xf]
                  %1013 = vst [vmem:[%s995 + $0x80] sm:$0xf] %v1012
                  %v1014 = vld [vmem:[%s994 + $0x24] sm:$0xf]
                  %1015 = vst [vmem:[%s995 + $0x84] sm:$0xf] %v1014
                  %v1016 = vld [vmem:[%s994 + $0x28] sm:$0xf]
                  %1017 = vst [vmem:[%s995 + $0x88] sm:$0xf] %v1016
                  %v1018 = vld [vmem:[%s994 + $0x2c] sm:$0xf]
                  %1019 = vst [vmem:[%s995 + $0x8c] sm:$0xf] %v1018
                  %v1020 = vld [vmem:[%s994 + $0x30] sm:$0xf]
                  %1021 = vst [vmem:[%s995 + $0xc0] sm:$0xf] %v1020
                  %v1022 = vld [vmem:[%s994 + $0x34] sm:$0xf]
                  %1023 = vst [vmem:[%s995 + $0xc4] sm:$0xf] %v1022
                  %v1024 = vld [vmem:[%s994 + $0x38] sm:$0xf]
                  %1025 = vst [vmem:[%s995 + $0xc8] sm:$0xf] %v1024
                  %v1026 = vld [vmem:[%s994 + $0x3c] sm:$0xf]
                  %1027 = vst [vmem:[%s995 + $0xcc] sm:$0xf] %v1026
                $region157: #{spiking_transformer_forward.7} parent=144 // loop_footer
                  %s993 = sadd.s32 1, %s989
                $region158: #{spiking_transformer_forward.7} parent=144 // loop_footer_branch
                  %988 = sbr.rel target = $region154
                $region159: #{spiking_transformer_forward.7} parent=144 // loop_exit
                  _
              $region145: #{spiking_transformer_forward.7} parent=129 // pred_fallthru
                _
            $region130: #{spiking_transformer_forward.7} parent=125 // pred_fallthru
              _
            // Predicated region
            $region131: #{spiking_transformer_forward.7} parent=125 // pred_check
              _
            $region132: #{spiking_transformer_forward.7} parent=125 // pred_check_branch
              %935 = sbr.rel (0) target = $region134
            $region133: #{spiking_transformer_forward.7} parent=125 // pred_region
              loop: start=0, step=1, limit=1
              $region135: #{spiking_transformer_forward.7} parent=133 // loop_pre_header
                _
              $region136: #{spiking_transformer_forward.7} parent=133 // loop_header
                %s938 = sphi 0, %s942
                %p939 = scmp.ge.s32.totalorder %s938, 1
                %s943 = sphi %s923, %s923
                %s944 = sphi %s929, %s929
              $region137: #{spiking_transformer_forward.7} parent=133 // loop_header_branch
                %941 = sbr.rel (%p939) target = $region141
              $region138: #{spiking_transformer_forward.7} parent=133 // loop_body
                %v945 = vld [vmem:[%s943] sm:$0xf]
                %946 = vst [vmem:[%s944] sm:$0xf] %v945
                %v947 = vld [vmem:[%s943 + $0x4] sm:$0xf]
                %948 = vst [vmem:[%s944 + $0x4] sm:$0xf] %v947
                %v949 = vld [vmem:[%s943 + $0x8] sm:$0xf]
                %950 = vst [vmem:[%s944 + $0x8] sm:$0xf] %v949
                %v951 = vld [vmem:[%s943 + $0xc] sm:$0xf]
                %952 = vst [vmem:[%s944 + $0xc] sm:$0xf] %v951
                %v953 = vld [vmem:[%s943 + $0x10] sm:$0xf]
                %954 = vst [vmem:[%s944 + $0x40] sm:$0xf] %v953
                %v955 = vld [vmem:[%s943 + $0x14] sm:$0xf]
                %956 = vst [vmem:[%s944 + $0x44] sm:$0xf] %v955
                %v957 = vld [vmem:[%s943 + $0x18] sm:$0xf]
                %958 = vst [vmem:[%s944 + $0x48] sm:$0xf] %v957
                %v959 = vld [vmem:[%s943 + $0x1c] sm:$0xf]
                %960 = vst [vmem:[%s944 + $0x4c] sm:$0xf] %v959
                %v961 = vld [vmem:[%s943 + $0x20] sm:$0xf]
                %962 = vst [vmem:[%s944 + $0x80] sm:$0xf] %v961
                %v963 = vld [vmem:[%s943 + $0x24] sm:$0xf]
                %964 = vst [vmem:[%s944 + $0x84] sm:$0xf] %v963
                %v965 = vld [vmem:[%s943 + $0x28] sm:$0xf]
                %966 = vst [vmem:[%s944 + $0x88] sm:$0xf] %v965
                %v967 = vld [vmem:[%s943 + $0x2c] sm:$0xf]
                %968 = vst [vmem:[%s944 + $0x8c] sm:$0xf] %v967
                %v969 = vld [vmem:[%s943 + $0x30] sm:$0xf]
                %970 = vst [vmem:[%s944 + $0xc0] sm:$0xf] %v969
                %v971 = vld [vmem:[%s943 + $0x34] sm:$0xf]
                %972 = vst [vmem:[%s944 + $0xc4] sm:$0xf] %v971
                %v973 = vld [vmem:[%s943 + $0x38] sm:$0xf]
                %974 = vst [vmem:[%s944 + $0xc8] sm:$0xf] %v973
                %v975 = vld [vmem:[%s943 + $0x3c] sm:$0xf]
                %976 = vst [vmem:[%s944 + $0xcc] sm:$0xf] %v975
              $region139: #{spiking_transformer_forward.7} parent=133 // loop_footer
                %s942 = sadd.s32 1, %s938
              $region140: #{spiking_transformer_forward.7} parent=133 // loop_footer_branch
                %937 = sbr.rel target = $region136
              $region141: #{spiking_transformer_forward.7} parent=133 // loop_exit
                _
            $region134: #{spiking_transformer_forward.7} parent=125 // pred_fallthru
              _
          $region126: #{spiking_transformer_forward.7} parent=121 // pred_fallthru
            _
          %1028 = vnop
        $region122: #{spiking_transformer_forward.7} parent=109 // pred_fallthru
          _
      $region110: #{spiking_transformer_forward.7} parent=5 // pred_fallthru
        _
      %p1029 = scmp.le.s32.totalorder 2, %s10
      // Predicated region
      $region160: #{spiking_transformer_forward.7} parent=5 // pred_check
        %p1030 = pneg %p1029
      $region161: #{spiking_transformer_forward.7} parent=5 // pred_check_branch
        %1032 = sbr.rel (%p1030) target = $region163
      $region162: #{spiking_transformer_forward.7} parent=5 // pred_region
        %s1033 = ssub.s32 %s10, 2
        // Predicated region
        $region164: #{spiking_transformer_forward.7} parent=162 // pred_check
          %p1034 = pneg %p133
        $region165: #{spiking_transformer_forward.7} parent=162 // pred_check_branch
          %1036 = sbr.rel (%p1034) target = $region167
        $region166: #{spiking_transformer_forward.7} parent=162 // pred_region
          %s1037 = sand.u32 %s118, 1
          %s1038 = sand.u32 %s118, 1
          %s1039 = smul.addr %s1038, 64
          %s1040 = scalar_lea.vmem [#allocation6], %s1039
        $region167: #{spiking_transformer_forward.7} parent=162 // pred_fallthru
          _
      $region163: #{spiking_transformer_forward.7} parent=5 // pred_fallthru
        _
    $region6: #{spiking_transformer_forward.7} parent=1 // loop_footer
      %s14 = sadd.s32 1, %s10
    $region7: #{spiking_transformer_forward.7} parent=1 // loop_footer_branch
      %9 = sbr.rel target = $region3
    $region8: #{spiking_transformer_forward.7} parent=1 // loop_exit
      _

// kernel: spiking_transformer_forward.9
$region0: #{spiking_transformer_forward.9}
  #allocation0 [shape = 'u32[]', space=smem, size = 0x4, offset = 0x4, fixed_abs, tag = 'smem constant byte address 0x4 - core index']
  #allocation1 [shape = 'u32[144,128]{1,0:T(1,128)}', space=vmem, size = 0x12000, scoped, tag = 'internal scratch']
  #allocation2 [shape = 'f32[128,32]{1,0:T(8,128)}', space=vmem, size = 0x10000, scoped, tag = 'scratch operand']
  #allocation3 [shape = 'f32[32,32]{1,0:T(8,128)}', space=vmem, size = 0x4000, scoped, tag = 'scratch operand']
  #allocation8 [shape = 's32[]', space=sflag, size = 0x4, offset = 0, fixed_abs, tag = 'sflag constant byte address 0x0 - dummy sync flag']
  %s0 = inlined_call_operand.vmem [shape: bf16[4,128,128], index: 0, kind: input, shape index: {}]
  %s1 = inlined_call_operand.vmem [shape: bf16[4,128,32], index: 1, kind: input, shape index: {}]
  %s2 = inlined_call_operand.vmem [shape: bf16[128,32], index: 2, kind: input, shape index: {}]
  %s3 = inlined_call_operand.vmem [shape: f32[1,32], index: 3, kind: input, shape index: {}]
  %s4 = inlined_call_operand.hbm [shape: f32[4,128,32], index: 4, kind: output, shape index: {}]
  %s5 = sld [smem:[#allocation0]]
  $region131: #{spiking_transformer_forward.9} parent=0
    _
  %s7 = ssub.s32 1, %s5
  %s8 = scalar_select 0, %s7, %s5
  $region1: #{spiking_transformer_forward.9} parent=0
    #allocation4 [shape = 'u8[65536]{0}', space=vmem, size = 0x10000, scoped, tag = 'input window, operand 0']
    #allocation5 [shape = 'u8[65536]{0}', space=vmem, size = 0x10000, scoped, tag = 'input window, operand 1']
    #allocation6 [shape = 'u8[131072]{0}', space=vmem, size = 0x20000, scoped, tag = 'output window, operand 0']
    #allocation7 [shape = 's32[2]{0}', space=sflag, size = 0x8, scoped, tag = 'scoped memory for spiking_transformer_forward.9']
    %9 = vsyncpa [#allocation7], 0
    %s10 = scalar_lea.sflag [#allocation7], 1
    %11 = vsyncpa %s10, 0
    loop: start=0, step=1, limit=6
    $region2: #{spiking_transformer_forward.9} parent=1 // loop_pre_header
      _
    $region3: #{spiking_transformer_forward.9} parent=1 // loop_header
      %s13 = sphi 0, %s17
      %p14 = scmp.ge.s32.totalorder %s13, 6
      %s23 = sphi 0, %s25
      %s26 = sphi 0, %s23
      %s27 = sphi 0, %s26
      %s43 = sphi 0, %s27
      %s49 = sphi 0, %s51
      %s52 = sphi 0, %s49
      %s53 = sphi 0, %s52
      %s69 = sphi 0, %s53
      %s73 = sphi 0, %s73
      %s75 = sphi 0, %s73
      %s76 = sphi 0, %s75
      %s90 = sphi 0, %s76
      %s94 = sphi 0, %s94
      %s96 = sphi 0, %s94
      %s97 = sphi 0, %s96
      %s111 = sphi 0, %s97
      %s117 = sphi 0, %s119
      %s120 = sphi 0, %s117
      %s121 = sphi 0, %s120
      %s137 = sphi 0, %s121
    $region4: #{spiking_transformer_forward.9} parent=1 // loop_header_branch
      %16 = sbr.rel (%p14) target = $region8
    $region5: #{spiking_transformer_forward.9} parent=1 // loop_body
      %s18 = ssub.s32 %s13, 1
      %s19 = ssub.s32 %s13, 2
      %s20 = sadd.s32 %s13, 1
      %s21 = ssub.s32 %s13, %s20
      %p22 = scmp.eq.s32.totalorder %s21, 0
      %s24 = sadd.s32 %s23, 1
      %s25 = scalar_select %p22, %s23, %s24
      %p28 = pneg %p22
      %p29 = scmp.eq.s32.totalorder %s13, 3
      %p30 = por %p28, %p29
      %p31 = scmp.ne.s32.totalorder %s23, %s26
      %p32 = scmp.eq.s32.totalorder %s13, 0
      %p33 = por %p31, %p32
      %p34 = scmp.ne.s32.totalorder %s23, %s26
      %p35 = scmp.eq.s32.totalorder %s18, 3
      %p36 = por %p34, %p35
      %p37 = scmp.ne.s32.totalorder %s26, %s27
      %p38 = scmp.eq.s32.totalorder %s18, 0
      %p39 = por %p37, %p38
      %p40 = scmp.ne.s32.totalorder %s26, %s27
      %p41 = scmp.eq.s32.totalorder %s19, 3
      %p42 = por %p40, %p41
      %p44 = scmp.ne.s32.totalorder %s27, %s43
      %p45 = scmp.eq.s32.totalorder %s19, 0
      %p46 = por %p44, %p45
      %s47 = ssub.s32 %s13, %s20
      %p48 = scmp.eq.s32.totalorder %s47, 0
      %s50 = sadd.s32 %s49, 1
      %s51 = scalar_select %p48, %s49, %s50
      %p54 = pneg %p48
      %p55 = scmp.eq.s32.totalorder %s13, 3
      %p56 = por %p54, %p55
      %p57 = scmp.ne.s32.totalorder %s49, %s52
      %p58 = scmp.eq.s32.totalorder %s13, 0
      %p59 = por %p57, %p58
      %p60 = scmp.ne.s32.totalorder %s49, %s52
      %p61 = scmp.eq.s32.totalorder %s18, 3
      %p62 = por %p60, %p61
      %p63 = scmp.ne.s32.totalorder %s52, %s53
      %p64 = scmp.eq.s32.totalorder %s18, 0
      %p65 = por %p63, %p64
      %p66 = scmp.ne.s32.totalorder %s52, %s53
      %p67 = scmp.eq.s32.totalorder %s19, 3
      %p68 = por %p66, %p67
      %p70 = scmp.ne.s32.totalorder %s53, %s69
      %p71 = scmp.eq.s32.totalorder %s19, 0
      %p72 = por %p70, %p71
      %s74 = sadd.s32 %s73, 1
      %p77 = scmp.eq.s32.totalorder %s13, 3
      %p78 = scmp.ne.s32.totalorder %s73, %s75
      %p79 = scmp.eq.s32.totalorder %s13, 0
      %p80 = por %p78, %p79
      %p81 = scmp.ne.s32.totalorder %s73, %s75
      %p82 = scmp.eq.s32.totalorder %s18, 3
      %p83 = por %p81, %p82
      %p84 = scmp.ne.s32.totalorder %s75, %s76
      %p85 = scmp.eq.s32.totalorder %s18, 0
      %p86 = por %p84, %p85
      %p87 = scmp.ne.s32.totalorder %s75, %s76
      %p88 = scmp.eq.s32.totalorder %s19, 3
      %p89 = por %p87, %p88
      %p91 = scmp.ne.s32.totalorder %s76, %s90
      %p92 = scmp.eq.s32.totalorder %s19, 0
      %p93 = por %p91, %p92
      %s95 = sadd.s32 %s94, 1
      %p98 = scmp.eq.s32.totalorder %s13, 3
      %p99 = scmp.ne.s32.totalorder %s94, %s96
      %p100 = scmp.eq.s32.totalorder %s13, 0
      %p101 = por %p99, %p100
      %p102 = scmp.ne.s32.totalorder %s94, %s96
      %p103 = scmp.eq.s32.totalorder %s18, 3
      %p104 = por %p102, %p103
      %p105 = scmp.ne.s32.totalorder %s96, %s97
      %p106 = scmp.eq.s32.totalorder %s18, 0
      %p107 = por %p105, %p106
      %p108 = scmp.ne.s32.totalorder %s96, %s97
      %p109 = scmp.eq.s32.totalorder %s19, 3
      %p110 = por %p108, %p109
      %p112 = scmp.ne.s32.totalorder %s97, %s111
      %p113 = scmp.eq.s32.totalorder %s19, 0
      %p114 = por %p112, %p113
      %s115 = ssub.s32 %s13, %s20
      %p116 = scmp.eq.s32.totalorder %s115, 0
      %s118 = sadd.s32 %s117, 1
      %s119 = scalar_select %p116, %s117, %s118
      %p122 = pneg %p116
      %p123 = scmp.eq.s32.totalorder %s13, 3
      %p124 = por %p122, %p123
      %p125 = scmp.ne.s32.totalorder %s117, %s120
      %p126 = scmp.eq.s32.totalorder %s13, 0
      %p127 = por %p125, %p126
      %p128 = scmp.ne.s32.totalorder %s117, %s120
      %p129 = scmp.eq.s32.totalorder %s18, 3
      %p130 = por %p128, %p129
      %p131 = scmp.ne.s32.totalorder %s120, %s121
      %p132 = scmp.eq.s32.totalorder %s18, 0
      %p133 = por %p131, %p132
      %p134 = scmp.ne.s32.totalorder %s120, %s121
      %p135 = scmp.eq.s32.totalorder %s19, 3
      %p136 = por %p134, %p135
      %p138 = scmp.ne.s32.totalorder %s121, %s137
      %p139 = scmp.eq.s32.totalorder %s19, 0
      %p140 = por %p138, %p139
      %p141 = scmp.le.s32.totalorder 1, %s13
      %p142 = scmp.lt.s32.totalorder %s13, 5
      %p143 = pnand %p141, %p142
      %p144 = pneg %p143
      // Predicated region
      $region9: #{spiking_transformer_forward.9} parent=5 // pred_check
        _
      $region10: #{spiking_transformer_forward.9} parent=5 // pred_check_branch
        %146 = sbr.rel (%p143) target = $region12
      $region11: #{spiking_transformer_forward.9} parent=5 // pred_region
        %s147 = ssub.s32 %s13, 1
        // Predicated region
        $region13: #{spiking_transformer_forward.9} parent=11 // pred_check
          %p148 = pneg %p86
        $region14: #{spiking_transformer_forward.9} parent=11 // pred_check_branch
          %150 = sbr.rel (%p148) target = $region16
        $region15: #{spiking_transformer_forward.9} parent=11 // pred_region
          _
        $region16: #{spiking_transformer_forward.9} parent=11 // pred_fallthru
          _
        // Predicated region
        $region17: #{spiking_transformer_forward.9} parent=11 // pred_check
          %p151 = pneg %p107
        $region18: #{spiking_transformer_forward.9} parent=11 // pred_check_branch
          %153 = sbr.rel (%p151) target = $region20
        $region19: #{spiking_transformer_forward.9} parent=11 // pred_region
          _
        $region20: #{spiking_transformer_forward.9} parent=11 // pred_fallthru
          _
      $region12: #{spiking_transformer_forward.9} parent=5 // pred_fallthru
        _
      %p154 = scmp.lt.s32.totalorder %s13, 4
      // Predicated region
      $region21: #{spiking_transformer_forward.9} parent=5 // pred_check
        %p155 = pneg %p154
      $region22: #{spiking_transformer_forward.9} parent=5 // pred_check_branch
        %157 = sbr.rel (%p155) target = $region24
      $region23: #{spiking_transformer_forward.9} parent=5 // pred_region
        // Predicated region
        $region25: #{spiking_transformer_forward.9} parent=23 // pred_check
          %p158 = pneg %p33
        $region26: #{spiking_transformer_forward.9} parent=23 // pred_check_branch
          %160 = sbr.rel (%p158) target = $region28
        $region27: #{spiking_transformer_forward.9} parent=23 // pred_region
          %s161 = sand.u32 %s23, 1
          %s162 = sand.u32 %s23, 1
          %s163 = smul.addr %s162, 64
          %s164 = scalar_lea.vmem [#allocation4], %s163
          %s165 = smul.u32 4, %s13
          %s166 = smul.addr %s165, 4
          %s167 = scalar_lea.vmem %s0, %s166
          // Predicated region
          $region29: #{spiking_transformer_forward.9} parent=27 // pred_check
            _
          $region30: #{spiking_transformer_forward.9} parent=27 // pred_check_branch
            %169 = sbr.rel (0) target = $region32
          $region31: #{spiking_transformer_forward.9} parent=27 // pred_region
            // Predicated region
            $region33: #{spiking_transformer_forward.9} parent=31 // pred_check
              _
            $region34: #{spiking_transformer_forward.9} parent=31 // pred_check_branch
              %171 = sbr.rel target = $region36
            $region35: #{spiking_transformer_forward.9} parent=31 // pred_region
              // Predicated region
              $region48: #{spiking_transformer_forward.9} parent=35 // pred_check
                _
              $region49: #{spiking_transformer_forward.9} parent=35 // pred_check_branch
                %216 = sbr.rel (0) target = $region51
              $region50: #{spiking_transformer_forward.9} parent=35 // pred_region
                loop: start=0, step=1, limit=1
                $region52: #{spiking_transformer_forward.9} parent=50 // loop_pre_header
                  _
                $region53: #{spiking_transformer_forward.9} parent=50 // loop_header
                  %s218 = sphi 0, %s222
                  %p219 = scmp.ge.s32.totalorder %s218, 1
                  %s223 = sphi %s167, %s167
                  %s224 = sphi %s164, %s164
                $region54: #{spiking_transformer_forward.9} parent=50 // loop_header_branch
                  %221 = sbr.rel (%p219) target = $region58
                $region55: #{spiking_transformer_forward.9} parent=50 // loop_body
                  _
                $region56: #{spiking_transformer_forward.9} parent=50 // loop_footer
                  %s222 = sadd.s32 1, %s218
                $region57: #{spiking_transformer_forward.9} parent=50 // loop_footer_branch
                  %217 = sbr.rel target = $region53
                $region58: #{spiking_transformer_forward.9} parent=50 // loop_exit
                  _
                loop: start=0, step=1, limit=1
                $region59: #{spiking_transformer_forward.9} parent=50 // loop_pre_header
                  _
                $region60: #{spiking_transformer_forward.9} parent=50 // loop_header
                  %s227 = sphi 0, %s231
                  %p228 = scmp.ge.s32.totalorder %s227, 1
                  %s232 = sphi %s167, %s167
                  %s233 = sphi %s164, %s164
                $region61: #{spiking_transformer_forward.9} parent=50 // loop_header_branch
                  %230 = sbr.rel (%p228) target = $region65
                $region62: #{spiking_transformer_forward.9} parent=50 // loop_body
                  %v234 = vld [vmem:[%s232] sm:$0xf]
                  %235 = vst [vmem:[%s233] sm:$0xf] %v234
                  %v236 = vld [vmem:[%s232 + $0x4] sm:$0xf]
                  %237 = vst [vmem:[%s233 + $0x4] sm:$0xf] %v236
                  %v238 = vld [vmem:[%s232 + $0x8] sm:$0xf]
                  %239 = vst [vmem:[%s233 + $0x8] sm:$0xf] %v238
                  %v240 = vld [vmem:[%s232 + $0xc] sm:$0xf]
                  %241 = vst [vmem:[%s233 + $0xc] sm:$0xf] %v240
                  %v242 = vld [vmem:[%s232 + $0x40] sm:$0xf]
                  %243 = vst [vmem:[%s233 + $0x10] sm:$0xf] %v242
                  %v244 = vld [vmem:[%s232 + $0x44] sm:$0xf]
                  %245 = vst [vmem:[%s233 + $0x14] sm:$0xf] %v244
                  %v246 = vld [vmem:[%s232 + $0x48] sm:$0xf]
                  %247 = vst [vmem:[%s233 + $0x18] sm:$0xf] %v246
                  %v248 = vld [vmem:[%s232 + $0x4c] sm:$0xf]
                  %249 = vst [vmem:[%s233 + $0x1c] sm:$0xf] %v248
                  %v250 = vld [vmem:[%s232 + $0x80] sm:$0xf]
                  %251 = vst [vmem:[%s233 + $0x20] sm:$0xf] %v250
                  %v252 = vld [vmem:[%s232 + $0x84] sm:$0xf]
                  %253 = vst [vmem:[%s233 + $0x24] sm:$0xf] %v252
                  %v254 = vld [vmem:[%s232 + $0x88] sm:$0xf]
                  %255 = vst [vmem:[%s233 + $0x28] sm:$0xf] %v254
                  %v256 = vld [vmem:[%s232 + $0x8c] sm:$0xf]
                  %257 = vst [vmem:[%s233 + $0x2c] sm:$0xf] %v256
                  %v258 = vld [vmem:[%s232 + $0xc0] sm:$0xf]
                  %259 = vst [vmem:[%s233 + $0x30] sm:$0xf] %v258
                  %v260 = vld [vmem:[%s232 + $0xc4] sm:$0xf]
                  %261 = vst [vmem:[%s233 + $0x34] sm:$0xf] %v260
                  %v262 = vld [vmem:[%s232 + $0xc8] sm:$0xf]
                  %263 = vst [vmem:[%s233 + $0x38] sm:$0xf] %v262
                  %v264 = vld [vmem:[%s232 + $0xcc] sm:$0xf]
                  %265 = vst [vmem:[%s233 + $0x3c] sm:$0xf] %v264
                $region63: #{spiking_transformer_forward.9} parent=50 // loop_footer
                  %s231 = sadd.s32 1, %s227
                $region64: #{spiking_transformer_forward.9} parent=50 // loop_footer_branch
                  %226 = sbr.rel target = $region60
                $region65: #{spiking_transformer_forward.9} parent=50 // loop_exit
                  _
              $region51: #{spiking_transformer_forward.9} parent=35 // pred_fallthru
                _
            $region36: #{spiking_transformer_forward.9} parent=31 // pred_fallthru
              _
            // Predicated region
            $region37: #{spiking_transformer_forward.9} parent=31 // pred_check
              _
            $region38: #{spiking_transformer_forward.9} parent=31 // pred_check_branch
              %173 = sbr.rel (0) target = $region40
            $region39: #{spiking_transformer_forward.9} parent=31 // pred_region
              loop: start=0, step=1, limit=1
              $region41: #{spiking_transformer_forward.9} parent=39 // loop_pre_header
                _
              $region42: #{spiking_transformer_forward.9} parent=39 // loop_header
                %s176 = sphi 0, %s180
                %p177 = scmp.ge.s32.totalorder %s176, 1
                %s181 = sphi %s167, %s167
                %s182 = sphi %s164, %s164
              $region43: #{spiking_transformer_forward.9} parent=39 // loop_header_branch
                %179 = sbr.rel (%p177) target = $region47
              $region44: #{spiking_transformer_forward.9} parent=39 // loop_body
                %v183 = vld [vmem:[%s181] sm:$0xf]
                %184 = vst [vmem:[%s182] sm:$0xf] %v183
                %v185 = vld [vmem:[%s181 + $0x4] sm:$0xf]
                %186 = vst [vmem:[%s182 + $0x4] sm:$0xf] %v185
                %v187 = vld [vmem:[%s181 + $0x8] sm:$0xf]
                %188 = vst [vmem:[%s182 + $0x8] sm:$0xf] %v187
                %v189 = vld [vmem:[%s181 + $0xc] sm:$0xf]
                %190 = vst [vmem:[%s182 + $0xc] sm:$0xf] %v189
                %v191 = vld [vmem:[%s181 + $0x40] sm:$0xf]
                %192 = vst [vmem:[%s182 + $0x10] sm:$0xf] %v191
                %v193 = vld [vmem:[%s181 + $0x44] sm:$0xf]
                %194 = vst [vmem:[%s182 + $0x14] sm:$0xf] %v193
                %v195 = vld [vmem:[%s181 + $0x48] sm:$0xf]
                %196 = vst [vmem:[%s182 + $0x18] sm:$0xf] %v195
                %v197 = vld [vmem:[%s181 + $0x4c] sm:$0xf]
                %198 = vst [vmem:[%s182 + $0x1c] sm:$0xf] %v197
                %v199 = vld [vmem:[%s181 + $0x80] sm:$0xf]
                %200 = vst [vmem:[%s182 + $0x20] sm:$0xf] %v199
                %v201 = vld [vmem:[%s181 + $0x84] sm:$0xf]
                %202 = vst [vmem:[%s182 + $0x24] sm:$0xf] %v201
                %v203 = vld [vmem:[%s181 + $0x88] sm:$0xf]
                %204 = vst [vmem:[%s182 + $0x28] sm:$0xf] %v203
                %v205 = vld [vmem:[%s181 + $0x8c] sm:$0xf]
                %206 = vst [vmem:[%s182 + $0x2c] sm:$0xf] %v205
                %v207 = vld [vmem:[%s181 + $0xc0] sm:$0xf]
                %208 = vst [vmem:[%s182 + $0x30] sm:$0xf] %v207
                %v209 = vld [vmem:[%s181 + $0xc4] sm:$0xf]
                %210 = vst [vmem:[%s182 + $0x34] sm:$0xf] %v209
                %v211 = vld [vmem:[%s181 + $0xc8] sm:$0xf]
                %212 = vst [vmem:[%s182 + $0x38] sm:$0xf] %v211
                %v213 = vld [vmem:[%s181 + $0xcc] sm:$0xf]
                %214 = vst [vmem:[%s182 + $0x3c] sm:$0xf] %v213
              $region45: #{spiking_transformer_forward.9} parent=39 // loop_footer
                %s180 = sadd.s32 1, %s176
              $region46: #{spiking_transformer_forward.9} parent=39 // loop_footer_branch
                %175 = sbr.rel target = $region42
              $region47: #{spiking_transformer_forward.9} parent=39 // loop_exit
                _
            $region40: #{spiking_transformer_forward.9} parent=31 // pred_fallthru
              _
          $region32: #{spiking_transformer_forward.9} parent=27 // pred_fallthru
            _
          %266 = vnop
        $region28: #{spiking_transformer_forward.9} parent=23 // pred_fallthru
          _
        // Predicated region
        $region66: #{spiking_transformer_forward.9} parent=23 // pred_check
          %p267 = pneg %p59
        $region67: #{spiking_transformer_forward.9} parent=23 // pred_check_branch
          %269 = sbr.rel (%p267) target = $region69
        $region68: #{spiking_transformer_forward.9} parent=23 // pred_region
          %s270 = sand.u32 %s49, 1
          %s271 = sand.u32 %s49, 1
          %s272 = smul.addr %s271, 64
          %s273 = scalar_lea.vmem [#allocation5], %s272
          %s274 = smul.u32 4, %s13
          %s275 = smul.addr %s274, 4
          %s276 = scalar_lea.vmem %s1, %s275
          // Predicated region
          $region70: #{spiking_transformer_forward.9} parent=68 // pred_check
            _
          $region71: #{spiking_transformer_forward.9} parent=68 // pred_check_branch
            %278 = sbr.rel (0) target = $region73
          $region72: #{spiking_transformer_forward.9} parent=68 // pred_region
            // Predicated region
            $region74: #{spiking_transformer_forward.9} parent=72 // pred_check
              _
            $region75: #{spiking_transformer_forward.9} parent=72 // pred_check_branch
              %280 = sbr.rel target = $region77
            $region76: #{spiking_transformer_forward.9} parent=72 // pred_region
              // Predicated region
              $region89: #{spiking_transformer_forward.9} parent=76 // pred_check
                _
              $region90: #{spiking_transformer_forward.9} parent=76 // pred_check_branch
                %325 = sbr.rel (0) target = $region92
              $region91: #{spiking_transformer_forward.9} parent=76 // pred_region
                loop: start=0, step=1, limit=1
                $region93: #{spiking_transformer_forward.9} parent=91 // loop_pre_header
                  _
                $region94: #{spiking_transformer_forward.9} parent=91 // loop_header
                  %s327 = sphi 0, %s331
                  %p328 = scmp.ge.s32.totalorder %s327, 1
                  %s332 = sphi %s276, %s276
                  %s333 = sphi %s273, %s273
                $region95: #{spiking_transformer_forward.9} parent=91 // loop_header_branch
                  %330 = sbr.rel (%p328) target = $region99
                $region96: #{spiking_transformer_forward.9} parent=91 // loop_body
                  _
                $region97: #{spiking_transformer_forward.9} parent=91 // loop_footer
                  %s331 = sadd.s32 1, %s327
                $region98: #{spiking_transformer_forward.9} parent=91 // loop_footer_branch
                  %326 = sbr.rel target = $region94
                $region99: #{spiking_transformer_forward.9} parent=91 // loop_exit
                  _
                loop: start=0, step=1, limit=1
                $region100: #{spiking_transformer_forward.9} parent=91 // loop_pre_header
                  _
                $region101: #{spiking_transformer_forward.9} parent=91 // loop_header
                  %s336 = sphi 0, %s340
                  %p337 = scmp.ge.s32.totalorder %s336, 1
                  %s341 = sphi %s276, %s276
                  %s342 = sphi %s273, %s273
                $region102: #{spiking_transformer_forward.9} parent=91 // loop_header_branch
                  %339 = sbr.rel (%p337) target = $region106
                $region103: #{spiking_transformer_forward.9} parent=91 // loop_body
                  %v343 = vld [vmem:[%s341] sm:$0xf]
                  %344 = vst [vmem:[%s342] sm:$0xf] %v343
                  %v345 = vld [vmem:[%s341 + $0x4] sm:$0xf]
                  %346 = vst [vmem:[%s342 + $0x4] sm:$0xf] %v345
                  %v347 = vld [vmem:[%s341 + $0x8] sm:$0xf]
                  %348 = vst [vmem:[%s342 + $0x8] sm:$0xf] %v347
                  %v349 = vld [vmem:[%s341 + $0xc] sm:$0xf]
                  %350 = vst [vmem:[%s342 + $0xc] sm:$0xf] %v349
                  %v351 = vld [vmem:[%s341 + $0x40] sm:$0xf]
                  %352 = vst [vmem:[%s342 + $0x10] sm:$0xf] %v351
                  %v353 = vld [vmem:[%s341 + $0x44] sm:$0xf]
                  %354 = vst [vmem:[%s342 + $0x14] sm:$0xf] %v353
                  %v355 = vld [vmem:[%s341 + $0x48] sm:$0xf]
                  %356 = vst [vmem:[%s342 + $0x18] sm:$0xf] %v355
                  %v357 = vld [vmem:[%s341 + $0x4c] sm:$0xf]
                  %358 = vst [vmem:[%s342 + $0x1c] sm:$0xf] %v357
                  %v359 = vld [vmem:[%s341 + $0x80] sm:$0xf]
                  %360 = vst [vmem:[%s342 + $0x20] sm:$0xf] %v359
                  %v361 = vld [vmem:[%s341 + $0x84] sm:$0xf]
                  %362 = vst [vmem:[%s342 + $0x24] sm:$0xf] %v361
                  %v363 = vld [vmem:[%s341 + $0x88] sm:$0xf]
                  %364 = vst [vmem:[%s342 + $0x28] sm:$0xf] %v363
                  %v365 = vld [vmem:[%s341 + $0x8c] sm:$0xf]
                  %366 = vst [vmem:[%s342 + $0x2c] sm:$0xf] %v365
                  %v367 = vld [vmem:[%s341 + $0xc0] sm:$0xf]
                  %368 = vst [vmem:[%s342 + $0x30] sm:$0xf] %v367
                  %v369 = vld [vmem:[%s341 + $0xc4] sm:$0xf]
                  %370 = vst [vmem:[%s342 + $0x34] sm:$0xf] %v369
                  %v371 = vld [vmem:[%s341 + $0xc8] sm:$0xf]
                  %372 = vst [vmem:[%s342 + $0x38] sm:$0xf] %v371
                  %v373 = vld [vmem:[%s341 + $0xcc] sm:$0xf]
                  %374 = vst [vmem:[%s342 + $0x3c] sm:$0xf] %v373
                $region104: #{spiking_transformer_forward.9} parent=91 // loop_footer
                  %s340 = sadd.s32 1, %s336
                $region105: #{spiking_transformer_forward.9} parent=91 // loop_footer_branch
                  %335 = sbr.rel target = $region101
                $region106: #{spiking_transformer_forward.9} parent=91 // loop_exit
                  _
              $region92: #{spiking_transformer_forward.9} parent=76 // pred_fallthru
                _
            $region77: #{spiking_transformer_forward.9} parent=72 // pred_fallthru
              _
            // Predicated region
            $region78: #{spiking_transformer_forward.9} parent=72 // pred_check
              _
            $region79: #{spiking_transformer_forward.9} parent=72 // pred_check_branch
              %282 = sbr.rel (0) target = $region81
            $region80: #{spiking_transformer_forward.9} parent=72 // pred_region
              loop: start=0, step=1, limit=1
              $region82: #{spiking_transformer_forward.9} parent=80 // loop_pre_header
                _
              $region83: #{spiking_transformer_forward.9} parent=80 // loop_header
                %s285 = sphi 0, %s289
                %p286 = scmp.ge.s32.totalorder %s285, 1
                %s290 = sphi %s276, %s276
                %s291 = sphi %s273, %s273
              $region84: #{spiking_transformer_forward.9} parent=80 // loop_header_branch
                %288 = sbr.rel (%p286) target = $region88
              $region85: #{spiking_transformer_forward.9} parent=80 // loop_body
                %v292 = vld [vmem:[%s290] sm:$0xf]
                %293 = vst [vmem:[%s291] sm:$0xf] %v292
                %v294 = vld [vmem:[%s290 + $0x4] sm:$0xf]
                %295 = vst [vmem:[%s291 + $0x4] sm:$0xf] %v294
                %v296 = vld [vmem:[%s290 + $0x8] sm:$0xf]
                %297 = vst [vmem:[%s291 + $0x8] sm:$0xf] %v296
                %v298 = vld [vmem:[%s290 + $0xc] sm:$0xf]
                %299 = vst [vmem:[%s291 + $0xc] sm:$0xf] %v298
                %v300 = vld [vmem:[%s290 + $0x40] sm:$0xf]
                %301 = vst [vmem:[%s291 + $0x10] sm:$0xf] %v300
                %v302 = vld [vmem:[%s290 + $0x44] sm:$0xf]
                %303 = vst [vmem:[%s291 + $0x14] sm:$0xf] %v302
                %v304 = vld [vmem:[%s290 + $0x48] sm:$0xf]
                %305 = vst [vmem:[%s291 + $0x18] sm:$0xf] %v304
                %v306 = vld [vmem:[%s290 + $0x4c] sm:$0xf]
                %307 = vst [vmem:[%s291 + $0x1c] sm:$0xf] %v306
                %v308 = vld [vmem:[%s290 + $0x80] sm:$0xf]
                %309 = vst [vmem:[%s291 + $0x20] sm:$0xf] %v308
                %v310 = vld [vmem:[%s290 + $0x84] sm:$0xf]
                %311 = vst [vmem:[%s291 + $0x24] sm:$0xf] %v310
                %v312 = vld [vmem:[%s290 + $0x88] sm:$0xf]
                %313 = vst [vmem:[%s291 + $0x28] sm:$0xf] %v312
                %v314 = vld [vmem:[%s290 + $0x8c] sm:$0xf]
                %315 = vst [vmem:[%s291 + $0x2c] sm:$0xf] %v314
                %v316 = vld [vmem:[%s290 + $0xc0] sm:$0xf]
                %317 = vst [vmem:[%s291 + $0x30] sm:$0xf] %v316
                %v318 = vld [vmem:[%s290 + $0xc4] sm:$0xf]
                %319 = vst [vmem:[%s291 + $0x34] sm:$0xf] %v318
                %v320 = vld [vmem:[%s290 + $0xc8] sm:$0xf]
                %321 = vst [vmem:[%s291 + $0x38] sm:$0xf] %v320
                %v322 = vld [vmem:[%s290 + $0xcc] sm:$0xf]
                %323 = vst [vmem:[%s291 + $0x3c] sm:$0xf] %v322
              $region86: #{spiking_transformer_forward.9} parent=80 // loop_footer
                %s289 = sadd.s32 1, %s285
              $region87: #{spiking_transformer_forward.9} parent=80 // loop_footer_branch
                %284 = sbr.rel target = $region83
              $region88: #{spiking_transformer_forward.9} parent=80 // loop_exit
                _
            $region81: #{spiking_transformer_forward.9} parent=72 // pred_fallthru
              _
          $region73: #{spiking_transformer_forward.9} parent=68 // pred_fallthru
            _
          %375 = vnop
        $region69: #{spiking_transformer_forward.9} parent=23 // pred_fallthru
          _
      $region24: #{spiking_transformer_forward.9} parent=5 // pred_fallthru
        _
      %p376 = scmp.le.s32.totalorder 1, %s13
      %p377 = scmp.lt.s32.totalorder %s13, 5
      %p378 = pnand %p376, %p377
      %p379 = pneg %p378
      // Predicated region
      $region107: #{spiking_transformer_forward.9} parent=5 // pred_check
        _
      $region108: #{spiking_transformer_forward.9} parent=5 // pred_check_branch
        %381 = sbr.rel (%p378) target = $region110
      $region109: #{spiking_transformer_forward.9} parent=5 // pred_region
        %s382 = ssub.s32 %s13, 1
        %s383 = sand.u32 %s26, 1
        %s384 = sand.u32 %s26, 1
        %s385 = smul.addr %s384, 64
        %s386 = scalar_lea.vmem [#allocation4], %s385
        // Predicated region
        $region111: #{spiking_transformer_forward.9} parent=109 // pred_check
          %p387 = pneg %p39
        $region112: #{spiking_transformer_forward.9} parent=109 // pred_check_branch
          %389 = sbr.rel (%p387) target = $region114
        $region113: #{spiking_transformer_forward.9} parent=109 // pred_region
          _
        $region114: #{spiking_transformer_forward.9} parent=109 // pred_fallthru
          _
        %s390 = sand.u32 %s52, 1
        %s391 = sand.u32 %s52, 1
        %s392 = smul.addr %s391, 64
        %s393 = scalar_lea.vmem [#allocation5], %s392
        // Predicated region
        $region115: #{spiking_transformer_forward.9} parent=109 // pred_check
          %p394 = pneg %p65
        $region116: #{spiking_transformer_forward.9} parent=109 // pred_check_branch
          %396 = sbr.rel (%p394) target = $region118
        $region117: #{spiking_transformer_forward.9} parent=109 // pred_region
          _
        $region118: #{spiking_transformer_forward.9} parent=109 // pred_fallthru
          _
        %s397 = sand.u32 %s26, 1
        %s398 = sand.u32 %s26, 1
        %s399 = smul.addr %s398, 64
        %s400 = scalar_lea.vmem [#allocation4], %s399
        %p401 = pneg %p39
        %p402 = pneg %p36
        %s403 = sand.u32 %s52, 1
        %s404 = sand.u32 %s52, 1
        %s405 = smul.addr %s404, 64
        %s406 = scalar_lea.vmem [#allocation5], %s405
        %p407 = pneg %p65
        %p408 = pneg %p62
        %p409 = pneg %p86
        %p410 = pneg %p83
        %p411 = pneg %p107
        %p412 = pneg %p104
        %p413 = pneg %p133
        %p414 = pneg %p130
        %s415 = sand.u32 %s120, 1
        %s416 = scalar_lea.sflag [#allocation7], %s415
        %s417 = sand.u32 %s120, 1
        %s418 = smul.addr %s417, 128
        %s419 = scalar_lea.vmem [#allocation6], %s418
        %s420 = smul.u32 4, %s18
        %s421 = smul.u32 4, %s18
        %s422 = smul.u32 4, %s18
        %v424 = vld [vmem:[%s386] sm:$0xf]
        %v425 = vld [vmem:[%s386 + $0x4] sm:$0xf]
        %v426 = vld [vmem:[%s386 + $0x8] sm:$0xf]
        %v427 = vld [vmem:[%s386 + $0xc] sm:$0xf]
        %v428 = vld [vmem:[%s386 + $0x10] sm:$0xf]
        %v429 = vld [vmem:[%s386 + $0x14] sm:$0xf]
        %v430 = vld [vmem:[%s386 + $0x18] sm:$0xf]
        %v431 = vld [vmem:[%s386 + $0x1c] sm:$0xf]
        %v432 = vld [vmem:[%s386 + $0x20] sm:$0xf]
        %v433 = vld [vmem:[%s386 + $0x24] sm:$0xf]
        %v434 = vld [vmem:[%s386 + $0x28] sm:$0xf]
        %v435 = vld [vmem:[%s386 + $0x2c] sm:$0xf]
        %v436 = vld [vmem:[%s386 + $0x30] sm:$0xf]
        %v437 = vld [vmem:[%s386 + $0x34] sm:$0xf]
        %v438 = vld [vmem:[%s386 + $0x38] sm:$0xf]
        %v439 = vld [vmem:[%s386 + $0x3c] sm:$0xf]
        %v440 = vld [vmem:[%s2] sm:$0xf]
        %v441 = vld [vmem:[%s2 + $0x4] sm:$0xf]
        %v442 = vld [vmem:[%s2 + $0x8] sm:$0xf]
        %v443 = vld [vmem:[%s2 + $0xc] sm:$0xf]
        %v444 = vld [vmem:[%s2 + $0x10] sm:$0xf]
        %v445 = vld [vmem:[%s2 + $0x14] sm:$0xf]
        %v446 = vld [vmem:[%s2 + $0x18] sm:$0xf]
        %v447 = vld [vmem:[%s2 + $0x1c] sm:$0xf]
        %v448 = vld [vmem:[%s2 + $0x20] sm:$0xf]
        %v449 = vld [vmem:[%s2 + $0x24] sm:$0xf]
        %v450 = vld [vmem:[%s2 + $0x28] sm:$0xf]
        %v451 = vld [vmem:[%s2 + $0x2c] sm:$0xf]
        %v452 = vld [vmem:[%s2 + $0x30] sm:$0xf]
        %v453 = vld [vmem:[%s2 + $0x34] sm:$0xf]
        %v454 = vld [vmem:[%s2 + $0x38] sm:$0xf]
        %v455 = vld [vmem:[%s2 + $0x3c] sm:$0xf]
        %v456 = vld [vmem:[%s3] sm:$0x1]
        %v458 = vlaneseq
        %v459 = vshrl.u32 %v458, 7
        %v460 = vsub.s32 0, %v459
        %v461 = vrot.slane %v456, %v460
        %v479 = vunpack.c.l.b16 %v424
        %v480 = vunpack.c.l.b16 %v425
        %v481 = vunpack.c.l.b16 %v426
        %v482 = vunpack.c.l.b16 %v427
        %v483 = vunpack.c.l.b16 %v428
        %v484 = vunpack.c.l.b16 %v429
        %v485 = vunpack.c.l.b16 %v430
        %v486 = vunpack.c.l.b16 %v431
        %v487 = vunpack.c.l.b16 %v432
        %v488 = vunpack.c.l.b16 %v433
        %v489 = vunpack.c.l.b16 %v434
        %v490 = vunpack.c.l.b16 %v435
        %v491 = vunpack.c.l.b16 %v436
        %v492 = vunpack.c.l.b16 %v437
        %v493 = vunpack.c.l.b16 %v438
        %v494 = vunpack.c.l.b16 %v439
        %v495 = vpack.c.b16 %v480, %v479
        %v496 = vpack.c.b16 %v482, %v481
        %v497 = vpack.c.b16 %v484, %v483
        %v498 = vpack.c.b16 %v486, %v485
        %v499 = vpack.c.b16 %v488, %v487
        %v500 = vpack.c.b16 %v490, %v489
        %v501 = vpack.c.b16 %v492, %v491
        %v502 = vpack.c.b16 %v494, %v493
        %v527 = vunpack.c.l.b16 %v440
        %v528 = vunpack.c.l.b16 %v441
        %v529 = vunpack.c.l.b16 %v442
        %v530 = vunpack.c.l.b16 %v443
        %v531 = vunpack.c.l.b16 %v444
        %v532 = vunpack.c.l.b16 %v445
        %v533 = vunpack.c.l.b16 %v446
        %v534 = vunpack.c.l.b16 %v447
        %v535 = vunpack.c.l.b16 %v448
        %v536 = vunpack.c.l.b16 %v449
        %v537 = vunpack.c.l.b16 %v450
        %v538 = vunpack.c.l.b16 %v451
        %v539 = vunpack.c.l.b16 %v452
        %v540 = vunpack.c.l.b16 %v453
        %v541 = vunpack.c.l.b16 %v454
        %v542 = vunpack.c.l.b16 %v455
        %v543 = vpack.c.b16 %v528, %v527
        %v544 = vpack.c.b16 %v530, %v529
        %v545 = vpack.c.b16 %v532, %v531
        %v546 = vpack.c.b16 %v534, %v533
        %v547 = vpack.c.b16 %v536, %v535
        %v548 = vpack.c.b16 %v538, %v537
        %v549 = vpack.c.b16 %v540, %v539
        %v550 = vpack.c.b16 %v542, %v541
        %559 = vmatprep.subr.bf16.mxu0 0
        %560 = vmatpush1.bf16.msra.mxu0 %v543
        %561 = vmatprep.subr.bf16.mxu0 0
        %562 = vmatpush1.bf16.msra.mxu0 %v544
        %563 = vmatprep.subr.bf16.mxu0 0
        %564 = vmatpush1.bf16.msra.mxu0 %v545
        %565 = vmatprep.subr.bf16.mxu0 0
        %566 = vmatpush1.bf16.msra.mxu0 %v546
        %567 = vmatprep.subr.bf16.mxu0 0
        %568 = vmatpush1.bf16.msra.mxu0 %v547
        %569 = vmatprep.subr.bf16.mxu0 0
        %570 = vmatpush1.bf16.msra.mxu0 %v548
        %571 = vmatprep.subr.bf16.mxu0 0
        %572 = vmatpush1.bf16.msra.mxu0 %v549
        %573 = vmatprep.subr.bf16.mxu0 0
        %574 = vmatpush1.bf16.msra.mxu0 %v550
        %575 = vmatprep.subr.bf16.mxu0 0
        %576 = vmatpush1.bf16.msra.mxu0 0
        %577 = vmatprep.subr.bf16.mxu0 0
        %578 = vmatpush1.bf16.msra.mxu0 0
        %579 = vmatprep.subr.bf16.mxu0 0
        %580 = vmatpush1.bf16.msra.mxu0 0
        %581 = vmatprep.subr.bf16.mxu0 0
        %582 = vmatpush1.bf16.msra.mxu0 0
        %583 = vmatprep.subr.bf16.mxu0 0
        %584 = vmatpush1.bf16.msra.mxu0 0
        %585 = vmatprep.subr.bf16.mxu0 0
        %586 = vmatpush1.bf16.msra.mxu0 0
        %587 = vmatprep.subr.bf16.mxu0 0
        %588 = vmatpush1.bf16.msra.mxu0 0
        %589 = vmatprep.subr.bf16.mxu0 0
        %590 = vmatpush1.bf16.msra.mxu0 0
        %591 = vmatprep.mubr.bf16.mxu0 0
        %592 = vmatmul.mubr.bf16.gmra.mrb[0].mxu0 %v495
        %v593 = vpop.f32.mrb[0].mxu0
        %v594 = vadd.f32 %v461, %v593
        %v595 = vpop.f32.mrb[0].mxu0
        %v596 = vpop.f32.mrb[0].mxu0
        %v597 = vadd.f32 %v461, %v596
        %v598 = vpop.f32.mrb[0].mxu0
        %599 = vmatprep.mubr.bf16.mxu0 0
        %600 = vmatmul.mubr.bf16.gmra.mrb[0].mxu0 %v496
        %v601 = vpop.f32.mrb[0].mxu0
        %v602 = vadd.f32 %v461, %v601
        %v603 = vpop.f32.mrb[0].mxu0
        %v604 = vpop.f32.mrb[0].mxu0
        %v605 = vadd.f32 %v461, %v604
        %v606 = vpop.f32.mrb[0].mxu0
        %607 = vmatprep.mubr.bf16.mxu0 0
        %608 = vmatmul.mubr.bf16.gmra.mrb[0].mxu0 %v497
        %v609 = vpop.f32.mrb[0].mxu0
        %v610 = vadd.f32 %v461, %v609
        %v611 = vpop.f32.mrb[0].mxu0
        %v612 = vpop.f32.mrb[0].mxu0
        %v613 = vadd.f32 %v461, %v612
        %v614 = vpop.f32.mrb[0].mxu0
        %615 = vmatprep.mubr.bf16.mxu0 0
        %616 = vmatmul.mubr.bf16.gmra.mrb[0].mxu0 %v498
        %v617 = vpop.f32.mrb[0].mxu0
        %v618 = vadd.f32 %v461, %v617
        %v619 = vpop.f32.mrb[0].mxu0
        %v620 = vpop.f32.mrb[0].mxu0
        %v621 = vadd.f32 %v461, %v620
        %v622 = vpop.f32.mrb[0].mxu0
        %623 = vmatprep.mubr.bf16.mxu0 0
        %624 = vmatmul.mubr.bf16.gmra.mrb[0].mxu0 %v499
        %v625 = vpop.f32.mrb[0].mxu0
        %v626 = vadd.f32 %v461, %v625
        %v627 = vpop.f32.mrb[0].mxu0
        %v628 = vpop.f32.mrb[0].mxu0
        %v629 = vadd.f32 %v461, %v628
        %v630 = vpop.f32.mrb[0].mxu0
        %631 = vmatprep.mubr.bf16.mxu0 0
        %632 = vmatmul.mubr.bf16.gmra.mrb[0].mxu0 %v500
        %v633 = vpop.f32.mrb[0].mxu0
        %v634 = vadd.f32 %v461, %v633
        %v635 = vpop.f32.mrb[0].mxu0
        %v636 = vpop.f32.mrb[0].mxu0
        %v637 = vadd.f32 %v461, %v636
        %v638 = vpop.f32.mrb[0].mxu0
        %639 = vmatprep.mubr.bf16.mxu0 0
        %640 = vmatmul.mubr.bf16.gmra.mrb[0].mxu0 %v501
        %v641 = vpop.f32.mrb[0].mxu0
        %v642 = vadd.f32 %v461, %v641
        %v643 = vpop.f32.mrb[0].mxu0
        %v644 = vpop.f32.mrb[0].mxu0
        %v645 = vadd.f32 %v461, %v644
        %v646 = vpop.f32.mrb[0].mxu0
        %647 = vmatprep.mubr.bf16.mxu0 0
        %648 = vmatmul.mubr.bf16.gmra.mrb[0].mxu0 %v502
        %v649 = vpop.f32.mrb[0].mxu0
        %v650 = vadd.f32 %v461, %v649
        %v651 = vpop.f32.mrb[0].mxu0
        %v652 = vpop.f32.mrb[0].mxu0
        %v653 = vadd.f32 %v461, %v652
        %v654 = vpop.f32.mrb[0].mxu0
        %655 = vdwg.mxu0
        %vm656 = vcmask 261120
        %657 = vst.msk [vmem:[#allocation2] sm:$0xff] %vm656, %v594
        %658 = vst.msk [vmem:[#allocation2 + $0x8] sm:$0xff] %vm656, %v597
        %659 = vst.msk [vmem:[#allocation2 + $0x10] sm:$0xff] %vm656, %v602
        %660 = vst.msk [vmem:[#allocation2 + $0x18] sm:$0xff] %vm656, %v605
        %661 = vst.msk [vmem:[#allocation2 + $0x20] sm:$0xff] %vm656, %v610
        %662 = vst.msk [vmem:[#allocation2 + $0x28] sm:$0xff] %vm656, %v613
        %663 = vst.msk [vmem:[#allocation2 + $0x30] sm:$0xff] %vm656, %v618
        %664 = vst.msk [vmem:[#allocation2 + $0x38] sm:$0xff] %vm656, %v621
        %665 = vst.msk [vmem:[#allocation2 + $0x40] sm:$0xff] %vm656, %v626
        %666 = vst.msk [vmem:[#allocation2 + $0x48] sm:$0xff] %vm656, %v629
        %667 = vst.msk [vmem:[#allocation2 + $0x50] sm:$0xff] %vm656, %v634
        %668 = vst.msk [vmem:[#allocation2 + $0x58] sm:$0xff] %vm656, %v637
        %669 = vst.msk [vmem:[#allocation2 + $0x60] sm:$0xff] %vm656, %v642
        %670 = vst.msk [vmem:[#allocation2 + $0x68] sm:$0xff] %vm656, %v645
        %671 = vst.msk [vmem:[#allocation2 + $0x70] sm:$0xff] %vm656, %v650
        %672 = vst.msk [vmem:[#allocation2 + $0x78] sm:$0xff] %vm656, %v653
        %673 = vst.msk [vmem:[#allocation3] sm:$0xff] %vm656, 0.0
        %674 = vst.msk [vmem:[#allocation3 + $0x8] sm:$0xff] %vm656, 0.0
        %675 = vst.msk [vmem:[#allocation3 + $0x10] sm:$0xff] %vm656, 0.0
        %676 = vst.msk [vmem:[#allocation3 + $0x18] sm:$0xff] %vm656, 0.0
        %v677 = vld [vmem:[#allocation3] sm:$0xff]
        %v678 = vld [vmem:[#allocation3 + $0x8] sm:$0xff]
        %v679 = vld [vmem:[#allocation3 + $0x10] sm:$0xff]
        %v680 = vld [vmem:[#allocation3 + $0x18] sm:$0xff]
        %v681 = vld [vmem:[#allocation2] sm:$0xff]
        %v682 = vld [vmem:[#allocation2 + $0x8] sm:$0xff]
        %v683 = vld [vmem:[#allocation2 + $0x10] sm:$0xff]
        %v684 = vld [vmem:[#allocation2 + $0x18] sm:$0xff]
        %v685 = vadd.f32 %v677, %v681
        %v686 = vadd.f32 %v678, %v682
        %v687 = vadd.f32 %v679, %v683
        %v688 = vadd.f32 %v680, %v684
        %v689 = vmul.f32 %v685, 0.5
        %v690 = vmul.f32 %v686, 0.5
        %v691 = vmul.f32 %v687, 0.5
        %v692 = vmul.f32 %v688, 0.5
        %vm693 = vcmp.ge.f32.partialorder %v689, 1.0
        %vm694 = vcmp.ge.f32.partialorder %v690, 1.0
        %vm695 = vcmp.ge.f32.partialorder %v691, 1.0
        %vm696 = vcmp.ge.f32.partialorder %v692, 1.0
        %v697 = vsel %vm693, 1, 0
        %v698 = vsel %vm694, 1, 0
        %v699 = vsel %vm695, 1, 0
        %v700 = vsel %vm696, 1, 0
        %v701 = vcvt.s32.f32 %v697
        %v702 = vcvt.s32.f32 %v698
        %v703 = vcvt.s32.f32 %v699
        %v704 = vcvt.s32.f32 %v700
        %v705 = vld [vmem:[%s393] sm:$0xf]
        %v706 = vld [vmem:[%s393 + $0x4] sm:$0xf]
        %v707 = vld [vmem:[%s393 + $0x8] sm:$0xf]
        %v708 = vld [vmem:[%s393 + $0xc] sm:$0xf]
        %v709 = vunpack.c.l.bf16 %v705
        %v710 = vunpack.c.l.bf16 %v706
        %v711 = vunpack.c.l.bf16 %v707
        %v712 = vunpack.c.l.bf16 %v708
        %v713 = vadd.f32 %v701, %v709
        %v714 = vadd.f32 %v702, %v710
        %v715 = vadd.f32 %v703, %v711
        %v716 = vadd.f32 %v704, %v712
        %717 = vst.msk [vmem:[%s419] sm:$0xff] %vm656, %v713
        %718 = vst.msk [vmem:[%s419 + $0x8] sm:$0xff] %vm656, %v714
        %719 = vst.msk [vmem:[%s419 + $0x10] sm:$0xff] %vm656, %v715
        %720 = vst.msk [vmem:[%s419 + $0x18] sm:$0xff] %vm656, %v716
        %v721 = vsel %vm693, 0.0, %v689
        %v722 = vsel %vm694, 0.0, %v690
        %v723 = vsel %vm695, 0.0, %v691
        %v724 = vsel %vm696, 0.0, %v692
        %725 = vst.msk [vmem:[#allocation3] sm:$0xff] %vm656, %v721
        %726 = vst.msk [vmem:[#allocation3 + $0x8] sm:$0xff] %vm656, %v722
        %727 = vst.msk [vmem:[#allocation3 + $0x10] sm:$0xff] %vm656, %v723
        %728 = vst.msk [vmem:[#allocation3 + $0x18] sm:$0xff] %vm656, %v724
        %v729 = vld [vmem:[#allocation3] sm:$0xff]
        %v730 = vld [vmem:[#allocation3 + $0x8] sm:$0xff]
        %v731 = vld [vmem:[#allocation3 + $0x10] sm:$0xff]
        %v732 = vld [vmem:[#allocation3 + $0x18] sm:$0xff]
        %v733 = vld [vmem:[#allocation2 + $0x20] sm:$0xff]
        %v734 = vld [vmem:[#allocation2 + $0x28] sm:$0xff]
        %v735 = vld [vmem:[#allocation2 + $0x30] sm:$0xff]
        %v736 = vld [vmem:[#allocation2 + $0x38] sm:$0xff]
        %v737 = vadd.f32 %v729, %v733
        %v738 = vadd.f32 %v730, %v734
        %v739 = vadd.f32 %v731, %v735
        %v740 = vadd.f32 %v732, %v736
        %v741 = vmul.f32 %v737, 0.5
        %v742 = vmul.f32 %v738, 0.5
        %v743 = vmul.f32 %v739, 0.5
        %v744 = vmul.f32 %v740, 0.5
        %vm745 = vcmp.ge.f32.partialorder %v741, 1.0
        %vm746 = vcmp.ge.f32.partialorder %v742, 1.0
        %vm747 = vcmp.ge.f32.partialorder %v743, 1.0
        %vm748 = vcmp.ge.f32.partialorder %v744, 1.0
        %v749 = vsel %vm745, 1, 0
        %v750 = vsel %vm746, 1, 0
        %v751 = vsel %vm747, 1, 0
        %v752 = vsel %vm748, 1, 0
        %v753 = vcvt.s32.f32 %v749
        %v754 = vcvt.s32.f32 %v750
        %v755 = vcvt.s32.f32 %v751
        %v756 = vcvt.s32.f32 %v752
        %s757 = scalar_lea.vmem %s393, 16 [#allocation5]
        %v758 = vld [vmem:[%s757] sm:$0xf]
        %v759 = vld [vmem:[%s757 + $0x4] sm:$0xf]
        %v760 = vld [vmem:[%s757 + $0x8] sm:$0xf]
        %v761 = vld [vmem:[%s757 + $0xc] sm:$0xf]
        %v762 = vunpack.c.l.bf16 %v758
        %v763 = vunpack.c.l.bf16 %v759
        %v764 = vunpack.c.l.bf16 %v760
        %v765 = vunpack.c.l.bf16 %v761
        %v766 = vadd.f32 %v753, %v762
        %v767 = vadd.f32 %v754, %v763
        %v768 = vadd.f32 %v755, %v764
        %v769 = vadd.f32 %v756, %v765
        %s770 = scalar_lea.vmem %s419, 32 [#allocation6]
        %771 = vst.msk [vmem:[%s770] sm:$0xff] %vm656, %v766
        %772 = vst.msk [vmem:[%s770 + $0x8] sm:$0xff] %vm656, %v767
        %773 = vst.msk [vmem:[%s770 + $0x10] sm:$0xff] %vm656, %v768
        %774 = vst.msk [vmem:[%s770 + $0x18] sm:$0xff] %vm656, %v769
        %v775 = vsel %vm745, 0.0, %v741
        %v776 = vsel %vm746, 0.0, %v742
        %v777 = vsel %vm747, 0.0, %v743
        %v778 = vsel %vm748, 0.0, %v744
        %779 = vst.msk [vmem:[#allocation3] sm:$0xff] %vm656, %v775
        %780 = vst.msk [vmem:[#allocation3 + $0x8] sm:$0xff] %vm656, %v776
        %781 = vst.msk [vmem:[#allocation3 + $0x10] sm:$0xff] %vm656, %v777
        %782 = vst.msk [vmem:[#allocation3 + $0x18] sm:$0xff] %vm656, %v778
        %v783 = vld [vmem:[#allocation3] sm:$0xff]
        %v784 = vld [vmem:[#allocation3 + $0x8] sm:$0xff]
        %v785 = vld [vmem:[#allocation3 + $0x10] sm:$0xff]
        %v786 = vld [vmem:[#allocation3 + $0x18] sm:$0xff]
        %v787 = vld [vmem:[#allocation2 + $0x40] sm:$0xff]
        %v788 = vld [vmem:[#allocation2 + $0x48] sm:$0xff]
        %v789 = vld [vmem:[#allocation2 + $0x50] sm:$0xff]
        %v790 = vld [vmem:[#allocation2 + $0x58] sm:$0xff]
        %v791 = vadd.f32 %v783, %v787
        %v792 = vadd.f32 %v784, %v788
        %v793 = vadd.f32 %v785, %v789
        %v794 = vadd.f32 %v786, %v790
        %v795 = vmul.f32 %v791, 0.5
        %v796 = vmul.f32 %v792, 0.5
        %v797 = vmul.f32 %v793, 0.5
        %v798 = vmul.f32 %v794, 0.5
        %vm799 = vcmp.ge.f32.partialorder %v795, 1.0
        %vm800 = vcmp.ge.f32.partialorder %v796, 1.0
        %vm801 = vcmp.ge.f32.partialorder %v797, 1.0
        %vm802 = vcmp.ge.f32.partialorder %v798, 1.0
        %v803 = vsel %vm799, 1, 0
        %v804 = vsel %vm800, 1, 0
        %v805 = vsel %vm801, 1, 0
        %v806 = vsel %vm802, 1, 0
        %v807 = vcvt.s32.f32 %v803
        %v808 = vcvt.s32.f32 %v804
        %v809 = vcvt.s32.f32 %v805
        %v810 = vcvt.s32.f32 %v806
        %s811 = scalar_lea.vmem %s393, 32 [#allocation5]
        %v812 = vld [vmem:[%s811] sm:$0xf]
        %v813 = vld [vmem:[%s811 + $0x4] sm:$0xf]
        %v814 = vld [vmem:[%s811 + $0x8] sm:$0xf]
        %v815 = vld [vmem:[%s811 + $0xc] sm:$0xf]
        %v816 = vunpack.c.l.bf16 %v812
        %v817 = vunpack.c.l.bf16 %v813
        %v818 = vunpack.c.l.bf16 %v814
        %v819 = vunpack.c.l.bf16 %v815
        %v820 = vadd.f32 %v807, %v816
        %v821 = vadd.f32 %v808, %v817
        %v822 = vadd.f32 %v809, %v818
        %v823 = vadd.f32 %v810, %v819
        %s824 = scalar_lea.vmem %s419, 64 [#allocation6]
        %825 = vst.msk [vmem:[%s824] sm:$0xff] %vm656, %v820
        %826 = vst.msk [vmem:[%s824 + $0x8] sm:$0xff] %vm656, %v821
        %827 = vst.msk [vmem:[%s824 + $0x10] sm:$0xff] %vm656, %v822
        %828 = vst.msk [vmem:[%s824 + $0x18] sm:$0xff] %vm656, %v823
        %v829 = vsel %vm799, 0.0, %v795
        %v830 = vsel %vm800, 0.0, %v796
        %v831 = vsel %vm801, 0.0, %v797
        %v832 = vsel %vm802, 0.0, %v798
        %833 = vst.msk [vmem:[#allocation3] sm:$0xff] %vm656, %v829
        %834 = vst.msk [vmem:[#allocation3 + $0x8] sm:$0xff] %vm656, %v830
        %835 = vst.msk [vmem:[#allocation3 + $0x10] sm:$0xff] %vm656, %v831
        %836 = vst.msk [vmem:[#allocation3 + $0x18] sm:$0xff] %vm656, %v832
        %v837 = vld [vmem:[#allocation3] sm:$0xff]
        %v838 = vld [vmem:[#allocation3 + $0x8] sm:$0xff]
        %v839 = vld [vmem:[#allocation3 + $0x10] sm:$0xff]
        %v840 = vld [vmem:[#allocation3 + $0x18] sm:$0xff]
        %v841 = vld [vmem:[#allocation2 + $0x60] sm:$0xff]
        %v842 = vld [vmem:[#allocation2 + $0x68] sm:$0xff]
        %v843 = vld [vmem:[#allocation2 + $0x70] sm:$0xff]
        %v844 = vld [vmem:[#allocation2 + $0x78] sm:$0xff]
        %v845 = vadd.f32 %v837, %v841
        %v846 = vadd.f32 %v838, %v842
        %v847 = vadd.f32 %v839, %v843
        %v848 = vadd.f32 %v840, %v844
        %v849 = vmul.f32 %v845, 0.5
        %v850 = vmul.f32 %v846, 0.5
        %v851 = vmul.f32 %v847, 0.5
        %v852 = vmul.f32 %v848, 0.5
        %vm853 = vcmp.ge.f32.partialorder %v849, 1.0
        %vm854 = vcmp.ge.f32.partialorder %v850, 1.0
        %vm855 = vcmp.ge.f32.partialorder %v851, 1.0
        %vm856 = vcmp.ge.f32.partialorder %v852, 1.0
        %v857 = vsel %vm853, 1, 0
        %v858 = vsel %vm854, 1, 0
        %v859 = vsel %vm855, 1, 0
        %v860 = vsel %vm856, 1, 0
        %v861 = vcvt.s32.f32 %v857
        %v862 = vcvt.s32.f32 %v858
        %v863 = vcvt.s32.f32 %v859
        %v864 = vcvt.s32.f32 %v860
        %s865 = scalar_lea.vmem %s393, 48 [#allocation5]
        %v866 = vld [vmem:[%s865] sm:$0xf]
        %v867 = vld [vmem:[%s865 + $0x4] sm:$0xf]
        %v868 = vld [vmem:[%s865 + $0x8] sm:$0xf]
        %v869 = vld [vmem:[%s865 + $0xc] sm:$0xf]
        %v870 = vunpack.c.l.bf16 %v866
        %v871 = vunpack.c.l.bf16 %v867
        %v872 = vunpack.c.l.bf16 %v868
        %v873 = vunpack.c.l.bf16 %v869
        %v874 = vadd.f32 %v861, %v870
        %v875 = vadd.f32 %v862, %v871
        %v876 = vadd.f32 %v863, %v872
        %v877 = vadd.f32 %v864, %v873
        %s878 = scalar_lea.vmem %s419, 96 [#allocation6]
        %879 = vst.msk [vmem:[%s878] sm:$0xff] %vm656, %v874
        %880 = vst.msk [vmem:[%s878 + $0x8] sm:$0xff] %vm656, %v875
        %881 = vst.msk [vmem:[%s878 + $0x10] sm:$0xff] %vm656, %v876
        %882 = vst.msk [vmem:[%s878 + $0x18] sm:$0xff] %vm656, %v877
        %v883 = vsel %vm853, 0.0, %v849
        %v884 = vsel %vm854, 0.0, %v850
        %v885 = vsel %vm855, 0.0, %v851
        %v886 = vsel %vm856, 0.0, %v852
        %887 = vst.msk [vmem:[#allocation3] sm:$0xff] %vm656, %v883
        %888 = vst.msk [vmem:[#allocation3 + $0x8] sm:$0xff] %vm656, %v884
        %889 = vst.msk [vmem:[#allocation3 + $0x10] sm:$0xff] %vm656, %v885
        %890 = vst.msk [vmem:[#allocation3 + $0x18] sm:$0xff] %vm656, %v886
        %s891 = sand.u32 %s120, 1
        %s892 = scalar_lea.sflag [#allocation7], %s891
        %s893 = sand.u32 %s120, 1
        %s894 = smul.addr %s893, 128
        %s895 = scalar_lea.vmem [#allocation6], %s894
        // Predicated region
        $region119: #{spiking_transformer_forward.9} parent=109 // pred_check
          %p896 = pneg %p130
        $region120: #{spiking_transformer_forward.9} parent=109 // pred_check_branch
          %898 = sbr.rel (%p896) target = $region122
        $region121: #{spiking_transformer_forward.9} parent=109 // pred_region
          #allocation9 [shape = 'u32[6]{0}', space=smem, size = 0x18, scoped, tag = 'DMA stride descriptor']
          %s899 = smul.u32 4, %s18
          %s901 = ssub.s32 2048, 2048
          %902 = vsyncadd %s892, %s901
          %s903 = smul.addr %s899, 128
          %s904 = scalar_lea.hbm %s4, %s903
          %s906 = sshll.u32 1, 14
          %s907 = sxor.u32 4294967295, %s906
          %s910 = sshll.u32 7, 18
          %s911 = sxor.u32 4294967295, %s910
          %s912 = sand.u32 0, %s911
          %s914 = sor.u32 %s912, 0
          %s916 = sshll.u32 3, 24
          %s917 = sxor.u32 4294967295, %s916
          %s918 = sand.u32 %s914, %s917
          %s920 = sor.u32 %s918, 0
          %s921 = sshll.u32 %s895, 4
          %s922 = int_to_ptr.vmem [resolvable:$true] %s921
          %928 = sst [smem:[#allocation9]] 512
          %s929 = scalar_lea.smem [#allocation9], 1
          %930 = sst [smem:[%s929]] 2048
          %s931 = scalar_lea.smem [#allocation9], 2
          %932 = sst [smem:[%s931]] 4
          %s933 = scalar_lea.smem [#allocation9], 3
          %934 = sst [smem:[%s933]] 128
          %s935 = scalar_lea.smem [#allocation9], 4
          %936 = sst [smem:[%s935]] 128
          %s937 = scalar_lea.smem [#allocation9], 5
          %938 = sst [smem:[%s937]] 8
          %940 = dma.general %s922, 2048, %s904, %s892, [#allocation8], [#allocation9], %s920, 0
        $region122: #{spiking_transformer_forward.9} parent=109 // pred_fallthru
          _
      $region110: #{spiking_transformer_forward.9} parent=5 // pred_fallthru
        _
      %p941 = scmp.le.s32.totalorder 2, %s13
      // Predicated region
      $region123: #{spiking_transformer_forward.9} parent=5 // pred_check
        %p942 = pneg %p941
      $region124: #{spiking_transformer_forward.9} parent=5 // pred_check_branch
        %944 = sbr.rel (%p942) target = $region126
      $region125: #{spiking_transformer_forward.9} parent=5 // pred_region
        %s945 = ssub.s32 %s13, 2
        // Predicated region
        $region127: #{spiking_transformer_forward.9} parent=125 // pred_check
          %p946 = pneg %p136
        $region128: #{spiking_transformer_forward.9} parent=125 // pred_check_branch
          %948 = sbr.rel (%p946) target = $region130
        $region129: #{spiking_transformer_forward.9} parent=125 // pred_region
          %s949 = sand.u32 %s121, 1
          %s950 = scalar_lea.sflag [#allocation7], %s949
          %s951 = sand.u32 %s121, 1
          %s952 = smul.addr %s951, 128
          %s953 = scalar_lea.vmem [#allocation6], %s952
          %954 = dma.done %s950, 2048
        $region130: #{spiking_transformer_forward.9} parent=125 // pred_fallthru
          _
      $region126: #{spiking_transformer_forward.9} parent=5 // pred_fallthru
        _
    $region6: #{spiking_transformer_forward.9} parent=1 // loop_footer
      %s17 = sadd.s32 1, %s13
    $region7: #{spiking_transformer_forward.9} parent=1 // loop_footer_branch
      %12 = sbr.rel target = $region3
    $region8: #{spiking_transformer_forward.9} parent=1 // loop_exit
      _
    %955 = vsyncpa [#allocation7], 1
    %s956 = scalar_lea.sflag [#allocation7], 1
    %957 = vsyncpa %s956, 1

</llo_original>
